<compile_context>
chip_gen: v7x
topology: tpu7x:2x2x1
jax: 0.10.0
libtpu: 0.0.40
codegen_flags: <defaults>
</compile_context>

<pallas_src>
import functools

import jax
import jax.numpy as jnp
import numpy as np
from jax import lax
from jax.experimental import pallas as pl
from jax.experimental.pallas import tpu as pltpu


def _dynamic_conv_kernel(x_ref, w1_ref, b1_ref, w2t_ref, b2_ref, cw_ref, cb_ref,
                         o_ref, xpad_ref, patches_ref, *,
                         H, W, Cin, Cout, Kmax, nK, P):
    HW = H * W
    KK = Kmax * Kmax

    x3 = x_ref[0]                                                    # (Cin, H, W) f32

    # ----- attention: AdaptiveAvgPool2d((1,1)) -> Linear -> ReLU -> Linear -> Softmax -----
    # (VPU broadcast-mul + reductions; keeps the MXU free, no activation reshape)
    pooled = jnp.sum(jnp.sum(x3, axis=2), axis=1, keepdims=True) * (1.0 / HW)     # (Cin, 1)
    hidden = jnp.sum(w1_ref[...] * pooled, axis=0, keepdims=True) + b1_ref[...]   # (1, Ch)
    hidden = jnp.maximum(hidden, 0.0)
    logits = jnp.sum(w2t_ref[...] * hidden, axis=1, keepdims=True) + b2_ref[...]  # (nK, 1)
    # torch.nn.Softmax() on a 2D (B, nK) input acts over the nK axis.
    z = logits - jnp.max(logits, axis=0, keepdims=True)
    e = jnp.exp(z)
    atten = e * pl.reciprocal(jnp.sum(e, axis=0, keepdims=True), approx=False)    # (nK, 1)

    # ----- zero ONLY the halo border of the padded scratch, then copy the interior -----
    if P > 0:
        zrows = jnp.zeros((Cin, P, W + 2 * P), jnp.float32)
        xpad_ref[:, pl.ds(0, P), :] = zrows
        xpad_ref[:, pl.ds(P + H, P), :] = zrows
        zcols = jnp.zeros((Cin, H, P), jnp.float32)
        xpad_ref[:, pl.ds(P, H), pl.ds(0, P)] = zcols
        xpad_ref[:, pl.ds(P, H), pl.ds(P + W, P)] = zcols
    xpad_ref[:, pl.ds(P, H), pl.ds(P, W)] = x3

    # ----- im2col, transposed & channel-major: rows = (tap, cin), cols = H*W (lane-dense) -----
    def tap_patch(t):
        dy, dx = divmod(t, Kmax)
        return xpad_ref[:, pl.ds(dy, H), pl.ds(dx, W)].reshape(Cin, HW)            # (Cin, HW)

    pair = (Cin % 16 != 0) and ((2 * Cin) % 16 == 0)   # pair taps -> 16-sublane bf16 stores
    t = 0
    while t < KK:                                       # static Python unroll (KK small)
        if pair and t + 1 < KK:
            blk = jnp.concatenate([tap_patch(t), tap_patch(t + 1)], axis=0)
            patches_ref[pl.ds(t * Cin, 2 * Cin), :] = blk.astype(jnp.bfloat16)
            t += 2
        else:
            patches_ref[pl.ds(t * Cin, Cin), :] = tap_patch(t).astype(jnp.bfloat16)
            t += 1

    # ----- one MXU matmul for ALL nK branches; output is already (rows, HW) lane-dense -----
    all_out = jnp.dot(cw_ref[...], patches_ref[...],
                      preferred_element_type=jnp.float32)            # (nK*Cout, HW) f32

    # ----- apply attention to the branch outputs: sum_i a_i * (conv_i(x) + b_i) -----
    cb = cb_ref[...]                                                 # (nK*Cout, 1) f32
    acc = (all_out[0:Cout, :] + cb[0:Cout, :]) * atten[0:1, 0:1]
    for i in range(1, nK):                                           # static unroll (nK small)
        lo = i * Cout
        acc = acc + (all_out[lo:lo + Cout, :] + cb[lo:lo + Cout, :]) * atten[i:i + 1, 0:1]

    o_ref[0] = acc                                                   # (Cout, HW), unmasked stores


def dynamic_conv_pallas(x_nchw, params, kernel_sizes):
    B, Cin, H, W = x_nchw.shape
    Cout = params["conv_w"][0].shape[0]
    nK = len(kernel_sizes)
    Kmax = max(kernel_sizes)
    # TODO(synk): PyTorch padding='same' with even kernel sizes is asymmetric; only odd sizes handled.
    P = Kmax // 2
    HW = H * W
    KK = Kmax * Kmax
    Ch = params["w1"].shape[1]

    # Pack every branch's OIHW weight, centered in a Kmax x Kmax window, into one bf16 slab
    # (nK*Cout, Kmax*Kmax*Cin); column index = (dy*Kmax + dx)*Cin + ci to match the im2col rows.
    cw = jnp.zeros((nK, Cout, Cin, Kmax, Kmax), jnp.float32)
    for i, k in enumerate(kernel_sizes):
        off = (Kmax - k) // 2
        cw = cw.at[i, :, :, off:off + k, off:off + k].set(params["conv_w"][i])
    cw_slab = jnp.transpose(cw, (0, 1, 3, 4, 2)).reshape(nK * Cout, KK * Cin).astype(jnp.bfloat16)
    cb_col = jnp.stack(params["conv_b"], axis=0).reshape(nK * Cout, 1)          # (nK*Cout, 1)

    w1 = params["w1"]                                   # (Cin, Ch)
    b1_row = params["b1"].reshape(1, Ch)                # (1, Ch)
    w2_t = jnp.transpose(params["w2"])                  # (nK, Ch)
    b2_col = params["b2"].reshape(nK, 1)                # (nK, 1)

    kernel = functools.partial(_dynamic_conv_kernel, H=H, W=W, Cin=Cin,
                               Cout=Cout, Kmax=Kmax, nK=nK, P=P)

    # TODO(synk): for large H*W / channels (esp. v7x's 64 MiB VMEM) add a spatial row-tile grid
    # axis with a Kmax-1 halo (and a multi-image block / fori_loop for tiny images to amortize
    # per-step overhead), and set vmem_limit_bytes; whole-image blocks are fine at these sizes.
    out = pl.pallas_call(
        kernel,
        out_shape=jax.ShapeDtypeStruct((B, Cout, HW), jnp.float32),
        grid=(B,),
        in_specs=[
            pl.BlockSpec((1, Cin, H, W), lambda b: (b, 0, 0, 0)),    # activation, channel-major
            pl.BlockSpec((Cin, Ch), lambda b: (0, 0)),
            pl.BlockSpec((1, Ch), lambda b: (0, 0)),
            pl.BlockSpec((nK, Ch), lambda b: (0, 0)),
            pl.BlockSpec((nK, 1), lambda b: (0, 0)),
            pl.BlockSpec((nK * Cout, KK * Cin), lambda b: (0, 0)),
            pl.BlockSpec((nK * Cout, 1), lambda b: (0, 0)),
        ],
        out_specs=pl.BlockSpec((1, Cout, HW), lambda b: (b, 0, 0)),
        scratch_shapes=[
            pltpu.VMEM((Cin, H + 2 * P, W + 2 * P), jnp.float32),    # padded activation
            pltpu.VMEM((KK * Cin, HW), jnp.bfloat16),                # transposed im2col patches
        ],
        compiler_params=pltpu.CompilerParams(dimension_semantics=("parallel",)),
    )(x_nchw.astype(jnp.float32), w1, b1_row, w2_t, b2_col, cw_slab, cb_col)

    return out.reshape(B, Cout, H, W)                                # pure reshape, no transpose


def dynamic_conv_reference(x_nchw, params, kernel_sizes):
    """Pure-JAX reference mirroring the PyTorch forward (sanity check)."""
    pooled = jnp.mean(x_nchw, axis=(2, 3))                           # (B, Cin)
    h = jax.nn.relu(pooled @ params["w1"] + params["b1"])
    atten = jax.nn.softmax(h @ params["w2"] + params["b2"], axis=-1)  # (B, nK)
    out = None
    for i, _ in enumerate(kernel_sizes):
        co = lax.conv_general_dilated(
            x_nchw, params["conv_w"][i], window_strides=(1, 1), padding="SAME",
            dimension_numbers=("NCHW", "OIHW", "NCHW"),
            precision=lax.Precision.HIGHEST)
        co = co + params["conv_b"][i][None, :, None, None]
        co = co * atten[:, i][:, None, None, None]
        out = co if out is None else out + co
    return out


if __name__ == "__main__":
    B, Cin, Cout, H, W = 2, 8, 8, 16, 16
    kernel_sizes = (1, 3, 5)
    Ch = Cin // 4
    nK = len(kernel_sizes)

    key = jax.random.PRNGKey(0)
    ks = jax.random.split(key, 5 + 2 * nK)

    params = {
        "w1": jax.random.normal(ks[0], (Cin, Ch), jnp.float32) * 0.2,
        "b1": jax.random.normal(ks[1], (Ch,), jnp.float32) * 0.1,
        "w2": jax.random.normal(ks[2], (Ch, nK), jnp.float32) * 0.2,
        "b2": jax.random.normal(ks[3], (nK,), jnp.float32) * 0.1,
        "conv_w": [],
        "conv_b": [],
    }
    for i, k in enumerate(kernel_sizes):
        scale = 1.0 / float(np.sqrt(Cin * k * k))
        params["conv_w"].append(
            jax.random.normal(ks[5 + 2 * i], (Cout, Cin, k, k), jnp.float32) * scale)
        params["conv_b"].append(
            jax.random.normal(ks[6 + 2 * i], (Cout,), jnp.float32) * 0.05)

    x = jax.random.normal(ks[4], (B, Cin, H, W), jnp.float32)        # NCHW like PyTorch

    out = jax.block_until_ready(dynamic_conv_pallas(x, params, kernel_sizes))
    ref = dynamic_conv_reference(x, params, kernel_sizes)
    np.testing.assert_allclose(np.asarray(out), np.asarray(ref), rtol=2e-2, atol=2e-2)
    assert out.shape == (B, Cout, H, W)
    print("KERNEL_OK")
</pallas_src>

<mosaic_0001>
module attributes {stable_mosaic.version = 11 : i64} {
  func.func @_dynamic_conv_kernel(%arg0: i32, %arg1: memref<1x8x16x16xf32, #tpu.memory_space<vmem>>, %arg2: memref<8x2xf32, #tpu.memory_space<vmem>>, %arg3: memref<1x2xf32, #tpu.memory_space<vmem>>, %arg4: memref<3x2xf32, #tpu.memory_space<vmem>>, %arg5: memref<3x1xf32, #tpu.memory_space<vmem>>, %arg6: memref<24x200xbf16, #tpu.memory_space<vmem>>, %arg7: memref<24x1xf32, #tpu.memory_space<vmem>>, %arg8: memref<1x8x256xf32, #tpu.memory_space<vmem>>, %arg9: memref<8x20x20xf32, #tpu.memory_space<vmem>>, %arg10: memref<200x256xbf16, #tpu.memory_space<vmem>>) attributes {dimension_semantics = [#tpu.dimension_semantics<parallel>], iteration_bounds = array<i64: 2>, scalar_prefetch = 0 : i64, scratch_operands = 2 : i64, tpu.core_type = #tpu.core_type<tc>, window_params = [{transform_indices = @transform_0, window_bounds = array<i64: 1, 8, 16, 16>}, {pipeline_mode = #tpu.pipeline_mode<synchronous>, transform_indices = @transform_1, window_bounds = array<i64: 8, 2>}, {pipeline_mode = #tpu.pipeline_mode<synchronous>, transform_indices = @transform_2, window_bounds = array<i64: 1, 2>}, {pipeline_mode = #tpu.pipeline_mode<synchronous>, transform_indices = @transform_3, window_bounds = array<i64: 3, 2>}, {pipeline_mode = #tpu.pipeline_mode<synchronous>, transform_indices = @transform_4, window_bounds = array<i64: 3, 1>}, {pipeline_mode = #tpu.pipeline_mode<synchronous>, transform_indices = @transform_5, window_bounds = array<i64: 24, 200>}, {pipeline_mode = #tpu.pipeline_mode<synchronous>, transform_indices = @transform_6, window_bounds = array<i64: 24, 1>}, {transform_indices = @transform_7, window_bounds = array<i64: 1, 8, 256>}]} {
    %c0 = arith.constant 0 : index
    %c0_0 = arith.constant 0 : index
    %c0_1 = arith.constant 0 : index
    %c0_2 = arith.constant 0 : index
    %0 = vector.load %arg1[%c0, %c0_0, %c0_1, %c0_2] : memref<1x8x16x16xf32, #tpu.memory_space<vmem>>, vector<1x8x16x16xf32>
    %1 = vector.shape_cast %0 : vector<1x8x16x16xf32> to vector<8x16x16xf32>
    %cst = arith.constant dense<0.000000e+00> : vector<8x16xf32>
    %2 = vector.multi_reduction <add>, %1, %cst [2] : vector<8x16x16xf32> to vector<8x16xf32>
    %cst_3 = arith.constant dense<0.000000e+00> : vector<8xf32>
    %3 = vector.multi_reduction <add>, %2, %cst_3 [1] : vector<8x16xf32> to vector<8xf32>
    %4 = vector.shape_cast %3 : vector<8xf32> to vector<8x1xf32>
    %cst_4 = arith.constant 3.906250e-03 : f32
    %5 = vector.broadcast %cst_4 : f32 to vector<8x1xf32>
    %6 = arith.mulf %4, %5 : vector<8x1xf32>
    %c0_5 = arith.constant 0 : index
    %c0_6 = arith.constant 0 : index
    %7 = vector.load %arg2[%c0_5, %c0_6] : memref<8x2xf32, #tpu.memory_space<vmem>>, vector<8x2xf32>
    %8 = vector.broadcast %6 : vector<8x1xf32> to vector<8x2xf32>
    %9 = arith.mulf %7, %8 : vector<8x2xf32>
    %cst_7 = arith.constant dense<0.000000e+00> : vector<2xf32>
    %10 = vector.multi_reduction <add>, %9, %cst_7 [0] : vector<8x2xf32> to vector<2xf32>
    %11 = vector.shape_cast %10 : vector<2xf32> to vector<1x2xf32>
    %c0_8 = arith.constant 0 : index
    %c0_9 = arith.constant 0 : index
    %12 = vector.load %arg3[%c0_8, %c0_9] : memref<1x2xf32, #tpu.memory_space<vmem>>, vector<1x2xf32>
    %13 = arith.addf %11, %12 : vector<1x2xf32>
    %cst_10 = arith.constant 0.000000e+00 : f32
    %14 = vector.broadcast %cst_10 : f32 to vector<1x2xf32>
    %15 = arith.maximumf %13, %14 : vector<1x2xf32>
    %c0_11 = arith.constant 0 : index
    %c0_12 = arith.constant 0 : index
    %16 = vector.load %arg4[%c0_11, %c0_12] : memref<3x2xf32, #tpu.memory_space<vmem>>, vector<3x2xf32>
    %17 = vector.broadcast %15 : vector<1x2xf32> to vector<3x2xf32>
    %18 = arith.mulf %16, %17 : vector<3x2xf32>
    %cst_13 = arith.constant dense<0.000000e+00> : vector<3xf32>
    %19 = vector.multi_reduction <add>, %18, %cst_13 [1] : vector<3x2xf32> to vector<3xf32>
    %20 = vector.shape_cast %19 : vector<3xf32> to vector<3x1xf32>
    %c0_14 = arith.constant 0 : index
    %c0_15 = arith.constant 0 : index
    %21 = vector.load %arg5[%c0_14, %c0_15] : memref<3x1xf32, #tpu.memory_space<vmem>>, vector<3x1xf32>
    %22 = arith.addf %20, %21 : vector<3x1xf32>
    %cst_16 = arith.constant dense<0xFF800000> : vector<1xf32>
    %23 = vector.multi_reduction <maximumf>, %22, %cst_16 [0] : vector<3x1xf32> to vector<1xf32>
    %24 = vector.shape_cast %23 : vector<1xf32> to vector<1x1xf32>
    %25 = vector.broadcast %24 : vector<1x1xf32> to vector<3x1xf32>
    %26 = arith.subf %22, %25 : vector<3x1xf32>
    %27 = math.exp %26 : vector<3x1xf32>
    %cst_17 = arith.constant dense<0.000000e+00> : vector<1xf32>
    %28 = vector.multi_reduction <add>, %27, %cst_17 [0] : vector<3x1xf32> to vector<1xf32>
    %29 = vector.shape_cast %28 : vector<1xf32> to vector<1x1xf32>
    %30 = tpu.reciprocal %29 : vector<1x1xf32> -> vector<1x1xf32>
    %31 = vector.broadcast %30 : vector<1x1xf32> to vector<3x1xf32>
    %32 = arith.mulf %27, %31 : vector<3x1xf32>
    %cst_18 = arith.constant 0.000000e+00 : f32
    %33 = vector.broadcast %cst_18 : f32 to vector<8x2x20xf32>
    %c0_19 = arith.constant 0 : index
    %c0_20 = arith.constant 0 : index
    %c0_21 = arith.constant 0 : index
    %34 = vector.load %arg9[%c0_19, %c0_20, %c0_21] : memref<8x20x20xf32, #tpu.memory_space<vmem>>, vector<8x2x20xf32>
    tpu.vector_store %arg9[%c0_19, %c0_20, %c0_21], %33 {strides = array<i32>} : memref<8x20x20xf32, #tpu.memory_space<vmem>>, vector<8x2x20xf32>,
    %c0_22 = arith.constant 0 : index
    %c18 = arith.constant 18 : index
    %c0_23 = arith.constant 0 : index
    %35 = vector.load %arg9[%c0_22, %c18, %c0_23] : memref<8x20x20xf32, #tpu.memory_space<vmem>>, vector<8x2x20xf32>
    tpu.vector_store %arg9[%c0_22, %c18, %c0_23], %33 {strides = array<i32>} : memref<8x20x20xf32, #tpu.memory_space<vmem>>, vector<8x2x20xf32>,
    %cst_24 = arith.constant 0.000000e+00 : f32
    %36 = vector.broadcast %cst_24 : f32 to vector<8x16x2xf32>
    %c0_25 = arith.constant 0 : index
    %c2 = arith.constant 2 : index
    %c0_26 = arith.constant 0 : index
    %37 = vector.load %arg9[%c0_25, %c2, %c0_26] : memref<8x20x20xf32, #tpu.memory_space<vmem>>, vector<8x16x2xf32>
    tpu.vector_store %arg9[%c0_25, %c2, %c0_26], %36 {strides = array<i32>} : memref<8x20x20xf32, #tpu.memory_space<vmem>>, vector<8x16x2xf32>,
    %c0_27 = arith.constant 0 : index
    %c2_28 = arith.constant 2 : index
    %c18_29 = arith.constant 18 : index
    %38 = vector.load %arg9[%c0_27, %c2_28, %c18_29] : memref<8x20x20xf32, #tpu.memory_space<vmem>>, vector<8x16x2xf32>
    tpu.vector_store %arg9[%c0_27, %c2_28, %c18_29], %36 {strides = array<i32>} : memref<8x20x20xf32, #tpu.memory_space<vmem>>, vector<8x16x2xf32>,
    %c0_30 = arith.constant 0 : index
    %c2_31 = arith.constant 2 : index
    %c2_32 = arith.constant 2 : index
    %39 = vector.load %arg9[%c0_30, %c2_31, %c2_32] : memref<8x20x20xf32, #tpu.memory_space<vmem>>, vector<8x16x16xf32>
    tpu.vector_store %arg9[%c0_30, %c2_31, %c2_32], %1 {strides = array<i32>} : memref<8x20x20xf32, #tpu.memory_space<vmem>>, vector<8x16x16xf32>,
    %c0_33 = arith.constant 0 : index
    %c0_34 = arith.constant 0 : index
    %c0_35 = arith.constant 0 : index
    %40 = vector.load %arg9[%c0_33, %c0_34, %c0_35] : memref<8x20x20xf32, #tpu.memory_space<vmem>>, vector<8x16x16xf32>
    %41 = vector.shape_cast %40 : vector<8x16x16xf32> to vector<8x256xf32>
    %c0_36 = arith.constant 0 : index
    %c0_37 = arith.constant 0 : index
    %c1 = arith.constant 1 : index
    %42 = vector.load %arg9[%c0_36, %c0_37, %c1] : memref<8x20x20xf32, #tpu.memory_space<vmem>>, vector<8x16x16xf32>
    %43 = vector.shape_cast %42 : vector<8x16x16xf32> to vector<8x256xf32>
    %44 = tpu.concatenate %41, %43 in 0 : vector<8x256xf32>, vector<8x256xf32> -> vector<16x256xf32>
    %45 = arith.truncf %44 : vector<16x256xf32> to vector<16x256xbf16>
    %c0_38 = arith.constant 0 : index
    %c0_39 = arith.constant 0 : index
    %46 = vector.load %arg10[%c0_38, %c0_39] : memref<200x256xbf16, #tpu.memory_space<vmem>>, vector<16x256xbf16>
    tpu.vector_store %arg10[%c0_38, %c0_39], %45 {strides = array<i32>} : memref<200x256xbf16, #tpu.memory_space<vmem>>, vector<16x256xbf16>,
    %c0_40 = arith.constant 0 : index
    %c0_41 = arith.constant 0 : index
    %c2_42 = arith.constant 2 : index
    %47 = vector.load %arg9[%c0_40, %c0_41, %c2_42] : memref<8x20x20xf32, #tpu.memory_space<vmem>>, vector<8x16x16xf32>
    %48 = vector.shape_cast %47 : vector<8x16x16xf32> to vector<8x256xf32>
    %c0_43 = arith.constant 0 : index
    %c0_44 = arith.constant 0 : index
    %c3 = arith.constant 3 : index
    %49 = vector.load %arg9[%c0_43, %c0_44, %c3] : memref<8x20x20xf32, #tpu.memory_space<vmem>>, vector<8x16x16xf32>
    %50 = vector.shape_cast %49 : vector<8x16x16xf32> to vector<8x256xf32>
    %51 = tpu.concatenate %48, %50 in 0 : vector<8x256xf32>, vector<8x256xf32> -> vector<16x256xf32>
    %52 = arith.truncf %51 : vector<16x256xf32> to vector<16x256xbf16>
    %c16 = arith.constant 16 : index
    %c0_45 = arith.constant 0 : index
    %53 = vector.load %arg10[%c16, %c0_45] : memref<200x256xbf16, #tpu.memory_space<vmem>>, vector<16x256xbf16>
    tpu.vector_store %arg10[%c16, %c0_45], %52 {strides = array<i32>} : memref<200x256xbf16, #tpu.memory_space<vmem>>, vector<16x256xbf16>,
    %c0_46 = arith.constant 0 : index
    %c0_47 = arith.constant 0 : index
    %c4 = arith.constant 4 : index
    %54 = vector.load %arg9[%c0_46, %c0_47, %c4] : memref<8x20x20xf32, #tpu.memory_space<vmem>>, vector<8x16x16xf32>
    %55 = vector.shape_cast %54 : vector<8x16x16xf32> to vector<8x256xf32>
    %c0_48 = arith.constant 0 : index
    %c1_49 = arith.constant 1 : index
    %c0_50 = arith.constant 0 : index
    %56 = vector.load %arg9[%c0_48, %c1_49, %c0_50] : memref<8x20x20xf32, #tpu.memory_space<vmem>>, vector<8x16x16xf32>
    %57 = vector.shape_cast %56 : vector<8x16x16xf32> to vector<8x256xf32>
    %58 = tpu.concatenate %55, %57 in 0 : vector<8x256xf32>, vector<8x256xf32> -> vector<16x256xf32>
    %59 = arith.truncf %58 : vector<16x256xf32> to vector<16x256xbf16>
    %c32 = arith.constant 32 : index
    %c0_51 = arith.constant 0 : index
    %60 = vector.load %arg10[%c32, %c0_51] : memref<200x256xbf16, #tpu.memory_space<vmem>>, vector<16x256xbf16>
    tpu.vector_store %arg10[%c32, %c0_51], %59 {strides = array<i32>} : memref<200x256xbf16, #tpu.memory_space<vmem>>, vector<16x256xbf16>,
    %c0_52 = arith.constant 0 : index
    %c1_53 = arith.constant 1 : index
    %c1_54 = arith.constant 1 : index
    %61 = vector.load %arg9[%c0_52, %c1_53, %c1_54] : memref<8x20x20xf32, #tpu.memory_space<vmem>>, vector<8x16x16xf32>
    %62 = vector.shape_cast %61 : vector<8x16x16xf32> to vector<8x256xf32>
    %c0_55 = arith.constant 0 : index
    %c1_56 = arith.constant 1 : index
    %c2_57 = arith.constant 2 : index
    %63 = vector.load %arg9[%c0_55, %c1_56, %c2_57] : memref<8x20x20xf32, #tpu.memory_space<vmem>>, vector<8x16x16xf32>
    %64 = vector.shape_cast %63 : vector<8x16x16xf32> to vector<8x256xf32>
    %65 = tpu.concatenate %62, %64 in 0 : vector<8x256xf32>, vector<8x256xf32> -> vector<16x256xf32>
    %66 = arith.truncf %65 : vector<16x256xf32> to vector<16x256xbf16>
    %c48 = arith.constant 48 : index
    %c0_58 = arith.constant 0 : index
    %67 = vector.load %arg10[%c48, %c0_58] : memref<200x256xbf16, #tpu.memory_space<vmem>>, vector<16x256xbf16>
    tpu.vector_store %arg10[%c48, %c0_58], %66 {strides = array<i32>} : memref<200x256xbf16, #tpu.memory_space<vmem>>, vector<16x256xbf16>,
    %c0_59 = arith.constant 0 : index
    %c1_60 = arith.constant 1 : index
    %c3_61 = arith.constant 3 : index
    %68 = vector.load %arg9[%c0_59, %c1_60, %c3_61] : memref<8x20x20xf32, #tpu.memory_space<vmem>>, vector<8x16x16xf32>
    %69 = vector.shape_cast %68 : vector<8x16x16xf32> to vector<8x256xf32>
    %c0_62 = arith.constant 0 : index
    %c1_63 = arith.constant 1 : index
    %c4_64 = arith.constant 4 : index
    %70 = vector.load %arg9[%c0_62, %c1_63, %c4_64] : memref<8x20x20xf32, #tpu.memory_space<vmem>>, vector<8x16x16xf32>
    %71 = vector.shape_cast %70 : vector<8x16x16xf32> to vector<8x256xf32>
    %72 = tpu.concatenate %69, %71 in 0 : vector<8x256xf32>, vector<8x256xf32> -> vector<16x256xf32>
    %73 = arith.truncf %72 : vector<16x256xf32> to vector<16x256xbf16>
    %c64 = arith.constant 64 : index
    %c0_65 = arith.constant 0 : index
    %74 = vector.load %arg10[%c64, %c0_65] : memref<200x256xbf16, #tpu.memory_space<vmem>>, vector<16x256xbf16>
    tpu.vector_store %arg10[%c64, %c0_65], %73 {strides = array<i32>} : memref<200x256xbf16, #tpu.memory_space<vmem>>, vector<16x256xbf16>,
    %c0_66 = arith.constant 0 : index
    %c2_67 = arith.constant 2 : index
    %c0_68 = arith.constant 0 : index
    %75 = vector.load %arg9[%c0_66, %c2_67, %c0_68] : memref<8x20x20xf32, #tpu.memory_space<vmem>>, vector<8x16x16xf32>
    %76 = vector.shape_cast %75 : vector<8x16x16xf32> to vector<8x256xf32>
    %c0_69 = arith.constant 0 : index
    %c2_70 = arith.constant 2 : index
    %c1_71 = arith.constant 1 : index
    %77 = vector.load %arg9[%c0_69, %c2_70, %c1_71] : memref<8x20x20xf32, #tpu.memory_space<vmem>>, vector<8x16x16xf32>
    %78 = vector.shape_cast %77 : vector<8x16x16xf32> to vector<8x256xf32>
    %79 = tpu.concatenate %76, %78 in 0 : vector<8x256xf32>, vector<8x256xf32> -> vector<16x256xf32>
    %80 = arith.truncf %79 : vector<16x256xf32> to vector<16x256xbf16>
    %c80 = arith.constant 80 : index
    %c0_72 = arith.constant 0 : index
    %81 = vector.load %arg10[%c80, %c0_72] : memref<200x256xbf16, #tpu.memory_space<vmem>>, vector<16x256xbf16>
    tpu.vector_store %arg10[%c80, %c0_72], %80 {strides = array<i32>} : memref<200x256xbf16, #tpu.memory_space<vmem>>, vector<16x256xbf16>,
    %c0_73 = arith.constant 0 : index
    %c2_74 = arith.constant 2 : index
    %c2_75 = arith.constant 2 : index
    %82 = vector.load %arg9[%c0_73, %c2_74, %c2_75] : memref<8x20x20xf32, #tpu.memory_space<vmem>>, vector<8x16x16xf32>
    %83 = vector.shape_cast %82 : vector<8x16x16xf32> to vector<8x256xf32>
    %c0_76 = arith.constant 0 : index
    %c2_77 = arith.constant 2 : index
    %c3_78 = arith.constant 3 : index
    %84 = vector.load %arg9[%c0_76, %c2_77, %c3_78] : memref<8x20x20xf32, #tpu.memory_space<vmem>>, vector<8x16x16xf32>
    %85 = vector.shape_cast %84 : vector<8x16x16xf32> to vector<8x256xf32>
    %86 = tpu.concatenate %83, %85 in 0 : vector<8x256xf32>, vector<8x256xf32> -> vector<16x256xf32>
    %87 = arith.truncf %86 : vector<16x256xf32> to vector<16x256xbf16>
    %c96 = arith.constant 96 : index
    %c0_79 = arith.constant 0 : index
    %88 = vector.load %arg10[%c96, %c0_79] : memref<200x256xbf16, #tpu.memory_space<vmem>>, vector<16x256xbf16>
    tpu.vector_store %arg10[%c96, %c0_79], %87 {strides = array<i32>} : memref<200x256xbf16, #tpu.memory_space<vmem>>, vector<16x256xbf16>,
    %c0_80 = arith.constant 0 : index
    %c2_81 = arith.constant 2 : index
    %c4_82 = arith.constant 4 : index
    %89 = vector.load %arg9[%c0_80, %c2_81, %c4_82] : memref<8x20x20xf32, #tpu.memory_space<vmem>>, vector<8x16x16xf32>
    %90 = vector.shape_cast %89 : vector<8x16x16xf32> to vector<8x256xf32>
    %c0_83 = arith.constant 0 : index
    %c3_84 = arith.constant 3 : index
    %c0_85 = arith.constant 0 : index
    %91 = vector.load %arg9[%c0_83, %c3_84, %c0_85] : memref<8x20x20xf32, #tpu.memory_space<vmem>>, vector<8x16x16xf32>
    %92 = vector.shape_cast %91 : vector<8x16x16xf32> to vector<8x256xf32>
    %93 = tpu.concatenate %90, %92 in 0 : vector<8x256xf32>, vector<8x256xf32> -> vector<16x256xf32>
    %94 = arith.truncf %93 : vector<16x256xf32> to vector<16x256xbf16>
    %c112 = arith.constant 112 : index
    %c0_86 = arith.constant 0 : index
    %95 = vector.load %arg10[%c112, %c0_86] : memref<200x256xbf16, #tpu.memory_space<vmem>>, vector<16x256xbf16>
    tpu.vector_store %arg10[%c112, %c0_86], %94 {strides = array<i32>} : memref<200x256xbf16, #tpu.memory_space<vmem>>, vector<16x256xbf16>,
    %c0_87 = arith.constant 0 : index
    %c3_88 = arith.constant 3 : index
    %c1_89 = arith.constant 1 : index
    %96 = vector.load %arg9[%c0_87, %c3_88, %c1_89] : memref<8x20x20xf32, #tpu.memory_space<vmem>>, vector<8x16x16xf32>
    %97 = vector.shape_cast %96 : vector<8x16x16xf32> to vector<8x256xf32>
    %c0_90 = arith.constant 0 : index
    %c3_91 = arith.constant 3 : index
    %c2_92 = arith.constant 2 : index
    %98 = vector.load %arg9[%c0_90, %c3_91, %c2_92] : memref<8x20x20xf32, #tpu.memory_space<vmem>>, vector<8x16x16xf32>
    %99 = vector.shape_cast %98 : vector<8x16x16xf32> to vector<8x256xf32>
    %100 = tpu.concatenate %97, %99 in 0 : vector<8x256xf32>, vector<8x256xf32> -> vector<16x256xf32>
    %101 = arith.truncf %100 : vector<16x256xf32> to vector<16x256xbf16>
    %c128 = arith.constant 128 : index
    %c0_93 = arith.constant 0 : index
    %102 = vector.load %arg10[%c128, %c0_93] : memref<200x256xbf16, #tpu.memory_space<vmem>>, vector<16x256xbf16>
    tpu.vector_store %arg10[%c128, %c0_93], %101 {strides = array<i32>} : memref<200x256xbf16, #tpu.memory_space<vmem>>, vector<16x256xbf16>,
    %c0_94 = arith.constant 0 : index
    %c3_95 = arith.constant 3 : index
    %c3_96 = arith.constant 3 : index
    %103 = vector.load %arg9[%c0_94, %c3_95, %c3_96] : memref<8x20x20xf32, #tpu.memory_space<vmem>>, vector<8x16x16xf32>
    %104 = vector.shape_cast %103 : vector<8x16x16xf32> to vector<8x256xf32>
    %c0_97 = arith.constant 0 : index
    %c3_98 = arith.constant 3 : index
    %c4_99 = arith.constant 4 : index
    %105 = vector.load %arg9[%c0_97, %c3_98, %c4_99] : memref<8x20x20xf32, #tpu.memory_space<vmem>>, vector<8x16x16xf32>
    %106 = vector.shape_cast %105 : vector<8x16x16xf32> to vector<8x256xf32>
    %107 = tpu.concatenate %104, %106 in 0 : vector<8x256xf32>, vector<8x256xf32> -> vector<16x256xf32>
    %108 = arith.truncf %107 : vector<16x256xf32> to vector<16x256xbf16>
    %c144 = arith.constant 144 : index
    %c0_100 = arith.constant 0 : index
    %109 = vector.load %arg10[%c144, %c0_100] : memref<200x256xbf16, #tpu.memory_space<vmem>>, vector<16x256xbf16>
    tpu.vector_store %arg10[%c144, %c0_100], %108 {strides = array<i32>} : memref<200x256xbf16, #tpu.memory_space<vmem>>, vector<16x256xbf16>,
    %c0_101 = arith.constant 0 : index
    %c4_102 = arith.constant 4 : index
    %c0_103 = arith.constant 0 : index
    %110 = vector.load %arg9[%c0_101, %c4_102, %c0_103] : memref<8x20x20xf32, #tpu.memory_space<vmem>>, vector<8x16x16xf32>
    %111 = vector.shape_cast %110 : vector<8x16x16xf32> to vector<8x256xf32>
    %c0_104 = arith.constant 0 : index
    %c4_105 = arith.constant 4 : index
    %c1_106 = arith.constant 1 : index
    %112 = vector.load %arg9[%c0_104, %c4_105, %c1_106] : memref<8x20x20xf32, #tpu.memory_space<vmem>>, vector<8x16x16xf32>
    %113 = vector.shape_cast %112 : vector<8x16x16xf32> to vector<8x256xf32>
    %114 = tpu.concatenate %111, %113 in 0 : vector<8x256xf32>, vector<8x256xf32> -> vector<16x256xf32>
    %115 = arith.truncf %114 : vector<16x256xf32> to vector<16x256xbf16>
    %c160 = arith.constant 160 : index
    %c0_107 = arith.constant 0 : index
    %116 = vector.load %arg10[%c160, %c0_107] : memref<200x256xbf16, #tpu.memory_space<vmem>>, vector<16x256xbf16>
    tpu.vector_store %arg10[%c160, %c0_107], %115 {strides = array<i32>} : memref<200x256xbf16, #tpu.memory_space<vmem>>, vector<16x256xbf16>,
    %c0_108 = arith.constant 0 : index
    %c4_109 = arith.constant 4 : index
    %c2_110 = arith.constant 2 : index
    %117 = vector.load %arg9[%c0_108, %c4_109, %c2_110] : memref<8x20x20xf32, #tpu.memory_space<vmem>>, vector<8x16x16xf32>
    %118 = vector.shape_cast %117 : vector<8x16x16xf32> to vector<8x256xf32>
    %c0_111 = arith.constant 0 : index
    %c4_112 = arith.constant 4 : index
    %c3_113 = arith.constant 3 : index
    %119 = vector.load %arg9[%c0_111, %c4_112, %c3_113] : memref<8x20x20xf32, #tpu.memory_space<vmem>>, vector<8x16x16xf32>
    %120 = vector.shape_cast %119 : vector<8x16x16xf32> to vector<8x256xf32>
    %121 = tpu.concatenate %118, %120 in 0 : vector<8x256xf32>, vector<8x256xf32> -> vector<16x256xf32>
    %122 = arith.truncf %121 : vector<16x256xf32> to vector<16x256xbf16>
    %c176 = arith.constant 176 : index
    %c0_114 = arith.constant 0 : index
    %123 = vector.load %arg10[%c176, %c0_114] : memref<200x256xbf16, #tpu.memory_space<vmem>>, vector<16x256xbf16>
    tpu.vector_store %arg10[%c176, %c0_114], %122 {strides = array<i32>} : memref<200x256xbf16, #tpu.memory_space<vmem>>, vector<16x256xbf16>,
    %c0_115 = arith.constant 0 : index
    %c4_116 = arith.constant 4 : index
    %c4_117 = arith.constant 4 : index
    %124 = vector.load %arg9[%c0_115, %c4_116, %c4_117] : memref<8x20x20xf32, #tpu.memory_space<vmem>>, vector<8x16x16xf32>
    %125 = vector.shape_cast %124 : vector<8x16x16xf32> to vector<8x256xf32>
    %126 = arith.truncf %125 : vector<8x256xf32> to vector<8x256xbf16>
    %c192 = arith.constant 192 : index
    %c0_118 = arith.constant 0 : index
    %127 = vector.load %arg10[%c192, %c0_118] : memref<200x256xbf16, #tpu.memory_space<vmem>>, vector<8x256xbf16>
    tpu.vector_store %arg10[%c192, %c0_118], %126 {strides = array<i32>} : memref<200x256xbf16, #tpu.memory_space<vmem>>, vector<8x256xbf16>,
    %c0_119 = arith.constant 0 : index
    %c0_120 = arith.constant 0 : index
    %128 = vector.load %arg6[%c0_119, %c0_120] : memref<24x200xbf16, #tpu.memory_space<vmem>>, vector<24x200xbf16>
    %c0_121 = arith.constant 0 : index
    %c0_122 = arith.constant 0 : index
    %129 = vector.load %arg10[%c0_121, %c0_122] : memref<200x256xbf16, #tpu.memory_space<vmem>>, vector<200x256xbf16>
    %cst_123 = arith.constant dense<0.000000e+00> : vector<24x256xf32>
    %130 = tpu.matmul %128, %129, %cst_123 {dimension_numbers = #tpu.dot_dimension_numbers<[1], [0], [0], [1], [0, 0, 1, 1], [], []>} : vector<24x200xbf16>, vector<200x256xbf16>, vector<24x256xf32> -> vector<24x256xf32>
    %c0_124 = arith.constant 0 : index
    %c0_125 = arith.constant 0 : index
    %131 = vector.load %arg7[%c0_124, %c0_125] : memref<24x1xf32, #tpu.memory_space<vmem>>, vector<24x1xf32>
    %132 = vector.extract_strided_slice %130 {offsets = [0, 0], sizes = [8, 256], strides = [1, 1]} : vector<24x256xf32> to vector<8x256xf32>
    %133 = vector.extract_strided_slice %131 {offsets = [0, 0], sizes = [8, 1], strides = [1, 1]} : vector<24x1xf32> to vector<8x1xf32>
    %134 = vector.broadcast %133 : vector<8x1xf32> to vector<8x256xf32>
    %135 = arith.addf %132, %134 : vector<8x256xf32>
    %136 = vector.extract_strided_slice %32 {offsets = [0, 0], sizes = [1, 1], strides = [1, 1]} : vector<3x1xf32> to vector<1x1xf32>
    %137 = vector.broadcast %136 : vector<1x1xf32> to vector<8x256xf32>
    %138 = arith.mulf %135, %137 : vector<8x256xf32>
    %139 = vector.extract_strided_slice %130 {offsets = [8, 0], sizes = [8, 256], strides = [1, 1]} : vector<24x256xf32> to vector<8x256xf32>
    %140 = vector.extract_strided_slice %131 {offsets = [8, 0], sizes = [8, 1], strides = [1, 1]} : vector<24x1xf32> to vector<8x1xf32>
    %141 = vector.broadcast %140 : vector<8x1xf32> to vector<8x256xf32>
    %142 = arith.addf %139, %141 : vector<8x256xf32>
    %143 = vector.extract_strided_slice %32 {offsets = [1, 0], sizes = [1, 1], strides = [1, 1]} : vector<3x1xf32> to vector<1x1xf32>
    %144 = vector.broadcast %143 : vector<1x1xf32> to vector<8x256xf32>
    %145 = arith.mulf %142, %144 : vector<8x256xf32>
    %146 = arith.addf %138, %145 : vector<8x256xf32>
    %147 = vector.extract_strided_slice %130 {offsets = [16, 0], sizes = [8, 256], strides = [1, 1]} : vector<24x256xf32> to vector<8x256xf32>
    %148 = vector.extract_strided_slice %131 {offsets = [16, 0], sizes = [8, 1], strides = [1, 1]} : vector<24x1xf32> to vector<8x1xf32>
    %149 = vector.broadcast %148 : vector<8x1xf32> to vector<8x256xf32>
    %150 = arith.addf %147, %149 : vector<8x256xf32>
    %151 = vector.extract_strided_slice %32 {offsets = [2, 0], sizes = [1, 1], strides = [1, 1]} : vector<3x1xf32> to vector<1x1xf32>
    %152 = vector.broadcast %151 : vector<1x1xf32> to vector<8x256xf32>
    %153 = arith.mulf %150, %152 : vector<8x256xf32>
    %154 = arith.addf %146, %153 : vector<8x256xf32>
    %c0_126 = arith.constant 0 : index
    %c0_127 = arith.constant 0 : index
    %c0_128 = arith.constant 0 : index
    %155 = vector.load %arg8[%c0_126, %c0_127, %c0_128] : memref<1x8x256xf32, #tpu.memory_space<vmem>>, vector<1x8x256xf32>
    %156 = vector.shape_cast %155 : vector<1x8x256xf32> to vector<8x256xf32>
    %157 = vector.shape_cast %154 : vector<8x256xf32> to vector<1x8x256xf32>
    tpu.vector_store %arg8[%c0_126, %c0_127, %c0_128], %157 {strides = array<i32>} : memref<1x8x256xf32, #tpu.memory_space<vmem>>, vector<1x8x256xf32>,
    return
  }
  func.func @transform_0(%arg0: i32) -> (i32, i32, i32, i32) {
    %c0_i32 = arith.constant 0 : i32
    %c0_i32_0 = arith.constant 0 : i32
    %c0_i32_1 = arith.constant 0 : i32
    %c0_i32_2 = arith.constant 0 : i32
    return %arg0, %c0_i32, %c0_i32_0, %c0_i32_1 : i32, i32, i32, i32
  }
  func.func @transform_1(%arg0: i32) -> (i32, i32) {
    %c0_i32 = arith.constant 0 : i32
    %c0_i32_0 = arith.constant 0 : i32
    %c0_i32_1 = arith.constant 0 : i32
    return %c0_i32, %c0_i32_0 : i32, i32
  }
  func.func @transform_2(%arg0: i32) -> (i32, i32) {
    %c0_i32 = arith.constant 0 : i32
    %c0_i32_0 = arith.constant 0 : i32
    %c0_i32_1 = arith.constant 0 : i32
    return %c0_i32, %c0_i32_0 : i32, i32
  }
  func.func @transform_3(%arg0: i32) -> (i32, i32) {
    %c0_i32 = arith.constant 0 : i32
    %c0_i32_0 = arith.constant 0 : i32
    %c0_i32_1 = arith.constant 0 : i32
    return %c0_i32, %c0_i32_0 : i32, i32
  }
  func.func @transform_4(%arg0: i32) -> (i32, i32) {
    %c0_i32 = arith.constant 0 : i32
    %c0_i32_0 = arith.constant 0 : i32
    %c0_i32_1 = arith.constant 0 : i32
    return %c0_i32, %c0_i32_0 : i32, i32
  }
  func.func @transform_5(%arg0: i32) -> (i32, i32) {
    %c0_i32 = arith.constant 0 : i32
    %c0_i32_0 = arith.constant 0 : i32
    %c0_i32_1 = arith.constant 0 : i32
    return %c0_i32, %c0_i32_0 : i32, i32
  }
  func.func @transform_6(%arg0: i32) -> (i32, i32) {
    %c0_i32 = arith.constant 0 : i32
    %c0_i32_0 = arith.constant 0 : i32
    %c0_i32_1 = arith.constant 0 : i32
    return %c0_i32, %c0_i32_0 : i32, i32
  }
  func.func @transform_7(%arg0: i32) -> (i32, i32, i32) {
    %c0_i32 = arith.constant 0 : i32
    %c0_i32_0 = arith.constant 0 : i32
    %c0_i32_1 = arith.constant 0 : i32
    return %arg0, %c0_i32, %c0_i32_0 : i32, i32, i32
  }
}

</mosaic_0001>

<llo_original>
// kernel: tpu_custom_call.1
$region0: #{tpu_custom_call.1}
  #allocation0 [shape = 'u32[]', space=smem, size = 0x4, offset = 0x4, fixed_abs, tag = 'smem constant byte address 0x4 - core index']
  #allocation1 [shape = 'u32[144,128]{1,0:T(1,128)}', space=vmem, size = 0x12000, scoped, tag = 'internal scratch']
  #allocation2 [shape = 'f32[8,20,20]{2,1,0:T(8,128)}', space=vmem, size = 0x18000, scoped, tag = 'scratch operand']
  #allocation3 [shape = 'bf16[200,256]{1,0:T(8,128)(2,1)}', space=vmem, size = 0x19000, scoped, tag = 'scratch operand']
  %s0 = inlined_call_operand.hbm [shape: f32[2,8,16,16], index: 0, kind: input, shape index: {}]
  %s1 = inlined_call_operand.vmem [shape: f32[8,2], index: 1, kind: input, shape index: {}]
  %s2 = inlined_call_operand.vmem [shape: f32[1,2], index: 2, kind: input, shape index: {}]
  %s3 = inlined_call_operand.vmem [shape: f32[3,2], index: 3, kind: input, shape index: {}]
  %s4 = inlined_call_operand.vmem [shape: f32[3,1], index: 4, kind: input, shape index: {}]
  %s5 = inlined_call_operand.vmem [shape: bf16[24,200], index: 5, kind: input, shape index: {}]
  %s6 = inlined_call_operand.vmem [shape: f32[24,1], index: 6, kind: input, shape index: {}]
  %s7 = inlined_call_operand.hbm [shape: f32[2,8,256], index: 7, kind: output, shape index: {}]
  %s8 = sld [smem:[#allocation0]]
  $region65: #{tpu_custom_call.1} parent=0
    _
  %s10 = ssub.s32 1, %s8
  %s11 = scalar_select 0, %s10, %s8
  $region1: #{tpu_custom_call.1} parent=0
    #allocation4 [shape = 'u8[131072]{0}', space=vmem, size = 0x20000, scoped, tag = 'input window, operand 0']
    #allocation5 [shape = 's32[2]{0}', space=sflag, size = 0x8, scoped, tag = 'scoped memory for tpu_custom_call.1']
    #allocation6 [shape = 's32[2]{0}', space=sflag, size = 0x8, scoped, tag = 'scoped memory for tpu_custom_call.1']
    #allocation7 [shape = 'u8[16384]{0}', space=vmem, size = 0x4000, scoped, tag = 'output window, operand 0']
    %12 = vsyncpa [#allocation5], 0
    %s13 = scalar_lea.sflag [#allocation5], 1
    %14 = vsyncpa %s13, 0
    %15 = vsyncpa [#allocation6], 0
    %s16 = scalar_lea.sflag [#allocation6], 1
    %17 = vsyncpa %s16, 0
    loop: start=0, step=1, limit=4
    $region2: #{tpu_custom_call.1} parent=1 // loop_pre_header
      _
    $region3: #{tpu_custom_call.1} parent=1 // loop_header
      %s19 = sphi 0, %s23
      %p20 = scmp.ge.s32.totalorder %s19, 4
      %s29 = sphi 0, %s31
      %s32 = sphi 0, %s29
      %s33 = sphi 0, %s32
      %s49 = sphi 0, %s33
      %s53 = sphi 0, %s53
      %s55 = sphi 0, %s53
      %s56 = sphi 0, %s55
      %s70 = sphi 0, %s56
      %s74 = sphi 0, %s74
      %s76 = sphi 0, %s74
      %s77 = sphi 0, %s76
      %s91 = sphi 0, %s77
      %s95 = sphi 0, %s95
      %s97 = sphi 0, %s95
      %s98 = sphi 0, %s97
      %s112 = sphi 0, %s98
      %s116 = sphi 0, %s116
      %s118 = sphi 0, %s116
      %s119 = sphi 0, %s118
      %s133 = sphi 0, %s119
      %s137 = sphi 0, %s137
      %s139 = sphi 0, %s137
      %s140 = sphi 0, %s139
      %s154 = sphi 0, %s140
      %s158 = sphi 0, %s158
      %s160 = sphi 0, %s158
      %s161 = sphi 0, %s160
      %s175 = sphi 0, %s161
      %s181 = sphi 0, %s183
      %s184 = sphi 0, %s181
      %s185 = sphi 0, %s184
      %s201 = sphi 0, %s185
    $region4: #{tpu_custom_call.1} parent=1 // loop_header_branch
      %22 = sbr.rel (%p20) target = $region8
    $region5: #{tpu_custom_call.1} parent=1 // loop_body
      %s24 = ssub.s32 %s19, 1
      %s25 = ssub.s32 %s19, 2
      %s26 = sadd.s32 %s19, 1
      %s27 = ssub.s32 %s19, %s26
      %p28 = scmp.eq.s32.totalorder %s27, 0
      %s30 = sadd.s32 %s29, 1
      %s31 = scalar_select %p28, %s29, %s30
      %p34 = pneg %p28
      %p35 = scmp.eq.s32.totalorder %s19, 1
      %p36 = por %p34, %p35
      %p37 = scmp.ne.s32.totalorder %s29, %s32
      %p38 = scmp.eq.s32.totalorder %s19, 0
      %p39 = por %p37, %p38
      %p40 = scmp.ne.s32.totalorder %s29, %s32
      %p41 = scmp.eq.s32.totalorder %s24, 1
      %p42 = por %p40, %p41
      %p43 = scmp.ne.s32.totalorder %s32, %s33
      %p44 = scmp.eq.s32.totalorder %s24, 0
      %p45 = por %p43, %p44
      %p46 = scmp.ne.s32.totalorder %s32, %s33
      %p47 = scmp.eq.s32.totalorder %s25, 1
      %p48 = por %p46, %p47
      %p50 = scmp.ne.s32.totalorder %s33, %s49
      %p51 = scmp.eq.s32.totalorder %s25, 0
      %p52 = por %p50, %p51
      %s54 = sadd.s32 %s53, 1
      %p57 = scmp.eq.s32.totalorder %s19, 1
      %p58 = scmp.ne.s32.totalorder %s53, %s55
      %p59 = scmp.eq.s32.totalorder %s19, 0
      %p60 = por %p58, %p59
      %p61 = scmp.ne.s32.totalorder %s53, %s55
      %p62 = scmp.eq.s32.totalorder %s24, 1
      %p63 = por %p61, %p62
      %p64 = scmp.ne.s32.totalorder %s55, %s56
      %p65 = scmp.eq.s32.totalorder %s24, 0
      %p66 = por %p64, %p65
      %p67 = scmp.ne.s32.totalorder %s55, %s56
      %p68 = scmp.eq.s32.totalorder %s25, 1
      %p69 = por %p67, %p68
      %p71 = scmp.ne.s32.totalorder %s56, %s70
      %p72 = scmp.eq.s32.totalorder %s25, 0
      %p73 = por %p71, %p72
      %s75 = sadd.s32 %s74, 1
      %p78 = scmp.eq.s32.totalorder %s19, 1
      %p79 = scmp.ne.s32.totalorder %s74, %s76
      %p80 = scmp.eq.s32.totalorder %s19, 0
      %p81 = por %p79, %p80
      %p82 = scmp.ne.s32.totalorder %s74, %s76
      %p83 = scmp.eq.s32.totalorder %s24, 1
      %p84 = por %p82, %p83
      %p85 = scmp.ne.s32.totalorder %s76, %s77
      %p86 = scmp.eq.s32.totalorder %s24, 0
      %p87 = por %p85, %p86
      %p88 = scmp.ne.s32.totalorder %s76, %s77
      %p89 = scmp.eq.s32.totalorder %s25, 1
      %p90 = por %p88, %p89
      %p92 = scmp.ne.s32.totalorder %s77, %s91
      %p93 = scmp.eq.s32.totalorder %s25, 0
      %p94 = por %p92, %p93
      %s96 = sadd.s32 %s95, 1
      %p99 = scmp.eq.s32.totalorder %s19, 1
      %p100 = scmp.ne.s32.totalorder %s95, %s97
      %p101 = scmp.eq.s32.totalorder %s19, 0
      %p102 = por %p100, %p101
      %p103 = scmp.ne.s32.totalorder %s95, %s97
      %p104 = scmp.eq.s32.totalorder %s24, 1
      %p105 = por %p103, %p104
      %p106 = scmp.ne.s32.totalorder %s97, %s98
      %p107 = scmp.eq.s32.totalorder %s24, 0
      %p108 = por %p106, %p107
      %p109 = scmp.ne.s32.totalorder %s97, %s98
      %p110 = scmp.eq.s32.totalorder %s25, 1
      %p111 = por %p109, %p110
      %p113 = scmp.ne.s32.totalorder %s98, %s112
      %p114 = scmp.eq.s32.totalorder %s25, 0
      %p115 = por %p113, %p114
      %s117 = sadd.s32 %s116, 1
      %p120 = scmp.eq.s32.totalorder %s19, 1
      %p121 = scmp.ne.s32.totalorder %s116, %s118
      %p122 = scmp.eq.s32.totalorder %s19, 0
      %p123 = por %p121, %p122
      %p124 = scmp.ne.s32.totalorder %s116, %s118
      %p125 = scmp.eq.s32.totalorder %s24, 1
      %p126 = por %p124, %p125
      %p127 = scmp.ne.s32.totalorder %s118, %s119
      %p128 = scmp.eq.s32.totalorder %s24, 0
      %p129 = por %p127, %p128
      %p130 = scmp.ne.s32.totalorder %s118, %s119
      %p131 = scmp.eq.s32.totalorder %s25, 1
      %p132 = por %p130, %p131
      %p134 = scmp.ne.s32.totalorder %s119, %s133
      %p135 = scmp.eq.s32.totalorder %s25, 0
      %p136 = por %p134, %p135
      %s138 = sadd.s32 %s137, 1
      %p141 = scmp.eq.s32.totalorder %s19, 1
      %p142 = scmp.ne.s32.totalorder %s137, %s139
      %p143 = scmp.eq.s32.totalorder %s19, 0
      %p144 = por %p142, %p143
      %p145 = scmp.ne.s32.totalorder %s137, %s139
      %p146 = scmp.eq.s32.totalorder %s24, 1
      %p147 = por %p145, %p146
      %p148 = scmp.ne.s32.totalorder %s139, %s140
      %p149 = scmp.eq.s32.totalorder %s24, 0
      %p150 = por %p148, %p149
      %p151 = scmp.ne.s32.totalorder %s139, %s140
      %p152 = scmp.eq.s32.totalorder %s25, 1
      %p153 = por %p151, %p152
      %p155 = scmp.ne.s32.totalorder %s140, %s154
      %p156 = scmp.eq.s32.totalorder %s25, 0
      %p157 = por %p155, %p156
      %s159 = sadd.s32 %s158, 1
      %p162 = scmp.eq.s32.totalorder %s19, 1
      %p163 = scmp.ne.s32.totalorder %s158, %s160
      %p164 = scmp.eq.s32.totalorder %s19, 0
      %p165 = por %p163, %p164
      %p166 = scmp.ne.s32.totalorder %s158, %s160
      %p167 = scmp.eq.s32.totalorder %s24, 1
      %p168 = por %p166, %p167
      %p169 = scmp.ne.s32.totalorder %s160, %s161
      %p170 = scmp.eq.s32.totalorder %s24, 0
      %p171 = por %p169, %p170
      %p172 = scmp.ne.s32.totalorder %s160, %s161
      %p173 = scmp.eq.s32.totalorder %s25, 1
      %p174 = por %p172, %p173
      %p176 = scmp.ne.s32.totalorder %s161, %s175
      %p177 = scmp.eq.s32.totalorder %s25, 0
      %p178 = por %p176, %p177
      %s179 = ssub.s32 %s19, %s26
      %p180 = scmp.eq.s32.totalorder %s179, 0
      %s182 = sadd.s32 %s181, 1
      %s183 = scalar_select %p180, %s181, %s182
      %p186 = pneg %p180
      %p187 = scmp.eq.s32.totalorder %s19, 1
      %p188 = por %p186, %p187
      %p189 = scmp.ne.s32.totalorder %s181, %s184
      %p190 = scmp.eq.s32.totalorder %s19, 0
      %p191 = por %p189, %p190
      %p192 = scmp.ne.s32.totalorder %s181, %s184
      %p193 = scmp.eq.s32.totalorder %s24, 1
      %p194 = por %p192, %p193
      %p195 = scmp.ne.s32.totalorder %s184, %s185
      %p196 = scmp.eq.s32.totalorder %s24, 0
      %p197 = por %p195, %p196
      %p198 = scmp.ne.s32.totalorder %s184, %s185
      %p199 = scmp.eq.s32.totalorder %s25, 1
      %p200 = por %p198, %p199
      %p202 = scmp.ne.s32.totalorder %s185, %s201
      %p203 = scmp.eq.s32.totalorder %s25, 0
      %p204 = por %p202, %p203
      %p205 = scmp.le.s32.totalorder 1, %s19
      %p206 = scmp.lt.s32.totalorder %s19, 3
      %p207 = pnand %p205, %p206
      %p208 = pneg %p207
      // Predicated region
      $region9: #{tpu_custom_call.1} parent=5 // pred_check
        _
      $region10: #{tpu_custom_call.1} parent=5 // pred_check_branch
        %210 = sbr.rel (%p207) target = $region12
      $region11: #{tpu_custom_call.1} parent=5 // pred_region
        %s211 = ssub.s32 %s19, 1
        // Predicated region
        $region13: #{tpu_custom_call.1} parent=11 // pred_check
          %p212 = pneg %p66
        $region14: #{tpu_custom_call.1} parent=11 // pred_check_branch
          %214 = sbr.rel (%p212) target = $region16
        $region15: #{tpu_custom_call.1} parent=11 // pred_region
          _
        $region16: #{tpu_custom_call.1} parent=11 // pred_fallthru
          _
        // Predicated region
        $region17: #{tpu_custom_call.1} parent=11 // pred_check
          %p215 = pneg %p87
        $region18: #{tpu_custom_call.1} parent=11 // pred_check_branch
          %217 = sbr.rel (%p215) target = $region20
        $region19: #{tpu_custom_call.1} parent=11 // pred_region
          _
        $region20: #{tpu_custom_call.1} parent=11 // pred_fallthru
          _
        // Predicated region
        $region21: #{tpu_custom_call.1} parent=11 // pred_check
          %p218 = pneg %p108
        $region22: #{tpu_custom_call.1} parent=11 // pred_check_branch
          %220 = sbr.rel (%p218) target = $region24
        $region23: #{tpu_custom_call.1} parent=11 // pred_region
          _
        $region24: #{tpu_custom_call.1} parent=11 // pred_fallthru
          _
        // Predicated region
        $region25: #{tpu_custom_call.1} parent=11 // pred_check
          %p221 = pneg %p129
        $region26: #{tpu_custom_call.1} parent=11 // pred_check_branch
          %223 = sbr.rel (%p221) target = $region28
        $region27: #{tpu_custom_call.1} parent=11 // pred_region
          _
        $region28: #{tpu_custom_call.1} parent=11 // pred_fallthru
          _
        // Predicated region
        $region29: #{tpu_custom_call.1} parent=11 // pred_check
          %p224 = pneg %p150
        $region30: #{tpu_custom_call.1} parent=11 // pred_check_branch
          %226 = sbr.rel (%p224) target = $region32
        $region31: #{tpu_custom_call.1} parent=11 // pred_region
          _
        $region32: #{tpu_custom_call.1} parent=11 // pred_fallthru
          _
        // Predicated region
        $region33: #{tpu_custom_call.1} parent=11 // pred_check
          %p227 = pneg %p171
        $region34: #{tpu_custom_call.1} parent=11 // pred_check_branch
          %229 = sbr.rel (%p227) target = $region36
        $region35: #{tpu_custom_call.1} parent=11 // pred_region
          _
        $region36: #{tpu_custom_call.1} parent=11 // pred_fallthru
          _
      $region12: #{tpu_custom_call.1} parent=5 // pred_fallthru
        _
      %p230 = scmp.lt.s32.totalorder %s19, 2
      // Predicated region
      $region37: #{tpu_custom_call.1} parent=5 // pred_check
        %p231 = pneg %p230
      $region38: #{tpu_custom_call.1} parent=5 // pred_check_branch
        %233 = sbr.rel (%p231) target = $region40
      $region39: #{tpu_custom_call.1} parent=5 // pred_region
        // Predicated region
        $region41: #{tpu_custom_call.1} parent=39 // pred_check
          %p234 = pneg %p39
        $region42: #{tpu_custom_call.1} parent=39 // pred_check_branch
          %236 = sbr.rel (%p234) target = $region44
        $region43: #{tpu_custom_call.1} parent=39 // pred_region
          %s237 = sand.u32 %s29, 1
          %s238 = scalar_lea.sflag [#allocation5], %s237
          %s239 = sand.u32 %s29, 1
          %s240 = smul.addr %s239, 128
          %s241 = scalar_lea.vmem [#allocation4], %s240
          %s243 = ssub.s32 2048, 2048
          %244 = vsyncadd %s238, %s243
          %s245 = smul.addr %s19, 16
          %s246 = smul.addr %s245, 128
          %s247 = scalar_lea.hbm %s0, %s246
          %s248 = sshll.u32 %s241, 4
          %s249 = int_to_ptr.vmem [resolvable:$true] %s248
          %254 = dma.hbm_to_vmem [thread:$0]  %s247, 2048, %s249, %s238, 128, 128, 8
        $region44: #{tpu_custom_call.1} parent=39 // pred_fallthru
          _
      $region40: #{tpu_custom_call.1} parent=5 // pred_fallthru
        _
      %p255 = scmp.le.s32.totalorder 1, %s19
      %p256 = scmp.lt.s32.totalorder %s19, 3
      %p257 = pnand %p255, %p256
      %p258 = pneg %p257
      // Predicated region
      $region45: #{tpu_custom_call.1} parent=5 // pred_check
        _
      $region46: #{tpu_custom_call.1} parent=5 // pred_check_branch
        %260 = sbr.rel (%p257) target = $region48
      $region47: #{tpu_custom_call.1} parent=5 // pred_region
        %s261 = ssub.s32 %s19, 1
        %s262 = sand.u32 %s32, 1
        %s263 = scalar_lea.sflag [#allocation5], %s262
        %s264 = sand.u32 %s32, 1
        %s265 = smul.addr %s264, 128
        %s266 = scalar_lea.vmem [#allocation4], %s265
        // Predicated region
        $region49: #{tpu_custom_call.1} parent=47 // pred_check
          %p267 = pneg %p45
        $region50: #{tpu_custom_call.1} parent=47 // pred_check_branch
          %269 = sbr.rel (%p267) target = $region52
        $region51: #{tpu_custom_call.1} parent=47 // pred_region
          %270 = dma.done %s263, 2048
        $region52: #{tpu_custom_call.1} parent=47 // pred_fallthru
          _
        %s271 = sand.u32 %s32, 1
        %s272 = scalar_lea.sflag [#allocation5], %s271
        %s273 = sand.u32 %s32, 1
        %s274 = smul.addr %s273, 128
        %s275 = scalar_lea.vmem [#allocation4], %s274
        %p276 = pneg %p45
        %p277 = pneg %p42
        %p278 = pneg %p66
        %p279 = pneg %p63
        %p280 = pneg %p87
        %p281 = pneg %p84
        %p282 = pneg %p108
        %p283 = pneg %p105
        %p284 = pneg %p129
        %p285 = pneg %p126
        %p286 = pneg %p150
        %p287 = pneg %p147
        %p288 = pneg %p171
        %p289 = pneg %p168
        %p290 = pneg %p197
        %p291 = pneg %p194
        %s292 = sand.u32 %s184, 1
        %s293 = scalar_lea.sflag [#allocation6], %s292
        %s294 = sand.u32 %s184, 1
        %s295 = smul.addr %s294, 16
        %s296 = scalar_lea.vmem [#allocation7], %s295
        %v298 = vld [vmem:[%s266] sm:$0xff]
        %v299 = vld [vmem:[%s266 + $0x8] sm:$0xff]
        %v300 = vld [vmem:[%s266 + $0x10] sm:$0xff]
        %v301 = vld [vmem:[%s266 + $0x18] sm:$0xff]
        %v302 = vld [vmem:[%s266 + $0x20] sm:$0xff]
        %v303 = vld [vmem:[%s266 + $0x28] sm:$0xff]
        %v304 = vld [vmem:[%s266 + $0x30] sm:$0xff]
        %v305 = vld [vmem:[%s266 + $0x38] sm:$0xff]
        %v306 = vld [vmem:[%s266 + $0x40] sm:$0xff]
        %v307 = vld [vmem:[%s266 + $0x48] sm:$0xff]
        %v308 = vld [vmem:[%s266 + $0x50] sm:$0xff]
        %v309 = vld [vmem:[%s266 + $0x58] sm:$0xff]
        %v310 = vld [vmem:[%s266 + $0x60] sm:$0xff]
        %v311 = vld [vmem:[%s266 + $0x68] sm:$0xff]
        %v312 = vld [vmem:[%s266 + $0x70] sm:$0xff]
        %v313 = vld [vmem:[%s266 + $0x78] sm:$0xff]
        %vm314 = vcmask 130048
        %v315 = vsel %vm314, %v298, 0.0
        %316 = vadd.xlane.f32.xlu0 %v315
        %v317 = vpop.xlane.xlu0 %316
        %v318 = vsel %vm314, %v299, 0.0
        %319 = vadd.xlane.f32.xlu0 %v318
        %v320 = vpop.xlane.xlu0 %319
        %v321 = vsel %vm314, %v300, 0.0
        %322 = vadd.xlane.f32.xlu0 %v321
        %v323 = vpop.xlane.xlu0 %322
        %v324 = vsel %vm314, %v301, 0.0
        %325 = vadd.xlane.f32.xlu0 %v324
        %v326 = vpop.xlane.xlu0 %325
        %v327 = vsel %vm314, %v302, 0.0
        %328 = vadd.xlane.f32.xlu0 %v327
        %v329 = vpop.xlane.xlu0 %328
        %v330 = vsel %vm314, %v303, 0.0
        %331 = vadd.xlane.f32.xlu0 %v330
        %v332 = vpop.xlane.xlu0 %331
        %v333 = vsel %vm314, %v304, 0.0
        %334 = vadd.xlane.f32.xlu0 %v333
        %v335 = vpop.xlane.xlu0 %334
        %v336 = vsel %vm314, %v305, 0.0
        %337 = vadd.xlane.f32.xlu0 %v336
        %v338 = vpop.xlane.xlu0 %337
        %v339 = vsel %vm314, %v306, 0.0
        %340 = vadd.xlane.f32.xlu0 %v339
        %v341 = vpop.xlane.xlu0 %340
        %v342 = vsel %vm314, %v307, 0.0
        %343 = vadd.xlane.f32.xlu0 %v342
        %v344 = vpop.xlane.xlu0 %343
        %v345 = vsel %vm314, %v308, 0.0
        %346 = vadd.xlane.f32.xlu0 %v345
        %v347 = vpop.xlane.xlu0 %346
        %v348 = vsel %vm314, %v309, 0.0
        %349 = vadd.xlane.f32.xlu0 %v348
        %v350 = vpop.xlane.xlu0 %349
        %v351 = vsel %vm314, %v310, 0.0
        %352 = vadd.xlane.f32.xlu0 %v351
        %v353 = vpop.xlane.xlu0 %352
        %v354 = vsel %vm314, %v311, 0.0
        %355 = vadd.xlane.f32.xlu0 %v354
        %v356 = vpop.xlane.xlu0 %355
        %v357 = vsel %vm314, %v312, 0.0
        %358 = vadd.xlane.f32.xlu0 %v357
        %v359 = vpop.xlane.xlu0 %358
        %v360 = vsel %vm314, %v313, 0.0
        %361 = vadd.xlane.f32.xlu0 %v360
        %v362 = vpop.xlane.xlu0 %361
        %v379 = vlaneseq
        %v380 = vand.u32 %v379, 127
        %v381 = vlaneseq
        %v382 = vshrl.u32 %v381, 7
        %v383 = vsub.s32 %v380, %v382
        %v384 = vrot.slane %v317, %v383
        %v385 = vadd.s32 %v380, 4294967288
        %v386 = vlaneseq
        %v387 = vshrl.u32 %v386, 7
        %v388 = vsub.s32 %v385, %v387
        %v389 = vrot.slane %v320, %v388
        %vm390 = vcmask 130112
        %v391 = vsel %vm390, %v389, %v384
        %v392 = vlaneseq
        %v393 = vshrl.u32 %v392, 7
        %v394 = vsub.s32 %v380, %v393
        %v395 = vrot.slane %v323, %v394
        %v396 = vlaneseq
        %v397 = vshrl.u32 %v396, 7
        %v398 = vsub.s32 %v385, %v397
        %v399 = vrot.slane %v326, %v398
        %v400 = vsel %vm390, %v399, %v395
        %v401 = vlaneseq
        %v402 = vshrl.u32 %v401, 7
        %v403 = vsub.s32 %v380, %v402
        %v404 = vrot.slane %v329, %v403
        %v405 = vlaneseq
        %v406 = vshrl.u32 %v405, 7
        %v407 = vsub.s32 %v385, %v406
        %v408 = vrot.slane %v332, %v407
        %v409 = vsel %vm390, %v408, %v404
        %v410 = vlaneseq
        %v411 = vshrl.u32 %v410, 7
        %v412 = vsub.s32 %v380, %v411
        %v413 = vrot.slane %v335, %v412
        %v414 = vlaneseq
        %v415 = vshrl.u32 %v414, 7
        %v416 = vsub.s32 %v385, %v415
        %v417 = vrot.slane %v338, %v416
        %v418 = vsel %vm390, %v417, %v413
        %v419 = vlaneseq
        %v420 = vshrl.u32 %v419, 7
        %v421 = vsub.s32 %v380, %v420
        %v422 = vrot.slane %v341, %v421
        %v423 = vlaneseq
        %v424 = vshrl.u32 %v423, 7
        %v425 = vsub.s32 %v385, %v424
        %v426 = vrot.slane %v344, %v425
        %v427 = vsel %vm390, %v426, %v422
        %v428 = vlaneseq
        %v429 = vshrl.u32 %v428, 7
        %v430 = vsub.s32 %v380, %v429
        %v431 = vrot.slane %v347, %v430
        %v432 = vlaneseq
        %v433 = vshrl.u32 %v432, 7
        %v434 = vsub.s32 %v385, %v433
        %v435 = vrot.slane %v350, %v434
        %v436 = vsel %vm390, %v435, %v431
        %v437 = vlaneseq
        %v438 = vshrl.u32 %v437, 7
        %v439 = vsub.s32 %v380, %v438
        %v440 = vrot.slane %v353, %v439
        %v441 = vlaneseq
        %v442 = vshrl.u32 %v441, 7
        %v443 = vsub.s32 %v385, %v442
        %v444 = vrot.slane %v356, %v443
        %v445 = vsel %vm390, %v444, %v440
        %v446 = vlaneseq
        %v447 = vshrl.u32 %v446, 7
        %v448 = vsub.s32 %v380, %v447
        %v449 = vrot.slane %v359, %v448
        %v450 = vlaneseq
        %v451 = vshrl.u32 %v450, 7
        %v452 = vsub.s32 %v385, %v451
        %v453 = vrot.slane %v362, %v452
        %v454 = vsel %vm390, %v453, %v449
        %vm455 = vcmask 1041409
        %v456 = vsel %vm455, %v400, %v391
        %vm457 = vcmask 1042434
        %v458 = vsel %vm457, %v409, %v456
        %vm459 = vcmask 1043459
        %v460 = vsel %vm459, %v418, %v458
        %vm461 = vcmask 1044484
        %v462 = vsel %vm461, %v427, %v460
        %vm463 = vcmask 1045509
        %v464 = vsel %vm463, %v436, %v462
        %vm465 = vcmask 1046534
        %v466 = vsel %vm465, %v445, %v464
        %vm467 = vcmask 1047559
        %v468 = vsel %vm467, %v454, %v466
        %v470 = vsel %vm314, %v468, 0.0
        %471 = vadd.xlane.f32.xlu0 %v470
        %v472 = vpop.xlane.xlu0 %471
        %v473 = vmul.f32 %v472, 0.00390625
        %v474 = vld [vmem:[%s1] sm:$0xff]
        %v475 = vmul.f32 %v474, %v473
        %vm476 = vcmask 15360
        %v477 = vsel %vm476, %v475, 0.0
        %v478 = vrot.slane %v477, 4
        %v479 = vadd.f32 %v477, %v478
        %v480 = vrot.slane %v479, 2
        %v481 = vadd.f32 %v479, %v480
        %v482 = vrot.slane %v481, 1
        %v483 = vadd.f32 %v481, %v482
        %v484 = vld [vmem:[%s2] sm:$0x1]
        %v485 = vadd.f32 %v483, %v484
        %v486 = vmax.f32 %v485, 0.0
        %v487 = vld [vmem:[%s3] sm:$0x7]
        %v488 = vlaneseq
        %v489 = vshrl.u32 %v488, 7
        %v490 = vsub.s32 0, %v489
        %v491 = vrot.slane %v486, %v490
        %v492 = vmul.f32 %v487, %v491
        %vm493 = vcmask 10240
        %v494 = vsel %vm493, %v492, 0.0
        %495 = vadd.xlane.f32.xlu0 %v494
        %v496 = vpop.xlane.xlu0 %495
        %v497 = vld [vmem:[%s4] sm:$0x7]
        %v498 = vadd.f32 %v496, %v497
        %vm499 = vcmask 2048
        %v500 = vsel %vm499, %v498, -inf
        %v501 = vrot.slane %v500, 4
        %v502 = vmax.f32 %v500, %v501
        %v503 = vrot.slane %v502, 2
        %v504 = vmax.f32 %v502, %v503
        %v505 = vrot.slane %v504, 1
        %v506 = vmax.f32 %v504, %v505
        %v507 = vsub.f32 %v498, %v506
        %v508 = vmul.f32 %v507, 1.442695
        %v509 = vpow.pop %v508
        %v510 = vsel %vm499, %v509, 0.0
        %v511 = vrot.slane %v510, 4
        %v512 = vadd.f32 %v510, %v511
        %v513 = vrot.slane %v512, 2
        %v514 = vadd.f32 %v512, %v513
        %v515 = vrot.slane %v514, 1
        %v516 = vadd.f32 %v514, %v515
        %v517 = vrcp.pop %v516
        %v518 = vmul.f32 %v509, %v517
        %vm519 = vcmask 156672
        %520 = vst.msk [vmem:[#allocation2] sm:$0x3] %vm519, 0.0
        %521 = vst.msk [vmem:[#allocation2 + $0x18] sm:$0x3] %vm519, 0.0
        %522 = vst.msk [vmem:[#allocation2 + $0x30] sm:$0x3] %vm519, 0.0
        %523 = vst.msk [vmem:[#allocation2 + $0x48] sm:$0x3] %vm519, 0.0
        %524 = vst.msk [vmem:[#allocation2 + $0x60] sm:$0x3] %vm519, 0.0
        %525 = vst.msk [vmem:[#allocation2 + $0x78] sm:$0x3] %vm519, 0.0
        %526 = vst.msk [vmem:[#allocation2 + $0x90] sm:$0x3] %vm519, 0.0
        %527 = vst.msk [vmem:[#allocation2 + $0xa8] sm:$0x3] %vm519, 0.0
        %528 = vst.msk [vmem:[#allocation2 + $0x12] sm:$0x3] %vm519, 0.0
        %529 = vst.msk [vmem:[#allocation2 + $0x2a] sm:$0x3] %vm519, 0.0
        %530 = vst.msk [vmem:[#allocation2 + $0x42] sm:$0x3] %vm519, 0.0
        %531 = vst.msk [vmem:[#allocation2 + $0x5a] sm:$0x3] %vm519, 0.0
        %532 = vst.msk [vmem:[#allocation2 + $0x72] sm:$0x3] %vm519, 0.0
        %533 = vst.msk [vmem:[#allocation2 + $0x8a] sm:$0x3] %vm519, 0.0
        %534 = vst.msk [vmem:[#allocation2 + $0xa2] sm:$0x3] %vm519, 0.0
        %535 = vst.msk [vmem:[#allocation2 + $0xba] sm:$0x3] %vm519, 0.0
        %536 = vst.msk [vmem:[#allocation2 + $0x2] sm:$0xff] %vm476, 0.0
        %537 = vst.msk [vmem:[#allocation2 + $0xa] sm:$0xff] %vm476, 0.0
        %538 = vst.msk [vmem:[#allocation2 + $0x1a] sm:$0xff] %vm476, 0.0
        %539 = vst.msk [vmem:[#allocation2 + $0x22] sm:$0xff] %vm476, 0.0
        %540 = vst.msk [vmem:[#allocation2 + $0x32] sm:$0xff] %vm476, 0.0
        %541 = vst.msk [vmem:[#allocation2 + $0x3a] sm:$0xff] %vm476, 0.0
        %542 = vst.msk [vmem:[#allocation2 + $0x4a] sm:$0xff] %vm476, 0.0
        %543 = vst.msk [vmem:[#allocation2 + $0x52] sm:$0xff] %vm476, 0.0
        %544 = vst.msk [vmem:[#allocation2 + $0x62] sm:$0xff] %vm476, 0.0
        %545 = vst.msk [vmem:[#allocation2 + $0x6a] sm:$0xff] %vm476, 0.0
        %546 = vst.msk [vmem:[#allocation2 + $0x7a] sm:$0xff] %vm476, 0.0
        %547 = vst.msk [vmem:[#allocation2 + $0x82] sm:$0xff] %vm476, 0.0
        %548 = vst.msk [vmem:[#allocation2 + $0x92] sm:$0xff] %vm476, 0.0
        %549 = vst.msk [vmem:[#allocation2 + $0x9a] sm:$0xff] %vm476, 0.0
        %550 = vst.msk [vmem:[#allocation2 + $0xaa] sm:$0xff] %vm476, 0.0
        %551 = vst.msk [vmem:[#allocation2 + $0xb2] sm:$0xff] %vm476, 0.0
        %vm552 = vcmask 162960
        %553 = vst.msk [vmem:[#allocation2 + $0x2] sm:$0xff] %vm552, 0.0
        %554 = vst.msk [vmem:[#allocation2 + $0xa] sm:$0xff] %vm552, 0.0
        %555 = vst.msk [vmem:[#allocation2 + $0x1a] sm:$0xff] %vm552, 0.0
        %556 = vst.msk [vmem:[#allocation2 + $0x22] sm:$0xff] %vm552, 0.0
        %557 = vst.msk [vmem:[#allocation2 + $0x32] sm:$0xff] %vm552, 0.0
        %558 = vst.msk [vmem:[#allocation2 + $0x3a] sm:$0xff] %vm552, 0.0
        %559 = vst.msk [vmem:[#allocation2 + $0x4a] sm:$0xff] %vm552, 0.0
        %560 = vst.msk [vmem:[#allocation2 + $0x52] sm:$0xff] %vm552, 0.0
        %561 = vst.msk [vmem:[#allocation2 + $0x62] sm:$0xff] %vm552, 0.0
        %562 = vst.msk [vmem:[#allocation2 + $0x6a] sm:$0xff] %vm552, 0.0
        %563 = vst.msk [vmem:[#allocation2 + $0x7a] sm:$0xff] %vm552, 0.0
        %564 = vst.msk [vmem:[#allocation2 + $0x82] sm:$0xff] %vm552, 0.0
        %565 = vst.msk [vmem:[#allocation2 + $0x92] sm:$0xff] %vm552, 0.0
        %566 = vst.msk [vmem:[#allocation2 + $0x9a] sm:$0xff] %vm552, 0.0
        %567 = vst.msk [vmem:[#allocation2 + $0xaa] sm:$0xff] %vm552, 0.0
        %568 = vst.msk [vmem:[#allocation2 + $0xb2] sm:$0xff] %vm552, 0.0
        %585 = vrot.lane.b32.xlu0 %v298, 2
        %v586 = vpop.permute.xlu0 %585
        %587 = vrot.lane.b32.xlu0 %v299, 2
        %v588 = vpop.permute.xlu0 %587
        %589 = vrot.lane.b32.xlu0 %v300, 2
        %v590 = vpop.permute.xlu0 %589
        %591 = vrot.lane.b32.xlu0 %v301, 2
        %v592 = vpop.permute.xlu0 %591
        %593 = vrot.lane.b32.xlu0 %v302, 2
        %v594 = vpop.permute.xlu0 %593
        %595 = vrot.lane.b32.xlu0 %v303, 2
        %v596 = vpop.permute.xlu0 %595
        %597 = vrot.lane.b32.xlu0 %v304, 2
        %v598 = vpop.permute.xlu0 %597
        %599 = vrot.lane.b32.xlu0 %v305, 2
        %v600 = vpop.permute.xlu0 %599
        %601 = vrot.lane.b32.xlu0 %v306, 2
        %v602 = vpop.permute.xlu0 %601
        %603 = vrot.lane.b32.xlu0 %v307, 2
        %v604 = vpop.permute.xlu0 %603
        %605 = vrot.lane.b32.xlu0 %v308, 2
        %v606 = vpop.permute.xlu0 %605
        %607 = vrot.lane.b32.xlu0 %v309, 2
        %v608 = vpop.permute.xlu0 %607
        %609 = vrot.lane.b32.xlu0 %v310, 2
        %v610 = vpop.permute.xlu0 %609
        %611 = vrot.lane.b32.xlu0 %v311, 2
        %v612 = vpop.permute.xlu0 %611
        %613 = vrot.lane.b32.xlu0 %v312, 2
        %v614 = vpop.permute.xlu0 %613
        %615 = vrot.lane.b32.xlu0 %v313, 2
        %v616 = vpop.permute.xlu0 %615
        %vm633 = vcmask 146448
        %634 = vst.msk [vmem:[#allocation2 + $0x2] sm:$0xff] %vm633, %v586
        %635 = vst.msk [vmem:[#allocation2 + $0xa] sm:$0xff] %vm633, %v588
        %636 = vst.msk [vmem:[#allocation2 + $0x1a] sm:$0xff] %vm633, %v590
        %637 = vst.msk [vmem:[#allocation2 + $0x22] sm:$0xff] %vm633, %v592
        %638 = vst.msk [vmem:[#allocation2 + $0x32] sm:$0xff] %vm633, %v594
        %639 = vst.msk [vmem:[#allocation2 + $0x3a] sm:$0xff] %vm633, %v596
        %640 = vst.msk [vmem:[#allocation2 + $0x4a] sm:$0xff] %vm633, %v598
        %641 = vst.msk [vmem:[#allocation2 + $0x52] sm:$0xff] %vm633, %v600
        %642 = vst.msk [vmem:[#allocation2 + $0x62] sm:$0xff] %vm633, %v602
        %643 = vst.msk [vmem:[#allocation2 + $0x6a] sm:$0xff] %vm633, %v604
        %644 = vst.msk [vmem:[#allocation2 + $0x7a] sm:$0xff] %vm633, %v606
        %645 = vst.msk [vmem:[#allocation2 + $0x82] sm:$0xff] %vm633, %v608
        %646 = vst.msk [vmem:[#allocation2 + $0x92] sm:$0xff] %vm633, %v610
        %647 = vst.msk [vmem:[#allocation2 + $0x9a] sm:$0xff] %vm633, %v612
        %648 = vst.msk [vmem:[#allocation2 + $0xaa] sm:$0xff] %vm633, %v614
        %649 = vst.msk [vmem:[#allocation2 + $0xb2] sm:$0xff] %vm633, %v616
        %v650 = vld [vmem:[#allocation2] sm:$0xff]
        %v651 = vld [vmem:[#allocation2 + $0x8] sm:$0xff]
        %v652 = vld [vmem:[#allocation2 + $0x18] sm:$0xff]
        %v653 = vld [vmem:[#allocation2 + $0x20] sm:$0xff]
        %v654 = vld [vmem:[#allocation2 + $0x30] sm:$0xff]
        %v655 = vld [vmem:[#allocation2 + $0x38] sm:$0xff]
        %v656 = vld [vmem:[#allocation2 + $0x48] sm:$0xff]
        %v657 = vld [vmem:[#allocation2 + $0x50] sm:$0xff]
        %v658 = vld [vmem:[#allocation2 + $0x60] sm:$0xff]
        %v659 = vld [vmem:[#allocation2 + $0x68] sm:$0xff]
        %v660 = vld [vmem:[#allocation2 + $0x78] sm:$0xff]
        %v661 = vld [vmem:[#allocation2 + $0x80] sm:$0xff]
        %v662 = vld [vmem:[#allocation2 + $0x90] sm:$0xff]
        %v663 = vld [vmem:[#allocation2 + $0x98] sm:$0xff]
        %v664 = vld [vmem:[#allocation2 + $0xa8] sm:$0xff]
        %v665 = vld [vmem:[#allocation2 + $0xb0] sm:$0xff]
        %v666 = vcombine.low %v650, %v654
        %v667 = vcombine.high %v650, %v654
        %v669 = vunpack.c.l.s4 1983009808
        %v670 = vunpack.c.0.s8 %v669
        %v671 = vlaneseq
        %v672 = vshrl.u32 %v671, 7
        %v673 = vsub.s32 %v670, %v672
        %v674 = vrot.slane %v666, %v673
        %v676 = vunpack.c.l.s4 1983009808
        %v677 = vunpack.c.0.s8 %v676
        %v678 = vlaneseq
        %v679 = vshrl.u32 %v678, 7
        %v680 = vsub.s32 %v677, %v679
        %v681 = vrot.slane %v667, %v680
        %v682 = vcombine.low %v652, %v656
        %v683 = vcombine.high %v652, %v656
        %v685 = vunpack.c.l.s4 1983009808
        %v686 = vunpack.c.0.s8 %v685
        %v687 = vlaneseq
        %v688 = vshrl.u32 %v687, 7
        %v689 = vsub.s32 %v686, %v688
        %v690 = vrot.slane %v682, %v689
        %v692 = vunpack.c.l.s4 1983009808
        %v693 = vunpack.c.0.s8 %v692
        %v694 = vlaneseq
        %v695 = vshrl.u32 %v694, 7
        %v696 = vsub.s32 %v693, %v695
        %v697 = vrot.slane %v683, %v696
        %v698 = vcombine.low %v658, %v662
        %v699 = vcombine.high %v658, %v662
        %v701 = vunpack.c.l.s4 1983009808
        %v702 = vunpack.c.0.s8 %v701
        %v703 = vlaneseq
        %v704 = vshrl.u32 %v703, 7
        %v705 = vsub.s32 %v702, %v704
        %v706 = vrot.slane %v698, %v705
        %v708 = vunpack.c.l.s4 1983009808
        %v709 = vunpack.c.0.s8 %v708
        %v710 = vlaneseq
        %v711 = vshrl.u32 %v710, 7
        %v712 = vsub.s32 %v709, %v711
        %v713 = vrot.slane %v699, %v712
        %v714 = vcombine.low %v660, %v664
        %v715 = vcombine.high %v660, %v664
        %v717 = vunpack.c.l.s4 1983009808
        %v718 = vunpack.c.0.s8 %v717
        %v719 = vlaneseq
        %v720 = vshrl.u32 %v719, 7
        %v721 = vsub.s32 %v718, %v720
        %v722 = vrot.slane %v714, %v721
        %v724 = vunpack.c.l.s4 1983009808
        %v725 = vunpack.c.0.s8 %v724
        %v726 = vlaneseq
        %v727 = vshrl.u32 %v726, 7
        %v728 = vsub.s32 %v725, %v727
        %v729 = vrot.slane %v715, %v728
        %v730 = vcombine.low %v674, %v690
        %v731 = vcombine.high %v674, %v690
        %v733 = vunpack.c.l.s4 1934713408
        %v734 = vunpack.c.0.s8 %v733
        %v735 = vlaneseq
        %v736 = vshrl.u32 %v735, 7
        %v737 = vsub.s32 %v734, %v736
        %v738 = vrot.slane %v730, %v737
        %v740 = vunpack.c.l.s4 1934713408
        %v741 = vunpack.c.0.s8 %v740
        %v742 = vlaneseq
        %v743 = vshrl.u32 %v742, 7
        %v744 = vsub.s32 %v741, %v743
        %v745 = vrot.slane %v731, %v744
        %v746 = vcombine.low %v681, %v697
        %v747 = vcombine.high %v681, %v697
        %v749 = vunpack.c.l.s4 1934713408
        %v750 = vunpack.c.0.s8 %v749
        %v751 = vlaneseq
        %v752 = vshrl.u32 %v751, 7
        %v753 = vsub.s32 %v750, %v752
        %v754 = vrot.slane %v746, %v753
        %v756 = vunpack.c.l.s4 1934713408
        %v757 = vunpack.c.0.s8 %v756
        %v758 = vlaneseq
        %v759 = vshrl.u32 %v758, 7
        %v760 = vsub.s32 %v757, %v759
        %v761 = vrot.slane %v747, %v760
        %v762 = vcombine.low %v706, %v722
        %v763 = vcombine.high %v706, %v722
        %v765 = vunpack.c.l.s4 1934713408
        %v766 = vunpack.c.0.s8 %v765
        %v767 = vlaneseq
        %v768 = vshrl.u32 %v767, 7
        %v769 = vsub.s32 %v766, %v768
        %v770 = vrot.slane %v762, %v769
        %v772 = vunpack.c.l.s4 1934713408
        %v773 = vunpack.c.0.s8 %v772
        %v774 = vlaneseq
        %v775 = vshrl.u32 %v774, 7
        %v776 = vsub.s32 %v773, %v775
        %v777 = vrot.slane %v763, %v776
        %v778 = vcombine.low %v713, %v729
        %v779 = vcombine.high %v713, %v729
        %v781 = vunpack.c.l.s4 1934713408
        %v782 = vunpack.c.0.s8 %v781
        %v783 = vlaneseq
        %v784 = vshrl.u32 %v783, 7
        %v785 = vsub.s32 %v782, %v784
        %v786 = vrot.slane %v778, %v785
        %v788 = vunpack.c.l.s4 1934713408
        %v789 = vunpack.c.0.s8 %v788
        %v790 = vlaneseq
        %v791 = vshrl.u32 %v790, 7
        %v792 = vsub.s32 %v789, %v791
        %v793 = vrot.slane %v779, %v792
        %v794 = vcombine.low %v738, %v770
        %v795 = vcombine.high %v738, %v770
        %v796 = vcombine.low %v745, %v777
        %v797 = vcombine.high %v745, %v777
        %v798 = vcombine.low %v754, %v786
        %v799 = vcombine.high %v754, %v786
        %v800 = vcombine.low %v761, %v793
        %v801 = vcombine.high %v761, %v793
        %v802 = vcombine.low %v651, %v655
        %v803 = vcombine.high %v651, %v655
        %v805 = vunpack.c.l.s4 1983009808
        %v806 = vunpack.c.0.s8 %v805
        %v807 = vlaneseq
        %v808 = vshrl.u32 %v807, 7
        %v809 = vsub.s32 %v806, %v808
        %v810 = vrot.slane %v802, %v809
        %v812 = vunpack.c.l.s4 1983009808
        %v813 = vunpack.c.0.s8 %v812
        %v814 = vlaneseq
        %v815 = vshrl.u32 %v814, 7
        %v816 = vsub.s32 %v813, %v815
        %v817 = vrot.slane %v803, %v816
        %v818 = vcombine.low %v653, %v657
        %v819 = vcombine.high %v653, %v657
        %v821 = vunpack.c.l.s4 1983009808
        %v822 = vunpack.c.0.s8 %v821
        %v823 = vlaneseq
        %v824 = vshrl.u32 %v823, 7
        %v825 = vsub.s32 %v822, %v824
        %v826 = vrot.slane %v818, %v825
        %v828 = vunpack.c.l.s4 1983009808
        %v829 = vunpack.c.0.s8 %v828
        %v830 = vlaneseq
        %v831 = vshrl.u32 %v830, 7
        %v832 = vsub.s32 %v829, %v831
        %v833 = vrot.slane %v819, %v832
        %v834 = vcombine.low %v659, %v663
        %v835 = vcombine.high %v659, %v663
        %v837 = vunpack.c.l.s4 1983009808
        %v838 = vunpack.c.0.s8 %v837
        %v839 = vlaneseq
        %v840 = vshrl.u32 %v839, 7
        %v841 = vsub.s32 %v838, %v840
        %v842 = vrot.slane %v834, %v841
        %v844 = vunpack.c.l.s4 1983009808
        %v845 = vunpack.c.0.s8 %v844
        %v846 = vlaneseq
        %v847 = vshrl.u32 %v846, 7
        %v848 = vsub.s32 %v845, %v847
        %v849 = vrot.slane %v835, %v848
        %v850 = vcombine.low %v661, %v665
        %v851 = vcombine.high %v661, %v665
        %v853 = vunpack.c.l.s4 1983009808
        %v854 = vunpack.c.0.s8 %v853
        %v855 = vlaneseq
        %v856 = vshrl.u32 %v855, 7
        %v857 = vsub.s32 %v854, %v856
        %v858 = vrot.slane %v850, %v857
        %v860 = vunpack.c.l.s4 1983009808
        %v861 = vunpack.c.0.s8 %v860
        %v862 = vlaneseq
        %v863 = vshrl.u32 %v862, 7
        %v864 = vsub.s32 %v861, %v863
        %v865 = vrot.slane %v851, %v864
        %v866 = vcombine.low %v810, %v826
        %v867 = vcombine.high %v810, %v826
        %v869 = vunpack.c.l.s4 1934713408
        %v870 = vunpack.c.0.s8 %v869
        %v871 = vlaneseq
        %v872 = vshrl.u32 %v871, 7
        %v873 = vsub.s32 %v870, %v872
        %v874 = vrot.slane %v866, %v873
        %v876 = vunpack.c.l.s4 1934713408
        %v877 = vunpack.c.0.s8 %v876
        %v878 = vlaneseq
        %v879 = vshrl.u32 %v878, 7
        %v880 = vsub.s32 %v877, %v879
        %v881 = vrot.slane %v867, %v880
        %v882 = vcombine.low %v817, %v833
        %v883 = vcombine.high %v817, %v833
        %v885 = vunpack.c.l.s4 1934713408
        %v886 = vunpack.c.0.s8 %v885
        %v887 = vlaneseq
        %v888 = vshrl.u32 %v887, 7
        %v889 = vsub.s32 %v886, %v888
        %v890 = vrot.slane %v882, %v889
        %v892 = vunpack.c.l.s4 1934713408
        %v893 = vunpack.c.0.s8 %v892
        %v894 = vlaneseq
        %v895 = vshrl.u32 %v894, 7
        %v896 = vsub.s32 %v893, %v895
        %v897 = vrot.slane %v883, %v896
        %v898 = vcombine.low %v842, %v858
        %v899 = vcombine.high %v842, %v858
        %v901 = vunpack.c.l.s4 1934713408
        %v902 = vunpack.c.0.s8 %v901
        %v903 = vlaneseq
        %v904 = vshrl.u32 %v903, 7
        %v905 = vsub.s32 %v902, %v904
        %v906 = vrot.slane %v898, %v905
        %v908 = vunpack.c.l.s4 1934713408
        %v909 = vunpack.c.0.s8 %v908
        %v910 = vlaneseq
        %v911 = vshrl.u32 %v910, 7
        %v912 = vsub.s32 %v909, %v911
        %v913 = vrot.slane %v899, %v912
        %v914 = vcombine.low %v849, %v865
        %v915 = vcombine.high %v849, %v865
        %v917 = vunpack.c.l.s4 1934713408
        %v918 = vunpack.c.0.s8 %v917
        %v919 = vlaneseq
        %v920 = vshrl.u32 %v919, 7
        %v921 = vsub.s32 %v918, %v920
        %v922 = vrot.slane %v914, %v921
        %v924 = vunpack.c.l.s4 1934713408
        %v925 = vunpack.c.0.s8 %v924
        %v926 = vlaneseq
        %v927 = vshrl.u32 %v926, 7
        %v928 = vsub.s32 %v925, %v927
        %v929 = vrot.slane %v915, %v928
        %v930 = vcombine.low %v874, %v906
        %v931 = vcombine.high %v874, %v906
        %v932 = vcombine.low %v881, %v913
        %v933 = vcombine.high %v881, %v913
        %v934 = vcombine.low %v890, %v922
        %v935 = vcombine.high %v890, %v922
        %v936 = vcombine.low %v897, %v929
        %v937 = vcombine.high %v897, %v929
        %939 = vrot.lane.b32.xlu0 %v795, 16
        %v940 = vpop.permute.xlu0 %939
        %943 = vrot.lane.b32.xlu0 %v796, 32
        %v944 = vpop.permute.xlu0 %943
        %947 = vrot.lane.b32.xlu0 %v797, 48
        %v948 = vpop.permute.xlu0 %947
        %951 = vrot.lane.b32.xlu0 %v798, 64
        %v952 = vpop.permute.xlu0 %951
        %955 = vrot.lane.b32.xlu0 %v799, 80
        %v956 = vpop.permute.xlu0 %955
        %959 = vrot.lane.b32.xlu0 %v800, 96
        %v960 = vpop.permute.xlu0 %959
        %963 = vrot.lane.b32.xlu0 %v801, 112
        %v964 = vpop.permute.xlu0 %963
        %967 = vrot.lane.b32.xlu0 %v931, 16
        %v968 = vpop.permute.xlu0 %967
        %971 = vrot.lane.b32.xlu0 %v932, 32
        %v972 = vpop.permute.xlu0 %971
        %975 = vrot.lane.b32.xlu0 %v933, 48
        %v976 = vpop.permute.xlu0 %975
        %979 = vrot.lane.b32.xlu0 %v934, 64
        %v980 = vpop.permute.xlu0 %979
        %983 = vrot.lane.b32.xlu0 %v935, 80
        %v984 = vpop.permute.xlu0 %983
        %987 = vrot.lane.b32.xlu0 %v936, 96
        %v988 = vpop.permute.xlu0 %987
        %991 = vrot.lane.b32.xlu0 %v937, 112
        %v992 = vpop.permute.xlu0 %991
        %v994 = vsel %vm314, %v794, %v940
        %vm995 = vcmask 261120
        %v996 = vsel %vm995, %v994, %v944
        %vm997 = vcmask 392192
        %v998 = vsel %vm997, %v996, %v948
        %vm999 = vcmask 523264
        %v1000 = vsel %vm999, %v998, %v952
        %vm1001 = vcmask 654336
        %v1002 = vsel %vm1001, %v1000, %v956
        %vm1003 = vcmask 785408
        %v1004 = vsel %vm1003, %v1002, %v960
        %vm1005 = vcmask 916480
        %v1006 = vsel %vm1005, %v1004, %v964
        %v1007 = vsel %vm314, %v930, %v968
        %v1008 = vsel %vm995, %v1007, %v972
        %v1009 = vsel %vm997, %v1008, %v976
        %v1010 = vsel %vm999, %v1009, %v980
        %v1011 = vsel %vm1001, %v1010, %v984
        %v1012 = vsel %vm1003, %v1011, %v988
        %v1013 = vsel %vm1005, %v1012, %v992
        %1030 = vrot.lane.b32.xlu0 %v650, 127
        %v1031 = vpop.permute.xlu0 %1030
        %1032 = vrot.lane.b32.xlu0 %v651, 127
        %v1033 = vpop.permute.xlu0 %1032
        %1034 = vrot.lane.b32.xlu0 %v652, 127
        %v1035 = vpop.permute.xlu0 %1034
        %1036 = vrot.lane.b32.xlu0 %v653, 127
        %v1037 = vpop.permute.xlu0 %1036
        %1038 = vrot.lane.b32.xlu0 %v654, 127
        %v1039 = vpop.permute.xlu0 %1038
        %1040 = vrot.lane.b32.xlu0 %v655, 127
        %v1041 = vpop.permute.xlu0 %1040
        %1042 = vrot.lane.b32.xlu0 %v656, 127
        %v1043 = vpop.permute.xlu0 %1042
        %1044 = vrot.lane.b32.xlu0 %v657, 127
        %v1045 = vpop.permute.xlu0 %1044
        %1046 = vrot.lane.b32.xlu0 %v658, 127
        %v1047 = vpop.permute.xlu0 %1046
        %1048 = vrot.lane.b32.xlu0 %v659, 127
        %v1049 = vpop.permute.xlu0 %1048
        %1050 = vrot.lane.b32.xlu0 %v660, 127
        %v1051 = vpop.permute.xlu0 %1050
        %1052 = vrot.lane.b32.xlu0 %v661, 127
        %v1053 = vpop.permute.xlu0 %1052
        %1054 = vrot.lane.b32.xlu0 %v662, 127
        %v1055 = vpop.permute.xlu0 %1054
        %1056 = vrot.lane.b32.xlu0 %v663, 127
        %v1057 = vpop.permute.xlu0 %1056
        %1058 = vrot.lane.b32.xlu0 %v664, 127
        %v1059 = vpop.permute.xlu0 %1058
        %1060 = vrot.lane.b32.xlu0 %v665, 127
        %v1061 = vpop.permute.xlu0 %1060
        %v1078 = vcombine.low %v1031, %v1039
        %v1079 = vcombine.high %v1031, %v1039
        %v1081 = vunpack.c.l.s4 1983009808
        %v1082 = vunpack.c.0.s8 %v1081
        %v1083 = vlaneseq
        %v1084 = vshrl.u32 %v1083, 7
        %v1085 = vsub.s32 %v1082, %v1084
        %v1086 = vrot.slane %v1078, %v1085
        %v1088 = vunpack.c.l.s4 1983009808
        %v1089 = vunpack.c.0.s8 %v1088
        %v1090 = vlaneseq
        %v1091 = vshrl.u32 %v1090, 7
        %v1092 = vsub.s32 %v1089, %v1091
        %v1093 = vrot.slane %v1079, %v1092
        %v1094 = vcombine.low %v1035, %v1043
        %v1095 = vcombine.high %v1035, %v1043
        %v1097 = vunpack.c.l.s4 1983009808
        %v1098 = vunpack.c.0.s8 %v1097
        %v1099 = vlaneseq
        %v1100 = vshrl.u32 %v1099, 7
        %v1101 = vsub.s32 %v1098, %v1100
        %v1102 = vrot.slane %v1094, %v1101
        %v1104 = vunpack.c.l.s4 1983009808
        %v1105 = vunpack.c.0.s8 %v1104
        %v1106 = vlaneseq
        %v1107 = vshrl.u32 %v1106, 7
        %v1108 = vsub.s32 %v1105, %v1107
        %v1109 = vrot.slane %v1095, %v1108
        %v1110 = vcombine.low %v1047, %v1055
        %v1111 = vcombine.high %v1047, %v1055
        %v1113 = vunpack.c.l.s4 1983009808
        %v1114 = vunpack.c.0.s8 %v1113
        %v1115 = vlaneseq
        %v1116 = vshrl.u32 %v1115, 7
        %v1117 = vsub.s32 %v1114, %v1116
        %v1118 = vrot.slane %v1110, %v1117
        %v1120 = vunpack.c.l.s4 1983009808
        %v1121 = vunpack.c.0.s8 %v1120
        %v1122 = vlaneseq
        %v1123 = vshrl.u32 %v1122, 7
        %v1124 = vsub.s32 %v1121, %v1123
        %v1125 = vrot.slane %v1111, %v1124
        %v1126 = vcombine.low %v1051, %v1059
        %v1127 = vcombine.high %v1051, %v1059
        %v1129 = vunpack.c.l.s4 1983009808
        %v1130 = vunpack.c.0.s8 %v1129
        %v1131 = vlaneseq
        %v1132 = vshrl.u32 %v1131, 7
        %v1133 = vsub.s32 %v1130, %v1132
        %v1134 = vrot.slane %v1126, %v1133
        %v1136 = vunpack.c.l.s4 1983009808
        %v1137 = vunpack.c.0.s8 %v1136
        %v1138 = vlaneseq
        %v1139 = vshrl.u32 %v1138, 7
        %v1140 = vsub.s32 %v1137, %v1139
        %v1141 = vrot.slane %v1127, %v1140
        %v1142 = vcombine.low %v1086, %v1102
        %v1143 = vcombine.high %v1086, %v1102
        %v1145 = vunpack.c.l.s4 1934713408
        %v1146 = vunpack.c.0.s8 %v1145
        %v1147 = vlaneseq
        %v1148 = vshrl.u32 %v1147, 7
        %v1149 = vsub.s32 %v1146, %v1148
        %v1150 = vrot.slane %v1142, %v1149
        %v1152 = vunpack.c.l.s4 1934713408
        %v1153 = vunpack.c.0.s8 %v1152
        %v1154 = vlaneseq
        %v1155 = vshrl.u32 %v1154, 7
        %v1156 = vsub.s32 %v1153, %v1155
        %v1157 = vrot.slane %v1143, %v1156
        %v1158 = vcombine.low %v1093, %v1109
        %v1159 = vcombine.high %v1093, %v1109
        %v1161 = vunpack.c.l.s4 1934713408
        %v1162 = vunpack.c.0.s8 %v1161
        %v1163 = vlaneseq
        %v1164 = vshrl.u32 %v1163, 7
        %v1165 = vsub.s32 %v1162, %v1164
        %v1166 = vrot.slane %v1158, %v1165
        %v1168 = vunpack.c.l.s4 1934713408
        %v1169 = vunpack.c.0.s8 %v1168
        %v1170 = vlaneseq
        %v1171 = vshrl.u32 %v1170, 7
        %v1172 = vsub.s32 %v1169, %v1171
        %v1173 = vrot.slane %v1159, %v1172
        %v1174 = vcombine.low %v1118, %v1134
        %v1175 = vcombine.high %v1118, %v1134
        %v1177 = vunpack.c.l.s4 1934713408
        %v1178 = vunpack.c.0.s8 %v1177
        %v1179 = vlaneseq
        %v1180 = vshrl.u32 %v1179, 7
        %v1181 = vsub.s32 %v1178, %v1180
        %v1182 = vrot.slane %v1174, %v1181
        %v1184 = vunpack.c.l.s4 1934713408
        %v1185 = vunpack.c.0.s8 %v1184
        %v1186 = vlaneseq
        %v1187 = vshrl.u32 %v1186, 7
        %v1188 = vsub.s32 %v1185, %v1187
        %v1189 = vrot.slane %v1175, %v1188
        %v1190 = vcombine.low %v1125, %v1141
        %v1191 = vcombine.high %v1125, %v1141
        %v1193 = vunpack.c.l.s4 1934713408
        %v1194 = vunpack.c.0.s8 %v1193
        %v1195 = vlaneseq
        %v1196 = vshrl.u32 %v1195, 7
        %v1197 = vsub.s32 %v1194, %v1196
        %v1198 = vrot.slane %v1190, %v1197
        %v1200 = vunpack.c.l.s4 1934713408
        %v1201 = vunpack.c.0.s8 %v1200
        %v1202 = vlaneseq
        %v1203 = vshrl.u32 %v1202, 7
        %v1204 = vsub.s32 %v1201, %v1203
        %v1205 = vrot.slane %v1191, %v1204
        %v1206 = vcombine.low %v1150, %v1182
        %v1207 = vcombine.high %v1150, %v1182
        %v1208 = vcombine.low %v1157, %v1189
        %v1209 = vcombine.high %v1157, %v1189
        %v1210 = vcombine.low %v1166, %v1198
        %v1211 = vcombine.high %v1166, %v1198
        %v1212 = vcombine.low %v1173, %v1205
        %v1213 = vcombine.high %v1173, %v1205
        %v1214 = vcombine.low %v1033, %v1041
        %v1215 = vcombine.high %v1033, %v1041
        %v1217 = vunpack.c.l.s4 1983009808
        %v1218 = vunpack.c.0.s8 %v1217
        %v1219 = vlaneseq
        %v1220 = vshrl.u32 %v1219, 7
        %v1221 = vsub.s32 %v1218, %v1220
        %v1222 = vrot.slane %v1214, %v1221
        %v1224 = vunpack.c.l.s4 1983009808
        %v1225 = vunpack.c.0.s8 %v1224
        %v1226 = vlaneseq
        %v1227 = vshrl.u32 %v1226, 7
        %v1228 = vsub.s32 %v1225, %v1227
        %v1229 = vrot.slane %v1215, %v1228
        %v1230 = vcombine.low %v1037, %v1045
        %v1231 = vcombine.high %v1037, %v1045
        %v1233 = vunpack.c.l.s4 1983009808
        %v1234 = vunpack.c.0.s8 %v1233
        %v1235 = vlaneseq
        %v1236 = vshrl.u32 %v1235, 7
        %v1237 = vsub.s32 %v1234, %v1236
        %v1238 = vrot.slane %v1230, %v1237
        %v1240 = vunpack.c.l.s4 1983009808
        %v1241 = vunpack.c.0.s8 %v1240
        %v1242 = vlaneseq
        %v1243 = vshrl.u32 %v1242, 7
        %v1244 = vsub.s32 %v1241, %v1243
        %v1245 = vrot.slane %v1231, %v1244
        %v1246 = vcombine.low %v1049, %v1057
        %v1247 = vcombine.high %v1049, %v1057
        %v1249 = vunpack.c.l.s4 1983009808
        %v1250 = vunpack.c.0.s8 %v1249
        %v1251 = vlaneseq
        %v1252 = vshrl.u32 %v1251, 7
        %v1253 = vsub.s32 %v1250, %v1252
        %v1254 = vrot.slane %v1246, %v1253
        %v1256 = vunpack.c.l.s4 1983009808
        %v1257 = vunpack.c.0.s8 %v1256
        %v1258 = vlaneseq
        %v1259 = vshrl.u32 %v1258, 7
        %v1260 = vsub.s32 %v1257, %v1259
        %v1261 = vrot.slane %v1247, %v1260
        %v1262 = vcombine.low %v1053, %v1061
        %v1263 = vcombine.high %v1053, %v1061
        %v1265 = vunpack.c.l.s4 1983009808
        %v1266 = vunpack.c.0.s8 %v1265
        %v1267 = vlaneseq
        %v1268 = vshrl.u32 %v1267, 7
        %v1269 = vsub.s32 %v1266, %v1268
        %v1270 = vrot.slane %v1262, %v1269
        %v1272 = vunpack.c.l.s4 1983009808
        %v1273 = vunpack.c.0.s8 %v1272
        %v1274 = vlaneseq
        %v1275 = vshrl.u32 %v1274, 7
        %v1276 = vsub.s32 %v1273, %v1275
        %v1277 = vrot.slane %v1263, %v1276
        %v1278 = vcombine.low %v1222, %v1238
        %v1279 = vcombine.high %v1222, %v1238
        %v1281 = vunpack.c.l.s4 1934713408
        %v1282 = vunpack.c.0.s8 %v1281
        %v1283 = vlaneseq
        %v1284 = vshrl.u32 %v1283, 7
        %v1285 = vsub.s32 %v1282, %v1284
        %v1286 = vrot.slane %v1278, %v1285
        %v1288 = vunpack.c.l.s4 1934713408
        %v1289 = vunpack.c.0.s8 %v1288
        %v1290 = vlaneseq
        %v1291 = vshrl.u32 %v1290, 7
        %v1292 = vsub.s32 %v1289, %v1291
        %v1293 = vrot.slane %v1279, %v1292
        %v1294 = vcombine.low %v1229, %v1245
        %v1295 = vcombine.high %v1229, %v1245
        %v1297 = vunpack.c.l.s4 1934713408
        %v1298 = vunpack.c.0.s8 %v1297
        %v1299 = vlaneseq
        %v1300 = vshrl.u32 %v1299, 7
        %v1301 = vsub.s32 %v1298, %v1300
        %v1302 = vrot.slane %v1294, %v1301
        %v1304 = vunpack.c.l.s4 1934713408
        %v1305 = vunpack.c.0.s8 %v1304
        %v1306 = vlaneseq
        %v1307 = vshrl.u32 %v1306, 7
        %v1308 = vsub.s32 %v1305, %v1307
        %v1309 = vrot.slane %v1295, %v1308
        %v1310 = vcombine.low %v1254, %v1270
        %v1311 = vcombine.high %v1254, %v1270
        %v1313 = vunpack.c.l.s4 1934713408
        %v1314 = vunpack.c.0.s8 %v1313
        %v1315 = vlaneseq
        %v1316 = vshrl.u32 %v1315, 7
        %v1317 = vsub.s32 %v1314, %v1316
        %v1318 = vrot.slane %v1310, %v1317
        %v1320 = vunpack.c.l.s4 1934713408
        %v1321 = vunpack.c.0.s8 %v1320
        %v1322 = vlaneseq
        %v1323 = vshrl.u32 %v1322, 7
        %v1324 = vsub.s32 %v1321, %v1323
        %v1325 = vrot.slane %v1311, %v1324
        %v1326 = vcombine.low %v1261, %v1277
        %v1327 = vcombine.high %v1261, %v1277
        %v1329 = vunpack.c.l.s4 1934713408
        %v1330 = vunpack.c.0.s8 %v1329
        %v1331 = vlaneseq
        %v1332 = vshrl.u32 %v1331, 7
        %v1333 = vsub.s32 %v1330, %v1332
        %v1334 = vrot.slane %v1326, %v1333
        %v1336 = vunpack.c.l.s4 1934713408
        %v1337 = vunpack.c.0.s8 %v1336
        %v1338 = vlaneseq
        %v1339 = vshrl.u32 %v1338, 7
        %v1340 = vsub.s32 %v1337, %v1339
        %v1341 = vrot.slane %v1327, %v1340
        %v1342 = vcombine.low %v1286, %v1318
        %v1343 = vcombine.high %v1286, %v1318
        %v1344 = vcombine.low %v1293, %v1325
        %v1345 = vcombine.high %v1293, %v1325
        %v1346 = vcombine.low %v1302, %v1334
        %v1347 = vcombine.high %v1302, %v1334
        %v1348 = vcombine.low %v1309, %v1341
        %v1349 = vcombine.high %v1309, %v1341
        %1351 = vrot.lane.b32.xlu0 %v1207, 16
        %v1352 = vpop.permute.xlu0 %1351
        %1355 = vrot.lane.b32.xlu0 %v1208, 32
        %v1356 = vpop.permute.xlu0 %1355
        %1359 = vrot.lane.b32.xlu0 %v1209, 48
        %v1360 = vpop.permute.xlu0 %1359
        %1363 = vrot.lane.b32.xlu0 %v1210, 64
        %v1364 = vpop.permute.xlu0 %1363
        %1367 = vrot.lane.b32.xlu0 %v1211, 80
        %v1368 = vpop.permute.xlu0 %1367
        %1371 = vrot.lane.b32.xlu0 %v1212, 96
        %v1372 = vpop.permute.xlu0 %1371
        %1375 = vrot.lane.b32.xlu0 %v1213, 112
        %v1376 = vpop.permute.xlu0 %1375
        %1379 = vrot.lane.b32.xlu0 %v1343, 16
        %v1380 = vpop.permute.xlu0 %1379
        %1383 = vrot.lane.b32.xlu0 %v1344, 32
        %v1384 = vpop.permute.xlu0 %1383
        %1387 = vrot.lane.b32.xlu0 %v1345, 48
        %v1388 = vpop.permute.xlu0 %1387
        %1391 = vrot.lane.b32.xlu0 %v1346, 64
        %v1392 = vpop.permute.xlu0 %1391
        %1395 = vrot.lane.b32.xlu0 %v1347, 80
        %v1396 = vpop.permute.xlu0 %1395
        %1399 = vrot.lane.b32.xlu0 %v1348, 96
        %v1400 = vpop.permute.xlu0 %1399
        %1403 = vrot.lane.b32.xlu0 %v1349, 112
        %v1404 = vpop.permute.xlu0 %1403
        %v1406 = vsel %vm314, %v1206, %v1352
        %v1407 = vsel %vm995, %v1406, %v1356
        %v1408 = vsel %vm997, %v1407, %v1360
        %v1409 = vsel %vm999, %v1408, %v1364
        %v1410 = vsel %vm1001, %v1409, %v1368
        %v1411 = vsel %vm1003, %v1410, %v1372
        %v1412 = vsel %vm1005, %v1411, %v1376
        %v1413 = vsel %vm314, %v1342, %v1380
        %v1414 = vsel %vm995, %v1413, %v1384
        %v1415 = vsel %vm997, %v1414, %v1388
        %v1416 = vsel %vm999, %v1415, %v1392
        %v1417 = vsel %vm1001, %v1416, %v1396
        %v1418 = vsel %vm1003, %v1417, %v1400
        %v1419 = vsel %vm1005, %v1418, %v1404
        %v1420 = vpack.c.bf16 %v1412, %v1006
        %v1421 = vpack.c.bf16 %v1419, %v1013
        %v1424 = vunpack.c.l.b16 %v1420
        %v1425 = vunpack.c.l.b16 %v1421
        %v1426 = vunpack.c.h.b16 %v1420
        %v1427 = vunpack.c.h.b16 %v1421
        %v1428 = vpack.c.b16 %v1425, %v1424
        %v1429 = vpack.c.b16 %v1427, %v1426
        %1432 = vst [vmem:[#allocation3] sm:$0xff] %v1428
        %1433 = vst [vmem:[#allocation3 + $0x8] sm:$0xff] %v1429
        %v1434 = vld [vmem:[#allocation2] sm:$0xff]
        %v1435 = vld [vmem:[#allocation2 + $0x8] sm:$0xff]
        %v1436 = vld [vmem:[#allocation2 + $0x18] sm:$0xff]
        %v1437 = vld [vmem:[#allocation2 + $0x20] sm:$0xff]
        %v1438 = vld [vmem:[#allocation2 + $0x30] sm:$0xff]
        %v1439 = vld [vmem:[#allocation2 + $0x38] sm:$0xff]
        %v1440 = vld [vmem:[#allocation2 + $0x48] sm:$0xff]
        %v1441 = vld [vmem:[#allocation2 + $0x50] sm:$0xff]
        %v1442 = vld [vmem:[#allocation2 + $0x60] sm:$0xff]
        %v1443 = vld [vmem:[#allocation2 + $0x68] sm:$0xff]
        %v1444 = vld [vmem:[#allocation2 + $0x78] sm:$0xff]
        %v1445 = vld [vmem:[#allocation2 + $0x80] sm:$0xff]
        %v1446 = vld [vmem:[#allocation2 + $0x90] sm:$0xff]
        %v1447 = vld [vmem:[#allocation2 + $0x98] sm:$0xff]
        %v1448 = vld [vmem:[#allocation2 + $0xa8] sm:$0xff]
        %v1449 = vld [vmem:[#allocation2 + $0xb0] sm:$0xff]
        %1466 = vrot.lane.b32.xlu0 %v1434, 126
        %v1467 = vpop.permute.xlu0 %1466
        %1468 = vrot.lane.b32.xlu0 %v1435, 126
        %v1469 = vpop.permute.xlu0 %1468
        %1470 = vrot.lane.b32.xlu0 %v1436, 126
        %v1471 = vpop.permute.xlu0 %1470
        %1472 = vrot.lane.b32.xlu0 %v1437, 126
        %v1473 = vpop.permute.xlu0 %1472
        %1474 = vrot.lane.b32.xlu0 %v1438, 126
        %v1475 = vpop.permute.xlu0 %1474
        %1476 = vrot.lane.b32.xlu0 %v1439, 126
        %v1477 = vpop.permute.xlu0 %1476
        %1478 = vrot.lane.b32.xlu0 %v1440, 126
        %v1479 = vpop.permute.xlu0 %1478
        %1480 = vrot.lane.b32.xlu0 %v1441, 126
        %v1481 = vpop.permute.xlu0 %1480
        %1482 = vrot.lane.b32.xlu0 %v1442, 126
        %v1483 = vpop.permute.xlu0 %1482
        %1484 = vrot.lane.b32.xlu0 %v1443, 126
        %v1485 = vpop.permute.xlu0 %1484
        %1486 = vrot.lane.b32.xlu0 %v1444, 126
        %v1487 = vpop.permute.xlu0 %1486
        %1488 = vrot.lane.b32.xlu0 %v1445, 126
        %v1489 = vpop.permute.xlu0 %1488
        %1490 = vrot.lane.b32.xlu0 %v1446, 126
        %v1491 = vpop.permute.xlu0 %1490
        %1492 = vrot.lane.b32.xlu0 %v1447, 126
        %v1493 = vpop.permute.xlu0 %1492
        %1494 = vrot.lane.b32.xlu0 %v1448, 126
        %v1495 = vpop.permute.xlu0 %1494
        %1496 = vrot.lane.b32.xlu0 %v1449, 126
        %v1497 = vpop.permute.xlu0 %1496
        %v1514 = vcombine.low %v1467, %v1475
        %v1515 = vcombine.high %v1467, %v1475
        %v1517 = vunpack.c.l.s4 1983009808
        %v1518 = vunpack.c.0.s8 %v1517
        %v1519 = vlaneseq
        %v1520 = vshrl.u32 %v1519, 7
        %v1521 = vsub.s32 %v1518, %v1520
        %v1522 = vrot.slane %v1514, %v1521
        %v1524 = vunpack.c.l.s4 1983009808
        %v1525 = vunpack.c.0.s8 %v1524
        %v1526 = vlaneseq
        %v1527 = vshrl.u32 %v1526, 7
        %v1528 = vsub.s32 %v1525, %v1527
        %v1529 = vrot.slane %v1515, %v1528
        %v1530 = vcombine.low %v1471, %v1479
        %v1531 = vcombine.high %v1471, %v1479
        %v1533 = vunpack.c.l.s4 1983009808
        %v1534 = vunpack.c.0.s8 %v1533
        %v1535 = vlaneseq
        %v1536 = vshrl.u32 %v1535, 7
        %v1537 = vsub.s32 %v1534, %v1536
        %v1538 = vrot.slane %v1530, %v1537
        %v1540 = vunpack.c.l.s4 1983009808
        %v1541 = vunpack.c.0.s8 %v1540
        %v1542 = vlaneseq
        %v1543 = vshrl.u32 %v1542, 7
        %v1544 = vsub.s32 %v1541, %v1543
        %v1545 = vrot.slane %v1531, %v1544
        %v1546 = vcombine.low %v1483, %v1491
        %v1547 = vcombine.high %v1483, %v1491
        %v1549 = vunpack.c.l.s4 1983009808
        %v1550 = vunpack.c.0.s8 %v1549
        %v1551 = vlaneseq
        %v1552 = vshrl.u32 %v1551, 7
        %v1553 = vsub.s32 %v1550, %v1552
        %v1554 = vrot.slane %v1546, %v1553
        %v1556 = vunpack.c.l.s4 1983009808
        %v1557 = vunpack.c.0.s8 %v1556
        %v1558 = vlaneseq
        %v1559 = vshrl.u32 %v1558, 7
        %v1560 = vsub.s32 %v1557, %v1559
        %v1561 = vrot.slane %v1547, %v1560
        %v1562 = vcombine.low %v1487, %v1495
        %v1563 = vcombine.high %v1487, %v1495
        %v1565 = vunpack.c.l.s4 1983009808
        %v1566 = vunpack.c.0.s8 %v1565
        %v1567 = vlaneseq
        %v1568 = vshrl.u32 %v1567, 7
        %v1569 = vsub.s32 %v1566, %v1568
        %v1570 = vrot.slane %v1562, %v1569
        %v1572 = vunpack.c.l.s4 1983009808
        %v1573 = vunpack.c.0.s8 %v1572
        %v1574 = vlaneseq
        %v1575 = vshrl.u32 %v1574, 7
        %v1576 = vsub.s32 %v1573, %v1575
        %v1577 = vrot.slane %v1563, %v1576
        %v1578 = vcombine.low %v1522, %v1538
        %v1579 = vcombine.high %v1522, %v1538
        %v1581 = vunpack.c.l.s4 1934713408
        %v1582 = vunpack.c.0.s8 %v1581
        %v1583 = vlaneseq
        %v1584 = vshrl.u32 %v1583, 7
        %v1585 = vsub.s32 %v1582, %v1584
        %v1586 = vrot.slane %v1578, %v1585
        %v1588 = vunpack.c.l.s4 1934713408
        %v1589 = vunpack.c.0.s8 %v1588
        %v1590 = vlaneseq
        %v1591 = vshrl.u32 %v1590, 7
        %v1592 = vsub.s32 %v1589, %v1591
        %v1593 = vrot.slane %v1579, %v1592
        %v1594 = vcombine.low %v1529, %v1545
        %v1595 = vcombine.high %v1529, %v1545
        %v1597 = vunpack.c.l.s4 1934713408
        %v1598 = vunpack.c.0.s8 %v1597
        %v1599 = vlaneseq
        %v1600 = vshrl.u32 %v1599, 7
        %v1601 = vsub.s32 %v1598, %v1600
        %v1602 = vrot.slane %v1594, %v1601
        %v1604 = vunpack.c.l.s4 1934713408
        %v1605 = vunpack.c.0.s8 %v1604
        %v1606 = vlaneseq
        %v1607 = vshrl.u32 %v1606, 7
        %v1608 = vsub.s32 %v1605, %v1607
        %v1609 = vrot.slane %v1595, %v1608
        %v1610 = vcombine.low %v1554, %v1570
        %v1611 = vcombine.high %v1554, %v1570
        %v1613 = vunpack.c.l.s4 1934713408
        %v1614 = vunpack.c.0.s8 %v1613
        %v1615 = vlaneseq
        %v1616 = vshrl.u32 %v1615, 7
        %v1617 = vsub.s32 %v1614, %v1616
        %v1618 = vrot.slane %v1610, %v1617
        %v1620 = vunpack.c.l.s4 1934713408
        %v1621 = vunpack.c.0.s8 %v1620
        %v1622 = vlaneseq
        %v1623 = vshrl.u32 %v1622, 7
        %v1624 = vsub.s32 %v1621, %v1623
        %v1625 = vrot.slane %v1611, %v1624
        %v1626 = vcombine.low %v1561, %v1577
        %v1627 = vcombine.high %v1561, %v1577
        %v1629 = vunpack.c.l.s4 1934713408
        %v1630 = vunpack.c.0.s8 %v1629
        %v1631 = vlaneseq
        %v1632 = vshrl.u32 %v1631, 7
        %v1633 = vsub.s32 %v1630, %v1632
        %v1634 = vrot.slane %v1626, %v1633
        %v1636 = vunpack.c.l.s4 1934713408
        %v1637 = vunpack.c.0.s8 %v1636
        %v1638 = vlaneseq
        %v1639 = vshrl.u32 %v1638, 7
        %v1640 = vsub.s32 %v1637, %v1639
        %v1641 = vrot.slane %v1627, %v1640
        %v1642 = vcombine.low %v1586, %v1618
        %v1643 = vcombine.high %v1586, %v1618
        %v1644 = vcombine.low %v1593, %v1625
        %v1645 = vcombine.high %v1593, %v1625
        %v1646 = vcombine.low %v1602, %v1634
        %v1647 = vcombine.high %v1602, %v1634
        %v1648 = vcombine.low %v1609, %v1641
        %v1649 = vcombine.high %v1609, %v1641
        %v1650 = vcombine.low %v1469, %v1477
        %v1651 = vcombine.high %v1469, %v1477
        %v1653 = vunpack.c.l.s4 1983009808
        %v1654 = vunpack.c.0.s8 %v1653
        %v1655 = vlaneseq
        %v1656 = vshrl.u32 %v1655, 7
        %v1657 = vsub.s32 %v1654, %v1656
        %v1658 = vrot.slane %v1650, %v1657
        %v1660 = vunpack.c.l.s4 1983009808
        %v1661 = vunpack.c.0.s8 %v1660
        %v1662 = vlaneseq
        %v1663 = vshrl.u32 %v1662, 7
        %v1664 = vsub.s32 %v1661, %v1663
        %v1665 = vrot.slane %v1651, %v1664
        %v1666 = vcombine.low %v1473, %v1481
        %v1667 = vcombine.high %v1473, %v1481
        %v1669 = vunpack.c.l.s4 1983009808
        %v1670 = vunpack.c.0.s8 %v1669
        %v1671 = vlaneseq
        %v1672 = vshrl.u32 %v1671, 7
        %v1673 = vsub.s32 %v1670, %v1672
        %v1674 = vrot.slane %v1666, %v1673
        %v1676 = vunpack.c.l.s4 1983009808
        %v1677 = vunpack.c.0.s8 %v1676
        %v1678 = vlaneseq
        %v1679 = vshrl.u32 %v1678, 7
        %v1680 = vsub.s32 %v1677, %v1679
        %v1681 = vrot.slane %v1667, %v1680
        %v1682 = vcombine.low %v1485, %v1493
        %v1683 = vcombine.high %v1485, %v1493
        %v1685 = vunpack.c.l.s4 1983009808
        %v1686 = vunpack.c.0.s8 %v1685
        %v1687 = vlaneseq
        %v1688 = vshrl.u32 %v1687, 7
        %v1689 = vsub.s32 %v1686, %v1688
        %v1690 = vrot.slane %v1682, %v1689
        %v1692 = vunpack.c.l.s4 1983009808
        %v1693 = vunpack.c.0.s8 %v1692
        %v1694 = vlaneseq
        %v1695 = vshrl.u32 %v1694, 7
        %v1696 = vsub.s32 %v1693, %v1695
        %v1697 = vrot.slane %v1683, %v1696
        %v1698 = vcombine.low %v1489, %v1497
        %v1699 = vcombine.high %v1489, %v1497
        %v1701 = vunpack.c.l.s4 1983009808
        %v1702 = vunpack.c.0.s8 %v1701
        %v1703 = vlaneseq
        %v1704 = vshrl.u32 %v1703, 7
        %v1705 = vsub.s32 %v1702, %v1704
        %v1706 = vrot.slane %v1698, %v1705
        %v1708 = vunpack.c.l.s4 1983009808
        %v1709 = vunpack.c.0.s8 %v1708
        %v1710 = vlaneseq
        %v1711 = vshrl.u32 %v1710, 7
        %v1712 = vsub.s32 %v1709, %v1711
        %v1713 = vrot.slane %v1699, %v1712
        %v1714 = vcombine.low %v1658, %v1674
        %v1715 = vcombine.high %v1658, %v1674
        %v1717 = vunpack.c.l.s4 1934713408
        %v1718 = vunpack.c.0.s8 %v1717
        %v1719 = vlaneseq
        %v1720 = vshrl.u32 %v1719, 7
        %v1721 = vsub.s32 %v1718, %v1720
        %v1722 = vrot.slane %v1714, %v1721
        %v1724 = vunpack.c.l.s4 1934713408
        %v1725 = vunpack.c.0.s8 %v1724
        %v1726 = vlaneseq
        %v1727 = vshrl.u32 %v1726, 7
        %v1728 = vsub.s32 %v1725, %v1727
        %v1729 = vrot.slane %v1715, %v1728
        %v1730 = vcombine.low %v1665, %v1681
        %v1731 = vcombine.high %v1665, %v1681
        %v1733 = vunpack.c.l.s4 1934713408
        %v1734 = vunpack.c.0.s8 %v1733
        %v1735 = vlaneseq
        %v1736 = vshrl.u32 %v1735, 7
        %v1737 = vsub.s32 %v1734, %v1736
        %v1738 = vrot.slane %v1730, %v1737
        %v1740 = vunpack.c.l.s4 1934713408
        %v1741 = vunpack.c.0.s8 %v1740
        %v1742 = vlaneseq
        %v1743 = vshrl.u32 %v1742, 7
        %v1744 = vsub.s32 %v1741, %v1743
        %v1745 = vrot.slane %v1731, %v1744
        %v1746 = vcombine.low %v1690, %v1706
        %v1747 = vcombine.high %v1690, %v1706
        %v1749 = vunpack.c.l.s4 1934713408
        %v1750 = vunpack.c.0.s8 %v1749
        %v1751 = vlaneseq
        %v1752 = vshrl.u32 %v1751, 7
        %v1753 = vsub.s32 %v1750, %v1752
        %v1754 = vrot.slane %v1746, %v1753
        %v1756 = vunpack.c.l.s4 1934713408
        %v1757 = vunpack.c.0.s8 %v1756
        %v1758 = vlaneseq
        %v1759 = vshrl.u32 %v1758, 7
        %v1760 = vsub.s32 %v1757, %v1759
        %v1761 = vrot.slane %v1747, %v1760
        %v1762 = vcombine.low %v1697, %v1713
        %v1763 = vcombine.high %v1697, %v1713
        %v1765 = vunpack.c.l.s4 1934713408
        %v1766 = vunpack.c.0.s8 %v1765
        %v1767 = vlaneseq
        %v1768 = vshrl.u32 %v1767, 7
        %v1769 = vsub.s32 %v1766, %v1768
        %v1770 = vrot.slane %v1762, %v1769
        %v1772 = vunpack.c.l.s4 1934713408
        %v1773 = vunpack.c.0.s8 %v1772
        %v1774 = vlaneseq
        %v1775 = vshrl.u32 %v1774, 7
        %v1776 = vsub.s32 %v1773, %v1775
        %v1777 = vrot.slane %v1763, %v1776
        %v1778 = vcombine.low %v1722, %v1754
        %v1779 = vcombine.high %v1722, %v1754
        %v1780 = vcombine.low %v1729, %v1761
        %v1781 = vcombine.high %v1729, %v1761
        %v1782 = vcombine.low %v1738, %v1770
        %v1783 = vcombine.high %v1738, %v1770
        %v1784 = vcombine.low %v1745, %v1777
        %v1785 = vcombine.high %v1745, %v1777
        %1787 = vrot.lane.b32.xlu0 %v1643, 16
        %v1788 = vpop.permute.xlu0 %1787
        %1791 = vrot.lane.b32.xlu0 %v1644, 32
        %v1792 = vpop.permute.xlu0 %1791
        %1795 = vrot.lane.b32.xlu0 %v1645, 48
        %v1796 = vpop.permute.xlu0 %1795
        %1799 = vrot.lane.b32.xlu0 %v1646, 64
        %v1800 = vpop.permute.xlu0 %1799
        %1803 = vrot.lane.b32.xlu0 %v1647, 80
        %v1804 = vpop.permute.xlu0 %1803
        %1807 = vrot.lane.b32.xlu0 %v1648, 96
        %v1808 = vpop.permute.xlu0 %1807
        %1811 = vrot.lane.b32.xlu0 %v1649, 112
        %v1812 = vpop.permute.xlu0 %1811
        %1815 = vrot.lane.b32.xlu0 %v1779, 16
        %v1816 = vpop.permute.xlu0 %1815
        %1819 = vrot.lane.b32.xlu0 %v1780, 32
        %v1820 = vpop.permute.xlu0 %1819
        %1823 = vrot.lane.b32.xlu0 %v1781, 48
        %v1824 = vpop.permute.xlu0 %1823
        %1827 = vrot.lane.b32.xlu0 %v1782, 64
        %v1828 = vpop.permute.xlu0 %1827
        %1831 = vrot.lane.b32.xlu0 %v1783, 80
        %v1832 = vpop.permute.xlu0 %1831
        %1835 = vrot.lane.b32.xlu0 %v1784, 96
        %v1836 = vpop.permute.xlu0 %1835
        %1839 = vrot.lane.b32.xlu0 %v1785, 112
        %v1840 = vpop.permute.xlu0 %1839
        %v1842 = vsel %vm314, %v1642, %v1788
        %v1843 = vsel %vm995, %v1842, %v1792
        %v1844 = vsel %vm997, %v1843, %v1796
        %v1845 = vsel %vm999, %v1844, %v1800
        %v1846 = vsel %vm1001, %v1845, %v1804
        %v1847 = vsel %vm1003, %v1846, %v1808
        %v1848 = vsel %vm1005, %v1847, %v1812
        %v1849 = vsel %vm314, %v1778, %v1816
        %v1850 = vsel %vm995, %v1849, %v1820
        %v1851 = vsel %vm997, %v1850, %v1824
        %v1852 = vsel %vm999, %v1851, %v1828
        %v1853 = vsel %vm1001, %v1852, %v1832
        %v1854 = vsel %vm1003, %v1853, %v1836
        %v1855 = vsel %vm1005, %v1854, %v1840
        %1856 = vrot.lane.b32.xlu0 %v1434, 125
        %v1857 = vpop.permute.xlu0 %1856
        %1858 = vrot.lane.b32.xlu0 %v1435, 125
        %v1859 = vpop.permute.xlu0 %1858
        %1860 = vrot.lane.b32.xlu0 %v1436, 125
        %v1861 = vpop.permute.xlu0 %1860
        %1862 = vrot.lane.b32.xlu0 %v1437, 125
        %v1863 = vpop.permute.xlu0 %1862
        %1864 = vrot.lane.b32.xlu0 %v1438, 125
        %v1865 = vpop.permute.xlu0 %1864
        %1866 = vrot.lane.b32.xlu0 %v1439, 125
        %v1867 = vpop.permute.xlu0 %1866
        %1868 = vrot.lane.b32.xlu0 %v1440, 125
        %v1869 = vpop.permute.xlu0 %1868
        %1870 = vrot.lane.b32.xlu0 %v1441, 125
        %v1871 = vpop.permute.xlu0 %1870
        %1872 = vrot.lane.b32.xlu0 %v1442, 125
        %v1873 = vpop.permute.xlu0 %1872
        %1874 = vrot.lane.b32.xlu0 %v1443, 125
        %v1875 = vpop.permute.xlu0 %1874
        %1876 = vrot.lane.b32.xlu0 %v1444, 125
        %v1877 = vpop.permute.xlu0 %1876
        %1878 = vrot.lane.b32.xlu0 %v1445, 125
        %v1879 = vpop.permute.xlu0 %1878
        %1880 = vrot.lane.b32.xlu0 %v1446, 125
        %v1881 = vpop.permute.xlu0 %1880
        %1882 = vrot.lane.b32.xlu0 %v1447, 125
        %v1883 = vpop.permute.xlu0 %1882
        %1884 = vrot.lane.b32.xlu0 %v1448, 125
        %v1885 = vpop.permute.xlu0 %1884
        %1886 = vrot.lane.b32.xlu0 %v1449, 125
        %v1887 = vpop.permute.xlu0 %1886
        %v1904 = vcombine.low %v1857, %v1865
        %v1905 = vcombine.high %v1857, %v1865
        %v1907 = vunpack.c.l.s4 1983009808
        %v1908 = vunpack.c.0.s8 %v1907
        %v1909 = vlaneseq
        %v1910 = vshrl.u32 %v1909, 7
        %v1911 = vsub.s32 %v1908, %v1910
        %v1912 = vrot.slane %v1904, %v1911
        %v1914 = vunpack.c.l.s4 1983009808
        %v1915 = vunpack.c.0.s8 %v1914
        %v1916 = vlaneseq
        %v1917 = vshrl.u32 %v1916, 7
        %v1918 = vsub.s32 %v1915, %v1917
        %v1919 = vrot.slane %v1905, %v1918
        %v1920 = vcombine.low %v1861, %v1869
        %v1921 = vcombine.high %v1861, %v1869
        %v1923 = vunpack.c.l.s4 1983009808
        %v1924 = vunpack.c.0.s8 %v1923
        %v1925 = vlaneseq
        %v1926 = vshrl.u32 %v1925, 7
        %v1927 = vsub.s32 %v1924, %v1926
        %v1928 = vrot.slane %v1920, %v1927
        %v1930 = vunpack.c.l.s4 1983009808
        %v1931 = vunpack.c.0.s8 %v1930
        %v1932 = vlaneseq
        %v1933 = vshrl.u32 %v1932, 7
        %v1934 = vsub.s32 %v1931, %v1933
        %v1935 = vrot.slane %v1921, %v1934
        %v1936 = vcombine.low %v1873, %v1881
        %v1937 = vcombine.high %v1873, %v1881
        %v1939 = vunpack.c.l.s4 1983009808
        %v1940 = vunpack.c.0.s8 %v1939
        %v1941 = vlaneseq
        %v1942 = vshrl.u32 %v1941, 7
        %v1943 = vsub.s32 %v1940, %v1942
        %v1944 = vrot.slane %v1936, %v1943
        %v1946 = vunpack.c.l.s4 1983009808
        %v1947 = vunpack.c.0.s8 %v1946
        %v1948 = vlaneseq
        %v1949 = vshrl.u32 %v1948, 7
        %v1950 = vsub.s32 %v1947, %v1949
        %v1951 = vrot.slane %v1937, %v1950
        %v1952 = vcombine.low %v1877, %v1885
        %v1953 = vcombine.high %v1877, %v1885
        %v1955 = vunpack.c.l.s4 1983009808
        %v1956 = vunpack.c.0.s8 %v1955
        %v1957 = vlaneseq
        %v1958 = vshrl.u32 %v1957, 7
        %v1959 = vsub.s32 %v1956, %v1958
        %v1960 = vrot.slane %v1952, %v1959
        %v1962 = vunpack.c.l.s4 1983009808
        %v1963 = vunpack.c.0.s8 %v1962
        %v1964 = vlaneseq
        %v1965 = vshrl.u32 %v1964, 7
        %v1966 = vsub.s32 %v1963, %v1965
        %v1967 = vrot.slane %v1953, %v1966
        %v1968 = vcombine.low %v1912, %v1928
        %v1969 = vcombine.high %v1912, %v1928
        %v1971 = vunpack.c.l.s4 1934713408
        %v1972 = vunpack.c.0.s8 %v1971
        %v1973 = vlaneseq
        %v1974 = vshrl.u32 %v1973, 7
        %v1975 = vsub.s32 %v1972, %v1974
        %v1976 = vrot.slane %v1968, %v1975
        %v1978 = vunpack.c.l.s4 1934713408
        %v1979 = vunpack.c.0.s8 %v1978
        %v1980 = vlaneseq
        %v1981 = vshrl.u32 %v1980, 7
        %v1982 = vsub.s32 %v1979, %v1981
        %v1983 = vrot.slane %v1969, %v1982
        %v1984 = vcombine.low %v1919, %v1935
        %v1985 = vcombine.high %v1919, %v1935
        %v1987 = vunpack.c.l.s4 1934713408
        %v1988 = vunpack.c.0.s8 %v1987
        %v1989 = vlaneseq
        %v1990 = vshrl.u32 %v1989, 7
        %v1991 = vsub.s32 %v1988, %v1990
        %v1992 = vrot.slane %v1984, %v1991
        %v1994 = vunpack.c.l.s4 1934713408
        %v1995 = vunpack.c.0.s8 %v1994
        %v1996 = vlaneseq
        %v1997 = vshrl.u32 %v1996, 7
        %v1998 = vsub.s32 %v1995, %v1997
        %v1999 = vrot.slane %v1985, %v1998
        %v2000 = vcombine.low %v1944, %v1960
        %v2001 = vcombine.high %v1944, %v1960
        %v2003 = vunpack.c.l.s4 1934713408
        %v2004 = vunpack.c.0.s8 %v2003
        %v2005 = vlaneseq
        %v2006 = vshrl.u32 %v2005, 7
        %v2007 = vsub.s32 %v2004, %v2006
        %v2008 = vrot.slane %v2000, %v2007
        %v2010 = vunpack.c.l.s4 1934713408
        %v2011 = vunpack.c.0.s8 %v2010
        %v2012 = vlaneseq
        %v2013 = vshrl.u32 %v2012, 7
        %v2014 = vsub.s32 %v2011, %v2013
        %v2015 = vrot.slane %v2001, %v2014
        %v2016 = vcombine.low %v1951, %v1967
        %v2017 = vcombine.high %v1951, %v1967
        %v2019 = vunpack.c.l.s4 1934713408
        %v2020 = vunpack.c.0.s8 %v2019
        %v2021 = vlaneseq
        %v2022 = vshrl.u32 %v2021, 7
        %v2023 = vsub.s32 %v2020, %v2022
        %v2024 = vrot.slane %v2016, %v2023
        %v2026 = vunpack.c.l.s4 1934713408
        %v2027 = vunpack.c.0.s8 %v2026
        %v2028 = vlaneseq
        %v2029 = vshrl.u32 %v2028, 7
        %v2030 = vsub.s32 %v2027, %v2029
        %v2031 = vrot.slane %v2017, %v2030
        %v2032 = vcombine.low %v1976, %v2008
        %v2033 = vcombine.high %v1976, %v2008
        %v2034 = vcombine.low %v1983, %v2015
        %v2035 = vcombine.high %v1983, %v2015
        %v2036 = vcombine.low %v1992, %v2024
        %v2037 = vcombine.high %v1992, %v2024
        %v2038 = vcombine.low %v1999, %v2031
        %v2039 = vcombine.high %v1999, %v2031
        %v2040 = vcombine.low %v1859, %v1867
        %v2041 = vcombine.high %v1859, %v1867
        %v2043 = vunpack.c.l.s4 1983009808
        %v2044 = vunpack.c.0.s8 %v2043
        %v2045 = vlaneseq
        %v2046 = vshrl.u32 %v2045, 7
        %v2047 = vsub.s32 %v2044, %v2046
        %v2048 = vrot.slane %v2040, %v2047
        %v2050 = vunpack.c.l.s4 1983009808
        %v2051 = vunpack.c.0.s8 %v2050
        %v2052 = vlaneseq
        %v2053 = vshrl.u32 %v2052, 7
        %v2054 = vsub.s32 %v2051, %v2053
        %v2055 = vrot.slane %v2041, %v2054
        %v2056 = vcombine.low %v1863, %v1871
        %v2057 = vcombine.high %v1863, %v1871
        %v2059 = vunpack.c.l.s4 1983009808
        %v2060 = vunpack.c.0.s8 %v2059
        %v2061 = vlaneseq
        %v2062 = vshrl.u32 %v2061, 7
        %v2063 = vsub.s32 %v2060, %v2062
        %v2064 = vrot.slane %v2056, %v2063
        %v2066 = vunpack.c.l.s4 1983009808
        %v2067 = vunpack.c.0.s8 %v2066
        %v2068 = vlaneseq
        %v2069 = vshrl.u32 %v2068, 7
        %v2070 = vsub.s32 %v2067, %v2069
        %v2071 = vrot.slane %v2057, %v2070
        %v2072 = vcombine.low %v1875, %v1883
        %v2073 = vcombine.high %v1875, %v1883
        %v2075 = vunpack.c.l.s4 1983009808
        %v2076 = vunpack.c.0.s8 %v2075
        %v2077 = vlaneseq
        %v2078 = vshrl.u32 %v2077, 7
        %v2079 = vsub.s32 %v2076, %v2078
        %v2080 = vrot.slane %v2072, %v2079
        %v2082 = vunpack.c.l.s4 1983009808
        %v2083 = vunpack.c.0.s8 %v2082
        %v2084 = vlaneseq
        %v2085 = vshrl.u32 %v2084, 7
        %v2086 = vsub.s32 %v2083, %v2085
        %v2087 = vrot.slane %v2073, %v2086
        %v2088 = vcombine.low %v1879, %v1887
        %v2089 = vcombine.high %v1879, %v1887
        %v2091 = vunpack.c.l.s4 1983009808
        %v2092 = vunpack.c.0.s8 %v2091
        %v2093 = vlaneseq
        %v2094 = vshrl.u32 %v2093, 7
        %v2095 = vsub.s32 %v2092, %v2094
        %v2096 = vrot.slane %v2088, %v2095
        %v2098 = vunpack.c.l.s4 1983009808
        %v2099 = vunpack.c.0.s8 %v2098
        %v2100 = vlaneseq
        %v2101 = vshrl.u32 %v2100, 7
        %v2102 = vsub.s32 %v2099, %v2101
        %v2103 = vrot.slane %v2089, %v2102
        %v2104 = vcombine.low %v2048, %v2064
        %v2105 = vcombine.high %v2048, %v2064
        %v2107 = vunpack.c.l.s4 1934713408
        %v2108 = vunpack.c.0.s8 %v2107
        %v2109 = vlaneseq
        %v2110 = vshrl.u32 %v2109, 7
        %v2111 = vsub.s32 %v2108, %v2110
        %v2112 = vrot.slane %v2104, %v2111
        %v2114 = vunpack.c.l.s4 1934713408
        %v2115 = vunpack.c.0.s8 %v2114
        %v2116 = vlaneseq
        %v2117 = vshrl.u32 %v2116, 7
        %v2118 = vsub.s32 %v2115, %v2117
        %v2119 = vrot.slane %v2105, %v2118
        %v2120 = vcombine.low %v2055, %v2071
        %v2121 = vcombine.high %v2055, %v2071
        %v2123 = vunpack.c.l.s4 1934713408
        %v2124 = vunpack.c.0.s8 %v2123
        %v2125 = vlaneseq
        %v2126 = vshrl.u32 %v2125, 7
        %v2127 = vsub.s32 %v2124, %v2126
        %v2128 = vrot.slane %v2120, %v2127
        %v2130 = vunpack.c.l.s4 1934713408
        %v2131 = vunpack.c.0.s8 %v2130
        %v2132 = vlaneseq
        %v2133 = vshrl.u32 %v2132, 7
        %v2134 = vsub.s32 %v2131, %v2133
        %v2135 = vrot.slane %v2121, %v2134
        %v2136 = vcombine.low %v2080, %v2096
        %v2137 = vcombine.high %v2080, %v2096
        %v2139 = vunpack.c.l.s4 1934713408
        %v2140 = vunpack.c.0.s8 %v2139
        %v2141 = vlaneseq
        %v2142 = vshrl.u32 %v2141, 7
        %v2143 = vsub.s32 %v2140, %v2142
        %v2144 = vrot.slane %v2136, %v2143
        %v2146 = vunpack.c.l.s4 1934713408
        %v2147 = vunpack.c.0.s8 %v2146
        %v2148 = vlaneseq
        %v2149 = vshrl.u32 %v2148, 7
        %v2150 = vsub.s32 %v2147, %v2149
        %v2151 = vrot.slane %v2137, %v2150
        %v2152 = vcombine.low %v2087, %v2103
        %v2153 = vcombine.high %v2087, %v2103
        %v2155 = vunpack.c.l.s4 1934713408
        %v2156 = vunpack.c.0.s8 %v2155
        %v2157 = vlaneseq
        %v2158 = vshrl.u32 %v2157, 7
        %v2159 = vsub.s32 %v2156, %v2158
        %v2160 = vrot.slane %v2152, %v2159
        %v2162 = vunpack.c.l.s4 1934713408
        %v2163 = vunpack.c.0.s8 %v2162
        %v2164 = vlaneseq
        %v2165 = vshrl.u32 %v2164, 7
        %v2166 = vsub.s32 %v2163, %v2165
        %v2167 = vrot.slane %v2153, %v2166
        %v2168 = vcombine.low %v2112, %v2144
        %v2169 = vcombine.high %v2112, %v2144
        %v2170 = vcombine.low %v2119, %v2151
        %v2171 = vcombine.high %v2119, %v2151
        %v2172 = vcombine.low %v2128, %v2160
        %v2173 = vcombine.high %v2128, %v2160
        %v2174 = vcombine.low %v2135, %v2167
        %v2175 = vcombine.high %v2135, %v2167
        %2177 = vrot.lane.b32.xlu0 %v2033, 16
        %v2178 = vpop.permute.xlu0 %2177
        %2181 = vrot.lane.b32.xlu0 %v2034, 32
        %v2182 = vpop.permute.xlu0 %2181
        %2185 = vrot.lane.b32.xlu0 %v2035, 48
        %v2186 = vpop.permute.xlu0 %2185
        %2189 = vrot.lane.b32.xlu0 %v2036, 64
        %v2190 = vpop.permute.xlu0 %2189
        %2193 = vrot.lane.b32.xlu0 %v2037, 80
        %v2194 = vpop.permute.xlu0 %2193
        %2197 = vrot.lane.b32.xlu0 %v2038, 96
        %v2198 = vpop.permute.xlu0 %2197
        %2201 = vrot.lane.b32.xlu0 %v2039, 112
        %v2202 = vpop.permute.xlu0 %2201
        %2205 = vrot.lane.b32.xlu0 %v2169, 16
        %v2206 = vpop.permute.xlu0 %2205
        %2209 = vrot.lane.b32.xlu0 %v2170, 32
        %v2210 = vpop.permute.xlu0 %2209
        %2213 = vrot.lane.b32.xlu0 %v2171, 48
        %v2214 = vpop.permute.xlu0 %2213
        %2217 = vrot.lane.b32.xlu0 %v2172, 64
        %v2218 = vpop.permute.xlu0 %2217
        %2221 = vrot.lane.b32.xlu0 %v2173, 80
        %v2222 = vpop.permute.xlu0 %2221
        %2225 = vrot.lane.b32.xlu0 %v2174, 96
        %v2226 = vpop.permute.xlu0 %2225
        %2229 = vrot.lane.b32.xlu0 %v2175, 112
        %v2230 = vpop.permute.xlu0 %2229
        %v2232 = vsel %vm314, %v2032, %v2178
        %v2233 = vsel %vm995, %v2232, %v2182
        %v2234 = vsel %vm997, %v2233, %v2186
        %v2235 = vsel %vm999, %v2234, %v2190
        %v2236 = vsel %vm1001, %v2235, %v2194
        %v2237 = vsel %vm1003, %v2236, %v2198
        %v2238 = vsel %vm1005, %v2237, %v2202
        %v2239 = vsel %vm314, %v2168, %v2206
        %v2240 = vsel %vm995, %v2239, %v2210
        %v2241 = vsel %vm997, %v2240, %v2214
        %v2242 = vsel %vm999, %v2241, %v2218
        %v2243 = vsel %vm1001, %v2242, %v2222
        %v2244 = vsel %vm1003, %v2243, %v2226
        %v2245 = vsel %vm1005, %v2244, %v2230
        %v2246 = vpack.c.bf16 %v2238, %v1848
        %v2247 = vpack.c.bf16 %v2245, %v1855
        %v2250 = vunpack.c.l.b16 %v2246
        %v2251 = vunpack.c.l.b16 %v2247
        %v2252 = vunpack.c.h.b16 %v2246
        %v2253 = vunpack.c.h.b16 %v2247
        %v2254 = vpack.c.b16 %v2251, %v2250
        %v2255 = vpack.c.b16 %v2253, %v2252
        %2258 = vst [vmem:[#allocation3 + $0x10] sm:$0xff] %v2254
        %2259 = vst [vmem:[#allocation3 + $0x18] sm:$0xff] %v2255
        %v2260 = vld [vmem:[#allocation2] sm:$0xff]
        %v2261 = vld [vmem:[#allocation2 + $0x8] sm:$0xff]
        %v2262 = vld [vmem:[#allocation2 + $0x18] sm:$0xff]
        %v2263 = vld [vmem:[#allocation2 + $0x20] sm:$0xff]
        %v2264 = vld [vmem:[#allocation2 + $0x30] sm:$0xff]
        %v2265 = vld [vmem:[#allocation2 + $0x38] sm:$0xff]
        %v2266 = vld [vmem:[#allocation2 + $0x48] sm:$0xff]
        %v2267 = vld [vmem:[#allocation2 + $0x50] sm:$0xff]
        %v2268 = vld [vmem:[#allocation2 + $0x60] sm:$0xff]
        %v2269 = vld [vmem:[#allocation2 + $0x68] sm:$0xff]
        %v2270 = vld [vmem:[#allocation2 + $0x78] sm:$0xff]
        %v2271 = vld [vmem:[#allocation2 + $0x80] sm:$0xff]
        %v2272 = vld [vmem:[#allocation2 + $0x90] sm:$0xff]
        %v2273 = vld [vmem:[#allocation2 + $0x98] sm:$0xff]
        %v2274 = vld [vmem:[#allocation2 + $0xa8] sm:$0xff]
        %v2275 = vld [vmem:[#allocation2 + $0xb0] sm:$0xff]
        %2292 = vrot.lane.b32.xlu0 %v2260, 124
        %v2293 = vpop.permute.xlu0 %2292
        %2294 = vrot.lane.b32.xlu0 %v2261, 124
        %v2295 = vpop.permute.xlu0 %2294
        %2296 = vrot.lane.b32.xlu0 %v2262, 124
        %v2297 = vpop.permute.xlu0 %2296
        %2298 = vrot.lane.b32.xlu0 %v2263, 124
        %v2299 = vpop.permute.xlu0 %2298
        %2300 = vrot.lane.b32.xlu0 %v2264, 124
        %v2301 = vpop.permute.xlu0 %2300
        %2302 = vrot.lane.b32.xlu0 %v2265, 124
        %v2303 = vpop.permute.xlu0 %2302
        %2304 = vrot.lane.b32.xlu0 %v2266, 124
        %v2305 = vpop.permute.xlu0 %2304
        %2306 = vrot.lane.b32.xlu0 %v2267, 124
        %v2307 = vpop.permute.xlu0 %2306
        %2308 = vrot.lane.b32.xlu0 %v2268, 124
        %v2309 = vpop.permute.xlu0 %2308
        %2310 = vrot.lane.b32.xlu0 %v2269, 124
        %v2311 = vpop.permute.xlu0 %2310
        %2312 = vrot.lane.b32.xlu0 %v2270, 124
        %v2313 = vpop.permute.xlu0 %2312
        %2314 = vrot.lane.b32.xlu0 %v2271, 124
        %v2315 = vpop.permute.xlu0 %2314
        %2316 = vrot.lane.b32.xlu0 %v2272, 124
        %v2317 = vpop.permute.xlu0 %2316
        %2318 = vrot.lane.b32.xlu0 %v2273, 124
        %v2319 = vpop.permute.xlu0 %2318
        %2320 = vrot.lane.b32.xlu0 %v2274, 124
        %v2321 = vpop.permute.xlu0 %2320
        %2322 = vrot.lane.b32.xlu0 %v2275, 124
        %v2323 = vpop.permute.xlu0 %2322
        %v2340 = vcombine.low %v2293, %v2301
        %v2341 = vcombine.high %v2293, %v2301
        %v2343 = vunpack.c.l.s4 1983009808
        %v2344 = vunpack.c.0.s8 %v2343
        %v2345 = vlaneseq
        %v2346 = vshrl.u32 %v2345, 7
        %v2347 = vsub.s32 %v2344, %v2346
        %v2348 = vrot.slane %v2340, %v2347
        %v2350 = vunpack.c.l.s4 1983009808
        %v2351 = vunpack.c.0.s8 %v2350
        %v2352 = vlaneseq
        %v2353 = vshrl.u32 %v2352, 7
        %v2354 = vsub.s32 %v2351, %v2353
        %v2355 = vrot.slane %v2341, %v2354
        %v2356 = vcombine.low %v2297, %v2305
        %v2357 = vcombine.high %v2297, %v2305
        %v2359 = vunpack.c.l.s4 1983009808
        %v2360 = vunpack.c.0.s8 %v2359
        %v2361 = vlaneseq
        %v2362 = vshrl.u32 %v2361, 7
        %v2363 = vsub.s32 %v2360, %v2362
        %v2364 = vrot.slane %v2356, %v2363
        %v2366 = vunpack.c.l.s4 1983009808
        %v2367 = vunpack.c.0.s8 %v2366
        %v2368 = vlaneseq
        %v2369 = vshrl.u32 %v2368, 7
        %v2370 = vsub.s32 %v2367, %v2369
        %v2371 = vrot.slane %v2357, %v2370
        %v2372 = vcombine.low %v2309, %v2317
        %v2373 = vcombine.high %v2309, %v2317
        %v2375 = vunpack.c.l.s4 1983009808
        %v2376 = vunpack.c.0.s8 %v2375
        %v2377 = vlaneseq
        %v2378 = vshrl.u32 %v2377, 7
        %v2379 = vsub.s32 %v2376, %v2378
        %v2380 = vrot.slane %v2372, %v2379
        %v2382 = vunpack.c.l.s4 1983009808
        %v2383 = vunpack.c.0.s8 %v2382
        %v2384 = vlaneseq
        %v2385 = vshrl.u32 %v2384, 7
        %v2386 = vsub.s32 %v2383, %v2385
        %v2387 = vrot.slane %v2373, %v2386
        %v2388 = vcombine.low %v2313, %v2321
        %v2389 = vcombine.high %v2313, %v2321
        %v2391 = vunpack.c.l.s4 1983009808
        %v2392 = vunpack.c.0.s8 %v2391
        %v2393 = vlaneseq
        %v2394 = vshrl.u32 %v2393, 7
        %v2395 = vsub.s32 %v2392, %v2394
        %v2396 = vrot.slane %v2388, %v2395
        %v2398 = vunpack.c.l.s4 1983009808
        %v2399 = vunpack.c.0.s8 %v2398
        %v2400 = vlaneseq
        %v2401 = vshrl.u32 %v2400, 7
        %v2402 = vsub.s32 %v2399, %v2401
        %v2403 = vrot.slane %v2389, %v2402
        %v2404 = vcombine.low %v2348, %v2364
        %v2405 = vcombine.high %v2348, %v2364
        %v2407 = vunpack.c.l.s4 1934713408
        %v2408 = vunpack.c.0.s8 %v2407
        %v2409 = vlaneseq
        %v2410 = vshrl.u32 %v2409, 7
        %v2411 = vsub.s32 %v2408, %v2410
        %v2412 = vrot.slane %v2404, %v2411
        %v2414 = vunpack.c.l.s4 1934713408
        %v2415 = vunpack.c.0.s8 %v2414
        %v2416 = vlaneseq
        %v2417 = vshrl.u32 %v2416, 7
        %v2418 = vsub.s32 %v2415, %v2417
        %v2419 = vrot.slane %v2405, %v2418
        %v2420 = vcombine.low %v2355, %v2371
        %v2421 = vcombine.high %v2355, %v2371
        %v2423 = vunpack.c.l.s4 1934713408
        %v2424 = vunpack.c.0.s8 %v2423
        %v2425 = vlaneseq
        %v2426 = vshrl.u32 %v2425, 7
        %v2427 = vsub.s32 %v2424, %v2426
        %v2428 = vrot.slane %v2420, %v2427
        %v2430 = vunpack.c.l.s4 1934713408
        %v2431 = vunpack.c.0.s8 %v2430
        %v2432 = vlaneseq
        %v2433 = vshrl.u32 %v2432, 7
        %v2434 = vsub.s32 %v2431, %v2433
        %v2435 = vrot.slane %v2421, %v2434
        %v2436 = vcombine.low %v2380, %v2396
        %v2437 = vcombine.high %v2380, %v2396
        %v2439 = vunpack.c.l.s4 1934713408
        %v2440 = vunpack.c.0.s8 %v2439
        %v2441 = vlaneseq
        %v2442 = vshrl.u32 %v2441, 7
        %v2443 = vsub.s32 %v2440, %v2442
        %v2444 = vrot.slane %v2436, %v2443
        %v2446 = vunpack.c.l.s4 1934713408
        %v2447 = vunpack.c.0.s8 %v2446
        %v2448 = vlaneseq
        %v2449 = vshrl.u32 %v2448, 7
        %v2450 = vsub.s32 %v2447, %v2449
        %v2451 = vrot.slane %v2437, %v2450
        %v2452 = vcombine.low %v2387, %v2403
        %v2453 = vcombine.high %v2387, %v2403
        %v2455 = vunpack.c.l.s4 1934713408
        %v2456 = vunpack.c.0.s8 %v2455
        %v2457 = vlaneseq
        %v2458 = vshrl.u32 %v2457, 7
        %v2459 = vsub.s32 %v2456, %v2458
        %v2460 = vrot.slane %v2452, %v2459
        %v2462 = vunpack.c.l.s4 1934713408
        %v2463 = vunpack.c.0.s8 %v2462
        %v2464 = vlaneseq
        %v2465 = vshrl.u32 %v2464, 7
        %v2466 = vsub.s32 %v2463, %v2465
        %v2467 = vrot.slane %v2453, %v2466
        %v2468 = vcombine.low %v2412, %v2444
        %v2469 = vcombine.high %v2412, %v2444
        %v2470 = vcombine.low %v2419, %v2451
        %v2471 = vcombine.high %v2419, %v2451
        %v2472 = vcombine.low %v2428, %v2460
        %v2473 = vcombine.high %v2428, %v2460
        %v2474 = vcombine.low %v2435, %v2467
        %v2475 = vcombine.high %v2435, %v2467
        %v2476 = vcombine.low %v2295, %v2303
        %v2477 = vcombine.high %v2295, %v2303
        %v2479 = vunpack.c.l.s4 1983009808
        %v2480 = vunpack.c.0.s8 %v2479
        %v2481 = vlaneseq
        %v2482 = vshrl.u32 %v2481, 7
        %v2483 = vsub.s32 %v2480, %v2482
        %v2484 = vrot.slane %v2476, %v2483
        %v2486 = vunpack.c.l.s4 1983009808
        %v2487 = vunpack.c.0.s8 %v2486
        %v2488 = vlaneseq
        %v2489 = vshrl.u32 %v2488, 7
        %v2490 = vsub.s32 %v2487, %v2489
        %v2491 = vrot.slane %v2477, %v2490
        %v2492 = vcombine.low %v2299, %v2307
        %v2493 = vcombine.high %v2299, %v2307
        %v2495 = vunpack.c.l.s4 1983009808
        %v2496 = vunpack.c.0.s8 %v2495
        %v2497 = vlaneseq
        %v2498 = vshrl.u32 %v2497, 7
        %v2499 = vsub.s32 %v2496, %v2498
        %v2500 = vrot.slane %v2492, %v2499
        %v2502 = vunpack.c.l.s4 1983009808
        %v2503 = vunpack.c.0.s8 %v2502
        %v2504 = vlaneseq
        %v2505 = vshrl.u32 %v2504, 7
        %v2506 = vsub.s32 %v2503, %v2505
        %v2507 = vrot.slane %v2493, %v2506
        %v2508 = vcombine.low %v2311, %v2319
        %v2509 = vcombine.high %v2311, %v2319
        %v2511 = vunpack.c.l.s4 1983009808
        %v2512 = vunpack.c.0.s8 %v2511
        %v2513 = vlaneseq
        %v2514 = vshrl.u32 %v2513, 7
        %v2515 = vsub.s32 %v2512, %v2514
        %v2516 = vrot.slane %v2508, %v2515
        %v2518 = vunpack.c.l.s4 1983009808
        %v2519 = vunpack.c.0.s8 %v2518
        %v2520 = vlaneseq
        %v2521 = vshrl.u32 %v2520, 7
        %v2522 = vsub.s32 %v2519, %v2521
        %v2523 = vrot.slane %v2509, %v2522
        %v2524 = vcombine.low %v2315, %v2323
        %v2525 = vcombine.high %v2315, %v2323
        %v2527 = vunpack.c.l.s4 1983009808
        %v2528 = vunpack.c.0.s8 %v2527
        %v2529 = vlaneseq
        %v2530 = vshrl.u32 %v2529, 7
        %v2531 = vsub.s32 %v2528, %v2530
        %v2532 = vrot.slane %v2524, %v2531
        %v2534 = vunpack.c.l.s4 1983009808
        %v2535 = vunpack.c.0.s8 %v2534
        %v2536 = vlaneseq
        %v2537 = vshrl.u32 %v2536, 7
        %v2538 = vsub.s32 %v2535, %v2537
        %v2539 = vrot.slane %v2525, %v2538
        %v2540 = vcombine.low %v2484, %v2500
        %v2541 = vcombine.high %v2484, %v2500
        %v2543 = vunpack.c.l.s4 1934713408
        %v2544 = vunpack.c.0.s8 %v2543
        %v2545 = vlaneseq
        %v2546 = vshrl.u32 %v2545, 7
        %v2547 = vsub.s32 %v2544, %v2546
        %v2548 = vrot.slane %v2540, %v2547
        %v2550 = vunpack.c.l.s4 1934713408
        %v2551 = vunpack.c.0.s8 %v2550
        %v2552 = vlaneseq
        %v2553 = vshrl.u32 %v2552, 7
        %v2554 = vsub.s32 %v2551, %v2553
        %v2555 = vrot.slane %v2541, %v2554
        %v2556 = vcombine.low %v2491, %v2507
        %v2557 = vcombine.high %v2491, %v2507
        %v2559 = vunpack.c.l.s4 1934713408
        %v2560 = vunpack.c.0.s8 %v2559
        %v2561 = vlaneseq
        %v2562 = vshrl.u32 %v2561, 7
        %v2563 = vsub.s32 %v2560, %v2562
        %v2564 = vrot.slane %v2556, %v2563
        %v2566 = vunpack.c.l.s4 1934713408
        %v2567 = vunpack.c.0.s8 %v2566
        %v2568 = vlaneseq
        %v2569 = vshrl.u32 %v2568, 7
        %v2570 = vsub.s32 %v2567, %v2569
        %v2571 = vrot.slane %v2557, %v2570
        %v2572 = vcombine.low %v2516, %v2532
        %v2573 = vcombine.high %v2516, %v2532
        %v2575 = vunpack.c.l.s4 1934713408
        %v2576 = vunpack.c.0.s8 %v2575
        %v2577 = vlaneseq
        %v2578 = vshrl.u32 %v2577, 7
        %v2579 = vsub.s32 %v2576, %v2578
        %v2580 = vrot.slane %v2572, %v2579
        %v2582 = vunpack.c.l.s4 1934713408
        %v2583 = vunpack.c.0.s8 %v2582
        %v2584 = vlaneseq
        %v2585 = vshrl.u32 %v2584, 7
        %v2586 = vsub.s32 %v2583, %v2585
        %v2587 = vrot.slane %v2573, %v2586
        %v2588 = vcombine.low %v2523, %v2539
        %v2589 = vcombine.high %v2523, %v2539
        %v2591 = vunpack.c.l.s4 1934713408
        %v2592 = vunpack.c.0.s8 %v2591
        %v2593 = vlaneseq
        %v2594 = vshrl.u32 %v2593, 7
        %v2595 = vsub.s32 %v2592, %v2594
        %v2596 = vrot.slane %v2588, %v2595
        %v2598 = vunpack.c.l.s4 1934713408
        %v2599 = vunpack.c.0.s8 %v2598
        %v2600 = vlaneseq
        %v2601 = vshrl.u32 %v2600, 7
        %v2602 = vsub.s32 %v2599, %v2601
        %v2603 = vrot.slane %v2589, %v2602
        %v2604 = vcombine.low %v2548, %v2580
        %v2605 = vcombine.high %v2548, %v2580
        %v2606 = vcombine.low %v2555, %v2587
        %v2607 = vcombine.high %v2555, %v2587
        %v2608 = vcombine.low %v2564, %v2596
        %v2609 = vcombine.high %v2564, %v2596
        %v2610 = vcombine.low %v2571, %v2603
        %v2611 = vcombine.high %v2571, %v2603
        %2613 = vrot.lane.b32.xlu0 %v2469, 16
        %v2614 = vpop.permute.xlu0 %2613
        %2617 = vrot.lane.b32.xlu0 %v2470, 32
        %v2618 = vpop.permute.xlu0 %2617
        %2621 = vrot.lane.b32.xlu0 %v2471, 48
        %v2622 = vpop.permute.xlu0 %2621
        %2625 = vrot.lane.b32.xlu0 %v2472, 64
        %v2626 = vpop.permute.xlu0 %2625
        %2629 = vrot.lane.b32.xlu0 %v2473, 80
        %v2630 = vpop.permute.xlu0 %2629
        %2633 = vrot.lane.b32.xlu0 %v2474, 96
        %v2634 = vpop.permute.xlu0 %2633
        %2637 = vrot.lane.b32.xlu0 %v2475, 112
        %v2638 = vpop.permute.xlu0 %2637
        %2641 = vrot.lane.b32.xlu0 %v2605, 16
        %v2642 = vpop.permute.xlu0 %2641
        %2645 = vrot.lane.b32.xlu0 %v2606, 32
        %v2646 = vpop.permute.xlu0 %2645
        %2649 = vrot.lane.b32.xlu0 %v2607, 48
        %v2650 = vpop.permute.xlu0 %2649
        %2653 = vrot.lane.b32.xlu0 %v2608, 64
        %v2654 = vpop.permute.xlu0 %2653
        %2657 = vrot.lane.b32.xlu0 %v2609, 80
        %v2658 = vpop.permute.xlu0 %2657
        %2661 = vrot.lane.b32.xlu0 %v2610, 96
        %v2662 = vpop.permute.xlu0 %2661
        %2665 = vrot.lane.b32.xlu0 %v2611, 112
        %v2666 = vpop.permute.xlu0 %2665
        %v2668 = vsel %vm314, %v2468, %v2614
        %v2669 = vsel %vm995, %v2668, %v2618
        %v2670 = vsel %vm997, %v2669, %v2622
        %v2671 = vsel %vm999, %v2670, %v2626
        %v2672 = vsel %vm1001, %v2671, %v2630
        %v2673 = vsel %vm1003, %v2672, %v2634
        %v2674 = vsel %vm1005, %v2673, %v2638
        %v2675 = vsel %vm314, %v2604, %v2642
        %v2676 = vsel %vm995, %v2675, %v2646
        %v2677 = vsel %vm997, %v2676, %v2650
        %v2678 = vsel %vm999, %v2677, %v2654
        %v2679 = vsel %vm1001, %v2678, %v2658
        %v2680 = vsel %vm1003, %v2679, %v2662
        %v2681 = vsel %vm1005, %v2680, %v2666
        %v2682 = vld [vmem:[#allocation2 + $0x1] sm:$0xff]
        %v2683 = vld [vmem:[#allocation2 + $0x9] sm:$0xff]
        %v2684 = vld [vmem:[#allocation2 + $0x19] sm:$0xff]
        %v2685 = vld [vmem:[#allocation2 + $0x21] sm:$0xff]
        %v2686 = vld [vmem:[#allocation2 + $0x31] sm:$0xff]
        %v2687 = vld [vmem:[#allocation2 + $0x39] sm:$0xff]
        %v2688 = vld [vmem:[#allocation2 + $0x49] sm:$0xff]
        %v2689 = vld [vmem:[#allocation2 + $0x51] sm:$0xff]
        %v2690 = vld [vmem:[#allocation2 + $0x61] sm:$0xff]
        %v2691 = vld [vmem:[#allocation2 + $0x69] sm:$0xff]
        %v2692 = vld [vmem:[#allocation2 + $0x79] sm:$0xff]
        %v2693 = vld [vmem:[#allocation2 + $0x81] sm:$0xff]
        %v2694 = vld [vmem:[#allocation2 + $0x91] sm:$0xff]
        %v2695 = vld [vmem:[#allocation2 + $0x99] sm:$0xff]
        %v2696 = vld [vmem:[#allocation2 + $0xa9] sm:$0xff]
        %v2697 = vld [vmem:[#allocation2 + $0xb1] sm:$0xff]
        %v2698 = vcombine.low %v2682, %v2686
        %v2699 = vcombine.high %v2682, %v2686
        %v2701 = vunpack.c.l.s4 1983009808
        %v2702 = vunpack.c.0.s8 %v2701
        %v2703 = vlaneseq
        %v2704 = vshrl.u32 %v2703, 7
        %v2705 = vsub.s32 %v2702, %v2704
        %v2706 = vrot.slane %v2698, %v2705
        %v2708 = vunpack.c.l.s4 1983009808
        %v2709 = vunpack.c.0.s8 %v2708
        %v2710 = vlaneseq
        %v2711 = vshrl.u32 %v2710, 7
        %v2712 = vsub.s32 %v2709, %v2711
        %v2713 = vrot.slane %v2699, %v2712
        %v2714 = vcombine.low %v2684, %v2688
        %v2715 = vcombine.high %v2684, %v2688
        %v2717 = vunpack.c.l.s4 1983009808
        %v2718 = vunpack.c.0.s8 %v2717
        %v2719 = vlaneseq
        %v2720 = vshrl.u32 %v2719, 7
        %v2721 = vsub.s32 %v2718, %v2720
        %v2722 = vrot.slane %v2714, %v2721
        %v2724 = vunpack.c.l.s4 1983009808
        %v2725 = vunpack.c.0.s8 %v2724
        %v2726 = vlaneseq
        %v2727 = vshrl.u32 %v2726, 7
        %v2728 = vsub.s32 %v2725, %v2727
        %v2729 = vrot.slane %v2715, %v2728
        %v2730 = vcombine.low %v2690, %v2694
        %v2731 = vcombine.high %v2690, %v2694
        %v2733 = vunpack.c.l.s4 1983009808
        %v2734 = vunpack.c.0.s8 %v2733
        %v2735 = vlaneseq
        %v2736 = vshrl.u32 %v2735, 7
        %v2737 = vsub.s32 %v2734, %v2736
        %v2738 = vrot.slane %v2730, %v2737
        %v2740 = vunpack.c.l.s4 1983009808
        %v2741 = vunpack.c.0.s8 %v2740
        %v2742 = vlaneseq
        %v2743 = vshrl.u32 %v2742, 7
        %v2744 = vsub.s32 %v2741, %v2743
        %v2745 = vrot.slane %v2731, %v2744
        %v2746 = vcombine.low %v2692, %v2696
        %v2747 = vcombine.high %v2692, %v2696
        %v2749 = vunpack.c.l.s4 1983009808
        %v2750 = vunpack.c.0.s8 %v2749
        %v2751 = vlaneseq
        %v2752 = vshrl.u32 %v2751, 7
        %v2753 = vsub.s32 %v2750, %v2752
        %v2754 = vrot.slane %v2746, %v2753
        %v2756 = vunpack.c.l.s4 1983009808
        %v2757 = vunpack.c.0.s8 %v2756
        %v2758 = vlaneseq
        %v2759 = vshrl.u32 %v2758, 7
        %v2760 = vsub.s32 %v2757, %v2759
        %v2761 = vrot.slane %v2747, %v2760
        %v2762 = vcombine.low %v2706, %v2722
        %v2763 = vcombine.high %v2706, %v2722
        %v2765 = vunpack.c.l.s4 1934713408
        %v2766 = vunpack.c.0.s8 %v2765
        %v2767 = vlaneseq
        %v2768 = vshrl.u32 %v2767, 7
        %v2769 = vsub.s32 %v2766, %v2768
        %v2770 = vrot.slane %v2762, %v2769
        %v2772 = vunpack.c.l.s4 1934713408
        %v2773 = vunpack.c.0.s8 %v2772
        %v2774 = vlaneseq
        %v2775 = vshrl.u32 %v2774, 7
        %v2776 = vsub.s32 %v2773, %v2775
        %v2777 = vrot.slane %v2763, %v2776
        %v2778 = vcombine.low %v2713, %v2729
        %v2779 = vcombine.high %v2713, %v2729
        %v2781 = vunpack.c.l.s4 1934713408
        %v2782 = vunpack.c.0.s8 %v2781
        %v2783 = vlaneseq
        %v2784 = vshrl.u32 %v2783, 7
        %v2785 = vsub.s32 %v2782, %v2784
        %v2786 = vrot.slane %v2778, %v2785
        %v2788 = vunpack.c.l.s4 1934713408
        %v2789 = vunpack.c.0.s8 %v2788
        %v2790 = vlaneseq
        %v2791 = vshrl.u32 %v2790, 7
        %v2792 = vsub.s32 %v2789, %v2791
        %v2793 = vrot.slane %v2779, %v2792
        %v2794 = vcombine.low %v2738, %v2754
        %v2795 = vcombine.high %v2738, %v2754
        %v2797 = vunpack.c.l.s4 1934713408
        %v2798 = vunpack.c.0.s8 %v2797
        %v2799 = vlaneseq
        %v2800 = vshrl.u32 %v2799, 7
        %v2801 = vsub.s32 %v2798, %v2800
        %v2802 = vrot.slane %v2794, %v2801
        %v2804 = vunpack.c.l.s4 1934713408
        %v2805 = vunpack.c.0.s8 %v2804
        %v2806 = vlaneseq
        %v2807 = vshrl.u32 %v2806, 7
        %v2808 = vsub.s32 %v2805, %v2807
        %v2809 = vrot.slane %v2795, %v2808
        %v2810 = vcombine.low %v2745, %v2761
        %v2811 = vcombine.high %v2745, %v2761
        %v2813 = vunpack.c.l.s4 1934713408
        %v2814 = vunpack.c.0.s8 %v2813
        %v2815 = vlaneseq
        %v2816 = vshrl.u32 %v2815, 7
        %v2817 = vsub.s32 %v2814, %v2816
        %v2818 = vrot.slane %v2810, %v2817
        %v2820 = vunpack.c.l.s4 1934713408
        %v2821 = vunpack.c.0.s8 %v2820
        %v2822 = vlaneseq
        %v2823 = vshrl.u32 %v2822, 7
        %v2824 = vsub.s32 %v2821, %v2823
        %v2825 = vrot.slane %v2811, %v2824
        %v2826 = vcombine.low %v2770, %v2802
        %v2827 = vcombine.high %v2770, %v2802
        %v2828 = vcombine.low %v2777, %v2809
        %v2829 = vcombine.high %v2777, %v2809
        %v2830 = vcombine.low %v2786, %v2818
        %v2831 = vcombine.high %v2786, %v2818
        %v2832 = vcombine.low %v2793, %v2825
        %v2833 = vcombine.high %v2793, %v2825
        %v2834 = vcombine.low %v2683, %v2687
        %v2835 = vcombine.high %v2683, %v2687
        %v2837 = vunpack.c.l.s4 1983009808
        %v2838 = vunpack.c.0.s8 %v2837
        %v2839 = vlaneseq
        %v2840 = vshrl.u32 %v2839, 7
        %v2841 = vsub.s32 %v2838, %v2840
        %v2842 = vrot.slane %v2834, %v2841
        %v2844 = vunpack.c.l.s4 1983009808
        %v2845 = vunpack.c.0.s8 %v2844
        %v2846 = vlaneseq
        %v2847 = vshrl.u32 %v2846, 7
        %v2848 = vsub.s32 %v2845, %v2847
        %v2849 = vrot.slane %v2835, %v2848
        %v2850 = vcombine.low %v2685, %v2689
        %v2851 = vcombine.high %v2685, %v2689
        %v2853 = vunpack.c.l.s4 1983009808
        %v2854 = vunpack.c.0.s8 %v2853
        %v2855 = vlaneseq
        %v2856 = vshrl.u32 %v2855, 7
        %v2857 = vsub.s32 %v2854, %v2856
        %v2858 = vrot.slane %v2850, %v2857
        %v2860 = vunpack.c.l.s4 1983009808
        %v2861 = vunpack.c.0.s8 %v2860
        %v2862 = vlaneseq
        %v2863 = vshrl.u32 %v2862, 7
        %v2864 = vsub.s32 %v2861, %v2863
        %v2865 = vrot.slane %v2851, %v2864
        %v2866 = vcombine.low %v2691, %v2695
        %v2867 = vcombine.high %v2691, %v2695
        %v2869 = vunpack.c.l.s4 1983009808
        %v2870 = vunpack.c.0.s8 %v2869
        %v2871 = vlaneseq
        %v2872 = vshrl.u32 %v2871, 7
        %v2873 = vsub.s32 %v2870, %v2872
        %v2874 = vrot.slane %v2866, %v2873
        %v2876 = vunpack.c.l.s4 1983009808
        %v2877 = vunpack.c.0.s8 %v2876
        %v2878 = vlaneseq
        %v2879 = vshrl.u32 %v2878, 7
        %v2880 = vsub.s32 %v2877, %v2879
        %v2881 = vrot.slane %v2867, %v2880
        %v2882 = vcombine.low %v2693, %v2697
        %v2883 = vcombine.high %v2693, %v2697
        %v2885 = vunpack.c.l.s4 1983009808
        %v2886 = vunpack.c.0.s8 %v2885
        %v2887 = vlaneseq
        %v2888 = vshrl.u32 %v2887, 7
        %v2889 = vsub.s32 %v2886, %v2888
        %v2890 = vrot.slane %v2882, %v2889
        %v2892 = vunpack.c.l.s4 1983009808
        %v2893 = vunpack.c.0.s8 %v2892
        %v2894 = vlaneseq
        %v2895 = vshrl.u32 %v2894, 7
        %v2896 = vsub.s32 %v2893, %v2895
        %v2897 = vrot.slane %v2883, %v2896
        %v2898 = vcombine.low %v2842, %v2858
        %v2899 = vcombine.high %v2842, %v2858
        %v2901 = vunpack.c.l.s4 1934713408
        %v2902 = vunpack.c.0.s8 %v2901
        %v2903 = vlaneseq
        %v2904 = vshrl.u32 %v2903, 7
        %v2905 = vsub.s32 %v2902, %v2904
        %v2906 = vrot.slane %v2898, %v2905
        %v2908 = vunpack.c.l.s4 1934713408
        %v2909 = vunpack.c.0.s8 %v2908
        %v2910 = vlaneseq
        %v2911 = vshrl.u32 %v2910, 7
        %v2912 = vsub.s32 %v2909, %v2911
        %v2913 = vrot.slane %v2899, %v2912
        %v2914 = vcombine.low %v2849, %v2865
        %v2915 = vcombine.high %v2849, %v2865
        %v2917 = vunpack.c.l.s4 1934713408
        %v2918 = vunpack.c.0.s8 %v2917
        %v2919 = vlaneseq
        %v2920 = vshrl.u32 %v2919, 7
        %v2921 = vsub.s32 %v2918, %v2920
        %v2922 = vrot.slane %v2914, %v2921
        %v2924 = vunpack.c.l.s4 1934713408
        %v2925 = vunpack.c.0.s8 %v2924
        %v2926 = vlaneseq
        %v2927 = vshrl.u32 %v2926, 7
        %v2928 = vsub.s32 %v2925, %v2927
        %v2929 = vrot.slane %v2915, %v2928
        %v2930 = vcombine.low %v2874, %v2890
        %v2931 = vcombine.high %v2874, %v2890
        %v2933 = vunpack.c.l.s4 1934713408
        %v2934 = vunpack.c.0.s8 %v2933
        %v2935 = vlaneseq
        %v2936 = vshrl.u32 %v2935, 7
        %v2937 = vsub.s32 %v2934, %v2936
        %v2938 = vrot.slane %v2930, %v2937
        %v2940 = vunpack.c.l.s4 1934713408
        %v2941 = vunpack.c.0.s8 %v2940
        %v2942 = vlaneseq
        %v2943 = vshrl.u32 %v2942, 7
        %v2944 = vsub.s32 %v2941, %v2943
        %v2945 = vrot.slane %v2931, %v2944
        %v2946 = vcombine.low %v2881, %v2897
        %v2947 = vcombine.high %v2881, %v2897
        %v2949 = vunpack.c.l.s4 1934713408
        %v2950 = vunpack.c.0.s8 %v2949
        %v2951 = vlaneseq
        %v2952 = vshrl.u32 %v2951, 7
        %v2953 = vsub.s32 %v2950, %v2952
        %v2954 = vrot.slane %v2946, %v2953
        %v2956 = vunpack.c.l.s4 1934713408
        %v2957 = vunpack.c.0.s8 %v2956
        %v2958 = vlaneseq
        %v2959 = vshrl.u32 %v2958, 7
        %v2960 = vsub.s32 %v2957, %v2959
        %v2961 = vrot.slane %v2947, %v2960
        %v2962 = vcombine.low %v2906, %v2938
        %v2963 = vcombine.high %v2906, %v2938
        %v2964 = vcombine.low %v2913, %v2945
        %v2965 = vcombine.high %v2913, %v2945
        %v2966 = vcombine.low %v2922, %v2954
        %v2967 = vcombine.high %v2922, %v2954
        %v2968 = vcombine.low %v2929, %v2961
        %v2969 = vcombine.high %v2929, %v2961
        %2971 = vrot.lane.b32.xlu0 %v2827, 16
        %v2972 = vpop.permute.xlu0 %2971
        %2975 = vrot.lane.b32.xlu0 %v2828, 32
        %v2976 = vpop.permute.xlu0 %2975
        %2979 = vrot.lane.b32.xlu0 %v2829, 48
        %v2980 = vpop.permute.xlu0 %2979
        %2983 = vrot.lane.b32.xlu0 %v2830, 64
        %v2984 = vpop.permute.xlu0 %2983
        %2987 = vrot.lane.b32.xlu0 %v2831, 80
        %v2988 = vpop.permute.xlu0 %2987
        %2991 = vrot.lane.b32.xlu0 %v2832, 96
        %v2992 = vpop.permute.xlu0 %2991
        %2995 = vrot.lane.b32.xlu0 %v2833, 112
        %v2996 = vpop.permute.xlu0 %2995
        %2999 = vrot.lane.b32.xlu0 %v2963, 16
        %v3000 = vpop.permute.xlu0 %2999
        %3003 = vrot.lane.b32.xlu0 %v2964, 32
        %v3004 = vpop.permute.xlu0 %3003
        %3007 = vrot.lane.b32.xlu0 %v2965, 48
        %v3008 = vpop.permute.xlu0 %3007
        %3011 = vrot.lane.b32.xlu0 %v2966, 64
        %v3012 = vpop.permute.xlu0 %3011
        %3015 = vrot.lane.b32.xlu0 %v2967, 80
        %v3016 = vpop.permute.xlu0 %3015
        %3019 = vrot.lane.b32.xlu0 %v2968, 96
        %v3020 = vpop.permute.xlu0 %3019
        %3023 = vrot.lane.b32.xlu0 %v2969, 112
        %v3024 = vpop.permute.xlu0 %3023
        %v3026 = vsel %vm314, %v2826, %v2972
        %v3027 = vsel %vm995, %v3026, %v2976
        %v3028 = vsel %vm997, %v3027, %v2980
        %v3029 = vsel %vm999, %v3028, %v2984
        %v3030 = vsel %vm1001, %v3029, %v2988
        %v3031 = vsel %vm1003, %v3030, %v2992
        %v3032 = vsel %vm1005, %v3031, %v2996
        %v3033 = vsel %vm314, %v2962, %v3000
        %v3034 = vsel %vm995, %v3033, %v3004
        %v3035 = vsel %vm997, %v3034, %v3008
        %v3036 = vsel %vm999, %v3035, %v3012
        %v3037 = vsel %vm1001, %v3036, %v3016
        %v3038 = vsel %vm1003, %v3037, %v3020
        %v3039 = vsel %vm1005, %v3038, %v3024
        %v3040 = vpack.c.bf16 %v3032, %v2674
        %v3041 = vpack.c.bf16 %v3039, %v2681
        %v3044 = vunpack.c.l.b16 %v3040
        %v3045 = vunpack.c.l.b16 %v3041
        %v3046 = vunpack.c.h.b16 %v3040
        %v3047 = vunpack.c.h.b16 %v3041
        %v3048 = vpack.c.b16 %v3045, %v3044
        %v3049 = vpack.c.b16 %v3047, %v3046
        %3052 = vst [vmem:[#allocation3 + $0x20] sm:$0xff] %v3048
        %3053 = vst [vmem:[#allocation3 + $0x28] sm:$0xff] %v3049
        %v3054 = vld [vmem:[#allocation2 + $0x1] sm:$0xff]
        %v3055 = vld [vmem:[#allocation2 + $0x9] sm:$0xff]
        %v3056 = vld [vmem:[#allocation2 + $0x19] sm:$0xff]
        %v3057 = vld [vmem:[#allocation2 + $0x21] sm:$0xff]
        %v3058 = vld [vmem:[#allocation2 + $0x31] sm:$0xff]
        %v3059 = vld [vmem:[#allocation2 + $0x39] sm:$0xff]
        %v3060 = vld [vmem:[#allocation2 + $0x49] sm:$0xff]
        %v3061 = vld [vmem:[#allocation2 + $0x51] sm:$0xff]
        %v3062 = vld [vmem:[#allocation2 + $0x61] sm:$0xff]
        %v3063 = vld [vmem:[#allocation2 + $0x69] sm:$0xff]
        %v3064 = vld [vmem:[#allocation2 + $0x79] sm:$0xff]
        %v3065 = vld [vmem:[#allocation2 + $0x81] sm:$0xff]
        %v3066 = vld [vmem:[#allocation2 + $0x91] sm:$0xff]
        %v3067 = vld [vmem:[#allocation2 + $0x99] sm:$0xff]
        %v3068 = vld [vmem:[#allocation2 + $0xa9] sm:$0xff]
        %v3069 = vld [vmem:[#allocation2 + $0xb1] sm:$0xff]
        %3086 = vrot.lane.b32.xlu0 %v3054, 127
        %v3087 = vpop.permute.xlu0 %3086
        %3088 = vrot.lane.b32.xlu0 %v3055, 127
        %v3089 = vpop.permute.xlu0 %3088
        %3090 = vrot.lane.b32.xlu0 %v3056, 127
        %v3091 = vpop.permute.xlu0 %3090
        %3092 = vrot.lane.b32.xlu0 %v3057, 127
        %v3093 = vpop.permute.xlu0 %3092
        %3094 = vrot.lane.b32.xlu0 %v3058, 127
        %v3095 = vpop.permute.xlu0 %3094
        %3096 = vrot.lane.b32.xlu0 %v3059, 127
        %v3097 = vpop.permute.xlu0 %3096
        %3098 = vrot.lane.b32.xlu0 %v3060, 127
        %v3099 = vpop.permute.xlu0 %3098
        %3100 = vrot.lane.b32.xlu0 %v3061, 127
        %v3101 = vpop.permute.xlu0 %3100
        %3102 = vrot.lane.b32.xlu0 %v3062, 127
        %v3103 = vpop.permute.xlu0 %3102
        %3104 = vrot.lane.b32.xlu0 %v3063, 127
        %v3105 = vpop.permute.xlu0 %3104
        %3106 = vrot.lane.b32.xlu0 %v3064, 127
        %v3107 = vpop.permute.xlu0 %3106
        %3108 = vrot.lane.b32.xlu0 %v3065, 127
        %v3109 = vpop.permute.xlu0 %3108
        %3110 = vrot.lane.b32.xlu0 %v3066, 127
        %v3111 = vpop.permute.xlu0 %3110
        %3112 = vrot.lane.b32.xlu0 %v3067, 127
        %v3113 = vpop.permute.xlu0 %3112
        %3114 = vrot.lane.b32.xlu0 %v3068, 127
        %v3115 = vpop.permute.xlu0 %3114
        %3116 = vrot.lane.b32.xlu0 %v3069, 127
        %v3117 = vpop.permute.xlu0 %3116
        %v3134 = vcombine.low %v3087, %v3095
        %v3135 = vcombine.high %v3087, %v3095
        %v3137 = vunpack.c.l.s4 1983009808
        %v3138 = vunpack.c.0.s8 %v3137
        %v3139 = vlaneseq
        %v3140 = vshrl.u32 %v3139, 7
        %v3141 = vsub.s32 %v3138, %v3140
        %v3142 = vrot.slane %v3134, %v3141
        %v3144 = vunpack.c.l.s4 1983009808
        %v3145 = vunpack.c.0.s8 %v3144
        %v3146 = vlaneseq
        %v3147 = vshrl.u32 %v3146, 7
        %v3148 = vsub.s32 %v3145, %v3147
        %v3149 = vrot.slane %v3135, %v3148
        %v3150 = vcombine.low %v3091, %v3099
        %v3151 = vcombine.high %v3091, %v3099
        %v3153 = vunpack.c.l.s4 1983009808
        %v3154 = vunpack.c.0.s8 %v3153
        %v3155 = vlaneseq
        %v3156 = vshrl.u32 %v3155, 7
        %v3157 = vsub.s32 %v3154, %v3156
        %v3158 = vrot.slane %v3150, %v3157
        %v3160 = vunpack.c.l.s4 1983009808
        %v3161 = vunpack.c.0.s8 %v3160
        %v3162 = vlaneseq
        %v3163 = vshrl.u32 %v3162, 7
        %v3164 = vsub.s32 %v3161, %v3163
        %v3165 = vrot.slane %v3151, %v3164
        %v3166 = vcombine.low %v3103, %v3111
        %v3167 = vcombine.high %v3103, %v3111
        %v3169 = vunpack.c.l.s4 1983009808
        %v3170 = vunpack.c.0.s8 %v3169
        %v3171 = vlaneseq
        %v3172 = vshrl.u32 %v3171, 7
        %v3173 = vsub.s32 %v3170, %v3172
        %v3174 = vrot.slane %v3166, %v3173
        %v3176 = vunpack.c.l.s4 1983009808
        %v3177 = vunpack.c.0.s8 %v3176
        %v3178 = vlaneseq
        %v3179 = vshrl.u32 %v3178, 7
        %v3180 = vsub.s32 %v3177, %v3179
        %v3181 = vrot.slane %v3167, %v3180
        %v3182 = vcombine.low %v3107, %v3115
        %v3183 = vcombine.high %v3107, %v3115
        %v3185 = vunpack.c.l.s4 1983009808
        %v3186 = vunpack.c.0.s8 %v3185
        %v3187 = vlaneseq
        %v3188 = vshrl.u32 %v3187, 7
        %v3189 = vsub.s32 %v3186, %v3188
        %v3190 = vrot.slane %v3182, %v3189
        %v3192 = vunpack.c.l.s4 1983009808
        %v3193 = vunpack.c.0.s8 %v3192
        %v3194 = vlaneseq
        %v3195 = vshrl.u32 %v3194, 7
        %v3196 = vsub.s32 %v3193, %v3195
        %v3197 = vrot.slane %v3183, %v3196
        %v3198 = vcombine.low %v3142, %v3158
        %v3199 = vcombine.high %v3142, %v3158
        %v3201 = vunpack.c.l.s4 1934713408
        %v3202 = vunpack.c.0.s8 %v3201
        %v3203 = vlaneseq
        %v3204 = vshrl.u32 %v3203, 7
        %v3205 = vsub.s32 %v3202, %v3204
        %v3206 = vrot.slane %v3198, %v3205
        %v3208 = vunpack.c.l.s4 1934713408
        %v3209 = vunpack.c.0.s8 %v3208
        %v3210 = vlaneseq
        %v3211 = vshrl.u32 %v3210, 7
        %v3212 = vsub.s32 %v3209, %v3211
        %v3213 = vrot.slane %v3199, %v3212
        %v3214 = vcombine.low %v3149, %v3165
        %v3215 = vcombine.high %v3149, %v3165
        %v3217 = vunpack.c.l.s4 1934713408
        %v3218 = vunpack.c.0.s8 %v3217
        %v3219 = vlaneseq
        %v3220 = vshrl.u32 %v3219, 7
        %v3221 = vsub.s32 %v3218, %v3220
        %v3222 = vrot.slane %v3214, %v3221
        %v3224 = vunpack.c.l.s4 1934713408
        %v3225 = vunpack.c.0.s8 %v3224
        %v3226 = vlaneseq
        %v3227 = vshrl.u32 %v3226, 7
        %v3228 = vsub.s32 %v3225, %v3227
        %v3229 = vrot.slane %v3215, %v3228
        %v3230 = vcombine.low %v3174, %v3190
        %v3231 = vcombine.high %v3174, %v3190
        %v3233 = vunpack.c.l.s4 1934713408
        %v3234 = vunpack.c.0.s8 %v3233
        %v3235 = vlaneseq
        %v3236 = vshrl.u32 %v3235, 7
        %v3237 = vsub.s32 %v3234, %v3236
        %v3238 = vrot.slane %v3230, %v3237
        %v3240 = vunpack.c.l.s4 1934713408
        %v3241 = vunpack.c.0.s8 %v3240
        %v3242 = vlaneseq
        %v3243 = vshrl.u32 %v3242, 7
        %v3244 = vsub.s32 %v3241, %v3243
        %v3245 = vrot.slane %v3231, %v3244
        %v3246 = vcombine.low %v3181, %v3197
        %v3247 = vcombine.high %v3181, %v3197
        %v3249 = vunpack.c.l.s4 1934713408
        %v3250 = vunpack.c.0.s8 %v3249
        %v3251 = vlaneseq
        %v3252 = vshrl.u32 %v3251, 7
        %v3253 = vsub.s32 %v3250, %v3252
        %v3254 = vrot.slane %v3246, %v3253
        %v3256 = vunpack.c.l.s4 1934713408
        %v3257 = vunpack.c.0.s8 %v3256
        %v3258 = vlaneseq
        %v3259 = vshrl.u32 %v3258, 7
        %v3260 = vsub.s32 %v3257, %v3259
        %v3261 = vrot.slane %v3247, %v3260
        %v3262 = vcombine.low %v3206, %v3238
        %v3263 = vcombine.high %v3206, %v3238
        %v3264 = vcombine.low %v3213, %v3245
        %v3265 = vcombine.high %v3213, %v3245
        %v3266 = vcombine.low %v3222, %v3254
        %v3267 = vcombine.high %v3222, %v3254
        %v3268 = vcombine.low %v3229, %v3261
        %v3269 = vcombine.high %v3229, %v3261
        %v3270 = vcombine.low %v3089, %v3097
        %v3271 = vcombine.high %v3089, %v3097
        %v3273 = vunpack.c.l.s4 1983009808
        %v3274 = vunpack.c.0.s8 %v3273
        %v3275 = vlaneseq
        %v3276 = vshrl.u32 %v3275, 7
        %v3277 = vsub.s32 %v3274, %v3276
        %v3278 = vrot.slane %v3270, %v3277
        %v3280 = vunpack.c.l.s4 1983009808
        %v3281 = vunpack.c.0.s8 %v3280
        %v3282 = vlaneseq
        %v3283 = vshrl.u32 %v3282, 7
        %v3284 = vsub.s32 %v3281, %v3283
        %v3285 = vrot.slane %v3271, %v3284
        %v3286 = vcombine.low %v3093, %v3101
        %v3287 = vcombine.high %v3093, %v3101
        %v3289 = vunpack.c.l.s4 1983009808
        %v3290 = vunpack.c.0.s8 %v3289
        %v3291 = vlaneseq
        %v3292 = vshrl.u32 %v3291, 7
        %v3293 = vsub.s32 %v3290, %v3292
        %v3294 = vrot.slane %v3286, %v3293
        %v3296 = vunpack.c.l.s4 1983009808
        %v3297 = vunpack.c.0.s8 %v3296
        %v3298 = vlaneseq
        %v3299 = vshrl.u32 %v3298, 7
        %v3300 = vsub.s32 %v3297, %v3299
        %v3301 = vrot.slane %v3287, %v3300
        %v3302 = vcombine.low %v3105, %v3113
        %v3303 = vcombine.high %v3105, %v3113
        %v3305 = vunpack.c.l.s4 1983009808
        %v3306 = vunpack.c.0.s8 %v3305
        %v3307 = vlaneseq
        %v3308 = vshrl.u32 %v3307, 7
        %v3309 = vsub.s32 %v3306, %v3308
        %v3310 = vrot.slane %v3302, %v3309
        %v3312 = vunpack.c.l.s4 1983009808
        %v3313 = vunpack.c.0.s8 %v3312
        %v3314 = vlaneseq
        %v3315 = vshrl.u32 %v3314, 7
        %v3316 = vsub.s32 %v3313, %v3315
        %v3317 = vrot.slane %v3303, %v3316
        %v3318 = vcombine.low %v3109, %v3117
        %v3319 = vcombine.high %v3109, %v3117
        %v3321 = vunpack.c.l.s4 1983009808
        %v3322 = vunpack.c.0.s8 %v3321
        %v3323 = vlaneseq
        %v3324 = vshrl.u32 %v3323, 7
        %v3325 = vsub.s32 %v3322, %v3324
        %v3326 = vrot.slane %v3318, %v3325
        %v3328 = vunpack.c.l.s4 1983009808
        %v3329 = vunpack.c.0.s8 %v3328
        %v3330 = vlaneseq
        %v3331 = vshrl.u32 %v3330, 7
        %v3332 = vsub.s32 %v3329, %v3331
        %v3333 = vrot.slane %v3319, %v3332
        %v3334 = vcombine.low %v3278, %v3294
        %v3335 = vcombine.high %v3278, %v3294
        %v3337 = vunpack.c.l.s4 1934713408
        %v3338 = vunpack.c.0.s8 %v3337
        %v3339 = vlaneseq
        %v3340 = vshrl.u32 %v3339, 7
        %v3341 = vsub.s32 %v3338, %v3340
        %v3342 = vrot.slane %v3334, %v3341
        %v3344 = vunpack.c.l.s4 1934713408
        %v3345 = vunpack.c.0.s8 %v3344
        %v3346 = vlaneseq
        %v3347 = vshrl.u32 %v3346, 7
        %v3348 = vsub.s32 %v3345, %v3347
        %v3349 = vrot.slane %v3335, %v3348
        %v3350 = vcombine.low %v3285, %v3301
        %v3351 = vcombine.high %v3285, %v3301
        %v3353 = vunpack.c.l.s4 1934713408
        %v3354 = vunpack.c.0.s8 %v3353
        %v3355 = vlaneseq
        %v3356 = vshrl.u32 %v3355, 7
        %v3357 = vsub.s32 %v3354, %v3356
        %v3358 = vrot.slane %v3350, %v3357
        %v3360 = vunpack.c.l.s4 1934713408
        %v3361 = vunpack.c.0.s8 %v3360
        %v3362 = vlaneseq
        %v3363 = vshrl.u32 %v3362, 7
        %v3364 = vsub.s32 %v3361, %v3363
        %v3365 = vrot.slane %v3351, %v3364
        %v3366 = vcombine.low %v3310, %v3326
        %v3367 = vcombine.high %v3310, %v3326
        %v3369 = vunpack.c.l.s4 1934713408
        %v3370 = vunpack.c.0.s8 %v3369
        %v3371 = vlaneseq
        %v3372 = vshrl.u32 %v3371, 7
        %v3373 = vsub.s32 %v3370, %v3372
        %v3374 = vrot.slane %v3366, %v3373
        %v3376 = vunpack.c.l.s4 1934713408
        %v3377 = vunpack.c.0.s8 %v3376
        %v3378 = vlaneseq
        %v3379 = vshrl.u32 %v3378, 7
        %v3380 = vsub.s32 %v3377, %v3379
        %v3381 = vrot.slane %v3367, %v3380
        %v3382 = vcombine.low %v3317, %v3333
        %v3383 = vcombine.high %v3317, %v3333
        %v3385 = vunpack.c.l.s4 1934713408
        %v3386 = vunpack.c.0.s8 %v3385
        %v3387 = vlaneseq
        %v3388 = vshrl.u32 %v3387, 7
        %v3389 = vsub.s32 %v3386, %v3388
        %v3390 = vrot.slane %v3382, %v3389
        %v3392 = vunpack.c.l.s4 1934713408
        %v3393 = vunpack.c.0.s8 %v3392
        %v3394 = vlaneseq
        %v3395 = vshrl.u32 %v3394, 7
        %v3396 = vsub.s32 %v3393, %v3395
        %v3397 = vrot.slane %v3383, %v3396
        %v3398 = vcombine.low %v3342, %v3374
        %v3399 = vcombine.high %v3342, %v3374
        %v3400 = vcombine.low %v3349, %v3381
        %v3401 = vcombine.high %v3349, %v3381
        %v3402 = vcombine.low %v3358, %v3390
        %v3403 = vcombine.high %v3358, %v3390
        %v3404 = vcombine.low %v3365, %v3397
        %v3405 = vcombine.high %v3365, %v3397
        %3407 = vrot.lane.b32.xlu0 %v3263, 16
        %v3408 = vpop.permute.xlu0 %3407
        %3411 = vrot.lane.b32.xlu0 %v3264, 32
        %v3412 = vpop.permute.xlu0 %3411
        %3415 = vrot.lane.b32.xlu0 %v3265, 48
        %v3416 = vpop.permute.xlu0 %3415
        %3419 = vrot.lane.b32.xlu0 %v3266, 64
        %v3420 = vpop.permute.xlu0 %3419
        %3423 = vrot.lane.b32.xlu0 %v3267, 80
        %v3424 = vpop.permute.xlu0 %3423
        %3427 = vrot.lane.b32.xlu0 %v3268, 96
        %v3428 = vpop.permute.xlu0 %3427
        %3431 = vrot.lane.b32.xlu0 %v3269, 112
        %v3432 = vpop.permute.xlu0 %3431
        %3435 = vrot.lane.b32.xlu0 %v3399, 16
        %v3436 = vpop.permute.xlu0 %3435
        %3439 = vrot.lane.b32.xlu0 %v3400, 32
        %v3440 = vpop.permute.xlu0 %3439
        %3443 = vrot.lane.b32.xlu0 %v3401, 48
        %v3444 = vpop.permute.xlu0 %3443
        %3447 = vrot.lane.b32.xlu0 %v3402, 64
        %v3448 = vpop.permute.xlu0 %3447
        %3451 = vrot.lane.b32.xlu0 %v3403, 80
        %v3452 = vpop.permute.xlu0 %3451
        %3455 = vrot.lane.b32.xlu0 %v3404, 96
        %v3456 = vpop.permute.xlu0 %3455
        %3459 = vrot.lane.b32.xlu0 %v3405, 112
        %v3460 = vpop.permute.xlu0 %3459
        %v3462 = vsel %vm314, %v3262, %v3408
        %v3463 = vsel %vm995, %v3462, %v3412
        %v3464 = vsel %vm997, %v3463, %v3416
        %v3465 = vsel %vm999, %v3464, %v3420
        %v3466 = vsel %vm1001, %v3465, %v3424
        %v3467 = vsel %vm1003, %v3466, %v3428
        %v3468 = vsel %vm1005, %v3467, %v3432
        %v3469 = vsel %vm314, %v3398, %v3436
        %v3470 = vsel %vm995, %v3469, %v3440
        %v3471 = vsel %vm997, %v3470, %v3444
        %v3472 = vsel %vm999, %v3471, %v3448
        %v3473 = vsel %vm1001, %v3472, %v3452
        %v3474 = vsel %vm1003, %v3473, %v3456
        %v3475 = vsel %vm1005, %v3474, %v3460
        %3476 = vrot.lane.b32.xlu0 %v3054, 126
        %v3477 = vpop.permute.xlu0 %3476
        %3478 = vrot.lane.b32.xlu0 %v3055, 126
        %v3479 = vpop.permute.xlu0 %3478
        %3480 = vrot.lane.b32.xlu0 %v3056, 126
        %v3481 = vpop.permute.xlu0 %3480
        %3482 = vrot.lane.b32.xlu0 %v3057, 126
        %v3483 = vpop.permute.xlu0 %3482
        %3484 = vrot.lane.b32.xlu0 %v3058, 126
        %v3485 = vpop.permute.xlu0 %3484
        %3486 = vrot.lane.b32.xlu0 %v3059, 126
        %v3487 = vpop.permute.xlu0 %3486
        %3488 = vrot.lane.b32.xlu0 %v3060, 126
        %v3489 = vpop.permute.xlu0 %3488
        %3490 = vrot.lane.b32.xlu0 %v3061, 126
        %v3491 = vpop.permute.xlu0 %3490
        %3492 = vrot.lane.b32.xlu0 %v3062, 126
        %v3493 = vpop.permute.xlu0 %3492
        %3494 = vrot.lane.b32.xlu0 %v3063, 126
        %v3495 = vpop.permute.xlu0 %3494
        %3496 = vrot.lane.b32.xlu0 %v3064, 126
        %v3497 = vpop.permute.xlu0 %3496
        %3498 = vrot.lane.b32.xlu0 %v3065, 126
        %v3499 = vpop.permute.xlu0 %3498
        %3500 = vrot.lane.b32.xlu0 %v3066, 126
        %v3501 = vpop.permute.xlu0 %3500
        %3502 = vrot.lane.b32.xlu0 %v3067, 126
        %v3503 = vpop.permute.xlu0 %3502
        %3504 = vrot.lane.b32.xlu0 %v3068, 126
        %v3505 = vpop.permute.xlu0 %3504
        %3506 = vrot.lane.b32.xlu0 %v3069, 126
        %v3507 = vpop.permute.xlu0 %3506
        %v3524 = vcombine.low %v3477, %v3485
        %v3525 = vcombine.high %v3477, %v3485
        %v3527 = vunpack.c.l.s4 1983009808
        %v3528 = vunpack.c.0.s8 %v3527
        %v3529 = vlaneseq
        %v3530 = vshrl.u32 %v3529, 7
        %v3531 = vsub.s32 %v3528, %v3530
        %v3532 = vrot.slane %v3524, %v3531
        %v3534 = vunpack.c.l.s4 1983009808
        %v3535 = vunpack.c.0.s8 %v3534
        %v3536 = vlaneseq
        %v3537 = vshrl.u32 %v3536, 7
        %v3538 = vsub.s32 %v3535, %v3537
        %v3539 = vrot.slane %v3525, %v3538
        %v3540 = vcombine.low %v3481, %v3489
        %v3541 = vcombine.high %v3481, %v3489
        %v3543 = vunpack.c.l.s4 1983009808
        %v3544 = vunpack.c.0.s8 %v3543
        %v3545 = vlaneseq
        %v3546 = vshrl.u32 %v3545, 7
        %v3547 = vsub.s32 %v3544, %v3546
        %v3548 = vrot.slane %v3540, %v3547
        %v3550 = vunpack.c.l.s4 1983009808
        %v3551 = vunpack.c.0.s8 %v3550
        %v3552 = vlaneseq
        %v3553 = vshrl.u32 %v3552, 7
        %v3554 = vsub.s32 %v3551, %v3553
        %v3555 = vrot.slane %v3541, %v3554
        %v3556 = vcombine.low %v3493, %v3501
        %v3557 = vcombine.high %v3493, %v3501
        %v3559 = vunpack.c.l.s4 1983009808
        %v3560 = vunpack.c.0.s8 %v3559
        %v3561 = vlaneseq
        %v3562 = vshrl.u32 %v3561, 7
        %v3563 = vsub.s32 %v3560, %v3562
        %v3564 = vrot.slane %v3556, %v3563
        %v3566 = vunpack.c.l.s4 1983009808
        %v3567 = vunpack.c.0.s8 %v3566
        %v3568 = vlaneseq
        %v3569 = vshrl.u32 %v3568, 7
        %v3570 = vsub.s32 %v3567, %v3569
        %v3571 = vrot.slane %v3557, %v3570
        %v3572 = vcombine.low %v3497, %v3505
        %v3573 = vcombine.high %v3497, %v3505
        %v3575 = vunpack.c.l.s4 1983009808
        %v3576 = vunpack.c.0.s8 %v3575
        %v3577 = vlaneseq
        %v3578 = vshrl.u32 %v3577, 7
        %v3579 = vsub.s32 %v3576, %v3578
        %v3580 = vrot.slane %v3572, %v3579
        %v3582 = vunpack.c.l.s4 1983009808
        %v3583 = vunpack.c.0.s8 %v3582
        %v3584 = vlaneseq
        %v3585 = vshrl.u32 %v3584, 7
        %v3586 = vsub.s32 %v3583, %v3585
        %v3587 = vrot.slane %v3573, %v3586
        %v3588 = vcombine.low %v3532, %v3548
        %v3589 = vcombine.high %v3532, %v3548
        %v3591 = vunpack.c.l.s4 1934713408
        %v3592 = vunpack.c.0.s8 %v3591
        %v3593 = vlaneseq
        %v3594 = vshrl.u32 %v3593, 7
        %v3595 = vsub.s32 %v3592, %v3594
        %v3596 = vrot.slane %v3588, %v3595
        %v3598 = vunpack.c.l.s4 1934713408
        %v3599 = vunpack.c.0.s8 %v3598
        %v3600 = vlaneseq
        %v3601 = vshrl.u32 %v3600, 7
        %v3602 = vsub.s32 %v3599, %v3601
        %v3603 = vrot.slane %v3589, %v3602
        %v3604 = vcombine.low %v3539, %v3555
        %v3605 = vcombine.high %v3539, %v3555
        %v3607 = vunpack.c.l.s4 1934713408
        %v3608 = vunpack.c.0.s8 %v3607
        %v3609 = vlaneseq
        %v3610 = vshrl.u32 %v3609, 7
        %v3611 = vsub.s32 %v3608, %v3610
        %v3612 = vrot.slane %v3604, %v3611
        %v3614 = vunpack.c.l.s4 1934713408
        %v3615 = vunpack.c.0.s8 %v3614
        %v3616 = vlaneseq
        %v3617 = vshrl.u32 %v3616, 7
        %v3618 = vsub.s32 %v3615, %v3617
        %v3619 = vrot.slane %v3605, %v3618
        %v3620 = vcombine.low %v3564, %v3580
        %v3621 = vcombine.high %v3564, %v3580
        %v3623 = vunpack.c.l.s4 1934713408
        %v3624 = vunpack.c.0.s8 %v3623
        %v3625 = vlaneseq
        %v3626 = vshrl.u32 %v3625, 7
        %v3627 = vsub.s32 %v3624, %v3626
        %v3628 = vrot.slane %v3620, %v3627
        %v3630 = vunpack.c.l.s4 1934713408
        %v3631 = vunpack.c.0.s8 %v3630
        %v3632 = vlaneseq
        %v3633 = vshrl.u32 %v3632, 7
        %v3634 = vsub.s32 %v3631, %v3633
        %v3635 = vrot.slane %v3621, %v3634
        %v3636 = vcombine.low %v3571, %v3587
        %v3637 = vcombine.high %v3571, %v3587
        %v3639 = vunpack.c.l.s4 1934713408
        %v3640 = vunpack.c.0.s8 %v3639
        %v3641 = vlaneseq
        %v3642 = vshrl.u32 %v3641, 7
        %v3643 = vsub.s32 %v3640, %v3642
        %v3644 = vrot.slane %v3636, %v3643
        %v3646 = vunpack.c.l.s4 1934713408
        %v3647 = vunpack.c.0.s8 %v3646
        %v3648 = vlaneseq
        %v3649 = vshrl.u32 %v3648, 7
        %v3650 = vsub.s32 %v3647, %v3649
        %v3651 = vrot.slane %v3637, %v3650
        %v3652 = vcombine.low %v3596, %v3628
        %v3653 = vcombine.high %v3596, %v3628
        %v3654 = vcombine.low %v3603, %v3635
        %v3655 = vcombine.high %v3603, %v3635
        %v3656 = vcombine.low %v3612, %v3644
        %v3657 = vcombine.high %v3612, %v3644
        %v3658 = vcombine.low %v3619, %v3651
        %v3659 = vcombine.high %v3619, %v3651
        %v3660 = vcombine.low %v3479, %v3487
        %v3661 = vcombine.high %v3479, %v3487
        %v3663 = vunpack.c.l.s4 1983009808
        %v3664 = vunpack.c.0.s8 %v3663
        %v3665 = vlaneseq
        %v3666 = vshrl.u32 %v3665, 7
        %v3667 = vsub.s32 %v3664, %v3666
        %v3668 = vrot.slane %v3660, %v3667
        %v3670 = vunpack.c.l.s4 1983009808
        %v3671 = vunpack.c.0.s8 %v3670
        %v3672 = vlaneseq
        %v3673 = vshrl.u32 %v3672, 7
        %v3674 = vsub.s32 %v3671, %v3673
        %v3675 = vrot.slane %v3661, %v3674
        %v3676 = vcombine.low %v3483, %v3491
        %v3677 = vcombine.high %v3483, %v3491
        %v3679 = vunpack.c.l.s4 1983009808
        %v3680 = vunpack.c.0.s8 %v3679
        %v3681 = vlaneseq
        %v3682 = vshrl.u32 %v3681, 7
        %v3683 = vsub.s32 %v3680, %v3682
        %v3684 = vrot.slane %v3676, %v3683
        %v3686 = vunpack.c.l.s4 1983009808
        %v3687 = vunpack.c.0.s8 %v3686
        %v3688 = vlaneseq
        %v3689 = vshrl.u32 %v3688, 7
        %v3690 = vsub.s32 %v3687, %v3689
        %v3691 = vrot.slane %v3677, %v3690
        %v3692 = vcombine.low %v3495, %v3503
        %v3693 = vcombine.high %v3495, %v3503
        %v3695 = vunpack.c.l.s4 1983009808
        %v3696 = vunpack.c.0.s8 %v3695
        %v3697 = vlaneseq
        %v3698 = vshrl.u32 %v3697, 7
        %v3699 = vsub.s32 %v3696, %v3698
        %v3700 = vrot.slane %v3692, %v3699
        %v3702 = vunpack.c.l.s4 1983009808
        %v3703 = vunpack.c.0.s8 %v3702
        %v3704 = vlaneseq
        %v3705 = vshrl.u32 %v3704, 7
        %v3706 = vsub.s32 %v3703, %v3705
        %v3707 = vrot.slane %v3693, %v3706
        %v3708 = vcombine.low %v3499, %v3507
        %v3709 = vcombine.high %v3499, %v3507
        %v3711 = vunpack.c.l.s4 1983009808
        %v3712 = vunpack.c.0.s8 %v3711
        %v3713 = vlaneseq
        %v3714 = vshrl.u32 %v3713, 7
        %v3715 = vsub.s32 %v3712, %v3714
        %v3716 = vrot.slane %v3708, %v3715
        %v3718 = vunpack.c.l.s4 1983009808
        %v3719 = vunpack.c.0.s8 %v3718
        %v3720 = vlaneseq
        %v3721 = vshrl.u32 %v3720, 7
        %v3722 = vsub.s32 %v3719, %v3721
        %v3723 = vrot.slane %v3709, %v3722
        %v3724 = vcombine.low %v3668, %v3684
        %v3725 = vcombine.high %v3668, %v3684
        %v3727 = vunpack.c.l.s4 1934713408
        %v3728 = vunpack.c.0.s8 %v3727
        %v3729 = vlaneseq
        %v3730 = vshrl.u32 %v3729, 7
        %v3731 = vsub.s32 %v3728, %v3730
        %v3732 = vrot.slane %v3724, %v3731
        %v3734 = vunpack.c.l.s4 1934713408
        %v3735 = vunpack.c.0.s8 %v3734
        %v3736 = vlaneseq
        %v3737 = vshrl.u32 %v3736, 7
        %v3738 = vsub.s32 %v3735, %v3737
        %v3739 = vrot.slane %v3725, %v3738
        %v3740 = vcombine.low %v3675, %v3691
        %v3741 = vcombine.high %v3675, %v3691
        %v3743 = vunpack.c.l.s4 1934713408
        %v3744 = vunpack.c.0.s8 %v3743
        %v3745 = vlaneseq
        %v3746 = vshrl.u32 %v3745, 7
        %v3747 = vsub.s32 %v3744, %v3746
        %v3748 = vrot.slane %v3740, %v3747
        %v3750 = vunpack.c.l.s4 1934713408
        %v3751 = vunpack.c.0.s8 %v3750
        %v3752 = vlaneseq
        %v3753 = vshrl.u32 %v3752, 7
        %v3754 = vsub.s32 %v3751, %v3753
        %v3755 = vrot.slane %v3741, %v3754
        %v3756 = vcombine.low %v3700, %v3716
        %v3757 = vcombine.high %v3700, %v3716
        %v3759 = vunpack.c.l.s4 1934713408
        %v3760 = vunpack.c.0.s8 %v3759
        %v3761 = vlaneseq
        %v3762 = vshrl.u32 %v3761, 7
        %v3763 = vsub.s32 %v3760, %v3762
        %v3764 = vrot.slane %v3756, %v3763
        %v3766 = vunpack.c.l.s4 1934713408
        %v3767 = vunpack.c.0.s8 %v3766
        %v3768 = vlaneseq
        %v3769 = vshrl.u32 %v3768, 7
        %v3770 = vsub.s32 %v3767, %v3769
        %v3771 = vrot.slane %v3757, %v3770
        %v3772 = vcombine.low %v3707, %v3723
        %v3773 = vcombine.high %v3707, %v3723
        %v3775 = vunpack.c.l.s4 1934713408
        %v3776 = vunpack.c.0.s8 %v3775
        %v3777 = vlaneseq
        %v3778 = vshrl.u32 %v3777, 7
        %v3779 = vsub.s32 %v3776, %v3778
        %v3780 = vrot.slane %v3772, %v3779
        %v3782 = vunpack.c.l.s4 1934713408
        %v3783 = vunpack.c.0.s8 %v3782
        %v3784 = vlaneseq
        %v3785 = vshrl.u32 %v3784, 7
        %v3786 = vsub.s32 %v3783, %v3785
        %v3787 = vrot.slane %v3773, %v3786
        %v3788 = vcombine.low %v3732, %v3764
        %v3789 = vcombine.high %v3732, %v3764
        %v3790 = vcombine.low %v3739, %v3771
        %v3791 = vcombine.high %v3739, %v3771
        %v3792 = vcombine.low %v3748, %v3780
        %v3793 = vcombine.high %v3748, %v3780
        %v3794 = vcombine.low %v3755, %v3787
        %v3795 = vcombine.high %v3755, %v3787
        %3797 = vrot.lane.b32.xlu0 %v3653, 16
        %v3798 = vpop.permute.xlu0 %3797
        %3801 = vrot.lane.b32.xlu0 %v3654, 32
        %v3802 = vpop.permute.xlu0 %3801
        %3805 = vrot.lane.b32.xlu0 %v3655, 48
        %v3806 = vpop.permute.xlu0 %3805
        %3809 = vrot.lane.b32.xlu0 %v3656, 64
        %v3810 = vpop.permute.xlu0 %3809
        %3813 = vrot.lane.b32.xlu0 %v3657, 80
        %v3814 = vpop.permute.xlu0 %3813
        %3817 = vrot.lane.b32.xlu0 %v3658, 96
        %v3818 = vpop.permute.xlu0 %3817
        %3821 = vrot.lane.b32.xlu0 %v3659, 112
        %v3822 = vpop.permute.xlu0 %3821
        %3825 = vrot.lane.b32.xlu0 %v3789, 16
        %v3826 = vpop.permute.xlu0 %3825
        %3829 = vrot.lane.b32.xlu0 %v3790, 32
        %v3830 = vpop.permute.xlu0 %3829
        %3833 = vrot.lane.b32.xlu0 %v3791, 48
        %v3834 = vpop.permute.xlu0 %3833
        %3837 = vrot.lane.b32.xlu0 %v3792, 64
        %v3838 = vpop.permute.xlu0 %3837
        %3841 = vrot.lane.b32.xlu0 %v3793, 80
        %v3842 = vpop.permute.xlu0 %3841
        %3845 = vrot.lane.b32.xlu0 %v3794, 96
        %v3846 = vpop.permute.xlu0 %3845
        %3849 = vrot.lane.b32.xlu0 %v3795, 112
        %v3850 = vpop.permute.xlu0 %3849
        %v3852 = vsel %vm314, %v3652, %v3798
        %v3853 = vsel %vm995, %v3852, %v3802
        %v3854 = vsel %vm997, %v3853, %v3806
        %v3855 = vsel %vm999, %v3854, %v3810
        %v3856 = vsel %vm1001, %v3855, %v3814
        %v3857 = vsel %vm1003, %v3856, %v3818
        %v3858 = vsel %vm1005, %v3857, %v3822
        %v3859 = vsel %vm314, %v3788, %v3826
        %v3860 = vsel %vm995, %v3859, %v3830
        %v3861 = vsel %vm997, %v3860, %v3834
        %v3862 = vsel %vm999, %v3861, %v3838
        %v3863 = vsel %vm1001, %v3862, %v3842
        %v3864 = vsel %vm1003, %v3863, %v3846
        %v3865 = vsel %vm1005, %v3864, %v3850
        %v3866 = vpack.c.bf16 %v3858, %v3468
        %v3867 = vpack.c.bf16 %v3865, %v3475
        %v3870 = vunpack.c.l.b16 %v3866
        %v3871 = vunpack.c.l.b16 %v3867
        %v3872 = vunpack.c.h.b16 %v3866
        %v3873 = vunpack.c.h.b16 %v3867
        %v3874 = vpack.c.b16 %v3871, %v3870
        %v3875 = vpack.c.b16 %v3873, %v3872
        %3878 = vst [vmem:[#allocation3 + $0x30] sm:$0xff] %v3874
        %3879 = vst [vmem:[#allocation3 + $0x38] sm:$0xff] %v3875
        %v3880 = vld [vmem:[#allocation2 + $0x1] sm:$0xff]
        %v3881 = vld [vmem:[#allocation2 + $0x9] sm:$0xff]
        %v3882 = vld [vmem:[#allocation2 + $0x19] sm:$0xff]
        %v3883 = vld [vmem:[#allocation2 + $0x21] sm:$0xff]
        %v3884 = vld [vmem:[#allocation2 + $0x31] sm:$0xff]
        %v3885 = vld [vmem:[#allocation2 + $0x39] sm:$0xff]
        %v3886 = vld [vmem:[#allocation2 + $0x49] sm:$0xff]
        %v3887 = vld [vmem:[#allocation2 + $0x51] sm:$0xff]
        %v3888 = vld [vmem:[#allocation2 + $0x61] sm:$0xff]
        %v3889 = vld [vmem:[#allocation2 + $0x69] sm:$0xff]
        %v3890 = vld [vmem:[#allocation2 + $0x79] sm:$0xff]
        %v3891 = vld [vmem:[#allocation2 + $0x81] sm:$0xff]
        %v3892 = vld [vmem:[#allocation2 + $0x91] sm:$0xff]
        %v3893 = vld [vmem:[#allocation2 + $0x99] sm:$0xff]
        %v3894 = vld [vmem:[#allocation2 + $0xa9] sm:$0xff]
        %v3895 = vld [vmem:[#allocation2 + $0xb1] sm:$0xff]
        %3912 = vrot.lane.b32.xlu0 %v3880, 125
        %v3913 = vpop.permute.xlu0 %3912
        %3914 = vrot.lane.b32.xlu0 %v3881, 125
        %v3915 = vpop.permute.xlu0 %3914
        %3916 = vrot.lane.b32.xlu0 %v3882, 125
        %v3917 = vpop.permute.xlu0 %3916
        %3918 = vrot.lane.b32.xlu0 %v3883, 125
        %v3919 = vpop.permute.xlu0 %3918
        %3920 = vrot.lane.b32.xlu0 %v3884, 125
        %v3921 = vpop.permute.xlu0 %3920
        %3922 = vrot.lane.b32.xlu0 %v3885, 125
        %v3923 = vpop.permute.xlu0 %3922
        %3924 = vrot.lane.b32.xlu0 %v3886, 125
        %v3925 = vpop.permute.xlu0 %3924
        %3926 = vrot.lane.b32.xlu0 %v3887, 125
        %v3927 = vpop.permute.xlu0 %3926
        %3928 = vrot.lane.b32.xlu0 %v3888, 125
        %v3929 = vpop.permute.xlu0 %3928
        %3930 = vrot.lane.b32.xlu0 %v3889, 125
        %v3931 = vpop.permute.xlu0 %3930
        %3932 = vrot.lane.b32.xlu0 %v3890, 125
        %v3933 = vpop.permute.xlu0 %3932
        %3934 = vrot.lane.b32.xlu0 %v3891, 125
        %v3935 = vpop.permute.xlu0 %3934
        %3936 = vrot.lane.b32.xlu0 %v3892, 125
        %v3937 = vpop.permute.xlu0 %3936
        %3938 = vrot.lane.b32.xlu0 %v3893, 125
        %v3939 = vpop.permute.xlu0 %3938
        %3940 = vrot.lane.b32.xlu0 %v3894, 125
        %v3941 = vpop.permute.xlu0 %3940
        %3942 = vrot.lane.b32.xlu0 %v3895, 125
        %v3943 = vpop.permute.xlu0 %3942
        %v3960 = vcombine.low %v3913, %v3921
        %v3961 = vcombine.high %v3913, %v3921
        %v3963 = vunpack.c.l.s4 1983009808
        %v3964 = vunpack.c.0.s8 %v3963
        %v3965 = vlaneseq
        %v3966 = vshrl.u32 %v3965, 7
        %v3967 = vsub.s32 %v3964, %v3966
        %v3968 = vrot.slane %v3960, %v3967
        %v3970 = vunpack.c.l.s4 1983009808
        %v3971 = vunpack.c.0.s8 %v3970
        %v3972 = vlaneseq
        %v3973 = vshrl.u32 %v3972, 7
        %v3974 = vsub.s32 %v3971, %v3973
        %v3975 = vrot.slane %v3961, %v3974
        %v3976 = vcombine.low %v3917, %v3925
        %v3977 = vcombine.high %v3917, %v3925
        %v3979 = vunpack.c.l.s4 1983009808
        %v3980 = vunpack.c.0.s8 %v3979
        %v3981 = vlaneseq
        %v3982 = vshrl.u32 %v3981, 7
        %v3983 = vsub.s32 %v3980, %v3982
        %v3984 = vrot.slane %v3976, %v3983
        %v3986 = vunpack.c.l.s4 1983009808
        %v3987 = vunpack.c.0.s8 %v3986
        %v3988 = vlaneseq
        %v3989 = vshrl.u32 %v3988, 7
        %v3990 = vsub.s32 %v3987, %v3989
        %v3991 = vrot.slane %v3977, %v3990
        %v3992 = vcombine.low %v3929, %v3937
        %v3993 = vcombine.high %v3929, %v3937
        %v3995 = vunpack.c.l.s4 1983009808
        %v3996 = vunpack.c.0.s8 %v3995
        %v3997 = vlaneseq
        %v3998 = vshrl.u32 %v3997, 7
        %v3999 = vsub.s32 %v3996, %v3998
        %v4000 = vrot.slane %v3992, %v3999
        %v4002 = vunpack.c.l.s4 1983009808
        %v4003 = vunpack.c.0.s8 %v4002
        %v4004 = vlaneseq
        %v4005 = vshrl.u32 %v4004, 7
        %v4006 = vsub.s32 %v4003, %v4005
        %v4007 = vrot.slane %v3993, %v4006
        %v4008 = vcombine.low %v3933, %v3941
        %v4009 = vcombine.high %v3933, %v3941
        %v4011 = vunpack.c.l.s4 1983009808
        %v4012 = vunpack.c.0.s8 %v4011
        %v4013 = vlaneseq
        %v4014 = vshrl.u32 %v4013, 7
        %v4015 = vsub.s32 %v4012, %v4014
        %v4016 = vrot.slane %v4008, %v4015
        %v4018 = vunpack.c.l.s4 1983009808
        %v4019 = vunpack.c.0.s8 %v4018
        %v4020 = vlaneseq
        %v4021 = vshrl.u32 %v4020, 7
        %v4022 = vsub.s32 %v4019, %v4021
        %v4023 = vrot.slane %v4009, %v4022
        %v4024 = vcombine.low %v3968, %v3984
        %v4025 = vcombine.high %v3968, %v3984
        %v4027 = vunpack.c.l.s4 1934713408
        %v4028 = vunpack.c.0.s8 %v4027
        %v4029 = vlaneseq
        %v4030 = vshrl.u32 %v4029, 7
        %v4031 = vsub.s32 %v4028, %v4030
        %v4032 = vrot.slane %v4024, %v4031
        %v4034 = vunpack.c.l.s4 1934713408
        %v4035 = vunpack.c.0.s8 %v4034
        %v4036 = vlaneseq
        %v4037 = vshrl.u32 %v4036, 7
        %v4038 = vsub.s32 %v4035, %v4037
        %v4039 = vrot.slane %v4025, %v4038
        %v4040 = vcombine.low %v3975, %v3991
        %v4041 = vcombine.high %v3975, %v3991
        %v4043 = vunpack.c.l.s4 1934713408
        %v4044 = vunpack.c.0.s8 %v4043
        %v4045 = vlaneseq
        %v4046 = vshrl.u32 %v4045, 7
        %v4047 = vsub.s32 %v4044, %v4046
        %v4048 = vrot.slane %v4040, %v4047
        %v4050 = vunpack.c.l.s4 1934713408
        %v4051 = vunpack.c.0.s8 %v4050
        %v4052 = vlaneseq
        %v4053 = vshrl.u32 %v4052, 7
        %v4054 = vsub.s32 %v4051, %v4053
        %v4055 = vrot.slane %v4041, %v4054
        %v4056 = vcombine.low %v4000, %v4016
        %v4057 = vcombine.high %v4000, %v4016
        %v4059 = vunpack.c.l.s4 1934713408
        %v4060 = vunpack.c.0.s8 %v4059
        %v4061 = vlaneseq
        %v4062 = vshrl.u32 %v4061, 7
        %v4063 = vsub.s32 %v4060, %v4062
        %v4064 = vrot.slane %v4056, %v4063
        %v4066 = vunpack.c.l.s4 1934713408
        %v4067 = vunpack.c.0.s8 %v4066
        %v4068 = vlaneseq
        %v4069 = vshrl.u32 %v4068, 7
        %v4070 = vsub.s32 %v4067, %v4069
        %v4071 = vrot.slane %v4057, %v4070
        %v4072 = vcombine.low %v4007, %v4023
        %v4073 = vcombine.high %v4007, %v4023
        %v4075 = vunpack.c.l.s4 1934713408
        %v4076 = vunpack.c.0.s8 %v4075
        %v4077 = vlaneseq
        %v4078 = vshrl.u32 %v4077, 7
        %v4079 = vsub.s32 %v4076, %v4078
        %v4080 = vrot.slane %v4072, %v4079
        %v4082 = vunpack.c.l.s4 1934713408
        %v4083 = vunpack.c.0.s8 %v4082
        %v4084 = vlaneseq
        %v4085 = vshrl.u32 %v4084, 7
        %v4086 = vsub.s32 %v4083, %v4085
        %v4087 = vrot.slane %v4073, %v4086
        %v4088 = vcombine.low %v4032, %v4064
        %v4089 = vcombine.high %v4032, %v4064
        %v4090 = vcombine.low %v4039, %v4071
        %v4091 = vcombine.high %v4039, %v4071
        %v4092 = vcombine.low %v4048, %v4080
        %v4093 = vcombine.high %v4048, %v4080
        %v4094 = vcombine.low %v4055, %v4087
        %v4095 = vcombine.high %v4055, %v4087
        %v4096 = vcombine.low %v3915, %v3923
        %v4097 = vcombine.high %v3915, %v3923
        %v4099 = vunpack.c.l.s4 1983009808
        %v4100 = vunpack.c.0.s8 %v4099
        %v4101 = vlaneseq
        %v4102 = vshrl.u32 %v4101, 7
        %v4103 = vsub.s32 %v4100, %v4102
        %v4104 = vrot.slane %v4096, %v4103
        %v4106 = vunpack.c.l.s4 1983009808
        %v4107 = vunpack.c.0.s8 %v4106
        %v4108 = vlaneseq
        %v4109 = vshrl.u32 %v4108, 7
        %v4110 = vsub.s32 %v4107, %v4109
        %v4111 = vrot.slane %v4097, %v4110
        %v4112 = vcombine.low %v3919, %v3927
        %v4113 = vcombine.high %v3919, %v3927
        %v4115 = vunpack.c.l.s4 1983009808
        %v4116 = vunpack.c.0.s8 %v4115
        %v4117 = vlaneseq
        %v4118 = vshrl.u32 %v4117, 7
        %v4119 = vsub.s32 %v4116, %v4118
        %v4120 = vrot.slane %v4112, %v4119
        %v4122 = vunpack.c.l.s4 1983009808
        %v4123 = vunpack.c.0.s8 %v4122
        %v4124 = vlaneseq
        %v4125 = vshrl.u32 %v4124, 7
        %v4126 = vsub.s32 %v4123, %v4125
        %v4127 = vrot.slane %v4113, %v4126
        %v4128 = vcombine.low %v3931, %v3939
        %v4129 = vcombine.high %v3931, %v3939
        %v4131 = vunpack.c.l.s4 1983009808
        %v4132 = vunpack.c.0.s8 %v4131
        %v4133 = vlaneseq
        %v4134 = vshrl.u32 %v4133, 7
        %v4135 = vsub.s32 %v4132, %v4134
        %v4136 = vrot.slane %v4128, %v4135
        %v4138 = vunpack.c.l.s4 1983009808
        %v4139 = vunpack.c.0.s8 %v4138
        %v4140 = vlaneseq
        %v4141 = vshrl.u32 %v4140, 7
        %v4142 = vsub.s32 %v4139, %v4141
        %v4143 = vrot.slane %v4129, %v4142
        %v4144 = vcombine.low %v3935, %v3943
        %v4145 = vcombine.high %v3935, %v3943
        %v4147 = vunpack.c.l.s4 1983009808
        %v4148 = vunpack.c.0.s8 %v4147
        %v4149 = vlaneseq
        %v4150 = vshrl.u32 %v4149, 7
        %v4151 = vsub.s32 %v4148, %v4150
        %v4152 = vrot.slane %v4144, %v4151
        %v4154 = vunpack.c.l.s4 1983009808
        %v4155 = vunpack.c.0.s8 %v4154
        %v4156 = vlaneseq
        %v4157 = vshrl.u32 %v4156, 7
        %v4158 = vsub.s32 %v4155, %v4157
        %v4159 = vrot.slane %v4145, %v4158
        %v4160 = vcombine.low %v4104, %v4120
        %v4161 = vcombine.high %v4104, %v4120
        %v4163 = vunpack.c.l.s4 1934713408
        %v4164 = vunpack.c.0.s8 %v4163
        %v4165 = vlaneseq
        %v4166 = vshrl.u32 %v4165, 7
        %v4167 = vsub.s32 %v4164, %v4166
        %v4168 = vrot.slane %v4160, %v4167
        %v4170 = vunpack.c.l.s4 1934713408
        %v4171 = vunpack.c.0.s8 %v4170
        %v4172 = vlaneseq
        %v4173 = vshrl.u32 %v4172, 7
        %v4174 = vsub.s32 %v4171, %v4173
        %v4175 = vrot.slane %v4161, %v4174
        %v4176 = vcombine.low %v4111, %v4127
        %v4177 = vcombine.high %v4111, %v4127
        %v4179 = vunpack.c.l.s4 1934713408
        %v4180 = vunpack.c.0.s8 %v4179
        %v4181 = vlaneseq
        %v4182 = vshrl.u32 %v4181, 7
        %v4183 = vsub.s32 %v4180, %v4182
        %v4184 = vrot.slane %v4176, %v4183
        %v4186 = vunpack.c.l.s4 1934713408
        %v4187 = vunpack.c.0.s8 %v4186
        %v4188 = vlaneseq
        %v4189 = vshrl.u32 %v4188, 7
        %v4190 = vsub.s32 %v4187, %v4189
        %v4191 = vrot.slane %v4177, %v4190
        %v4192 = vcombine.low %v4136, %v4152
        %v4193 = vcombine.high %v4136, %v4152
        %v4195 = vunpack.c.l.s4 1934713408
        %v4196 = vunpack.c.0.s8 %v4195
        %v4197 = vlaneseq
        %v4198 = vshrl.u32 %v4197, 7
        %v4199 = vsub.s32 %v4196, %v4198
        %v4200 = vrot.slane %v4192, %v4199
        %v4202 = vunpack.c.l.s4 1934713408
        %v4203 = vunpack.c.0.s8 %v4202
        %v4204 = vlaneseq
        %v4205 = vshrl.u32 %v4204, 7
        %v4206 = vsub.s32 %v4203, %v4205
        %v4207 = vrot.slane %v4193, %v4206
        %v4208 = vcombine.low %v4143, %v4159
        %v4209 = vcombine.high %v4143, %v4159
        %v4211 = vunpack.c.l.s4 1934713408
        %v4212 = vunpack.c.0.s8 %v4211
        %v4213 = vlaneseq
        %v4214 = vshrl.u32 %v4213, 7
        %v4215 = vsub.s32 %v4212, %v4214
        %v4216 = vrot.slane %v4208, %v4215
        %v4218 = vunpack.c.l.s4 1934713408
        %v4219 = vunpack.c.0.s8 %v4218
        %v4220 = vlaneseq
        %v4221 = vshrl.u32 %v4220, 7
        %v4222 = vsub.s32 %v4219, %v4221
        %v4223 = vrot.slane %v4209, %v4222
        %v4224 = vcombine.low %v4168, %v4200
        %v4225 = vcombine.high %v4168, %v4200
        %v4226 = vcombine.low %v4175, %v4207
        %v4227 = vcombine.high %v4175, %v4207
        %v4228 = vcombine.low %v4184, %v4216
        %v4229 = vcombine.high %v4184, %v4216
        %v4230 = vcombine.low %v4191, %v4223
        %v4231 = vcombine.high %v4191, %v4223
        %4233 = vrot.lane.b32.xlu0 %v4089, 16
        %v4234 = vpop.permute.xlu0 %4233
        %4237 = vrot.lane.b32.xlu0 %v4090, 32
        %v4238 = vpop.permute.xlu0 %4237
        %4241 = vrot.lane.b32.xlu0 %v4091, 48
        %v4242 = vpop.permute.xlu0 %4241
        %4245 = vrot.lane.b32.xlu0 %v4092, 64
        %v4246 = vpop.permute.xlu0 %4245
        %4249 = vrot.lane.b32.xlu0 %v4093, 80
        %v4250 = vpop.permute.xlu0 %4249
        %4253 = vrot.lane.b32.xlu0 %v4094, 96
        %v4254 = vpop.permute.xlu0 %4253
        %4257 = vrot.lane.b32.xlu0 %v4095, 112
        %v4258 = vpop.permute.xlu0 %4257
        %4261 = vrot.lane.b32.xlu0 %v4225, 16
        %v4262 = vpop.permute.xlu0 %4261
        %4265 = vrot.lane.b32.xlu0 %v4226, 32
        %v4266 = vpop.permute.xlu0 %4265
        %4269 = vrot.lane.b32.xlu0 %v4227, 48
        %v4270 = vpop.permute.xlu0 %4269
        %4273 = vrot.lane.b32.xlu0 %v4228, 64
        %v4274 = vpop.permute.xlu0 %4273
        %4277 = vrot.lane.b32.xlu0 %v4229, 80
        %v4278 = vpop.permute.xlu0 %4277
        %4281 = vrot.lane.b32.xlu0 %v4230, 96
        %v4282 = vpop.permute.xlu0 %4281
        %4285 = vrot.lane.b32.xlu0 %v4231, 112
        %v4286 = vpop.permute.xlu0 %4285
        %v4288 = vsel %vm314, %v4088, %v4234
        %v4289 = vsel %vm995, %v4288, %v4238
        %v4290 = vsel %vm997, %v4289, %v4242
        %v4291 = vsel %vm999, %v4290, %v4246
        %v4292 = vsel %vm1001, %v4291, %v4250
        %v4293 = vsel %vm1003, %v4292, %v4254
        %v4294 = vsel %vm1005, %v4293, %v4258
        %v4295 = vsel %vm314, %v4224, %v4262
        %v4296 = vsel %vm995, %v4295, %v4266
        %v4297 = vsel %vm997, %v4296, %v4270
        %v4298 = vsel %vm999, %v4297, %v4274
        %v4299 = vsel %vm1001, %v4298, %v4278
        %v4300 = vsel %vm1003, %v4299, %v4282
        %v4301 = vsel %vm1005, %v4300, %v4286
        %4302 = vrot.lane.b32.xlu0 %v3880, 124
        %v4303 = vpop.permute.xlu0 %4302
        %4304 = vrot.lane.b32.xlu0 %v3881, 124
        %v4305 = vpop.permute.xlu0 %4304
        %4306 = vrot.lane.b32.xlu0 %v3882, 124
        %v4307 = vpop.permute.xlu0 %4306
        %4308 = vrot.lane.b32.xlu0 %v3883, 124
        %v4309 = vpop.permute.xlu0 %4308
        %4310 = vrot.lane.b32.xlu0 %v3884, 124
        %v4311 = vpop.permute.xlu0 %4310
        %4312 = vrot.lane.b32.xlu0 %v3885, 124
        %v4313 = vpop.permute.xlu0 %4312
        %4314 = vrot.lane.b32.xlu0 %v3886, 124
        %v4315 = vpop.permute.xlu0 %4314
        %4316 = vrot.lane.b32.xlu0 %v3887, 124
        %v4317 = vpop.permute.xlu0 %4316
        %4318 = vrot.lane.b32.xlu0 %v3888, 124
        %v4319 = vpop.permute.xlu0 %4318
        %4320 = vrot.lane.b32.xlu0 %v3889, 124
        %v4321 = vpop.permute.xlu0 %4320
        %4322 = vrot.lane.b32.xlu0 %v3890, 124
        %v4323 = vpop.permute.xlu0 %4322
        %4324 = vrot.lane.b32.xlu0 %v3891, 124
        %v4325 = vpop.permute.xlu0 %4324
        %4326 = vrot.lane.b32.xlu0 %v3892, 124
        %v4327 = vpop.permute.xlu0 %4326
        %4328 = vrot.lane.b32.xlu0 %v3893, 124
        %v4329 = vpop.permute.xlu0 %4328
        %4330 = vrot.lane.b32.xlu0 %v3894, 124
        %v4331 = vpop.permute.xlu0 %4330
        %4332 = vrot.lane.b32.xlu0 %v3895, 124
        %v4333 = vpop.permute.xlu0 %4332
        %v4350 = vcombine.low %v4303, %v4311
        %v4351 = vcombine.high %v4303, %v4311
        %v4353 = vunpack.c.l.s4 1983009808
        %v4354 = vunpack.c.0.s8 %v4353
        %v4355 = vlaneseq
        %v4356 = vshrl.u32 %v4355, 7
        %v4357 = vsub.s32 %v4354, %v4356
        %v4358 = vrot.slane %v4350, %v4357
        %v4360 = vunpack.c.l.s4 1983009808
        %v4361 = vunpack.c.0.s8 %v4360
        %v4362 = vlaneseq
        %v4363 = vshrl.u32 %v4362, 7
        %v4364 = vsub.s32 %v4361, %v4363
        %v4365 = vrot.slane %v4351, %v4364
        %v4366 = vcombine.low %v4307, %v4315
        %v4367 = vcombine.high %v4307, %v4315
        %v4369 = vunpack.c.l.s4 1983009808
        %v4370 = vunpack.c.0.s8 %v4369
        %v4371 = vlaneseq
        %v4372 = vshrl.u32 %v4371, 7
        %v4373 = vsub.s32 %v4370, %v4372
        %v4374 = vrot.slane %v4366, %v4373
        %v4376 = vunpack.c.l.s4 1983009808
        %v4377 = vunpack.c.0.s8 %v4376
        %v4378 = vlaneseq
        %v4379 = vshrl.u32 %v4378, 7
        %v4380 = vsub.s32 %v4377, %v4379
        %v4381 = vrot.slane %v4367, %v4380
        %v4382 = vcombine.low %v4319, %v4327
        %v4383 = vcombine.high %v4319, %v4327
        %v4385 = vunpack.c.l.s4 1983009808
        %v4386 = vunpack.c.0.s8 %v4385
        %v4387 = vlaneseq
        %v4388 = vshrl.u32 %v4387, 7
        %v4389 = vsub.s32 %v4386, %v4388
        %v4390 = vrot.slane %v4382, %v4389
        %v4392 = vunpack.c.l.s4 1983009808
        %v4393 = vunpack.c.0.s8 %v4392
        %v4394 = vlaneseq
        %v4395 = vshrl.u32 %v4394, 7
        %v4396 = vsub.s32 %v4393, %v4395
        %v4397 = vrot.slane %v4383, %v4396
        %v4398 = vcombine.low %v4323, %v4331
        %v4399 = vcombine.high %v4323, %v4331
        %v4401 = vunpack.c.l.s4 1983009808
        %v4402 = vunpack.c.0.s8 %v4401
        %v4403 = vlaneseq
        %v4404 = vshrl.u32 %v4403, 7
        %v4405 = vsub.s32 %v4402, %v4404
        %v4406 = vrot.slane %v4398, %v4405
        %v4408 = vunpack.c.l.s4 1983009808
        %v4409 = vunpack.c.0.s8 %v4408
        %v4410 = vlaneseq
        %v4411 = vshrl.u32 %v4410, 7
        %v4412 = vsub.s32 %v4409, %v4411
        %v4413 = vrot.slane %v4399, %v4412
        %v4414 = vcombine.low %v4358, %v4374
        %v4415 = vcombine.high %v4358, %v4374
        %v4417 = vunpack.c.l.s4 1934713408
        %v4418 = vunpack.c.0.s8 %v4417
        %v4419 = vlaneseq
        %v4420 = vshrl.u32 %v4419, 7
        %v4421 = vsub.s32 %v4418, %v4420
        %v4422 = vrot.slane %v4414, %v4421
        %v4424 = vunpack.c.l.s4 1934713408
        %v4425 = vunpack.c.0.s8 %v4424
        %v4426 = vlaneseq
        %v4427 = vshrl.u32 %v4426, 7
        %v4428 = vsub.s32 %v4425, %v4427
        %v4429 = vrot.slane %v4415, %v4428
        %v4430 = vcombine.low %v4365, %v4381
        %v4431 = vcombine.high %v4365, %v4381
        %v4433 = vunpack.c.l.s4 1934713408
        %v4434 = vunpack.c.0.s8 %v4433
        %v4435 = vlaneseq
        %v4436 = vshrl.u32 %v4435, 7
        %v4437 = vsub.s32 %v4434, %v4436
        %v4438 = vrot.slane %v4430, %v4437
        %v4440 = vunpack.c.l.s4 1934713408
        %v4441 = vunpack.c.0.s8 %v4440
        %v4442 = vlaneseq
        %v4443 = vshrl.u32 %v4442, 7
        %v4444 = vsub.s32 %v4441, %v4443
        %v4445 = vrot.slane %v4431, %v4444
        %v4446 = vcombine.low %v4390, %v4406
        %v4447 = vcombine.high %v4390, %v4406
        %v4449 = vunpack.c.l.s4 1934713408
        %v4450 = vunpack.c.0.s8 %v4449
        %v4451 = vlaneseq
        %v4452 = vshrl.u32 %v4451, 7
        %v4453 = vsub.s32 %v4450, %v4452
        %v4454 = vrot.slane %v4446, %v4453
        %v4456 = vunpack.c.l.s4 1934713408
        %v4457 = vunpack.c.0.s8 %v4456
        %v4458 = vlaneseq
        %v4459 = vshrl.u32 %v4458, 7
        %v4460 = vsub.s32 %v4457, %v4459
        %v4461 = vrot.slane %v4447, %v4460
        %v4462 = vcombine.low %v4397, %v4413
        %v4463 = vcombine.high %v4397, %v4413
        %v4465 = vunpack.c.l.s4 1934713408
        %v4466 = vunpack.c.0.s8 %v4465
        %v4467 = vlaneseq
        %v4468 = vshrl.u32 %v4467, 7
        %v4469 = vsub.s32 %v4466, %v4468
        %v4470 = vrot.slane %v4462, %v4469
        %v4472 = vunpack.c.l.s4 1934713408
        %v4473 = vunpack.c.0.s8 %v4472
        %v4474 = vlaneseq
        %v4475 = vshrl.u32 %v4474, 7
        %v4476 = vsub.s32 %v4473, %v4475
        %v4477 = vrot.slane %v4463, %v4476
        %v4478 = vcombine.low %v4422, %v4454
        %v4479 = vcombine.high %v4422, %v4454
        %v4480 = vcombine.low %v4429, %v4461
        %v4481 = vcombine.high %v4429, %v4461
        %v4482 = vcombine.low %v4438, %v4470
        %v4483 = vcombine.high %v4438, %v4470
        %v4484 = vcombine.low %v4445, %v4477
        %v4485 = vcombine.high %v4445, %v4477
        %v4486 = vcombine.low %v4305, %v4313
        %v4487 = vcombine.high %v4305, %v4313
        %v4489 = vunpack.c.l.s4 1983009808
        %v4490 = vunpack.c.0.s8 %v4489
        %v4491 = vlaneseq
        %v4492 = vshrl.u32 %v4491, 7
        %v4493 = vsub.s32 %v4490, %v4492
        %v4494 = vrot.slane %v4486, %v4493
        %v4496 = vunpack.c.l.s4 1983009808
        %v4497 = vunpack.c.0.s8 %v4496
        %v4498 = vlaneseq
        %v4499 = vshrl.u32 %v4498, 7
        %v4500 = vsub.s32 %v4497, %v4499
        %v4501 = vrot.slane %v4487, %v4500
        %v4502 = vcombine.low %v4309, %v4317
        %v4503 = vcombine.high %v4309, %v4317
        %v4505 = vunpack.c.l.s4 1983009808
        %v4506 = vunpack.c.0.s8 %v4505
        %v4507 = vlaneseq
        %v4508 = vshrl.u32 %v4507, 7
        %v4509 = vsub.s32 %v4506, %v4508
        %v4510 = vrot.slane %v4502, %v4509
        %v4512 = vunpack.c.l.s4 1983009808
        %v4513 = vunpack.c.0.s8 %v4512
        %v4514 = vlaneseq
        %v4515 = vshrl.u32 %v4514, 7
        %v4516 = vsub.s32 %v4513, %v4515
        %v4517 = vrot.slane %v4503, %v4516
        %v4518 = vcombine.low %v4321, %v4329
        %v4519 = vcombine.high %v4321, %v4329
        %v4521 = vunpack.c.l.s4 1983009808
        %v4522 = vunpack.c.0.s8 %v4521
        %v4523 = vlaneseq
        %v4524 = vshrl.u32 %v4523, 7
        %v4525 = vsub.s32 %v4522, %v4524
        %v4526 = vrot.slane %v4518, %v4525
        %v4528 = vunpack.c.l.s4 1983009808
        %v4529 = vunpack.c.0.s8 %v4528
        %v4530 = vlaneseq
        %v4531 = vshrl.u32 %v4530, 7
        %v4532 = vsub.s32 %v4529, %v4531
        %v4533 = vrot.slane %v4519, %v4532
        %v4534 = vcombine.low %v4325, %v4333
        %v4535 = vcombine.high %v4325, %v4333
        %v4537 = vunpack.c.l.s4 1983009808
        %v4538 = vunpack.c.0.s8 %v4537
        %v4539 = vlaneseq
        %v4540 = vshrl.u32 %v4539, 7
        %v4541 = vsub.s32 %v4538, %v4540
        %v4542 = vrot.slane %v4534, %v4541
        %v4544 = vunpack.c.l.s4 1983009808
        %v4545 = vunpack.c.0.s8 %v4544
        %v4546 = vlaneseq
        %v4547 = vshrl.u32 %v4546, 7
        %v4548 = vsub.s32 %v4545, %v4547
        %v4549 = vrot.slane %v4535, %v4548
        %v4550 = vcombine.low %v4494, %v4510
        %v4551 = vcombine.high %v4494, %v4510
        %v4553 = vunpack.c.l.s4 1934713408
        %v4554 = vunpack.c.0.s8 %v4553
        %v4555 = vlaneseq
        %v4556 = vshrl.u32 %v4555, 7
        %v4557 = vsub.s32 %v4554, %v4556
        %v4558 = vrot.slane %v4550, %v4557
        %v4560 = vunpack.c.l.s4 1934713408
        %v4561 = vunpack.c.0.s8 %v4560
        %v4562 = vlaneseq
        %v4563 = vshrl.u32 %v4562, 7
        %v4564 = vsub.s32 %v4561, %v4563
        %v4565 = vrot.slane %v4551, %v4564
        %v4566 = vcombine.low %v4501, %v4517
        %v4567 = vcombine.high %v4501, %v4517
        %v4569 = vunpack.c.l.s4 1934713408
        %v4570 = vunpack.c.0.s8 %v4569
        %v4571 = vlaneseq
        %v4572 = vshrl.u32 %v4571, 7
        %v4573 = vsub.s32 %v4570, %v4572
        %v4574 = vrot.slane %v4566, %v4573
        %v4576 = vunpack.c.l.s4 1934713408
        %v4577 = vunpack.c.0.s8 %v4576
        %v4578 = vlaneseq
        %v4579 = vshrl.u32 %v4578, 7
        %v4580 = vsub.s32 %v4577, %v4579
        %v4581 = vrot.slane %v4567, %v4580
        %v4582 = vcombine.low %v4526, %v4542
        %v4583 = vcombine.high %v4526, %v4542
        %v4585 = vunpack.c.l.s4 1934713408
        %v4586 = vunpack.c.0.s8 %v4585
        %v4587 = vlaneseq
        %v4588 = vshrl.u32 %v4587, 7
        %v4589 = vsub.s32 %v4586, %v4588
        %v4590 = vrot.slane %v4582, %v4589
        %v4592 = vunpack.c.l.s4 1934713408
        %v4593 = vunpack.c.0.s8 %v4592
        %v4594 = vlaneseq
        %v4595 = vshrl.u32 %v4594, 7
        %v4596 = vsub.s32 %v4593, %v4595
        %v4597 = vrot.slane %v4583, %v4596
        %v4598 = vcombine.low %v4533, %v4549
        %v4599 = vcombine.high %v4533, %v4549
        %v4601 = vunpack.c.l.s4 1934713408
        %v4602 = vunpack.c.0.s8 %v4601
        %v4603 = vlaneseq
        %v4604 = vshrl.u32 %v4603, 7
        %v4605 = vsub.s32 %v4602, %v4604
        %v4606 = vrot.slane %v4598, %v4605
        %v4608 = vunpack.c.l.s4 1934713408
        %v4609 = vunpack.c.0.s8 %v4608
        %v4610 = vlaneseq
        %v4611 = vshrl.u32 %v4610, 7
        %v4612 = vsub.s32 %v4609, %v4611
        %v4613 = vrot.slane %v4599, %v4612
        %v4614 = vcombine.low %v4558, %v4590
        %v4615 = vcombine.high %v4558, %v4590
        %v4616 = vcombine.low %v4565, %v4597
        %v4617 = vcombine.high %v4565, %v4597
        %v4618 = vcombine.low %v4574, %v4606
        %v4619 = vcombine.high %v4574, %v4606
        %v4620 = vcombine.low %v4581, %v4613
        %v4621 = vcombine.high %v4581, %v4613
        %4623 = vrot.lane.b32.xlu0 %v4479, 16
        %v4624 = vpop.permute.xlu0 %4623
        %4627 = vrot.lane.b32.xlu0 %v4480, 32
        %v4628 = vpop.permute.xlu0 %4627
        %4631 = vrot.lane.b32.xlu0 %v4481, 48
        %v4632 = vpop.permute.xlu0 %4631
        %4635 = vrot.lane.b32.xlu0 %v4482, 64
        %v4636 = vpop.permute.xlu0 %4635
        %4639 = vrot.lane.b32.xlu0 %v4483, 80
        %v4640 = vpop.permute.xlu0 %4639
        %4643 = vrot.lane.b32.xlu0 %v4484, 96
        %v4644 = vpop.permute.xlu0 %4643
        %4647 = vrot.lane.b32.xlu0 %v4485, 112
        %v4648 = vpop.permute.xlu0 %4647
        %4651 = vrot.lane.b32.xlu0 %v4615, 16
        %v4652 = vpop.permute.xlu0 %4651
        %4655 = vrot.lane.b32.xlu0 %v4616, 32
        %v4656 = vpop.permute.xlu0 %4655
        %4659 = vrot.lane.b32.xlu0 %v4617, 48
        %v4660 = vpop.permute.xlu0 %4659
        %4663 = vrot.lane.b32.xlu0 %v4618, 64
        %v4664 = vpop.permute.xlu0 %4663
        %4667 = vrot.lane.b32.xlu0 %v4619, 80
        %v4668 = vpop.permute.xlu0 %4667
        %4671 = vrot.lane.b32.xlu0 %v4620, 96
        %v4672 = vpop.permute.xlu0 %4671
        %4675 = vrot.lane.b32.xlu0 %v4621, 112
        %v4676 = vpop.permute.xlu0 %4675
        %v4678 = vsel %vm314, %v4478, %v4624
        %v4679 = vsel %vm995, %v4678, %v4628
        %v4680 = vsel %vm997, %v4679, %v4632
        %v4681 = vsel %vm999, %v4680, %v4636
        %v4682 = vsel %vm1001, %v4681, %v4640
        %v4683 = vsel %vm1003, %v4682, %v4644
        %v4684 = vsel %vm1005, %v4683, %v4648
        %v4685 = vsel %vm314, %v4614, %v4652
        %v4686 = vsel %vm995, %v4685, %v4656
        %v4687 = vsel %vm997, %v4686, %v4660
        %v4688 = vsel %vm999, %v4687, %v4664
        %v4689 = vsel %vm1001, %v4688, %v4668
        %v4690 = vsel %vm1003, %v4689, %v4672
        %v4691 = vsel %vm1005, %v4690, %v4676
        %v4692 = vpack.c.bf16 %v4684, %v4294
        %v4693 = vpack.c.bf16 %v4691, %v4301
        %v4696 = vunpack.c.l.b16 %v4692
        %v4697 = vunpack.c.l.b16 %v4693
        %v4698 = vunpack.c.h.b16 %v4692
        %v4699 = vunpack.c.h.b16 %v4693
        %v4700 = vpack.c.b16 %v4697, %v4696
        %v4701 = vpack.c.b16 %v4699, %v4698
        %4704 = vst [vmem:[#allocation3 + $0x40] sm:$0xff] %v4700
        %4705 = vst [vmem:[#allocation3 + $0x48] sm:$0xff] %v4701
        %v4706 = vld [vmem:[#allocation2 + $0x2] sm:$0xff]
        %v4707 = vld [vmem:[#allocation2 + $0xa] sm:$0xff]
        %v4708 = vld [vmem:[#allocation2 + $0x1a] sm:$0xff]
        %v4709 = vld [vmem:[#allocation2 + $0x22] sm:$0xff]
        %v4710 = vld [vmem:[#allocation2 + $0x32] sm:$0xff]
        %v4711 = vld [vmem:[#allocation2 + $0x3a] sm:$0xff]
        %v4712 = vld [vmem:[#allocation2 + $0x4a] sm:$0xff]
        %v4713 = vld [vmem:[#allocation2 + $0x52] sm:$0xff]
        %v4714 = vld [vmem:[#allocation2 + $0x62] sm:$0xff]
        %v4715 = vld [vmem:[#allocation2 + $0x6a] sm:$0xff]
        %v4716 = vld [vmem:[#allocation2 + $0x7a] sm:$0xff]
        %v4717 = vld [vmem:[#allocation2 + $0x82] sm:$0xff]
        %v4718 = vld [vmem:[#allocation2 + $0x92] sm:$0xff]
        %v4719 = vld [vmem:[#allocation2 + $0x9a] sm:$0xff]
        %v4720 = vld [vmem:[#allocation2 + $0xaa] sm:$0xff]
        %v4721 = vld [vmem:[#allocation2 + $0xb2] sm:$0xff]
        %v4722 = vcombine.low %v4706, %v4710
        %v4723 = vcombine.high %v4706, %v4710
        %v4725 = vunpack.c.l.s4 1983009808
        %v4726 = vunpack.c.0.s8 %v4725
        %v4727 = vlaneseq
        %v4728 = vshrl.u32 %v4727, 7
        %v4729 = vsub.s32 %v4726, %v4728
        %v4730 = vrot.slane %v4722, %v4729
        %v4732 = vunpack.c.l.s4 1983009808
        %v4733 = vunpack.c.0.s8 %v4732
        %v4734 = vlaneseq
        %v4735 = vshrl.u32 %v4734, 7
        %v4736 = vsub.s32 %v4733, %v4735
        %v4737 = vrot.slane %v4723, %v4736
        %v4738 = vcombine.low %v4708, %v4712
        %v4739 = vcombine.high %v4708, %v4712
        %v4741 = vunpack.c.l.s4 1983009808
        %v4742 = vunpack.c.0.s8 %v4741
        %v4743 = vlaneseq
        %v4744 = vshrl.u32 %v4743, 7
        %v4745 = vsub.s32 %v4742, %v4744
        %v4746 = vrot.slane %v4738, %v4745
        %v4748 = vunpack.c.l.s4 1983009808
        %v4749 = vunpack.c.0.s8 %v4748
        %v4750 = vlaneseq
        %v4751 = vshrl.u32 %v4750, 7
        %v4752 = vsub.s32 %v4749, %v4751
        %v4753 = vrot.slane %v4739, %v4752
        %v4754 = vcombine.low %v4714, %v4718
        %v4755 = vcombine.high %v4714, %v4718
        %v4757 = vunpack.c.l.s4 1983009808
        %v4758 = vunpack.c.0.s8 %v4757
        %v4759 = vlaneseq
        %v4760 = vshrl.u32 %v4759, 7
        %v4761 = vsub.s32 %v4758, %v4760
        %v4762 = vrot.slane %v4754, %v4761
        %v4764 = vunpack.c.l.s4 1983009808
        %v4765 = vunpack.c.0.s8 %v4764
        %v4766 = vlaneseq
        %v4767 = vshrl.u32 %v4766, 7
        %v4768 = vsub.s32 %v4765, %v4767
        %v4769 = vrot.slane %v4755, %v4768
        %v4770 = vcombine.low %v4716, %v4720
        %v4771 = vcombine.high %v4716, %v4720
        %v4773 = vunpack.c.l.s4 1983009808
        %v4774 = vunpack.c.0.s8 %v4773
        %v4775 = vlaneseq
        %v4776 = vshrl.u32 %v4775, 7
        %v4777 = vsub.s32 %v4774, %v4776
        %v4778 = vrot.slane %v4770, %v4777
        %v4780 = vunpack.c.l.s4 1983009808
        %v4781 = vunpack.c.0.s8 %v4780
        %v4782 = vlaneseq
        %v4783 = vshrl.u32 %v4782, 7
        %v4784 = vsub.s32 %v4781, %v4783
        %v4785 = vrot.slane %v4771, %v4784
        %v4786 = vcombine.low %v4730, %v4746
        %v4787 = vcombine.high %v4730, %v4746
        %v4789 = vunpack.c.l.s4 1934713408
        %v4790 = vunpack.c.0.s8 %v4789
        %v4791 = vlaneseq
        %v4792 = vshrl.u32 %v4791, 7
        %v4793 = vsub.s32 %v4790, %v4792
        %v4794 = vrot.slane %v4786, %v4793
        %v4796 = vunpack.c.l.s4 1934713408
        %v4797 = vunpack.c.0.s8 %v4796
        %v4798 = vlaneseq
        %v4799 = vshrl.u32 %v4798, 7
        %v4800 = vsub.s32 %v4797, %v4799
        %v4801 = vrot.slane %v4787, %v4800
        %v4802 = vcombine.low %v4737, %v4753
        %v4803 = vcombine.high %v4737, %v4753
        %v4805 = vunpack.c.l.s4 1934713408
        %v4806 = vunpack.c.0.s8 %v4805
        %v4807 = vlaneseq
        %v4808 = vshrl.u32 %v4807, 7
        %v4809 = vsub.s32 %v4806, %v4808
        %v4810 = vrot.slane %v4802, %v4809
        %v4812 = vunpack.c.l.s4 1934713408
        %v4813 = vunpack.c.0.s8 %v4812
        %v4814 = vlaneseq
        %v4815 = vshrl.u32 %v4814, 7
        %v4816 = vsub.s32 %v4813, %v4815
        %v4817 = vrot.slane %v4803, %v4816
        %v4818 = vcombine.low %v4762, %v4778
        %v4819 = vcombine.high %v4762, %v4778
        %v4821 = vunpack.c.l.s4 1934713408
        %v4822 = vunpack.c.0.s8 %v4821
        %v4823 = vlaneseq
        %v4824 = vshrl.u32 %v4823, 7
        %v4825 = vsub.s32 %v4822, %v4824
        %v4826 = vrot.slane %v4818, %v4825
        %v4828 = vunpack.c.l.s4 1934713408
        %v4829 = vunpack.c.0.s8 %v4828
        %v4830 = vlaneseq
        %v4831 = vshrl.u32 %v4830, 7
        %v4832 = vsub.s32 %v4829, %v4831
        %v4833 = vrot.slane %v4819, %v4832
        %v4834 = vcombine.low %v4769, %v4785
        %v4835 = vcombine.high %v4769, %v4785
        %v4837 = vunpack.c.l.s4 1934713408
        %v4838 = vunpack.c.0.s8 %v4837
        %v4839 = vlaneseq
        %v4840 = vshrl.u32 %v4839, 7
        %v4841 = vsub.s32 %v4838, %v4840
        %v4842 = vrot.slane %v4834, %v4841
        %v4844 = vunpack.c.l.s4 1934713408
        %v4845 = vunpack.c.0.s8 %v4844
        %v4846 = vlaneseq
        %v4847 = vshrl.u32 %v4846, 7
        %v4848 = vsub.s32 %v4845, %v4847
        %v4849 = vrot.slane %v4835, %v4848
        %v4850 = vcombine.low %v4794, %v4826
        %v4851 = vcombine.high %v4794, %v4826
        %v4852 = vcombine.low %v4801, %v4833
        %v4853 = vcombine.high %v4801, %v4833
        %v4854 = vcombine.low %v4810, %v4842
        %v4855 = vcombine.high %v4810, %v4842
        %v4856 = vcombine.low %v4817, %v4849
        %v4857 = vcombine.high %v4817, %v4849
        %v4858 = vcombine.low %v4707, %v4711
        %v4859 = vcombine.high %v4707, %v4711
        %v4861 = vunpack.c.l.s4 1983009808
        %v4862 = vunpack.c.0.s8 %v4861
        %v4863 = vlaneseq
        %v4864 = vshrl.u32 %v4863, 7
        %v4865 = vsub.s32 %v4862, %v4864
        %v4866 = vrot.slane %v4858, %v4865
        %v4868 = vunpack.c.l.s4 1983009808
        %v4869 = vunpack.c.0.s8 %v4868
        %v4870 = vlaneseq
        %v4871 = vshrl.u32 %v4870, 7
        %v4872 = vsub.s32 %v4869, %v4871
        %v4873 = vrot.slane %v4859, %v4872
        %v4874 = vcombine.low %v4709, %v4713
        %v4875 = vcombine.high %v4709, %v4713
        %v4877 = vunpack.c.l.s4 1983009808
        %v4878 = vunpack.c.0.s8 %v4877
        %v4879 = vlaneseq
        %v4880 = vshrl.u32 %v4879, 7
        %v4881 = vsub.s32 %v4878, %v4880
        %v4882 = vrot.slane %v4874, %v4881
        %v4884 = vunpack.c.l.s4 1983009808
        %v4885 = vunpack.c.0.s8 %v4884
        %v4886 = vlaneseq
        %v4887 = vshrl.u32 %v4886, 7
        %v4888 = vsub.s32 %v4885, %v4887
        %v4889 = vrot.slane %v4875, %v4888
        %v4890 = vcombine.low %v4715, %v4719
        %v4891 = vcombine.high %v4715, %v4719
        %v4893 = vunpack.c.l.s4 1983009808
        %v4894 = vunpack.c.0.s8 %v4893
        %v4895 = vlaneseq
        %v4896 = vshrl.u32 %v4895, 7
        %v4897 = vsub.s32 %v4894, %v4896
        %v4898 = vrot.slane %v4890, %v4897
        %v4900 = vunpack.c.l.s4 1983009808
        %v4901 = vunpack.c.0.s8 %v4900
        %v4902 = vlaneseq
        %v4903 = vshrl.u32 %v4902, 7
        %v4904 = vsub.s32 %v4901, %v4903
        %v4905 = vrot.slane %v4891, %v4904
        %v4906 = vcombine.low %v4717, %v4721
        %v4907 = vcombine.high %v4717, %v4721
        %v4909 = vunpack.c.l.s4 1983009808
        %v4910 = vunpack.c.0.s8 %v4909
        %v4911 = vlaneseq
        %v4912 = vshrl.u32 %v4911, 7
        %v4913 = vsub.s32 %v4910, %v4912
        %v4914 = vrot.slane %v4906, %v4913
        %v4916 = vunpack.c.l.s4 1983009808
        %v4917 = vunpack.c.0.s8 %v4916
        %v4918 = vlaneseq
        %v4919 = vshrl.u32 %v4918, 7
        %v4920 = vsub.s32 %v4917, %v4919
        %v4921 = vrot.slane %v4907, %v4920
        %v4922 = vcombine.low %v4866, %v4882
        %v4923 = vcombine.high %v4866, %v4882
        %v4925 = vunpack.c.l.s4 1934713408
        %v4926 = vunpack.c.0.s8 %v4925
        %v4927 = vlaneseq
        %v4928 = vshrl.u32 %v4927, 7
        %v4929 = vsub.s32 %v4926, %v4928
        %v4930 = vrot.slane %v4922, %v4929
        %v4932 = vunpack.c.l.s4 1934713408
        %v4933 = vunpack.c.0.s8 %v4932
        %v4934 = vlaneseq
        %v4935 = vshrl.u32 %v4934, 7
        %v4936 = vsub.s32 %v4933, %v4935
        %v4937 = vrot.slane %v4923, %v4936
        %v4938 = vcombine.low %v4873, %v4889
        %v4939 = vcombine.high %v4873, %v4889
        %v4941 = vunpack.c.l.s4 1934713408
        %v4942 = vunpack.c.0.s8 %v4941
        %v4943 = vlaneseq
        %v4944 = vshrl.u32 %v4943, 7
        %v4945 = vsub.s32 %v4942, %v4944
        %v4946 = vrot.slane %v4938, %v4945
        %v4948 = vunpack.c.l.s4 1934713408
        %v4949 = vunpack.c.0.s8 %v4948
        %v4950 = vlaneseq
        %v4951 = vshrl.u32 %v4950, 7
        %v4952 = vsub.s32 %v4949, %v4951
        %v4953 = vrot.slane %v4939, %v4952
        %v4954 = vcombine.low %v4898, %v4914
        %v4955 = vcombine.high %v4898, %v4914
        %v4957 = vunpack.c.l.s4 1934713408
        %v4958 = vunpack.c.0.s8 %v4957
        %v4959 = vlaneseq
        %v4960 = vshrl.u32 %v4959, 7
        %v4961 = vsub.s32 %v4958, %v4960
        %v4962 = vrot.slane %v4954, %v4961
        %v4964 = vunpack.c.l.s4 1934713408
        %v4965 = vunpack.c.0.s8 %v4964
        %v4966 = vlaneseq
        %v4967 = vshrl.u32 %v4966, 7
        %v4968 = vsub.s32 %v4965, %v4967
        %v4969 = vrot.slane %v4955, %v4968
        %v4970 = vcombine.low %v4905, %v4921
        %v4971 = vcombine.high %v4905, %v4921
        %v4973 = vunpack.c.l.s4 1934713408
        %v4974 = vunpack.c.0.s8 %v4973
        %v4975 = vlaneseq
        %v4976 = vshrl.u32 %v4975, 7
        %v4977 = vsub.s32 %v4974, %v4976
        %v4978 = vrot.slane %v4970, %v4977
        %v4980 = vunpack.c.l.s4 1934713408
        %v4981 = vunpack.c.0.s8 %v4980
        %v4982 = vlaneseq
        %v4983 = vshrl.u32 %v4982, 7
        %v4984 = vsub.s32 %v4981, %v4983
        %v4985 = vrot.slane %v4971, %v4984
        %v4986 = vcombine.low %v4930, %v4962
        %v4987 = vcombine.high %v4930, %v4962
        %v4988 = vcombine.low %v4937, %v4969
        %v4989 = vcombine.high %v4937, %v4969
        %v4990 = vcombine.low %v4946, %v4978
        %v4991 = vcombine.high %v4946, %v4978
        %v4992 = vcombine.low %v4953, %v4985
        %v4993 = vcombine.high %v4953, %v4985
        %4995 = vrot.lane.b32.xlu0 %v4851, 16
        %v4996 = vpop.permute.xlu0 %4995
        %4999 = vrot.lane.b32.xlu0 %v4852, 32
        %v5000 = vpop.permute.xlu0 %4999
        %5003 = vrot.lane.b32.xlu0 %v4853, 48
        %v5004 = vpop.permute.xlu0 %5003
        %5007 = vrot.lane.b32.xlu0 %v4854, 64
        %v5008 = vpop.permute.xlu0 %5007
        %5011 = vrot.lane.b32.xlu0 %v4855, 80
        %v5012 = vpop.permute.xlu0 %5011
        %5015 = vrot.lane.b32.xlu0 %v4856, 96
        %v5016 = vpop.permute.xlu0 %5015
        %5019 = vrot.lane.b32.xlu0 %v4857, 112
        %v5020 = vpop.permute.xlu0 %5019
        %5023 = vrot.lane.b32.xlu0 %v4987, 16
        %v5024 = vpop.permute.xlu0 %5023
        %5027 = vrot.lane.b32.xlu0 %v4988, 32
        %v5028 = vpop.permute.xlu0 %5027
        %5031 = vrot.lane.b32.xlu0 %v4989, 48
        %v5032 = vpop.permute.xlu0 %5031
        %5035 = vrot.lane.b32.xlu0 %v4990, 64
        %v5036 = vpop.permute.xlu0 %5035
        %5039 = vrot.lane.b32.xlu0 %v4991, 80
        %v5040 = vpop.permute.xlu0 %5039
        %5043 = vrot.lane.b32.xlu0 %v4992, 96
        %v5044 = vpop.permute.xlu0 %5043
        %5047 = vrot.lane.b32.xlu0 %v4993, 112
        %v5048 = vpop.permute.xlu0 %5047
        %v5050 = vsel %vm314, %v4850, %v4996
        %v5051 = vsel %vm995, %v5050, %v5000
        %v5052 = vsel %vm997, %v5051, %v5004
        %v5053 = vsel %vm999, %v5052, %v5008
        %v5054 = vsel %vm1001, %v5053, %v5012
        %v5055 = vsel %vm1003, %v5054, %v5016
        %v5056 = vsel %vm1005, %v5055, %v5020
        %v5057 = vsel %vm314, %v4986, %v5024
        %v5058 = vsel %vm995, %v5057, %v5028
        %v5059 = vsel %vm997, %v5058, %v5032
        %v5060 = vsel %vm999, %v5059, %v5036
        %v5061 = vsel %vm1001, %v5060, %v5040
        %v5062 = vsel %vm1003, %v5061, %v5044
        %v5063 = vsel %vm1005, %v5062, %v5048
        %5080 = vrot.lane.b32.xlu0 %v4706, 127
        %v5081 = vpop.permute.xlu0 %5080
        %5082 = vrot.lane.b32.xlu0 %v4707, 127
        %v5083 = vpop.permute.xlu0 %5082
        %5084 = vrot.lane.b32.xlu0 %v4708, 127
        %v5085 = vpop.permute.xlu0 %5084
        %5086 = vrot.lane.b32.xlu0 %v4709, 127
        %v5087 = vpop.permute.xlu0 %5086
        %5088 = vrot.lane.b32.xlu0 %v4710, 127
        %v5089 = vpop.permute.xlu0 %5088
        %5090 = vrot.lane.b32.xlu0 %v4711, 127
        %v5091 = vpop.permute.xlu0 %5090
        %5092 = vrot.lane.b32.xlu0 %v4712, 127
        %v5093 = vpop.permute.xlu0 %5092
        %5094 = vrot.lane.b32.xlu0 %v4713, 127
        %v5095 = vpop.permute.xlu0 %5094
        %5096 = vrot.lane.b32.xlu0 %v4714, 127
        %v5097 = vpop.permute.xlu0 %5096
        %5098 = vrot.lane.b32.xlu0 %v4715, 127
        %v5099 = vpop.permute.xlu0 %5098
        %5100 = vrot.lane.b32.xlu0 %v4716, 127
        %v5101 = vpop.permute.xlu0 %5100
        %5102 = vrot.lane.b32.xlu0 %v4717, 127
        %v5103 = vpop.permute.xlu0 %5102
        %5104 = vrot.lane.b32.xlu0 %v4718, 127
        %v5105 = vpop.permute.xlu0 %5104
        %5106 = vrot.lane.b32.xlu0 %v4719, 127
        %v5107 = vpop.permute.xlu0 %5106
        %5108 = vrot.lane.b32.xlu0 %v4720, 127
        %v5109 = vpop.permute.xlu0 %5108
        %5110 = vrot.lane.b32.xlu0 %v4721, 127
        %v5111 = vpop.permute.xlu0 %5110
        %v5128 = vcombine.low %v5081, %v5089
        %v5129 = vcombine.high %v5081, %v5089
        %v5131 = vunpack.c.l.s4 1983009808
        %v5132 = vunpack.c.0.s8 %v5131
        %v5133 = vlaneseq
        %v5134 = vshrl.u32 %v5133, 7
        %v5135 = vsub.s32 %v5132, %v5134
        %v5136 = vrot.slane %v5128, %v5135
        %v5138 = vunpack.c.l.s4 1983009808
        %v5139 = vunpack.c.0.s8 %v5138
        %v5140 = vlaneseq
        %v5141 = vshrl.u32 %v5140, 7
        %v5142 = vsub.s32 %v5139, %v5141
        %v5143 = vrot.slane %v5129, %v5142
        %v5144 = vcombine.low %v5085, %v5093
        %v5145 = vcombine.high %v5085, %v5093
        %v5147 = vunpack.c.l.s4 1983009808
        %v5148 = vunpack.c.0.s8 %v5147
        %v5149 = vlaneseq
        %v5150 = vshrl.u32 %v5149, 7
        %v5151 = vsub.s32 %v5148, %v5150
        %v5152 = vrot.slane %v5144, %v5151
        %v5154 = vunpack.c.l.s4 1983009808
        %v5155 = vunpack.c.0.s8 %v5154
        %v5156 = vlaneseq
        %v5157 = vshrl.u32 %v5156, 7
        %v5158 = vsub.s32 %v5155, %v5157
        %v5159 = vrot.slane %v5145, %v5158
        %v5160 = vcombine.low %v5097, %v5105
        %v5161 = vcombine.high %v5097, %v5105
        %v5163 = vunpack.c.l.s4 1983009808
        %v5164 = vunpack.c.0.s8 %v5163
        %v5165 = vlaneseq
        %v5166 = vshrl.u32 %v5165, 7
        %v5167 = vsub.s32 %v5164, %v5166
        %v5168 = vrot.slane %v5160, %v5167
        %v5170 = vunpack.c.l.s4 1983009808
        %v5171 = vunpack.c.0.s8 %v5170
        %v5172 = vlaneseq
        %v5173 = vshrl.u32 %v5172, 7
        %v5174 = vsub.s32 %v5171, %v5173
        %v5175 = vrot.slane %v5161, %v5174
        %v5176 = vcombine.low %v5101, %v5109
        %v5177 = vcombine.high %v5101, %v5109
        %v5179 = vunpack.c.l.s4 1983009808
        %v5180 = vunpack.c.0.s8 %v5179
        %v5181 = vlaneseq
        %v5182 = vshrl.u32 %v5181, 7
        %v5183 = vsub.s32 %v5180, %v5182
        %v5184 = vrot.slane %v5176, %v5183
        %v5186 = vunpack.c.l.s4 1983009808
        %v5187 = vunpack.c.0.s8 %v5186
        %v5188 = vlaneseq
        %v5189 = vshrl.u32 %v5188, 7
        %v5190 = vsub.s32 %v5187, %v5189
        %v5191 = vrot.slane %v5177, %v5190
        %v5192 = vcombine.low %v5136, %v5152
        %v5193 = vcombine.high %v5136, %v5152
        %v5195 = vunpack.c.l.s4 1934713408
        %v5196 = vunpack.c.0.s8 %v5195
        %v5197 = vlaneseq
        %v5198 = vshrl.u32 %v5197, 7
        %v5199 = vsub.s32 %v5196, %v5198
        %v5200 = vrot.slane %v5192, %v5199
        %v5202 = vunpack.c.l.s4 1934713408
        %v5203 = vunpack.c.0.s8 %v5202
        %v5204 = vlaneseq
        %v5205 = vshrl.u32 %v5204, 7
        %v5206 = vsub.s32 %v5203, %v5205
        %v5207 = vrot.slane %v5193, %v5206
        %v5208 = vcombine.low %v5143, %v5159
        %v5209 = vcombine.high %v5143, %v5159
        %v5211 = vunpack.c.l.s4 1934713408
        %v5212 = vunpack.c.0.s8 %v5211
        %v5213 = vlaneseq
        %v5214 = vshrl.u32 %v5213, 7
        %v5215 = vsub.s32 %v5212, %v5214
        %v5216 = vrot.slane %v5208, %v5215
        %v5218 = vunpack.c.l.s4 1934713408
        %v5219 = vunpack.c.0.s8 %v5218
        %v5220 = vlaneseq
        %v5221 = vshrl.u32 %v5220, 7
        %v5222 = vsub.s32 %v5219, %v5221
        %v5223 = vrot.slane %v5209, %v5222
        %v5224 = vcombine.low %v5168, %v5184
        %v5225 = vcombine.high %v5168, %v5184
        %v5227 = vunpack.c.l.s4 1934713408
        %v5228 = vunpack.c.0.s8 %v5227
        %v5229 = vlaneseq
        %v5230 = vshrl.u32 %v5229, 7
        %v5231 = vsub.s32 %v5228, %v5230
        %v5232 = vrot.slane %v5224, %v5231
        %v5234 = vunpack.c.l.s4 1934713408
        %v5235 = vunpack.c.0.s8 %v5234
        %v5236 = vlaneseq
        %v5237 = vshrl.u32 %v5236, 7
        %v5238 = vsub.s32 %v5235, %v5237
        %v5239 = vrot.slane %v5225, %v5238
        %v5240 = vcombine.low %v5175, %v5191
        %v5241 = vcombine.high %v5175, %v5191
        %v5243 = vunpack.c.l.s4 1934713408
        %v5244 = vunpack.c.0.s8 %v5243
        %v5245 = vlaneseq
        %v5246 = vshrl.u32 %v5245, 7
        %v5247 = vsub.s32 %v5244, %v5246
        %v5248 = vrot.slane %v5240, %v5247
        %v5250 = vunpack.c.l.s4 1934713408
        %v5251 = vunpack.c.0.s8 %v5250
        %v5252 = vlaneseq
        %v5253 = vshrl.u32 %v5252, 7
        %v5254 = vsub.s32 %v5251, %v5253
        %v5255 = vrot.slane %v5241, %v5254
        %v5256 = vcombine.low %v5200, %v5232
        %v5257 = vcombine.high %v5200, %v5232
        %v5258 = vcombine.low %v5207, %v5239
        %v5259 = vcombine.high %v5207, %v5239
        %v5260 = vcombine.low %v5216, %v5248
        %v5261 = vcombine.high %v5216, %v5248
        %v5262 = vcombine.low %v5223, %v5255
        %v5263 = vcombine.high %v5223, %v5255
        %v5264 = vcombine.low %v5083, %v5091
        %v5265 = vcombine.high %v5083, %v5091
        %v5267 = vunpack.c.l.s4 1983009808
        %v5268 = vunpack.c.0.s8 %v5267
        %v5269 = vlaneseq
        %v5270 = vshrl.u32 %v5269, 7
        %v5271 = vsub.s32 %v5268, %v5270
        %v5272 = vrot.slane %v5264, %v5271
        %v5274 = vunpack.c.l.s4 1983009808
        %v5275 = vunpack.c.0.s8 %v5274
        %v5276 = vlaneseq
        %v5277 = vshrl.u32 %v5276, 7
        %v5278 = vsub.s32 %v5275, %v5277
        %v5279 = vrot.slane %v5265, %v5278
        %v5280 = vcombine.low %v5087, %v5095
        %v5281 = vcombine.high %v5087, %v5095
        %v5283 = vunpack.c.l.s4 1983009808
        %v5284 = vunpack.c.0.s8 %v5283
        %v5285 = vlaneseq
        %v5286 = vshrl.u32 %v5285, 7
        %v5287 = vsub.s32 %v5284, %v5286
        %v5288 = vrot.slane %v5280, %v5287
        %v5290 = vunpack.c.l.s4 1983009808
        %v5291 = vunpack.c.0.s8 %v5290
        %v5292 = vlaneseq
        %v5293 = vshrl.u32 %v5292, 7
        %v5294 = vsub.s32 %v5291, %v5293
        %v5295 = vrot.slane %v5281, %v5294
        %v5296 = vcombine.low %v5099, %v5107
        %v5297 = vcombine.high %v5099, %v5107
        %v5299 = vunpack.c.l.s4 1983009808
        %v5300 = vunpack.c.0.s8 %v5299
        %v5301 = vlaneseq
        %v5302 = vshrl.u32 %v5301, 7
        %v5303 = vsub.s32 %v5300, %v5302
        %v5304 = vrot.slane %v5296, %v5303
        %v5306 = vunpack.c.l.s4 1983009808
        %v5307 = vunpack.c.0.s8 %v5306
        %v5308 = vlaneseq
        %v5309 = vshrl.u32 %v5308, 7
        %v5310 = vsub.s32 %v5307, %v5309
        %v5311 = vrot.slane %v5297, %v5310
        %v5312 = vcombine.low %v5103, %v5111
        %v5313 = vcombine.high %v5103, %v5111
        %v5315 = vunpack.c.l.s4 1983009808
        %v5316 = vunpack.c.0.s8 %v5315
        %v5317 = vlaneseq
        %v5318 = vshrl.u32 %v5317, 7
        %v5319 = vsub.s32 %v5316, %v5318
        %v5320 = vrot.slane %v5312, %v5319
        %v5322 = vunpack.c.l.s4 1983009808
        %v5323 = vunpack.c.0.s8 %v5322
        %v5324 = vlaneseq
        %v5325 = vshrl.u32 %v5324, 7
        %v5326 = vsub.s32 %v5323, %v5325
        %v5327 = vrot.slane %v5313, %v5326
        %v5328 = vcombine.low %v5272, %v5288
        %v5329 = vcombine.high %v5272, %v5288
        %v5331 = vunpack.c.l.s4 1934713408
        %v5332 = vunpack.c.0.s8 %v5331
        %v5333 = vlaneseq
        %v5334 = vshrl.u32 %v5333, 7
        %v5335 = vsub.s32 %v5332, %v5334
        %v5336 = vrot.slane %v5328, %v5335
        %v5338 = vunpack.c.l.s4 1934713408
        %v5339 = vunpack.c.0.s8 %v5338
        %v5340 = vlaneseq
        %v5341 = vshrl.u32 %v5340, 7
        %v5342 = vsub.s32 %v5339, %v5341
        %v5343 = vrot.slane %v5329, %v5342
        %v5344 = vcombine.low %v5279, %v5295
        %v5345 = vcombine.high %v5279, %v5295
        %v5347 = vunpack.c.l.s4 1934713408
        %v5348 = vunpack.c.0.s8 %v5347
        %v5349 = vlaneseq
        %v5350 = vshrl.u32 %v5349, 7
        %v5351 = vsub.s32 %v5348, %v5350
        %v5352 = vrot.slane %v5344, %v5351
        %v5354 = vunpack.c.l.s4 1934713408
        %v5355 = vunpack.c.0.s8 %v5354
        %v5356 = vlaneseq
        %v5357 = vshrl.u32 %v5356, 7
        %v5358 = vsub.s32 %v5355, %v5357
        %v5359 = vrot.slane %v5345, %v5358
        %v5360 = vcombine.low %v5304, %v5320
        %v5361 = vcombine.high %v5304, %v5320
        %v5363 = vunpack.c.l.s4 1934713408
        %v5364 = vunpack.c.0.s8 %v5363
        %v5365 = vlaneseq
        %v5366 = vshrl.u32 %v5365, 7
        %v5367 = vsub.s32 %v5364, %v5366
        %v5368 = vrot.slane %v5360, %v5367
        %v5370 = vunpack.c.l.s4 1934713408
        %v5371 = vunpack.c.0.s8 %v5370
        %v5372 = vlaneseq
        %v5373 = vshrl.u32 %v5372, 7
        %v5374 = vsub.s32 %v5371, %v5373
        %v5375 = vrot.slane %v5361, %v5374
        %v5376 = vcombine.low %v5311, %v5327
        %v5377 = vcombine.high %v5311, %v5327
        %v5379 = vunpack.c.l.s4 1934713408
        %v5380 = vunpack.c.0.s8 %v5379
        %v5381 = vlaneseq
        %v5382 = vshrl.u32 %v5381, 7
        %v5383 = vsub.s32 %v5380, %v5382
        %v5384 = vrot.slane %v5376, %v5383
        %v5386 = vunpack.c.l.s4 1934713408
        %v5387 = vunpack.c.0.s8 %v5386
        %v5388 = vlaneseq
        %v5389 = vshrl.u32 %v5388, 7
        %v5390 = vsub.s32 %v5387, %v5389
        %v5391 = vrot.slane %v5377, %v5390
        %v5392 = vcombine.low %v5336, %v5368
        %v5393 = vcombine.high %v5336, %v5368
        %v5394 = vcombine.low %v5343, %v5375
        %v5395 = vcombine.high %v5343, %v5375
        %v5396 = vcombine.low %v5352, %v5384
        %v5397 = vcombine.high %v5352, %v5384
        %v5398 = vcombine.low %v5359, %v5391
        %v5399 = vcombine.high %v5359, %v5391
        %5401 = vrot.lane.b32.xlu0 %v5257, 16
        %v5402 = vpop.permute.xlu0 %5401
        %5405 = vrot.lane.b32.xlu0 %v5258, 32
        %v5406 = vpop.permute.xlu0 %5405
        %5409 = vrot.lane.b32.xlu0 %v5259, 48
        %v5410 = vpop.permute.xlu0 %5409
        %5413 = vrot.lane.b32.xlu0 %v5260, 64
        %v5414 = vpop.permute.xlu0 %5413
        %5417 = vrot.lane.b32.xlu0 %v5261, 80
        %v5418 = vpop.permute.xlu0 %5417
        %5421 = vrot.lane.b32.xlu0 %v5262, 96
        %v5422 = vpop.permute.xlu0 %5421
        %5425 = vrot.lane.b32.xlu0 %v5263, 112
        %v5426 = vpop.permute.xlu0 %5425
        %5429 = vrot.lane.b32.xlu0 %v5393, 16
        %v5430 = vpop.permute.xlu0 %5429
        %5433 = vrot.lane.b32.xlu0 %v5394, 32
        %v5434 = vpop.permute.xlu0 %5433
        %5437 = vrot.lane.b32.xlu0 %v5395, 48
        %v5438 = vpop.permute.xlu0 %5437
        %5441 = vrot.lane.b32.xlu0 %v5396, 64
        %v5442 = vpop.permute.xlu0 %5441
        %5445 = vrot.lane.b32.xlu0 %v5397, 80
        %v5446 = vpop.permute.xlu0 %5445
        %5449 = vrot.lane.b32.xlu0 %v5398, 96
        %v5450 = vpop.permute.xlu0 %5449
        %5453 = vrot.lane.b32.xlu0 %v5399, 112
        %v5454 = vpop.permute.xlu0 %5453
        %v5456 = vsel %vm314, %v5256, %v5402
        %v5457 = vsel %vm995, %v5456, %v5406
        %v5458 = vsel %vm997, %v5457, %v5410
        %v5459 = vsel %vm999, %v5458, %v5414
        %v5460 = vsel %vm1001, %v5459, %v5418
        %v5461 = vsel %vm1003, %v5460, %v5422
        %v5462 = vsel %vm1005, %v5461, %v5426
        %v5463 = vsel %vm314, %v5392, %v5430
        %v5464 = vsel %vm995, %v5463, %v5434
        %v5465 = vsel %vm997, %v5464, %v5438
        %v5466 = vsel %vm999, %v5465, %v5442
        %v5467 = vsel %vm1001, %v5466, %v5446
        %v5468 = vsel %vm1003, %v5467, %v5450
        %v5469 = vsel %vm1005, %v5468, %v5454
        %v5470 = vpack.c.bf16 %v5462, %v5056
        %v5471 = vpack.c.bf16 %v5469, %v5063
        %v5474 = vunpack.c.l.b16 %v5470
        %v5475 = vunpack.c.l.b16 %v5471
        %v5476 = vunpack.c.h.b16 %v5470
        %v5477 = vunpack.c.h.b16 %v5471
        %v5478 = vpack.c.b16 %v5475, %v5474
        %v5479 = vpack.c.b16 %v5477, %v5476
        %5482 = vst [vmem:[#allocation3 + $0x50] sm:$0xff] %v5478
        %5483 = vst [vmem:[#allocation3 + $0x58] sm:$0xff] %v5479
        %v5484 = vld [vmem:[#allocation2 + $0x2] sm:$0xff]
        %v5485 = vld [vmem:[#allocation2 + $0xa] sm:$0xff]
        %v5486 = vld [vmem:[#allocation2 + $0x1a] sm:$0xff]
        %v5487 = vld [vmem:[#allocation2 + $0x22] sm:$0xff]
        %v5488 = vld [vmem:[#allocation2 + $0x32] sm:$0xff]
        %v5489 = vld [vmem:[#allocation2 + $0x3a] sm:$0xff]
        %v5490 = vld [vmem:[#allocation2 + $0x4a] sm:$0xff]
        %v5491 = vld [vmem:[#allocation2 + $0x52] sm:$0xff]
        %v5492 = vld [vmem:[#allocation2 + $0x62] sm:$0xff]
        %v5493 = vld [vmem:[#allocation2 + $0x6a] sm:$0xff]
        %v5494 = vld [vmem:[#allocation2 + $0x7a] sm:$0xff]
        %v5495 = vld [vmem:[#allocation2 + $0x82] sm:$0xff]
        %v5496 = vld [vmem:[#allocation2 + $0x92] sm:$0xff]
        %v5497 = vld [vmem:[#allocation2 + $0x9a] sm:$0xff]
        %v5498 = vld [vmem:[#allocation2 + $0xaa] sm:$0xff]
        %v5499 = vld [vmem:[#allocation2 + $0xb2] sm:$0xff]
        %5516 = vrot.lane.b32.xlu0 %v5484, 126
        %v5517 = vpop.permute.xlu0 %5516
        %5518 = vrot.lane.b32.xlu0 %v5485, 126
        %v5519 = vpop.permute.xlu0 %5518
        %5520 = vrot.lane.b32.xlu0 %v5486, 126
        %v5521 = vpop.permute.xlu0 %5520
        %5522 = vrot.lane.b32.xlu0 %v5487, 126
        %v5523 = vpop.permute.xlu0 %5522
        %5524 = vrot.lane.b32.xlu0 %v5488, 126
        %v5525 = vpop.permute.xlu0 %5524
        %5526 = vrot.lane.b32.xlu0 %v5489, 126
        %v5527 = vpop.permute.xlu0 %5526
        %5528 = vrot.lane.b32.xlu0 %v5490, 126
        %v5529 = vpop.permute.xlu0 %5528
        %5530 = vrot.lane.b32.xlu0 %v5491, 126
        %v5531 = vpop.permute.xlu0 %5530
        %5532 = vrot.lane.b32.xlu0 %v5492, 126
        %v5533 = vpop.permute.xlu0 %5532
        %5534 = vrot.lane.b32.xlu0 %v5493, 126
        %v5535 = vpop.permute.xlu0 %5534
        %5536 = vrot.lane.b32.xlu0 %v5494, 126
        %v5537 = vpop.permute.xlu0 %5536
        %5538 = vrot.lane.b32.xlu0 %v5495, 126
        %v5539 = vpop.permute.xlu0 %5538
        %5540 = vrot.lane.b32.xlu0 %v5496, 126
        %v5541 = vpop.permute.xlu0 %5540
        %5542 = vrot.lane.b32.xlu0 %v5497, 126
        %v5543 = vpop.permute.xlu0 %5542
        %5544 = vrot.lane.b32.xlu0 %v5498, 126
        %v5545 = vpop.permute.xlu0 %5544
        %5546 = vrot.lane.b32.xlu0 %v5499, 126
        %v5547 = vpop.permute.xlu0 %5546
        %v5564 = vcombine.low %v5517, %v5525
        %v5565 = vcombine.high %v5517, %v5525
        %v5567 = vunpack.c.l.s4 1983009808
        %v5568 = vunpack.c.0.s8 %v5567
        %v5569 = vlaneseq
        %v5570 = vshrl.u32 %v5569, 7
        %v5571 = vsub.s32 %v5568, %v5570
        %v5572 = vrot.slane %v5564, %v5571
        %v5574 = vunpack.c.l.s4 1983009808
        %v5575 = vunpack.c.0.s8 %v5574
        %v5576 = vlaneseq
        %v5577 = vshrl.u32 %v5576, 7
        %v5578 = vsub.s32 %v5575, %v5577
        %v5579 = vrot.slane %v5565, %v5578
        %v5580 = vcombine.low %v5521, %v5529
        %v5581 = vcombine.high %v5521, %v5529
        %v5583 = vunpack.c.l.s4 1983009808
        %v5584 = vunpack.c.0.s8 %v5583
        %v5585 = vlaneseq
        %v5586 = vshrl.u32 %v5585, 7
        %v5587 = vsub.s32 %v5584, %v5586
        %v5588 = vrot.slane %v5580, %v5587
        %v5590 = vunpack.c.l.s4 1983009808
        %v5591 = vunpack.c.0.s8 %v5590
        %v5592 = vlaneseq
        %v5593 = vshrl.u32 %v5592, 7
        %v5594 = vsub.s32 %v5591, %v5593
        %v5595 = vrot.slane %v5581, %v5594
        %v5596 = vcombine.low %v5533, %v5541
        %v5597 = vcombine.high %v5533, %v5541
        %v5599 = vunpack.c.l.s4 1983009808
        %v5600 = vunpack.c.0.s8 %v5599
        %v5601 = vlaneseq
        %v5602 = vshrl.u32 %v5601, 7
        %v5603 = vsub.s32 %v5600, %v5602
        %v5604 = vrot.slane %v5596, %v5603
        %v5606 = vunpack.c.l.s4 1983009808
        %v5607 = vunpack.c.0.s8 %v5606
        %v5608 = vlaneseq
        %v5609 = vshrl.u32 %v5608, 7
        %v5610 = vsub.s32 %v5607, %v5609
        %v5611 = vrot.slane %v5597, %v5610
        %v5612 = vcombine.low %v5537, %v5545
        %v5613 = vcombine.high %v5537, %v5545
        %v5615 = vunpack.c.l.s4 1983009808
        %v5616 = vunpack.c.0.s8 %v5615
        %v5617 = vlaneseq
        %v5618 = vshrl.u32 %v5617, 7
        %v5619 = vsub.s32 %v5616, %v5618
        %v5620 = vrot.slane %v5612, %v5619
        %v5622 = vunpack.c.l.s4 1983009808
        %v5623 = vunpack.c.0.s8 %v5622
        %v5624 = vlaneseq
        %v5625 = vshrl.u32 %v5624, 7
        %v5626 = vsub.s32 %v5623, %v5625
        %v5627 = vrot.slane %v5613, %v5626
        %v5628 = vcombine.low %v5572, %v5588
        %v5629 = vcombine.high %v5572, %v5588
        %v5631 = vunpack.c.l.s4 1934713408
        %v5632 = vunpack.c.0.s8 %v5631
        %v5633 = vlaneseq
        %v5634 = vshrl.u32 %v5633, 7
        %v5635 = vsub.s32 %v5632, %v5634
        %v5636 = vrot.slane %v5628, %v5635
        %v5638 = vunpack.c.l.s4 1934713408
        %v5639 = vunpack.c.0.s8 %v5638
        %v5640 = vlaneseq
        %v5641 = vshrl.u32 %v5640, 7
        %v5642 = vsub.s32 %v5639, %v5641
        %v5643 = vrot.slane %v5629, %v5642
        %v5644 = vcombine.low %v5579, %v5595
        %v5645 = vcombine.high %v5579, %v5595
        %v5647 = vunpack.c.l.s4 1934713408
        %v5648 = vunpack.c.0.s8 %v5647
        %v5649 = vlaneseq
        %v5650 = vshrl.u32 %v5649, 7
        %v5651 = vsub.s32 %v5648, %v5650
        %v5652 = vrot.slane %v5644, %v5651
        %v5654 = vunpack.c.l.s4 1934713408
        %v5655 = vunpack.c.0.s8 %v5654
        %v5656 = vlaneseq
        %v5657 = vshrl.u32 %v5656, 7
        %v5658 = vsub.s32 %v5655, %v5657
        %v5659 = vrot.slane %v5645, %v5658
        %v5660 = vcombine.low %v5604, %v5620
        %v5661 = vcombine.high %v5604, %v5620
        %v5663 = vunpack.c.l.s4 1934713408
        %v5664 = vunpack.c.0.s8 %v5663
        %v5665 = vlaneseq
        %v5666 = vshrl.u32 %v5665, 7
        %v5667 = vsub.s32 %v5664, %v5666
        %v5668 = vrot.slane %v5660, %v5667
        %v5670 = vunpack.c.l.s4 1934713408
        %v5671 = vunpack.c.0.s8 %v5670
        %v5672 = vlaneseq
        %v5673 = vshrl.u32 %v5672, 7
        %v5674 = vsub.s32 %v5671, %v5673
        %v5675 = vrot.slane %v5661, %v5674
        %v5676 = vcombine.low %v5611, %v5627
        %v5677 = vcombine.high %v5611, %v5627
        %v5679 = vunpack.c.l.s4 1934713408
        %v5680 = vunpack.c.0.s8 %v5679
        %v5681 = vlaneseq
        %v5682 = vshrl.u32 %v5681, 7
        %v5683 = vsub.s32 %v5680, %v5682
        %v5684 = vrot.slane %v5676, %v5683
        %v5686 = vunpack.c.l.s4 1934713408
        %v5687 = vunpack.c.0.s8 %v5686
        %v5688 = vlaneseq
        %v5689 = vshrl.u32 %v5688, 7
        %v5690 = vsub.s32 %v5687, %v5689
        %v5691 = vrot.slane %v5677, %v5690
        %v5692 = vcombine.low %v5636, %v5668
        %v5693 = vcombine.high %v5636, %v5668
        %v5694 = vcombine.low %v5643, %v5675
        %v5695 = vcombine.high %v5643, %v5675
        %v5696 = vcombine.low %v5652, %v5684
        %v5697 = vcombine.high %v5652, %v5684
        %v5698 = vcombine.low %v5659, %v5691
        %v5699 = vcombine.high %v5659, %v5691
        %v5700 = vcombine.low %v5519, %v5527
        %v5701 = vcombine.high %v5519, %v5527
        %v5703 = vunpack.c.l.s4 1983009808
        %v5704 = vunpack.c.0.s8 %v5703
        %v5705 = vlaneseq
        %v5706 = vshrl.u32 %v5705, 7
        %v5707 = vsub.s32 %v5704, %v5706
        %v5708 = vrot.slane %v5700, %v5707
        %v5710 = vunpack.c.l.s4 1983009808
        %v5711 = vunpack.c.0.s8 %v5710
        %v5712 = vlaneseq
        %v5713 = vshrl.u32 %v5712, 7
        %v5714 = vsub.s32 %v5711, %v5713
        %v5715 = vrot.slane %v5701, %v5714
        %v5716 = vcombine.low %v5523, %v5531
        %v5717 = vcombine.high %v5523, %v5531
        %v5719 = vunpack.c.l.s4 1983009808
        %v5720 = vunpack.c.0.s8 %v5719
        %v5721 = vlaneseq
        %v5722 = vshrl.u32 %v5721, 7
        %v5723 = vsub.s32 %v5720, %v5722
        %v5724 = vrot.slane %v5716, %v5723
        %v5726 = vunpack.c.l.s4 1983009808
        %v5727 = vunpack.c.0.s8 %v5726
        %v5728 = vlaneseq
        %v5729 = vshrl.u32 %v5728, 7
        %v5730 = vsub.s32 %v5727, %v5729
        %v5731 = vrot.slane %v5717, %v5730
        %v5732 = vcombine.low %v5535, %v5543
        %v5733 = vcombine.high %v5535, %v5543
        %v5735 = vunpack.c.l.s4 1983009808
        %v5736 = vunpack.c.0.s8 %v5735
        %v5737 = vlaneseq
        %v5738 = vshrl.u32 %v5737, 7
        %v5739 = vsub.s32 %v5736, %v5738
        %v5740 = vrot.slane %v5732, %v5739
        %v5742 = vunpack.c.l.s4 1983009808
        %v5743 = vunpack.c.0.s8 %v5742
        %v5744 = vlaneseq
        %v5745 = vshrl.u32 %v5744, 7
        %v5746 = vsub.s32 %v5743, %v5745
        %v5747 = vrot.slane %v5733, %v5746
        %v5748 = vcombine.low %v5539, %v5547
        %v5749 = vcombine.high %v5539, %v5547
        %v5751 = vunpack.c.l.s4 1983009808
        %v5752 = vunpack.c.0.s8 %v5751
        %v5753 = vlaneseq
        %v5754 = vshrl.u32 %v5753, 7
        %v5755 = vsub.s32 %v5752, %v5754
        %v5756 = vrot.slane %v5748, %v5755
        %v5758 = vunpack.c.l.s4 1983009808
        %v5759 = vunpack.c.0.s8 %v5758
        %v5760 = vlaneseq
        %v5761 = vshrl.u32 %v5760, 7
        %v5762 = vsub.s32 %v5759, %v5761
        %v5763 = vrot.slane %v5749, %v5762
        %v5764 = vcombine.low %v5708, %v5724
        %v5765 = vcombine.high %v5708, %v5724
        %v5767 = vunpack.c.l.s4 1934713408
        %v5768 = vunpack.c.0.s8 %v5767
        %v5769 = vlaneseq
        %v5770 = vshrl.u32 %v5769, 7
        %v5771 = vsub.s32 %v5768, %v5770
        %v5772 = vrot.slane %v5764, %v5771
        %v5774 = vunpack.c.l.s4 1934713408
        %v5775 = vunpack.c.0.s8 %v5774
        %v5776 = vlaneseq
        %v5777 = vshrl.u32 %v5776, 7
        %v5778 = vsub.s32 %v5775, %v5777
        %v5779 = vrot.slane %v5765, %v5778
        %v5780 = vcombine.low %v5715, %v5731
        %v5781 = vcombine.high %v5715, %v5731
        %v5783 = vunpack.c.l.s4 1934713408
        %v5784 = vunpack.c.0.s8 %v5783
        %v5785 = vlaneseq
        %v5786 = vshrl.u32 %v5785, 7
        %v5787 = vsub.s32 %v5784, %v5786
        %v5788 = vrot.slane %v5780, %v5787
        %v5790 = vunpack.c.l.s4 1934713408
        %v5791 = vunpack.c.0.s8 %v5790
        %v5792 = vlaneseq
        %v5793 = vshrl.u32 %v5792, 7
        %v5794 = vsub.s32 %v5791, %v5793
        %v5795 = vrot.slane %v5781, %v5794
        %v5796 = vcombine.low %v5740, %v5756
        %v5797 = vcombine.high %v5740, %v5756
        %v5799 = vunpack.c.l.s4 1934713408
        %v5800 = vunpack.c.0.s8 %v5799
        %v5801 = vlaneseq
        %v5802 = vshrl.u32 %v5801, 7
        %v5803 = vsub.s32 %v5800, %v5802
        %v5804 = vrot.slane %v5796, %v5803
        %v5806 = vunpack.c.l.s4 1934713408
        %v5807 = vunpack.c.0.s8 %v5806
        %v5808 = vlaneseq
        %v5809 = vshrl.u32 %v5808, 7
        %v5810 = vsub.s32 %v5807, %v5809
        %v5811 = vrot.slane %v5797, %v5810
        %v5812 = vcombine.low %v5747, %v5763
        %v5813 = vcombine.high %v5747, %v5763
        %v5815 = vunpack.c.l.s4 1934713408
        %v5816 = vunpack.c.0.s8 %v5815
        %v5817 = vlaneseq
        %v5818 = vshrl.u32 %v5817, 7
        %v5819 = vsub.s32 %v5816, %v5818
        %v5820 = vrot.slane %v5812, %v5819
        %v5822 = vunpack.c.l.s4 1934713408
        %v5823 = vunpack.c.0.s8 %v5822
        %v5824 = vlaneseq
        %v5825 = vshrl.u32 %v5824, 7
        %v5826 = vsub.s32 %v5823, %v5825
        %v5827 = vrot.slane %v5813, %v5826
        %v5828 = vcombine.low %v5772, %v5804
        %v5829 = vcombine.high %v5772, %v5804
        %v5830 = vcombine.low %v5779, %v5811
        %v5831 = vcombine.high %v5779, %v5811
        %v5832 = vcombine.low %v5788, %v5820
        %v5833 = vcombine.high %v5788, %v5820
        %v5834 = vcombine.low %v5795, %v5827
        %v5835 = vcombine.high %v5795, %v5827
        %5837 = vrot.lane.b32.xlu0 %v5693, 16
        %v5838 = vpop.permute.xlu0 %5837
        %5841 = vrot.lane.b32.xlu0 %v5694, 32
        %v5842 = vpop.permute.xlu0 %5841
        %5845 = vrot.lane.b32.xlu0 %v5695, 48
        %v5846 = vpop.permute.xlu0 %5845
        %5849 = vrot.lane.b32.xlu0 %v5696, 64
        %v5850 = vpop.permute.xlu0 %5849
        %5853 = vrot.lane.b32.xlu0 %v5697, 80
        %v5854 = vpop.permute.xlu0 %5853
        %5857 = vrot.lane.b32.xlu0 %v5698, 96
        %v5858 = vpop.permute.xlu0 %5857
        %5861 = vrot.lane.b32.xlu0 %v5699, 112
        %v5862 = vpop.permute.xlu0 %5861
        %5865 = vrot.lane.b32.xlu0 %v5829, 16
        %v5866 = vpop.permute.xlu0 %5865
        %5869 = vrot.lane.b32.xlu0 %v5830, 32
        %v5870 = vpop.permute.xlu0 %5869
        %5873 = vrot.lane.b32.xlu0 %v5831, 48
        %v5874 = vpop.permute.xlu0 %5873
        %5877 = vrot.lane.b32.xlu0 %v5832, 64
        %v5878 = vpop.permute.xlu0 %5877
        %5881 = vrot.lane.b32.xlu0 %v5833, 80
        %v5882 = vpop.permute.xlu0 %5881
        %5885 = vrot.lane.b32.xlu0 %v5834, 96
        %v5886 = vpop.permute.xlu0 %5885
        %5889 = vrot.lane.b32.xlu0 %v5835, 112
        %v5890 = vpop.permute.xlu0 %5889
        %v5892 = vsel %vm314, %v5692, %v5838
        %v5893 = vsel %vm995, %v5892, %v5842
        %v5894 = vsel %vm997, %v5893, %v5846
        %v5895 = vsel %vm999, %v5894, %v5850
        %v5896 = vsel %vm1001, %v5895, %v5854
        %v5897 = vsel %vm1003, %v5896, %v5858
        %v5898 = vsel %vm1005, %v5897, %v5862
        %v5899 = vsel %vm314, %v5828, %v5866
        %v5900 = vsel %vm995, %v5899, %v5870
        %v5901 = vsel %vm997, %v5900, %v5874
        %v5902 = vsel %vm999, %v5901, %v5878
        %v5903 = vsel %vm1001, %v5902, %v5882
        %v5904 = vsel %vm1003, %v5903, %v5886
        %v5905 = vsel %vm1005, %v5904, %v5890
        %5906 = vrot.lane.b32.xlu0 %v5484, 125
        %v5907 = vpop.permute.xlu0 %5906
        %5908 = vrot.lane.b32.xlu0 %v5485, 125
        %v5909 = vpop.permute.xlu0 %5908
        %5910 = vrot.lane.b32.xlu0 %v5486, 125
        %v5911 = vpop.permute.xlu0 %5910
        %5912 = vrot.lane.b32.xlu0 %v5487, 125
        %v5913 = vpop.permute.xlu0 %5912
        %5914 = vrot.lane.b32.xlu0 %v5488, 125
        %v5915 = vpop.permute.xlu0 %5914
        %5916 = vrot.lane.b32.xlu0 %v5489, 125
        %v5917 = vpop.permute.xlu0 %5916
        %5918 = vrot.lane.b32.xlu0 %v5490, 125
        %v5919 = vpop.permute.xlu0 %5918
        %5920 = vrot.lane.b32.xlu0 %v5491, 125
        %v5921 = vpop.permute.xlu0 %5920
        %5922 = vrot.lane.b32.xlu0 %v5492, 125
        %v5923 = vpop.permute.xlu0 %5922
        %5924 = vrot.lane.b32.xlu0 %v5493, 125
        %v5925 = vpop.permute.xlu0 %5924
        %5926 = vrot.lane.b32.xlu0 %v5494, 125
        %v5927 = vpop.permute.xlu0 %5926
        %5928 = vrot.lane.b32.xlu0 %v5495, 125
        %v5929 = vpop.permute.xlu0 %5928
        %5930 = vrot.lane.b32.xlu0 %v5496, 125
        %v5931 = vpop.permute.xlu0 %5930
        %5932 = vrot.lane.b32.xlu0 %v5497, 125
        %v5933 = vpop.permute.xlu0 %5932
        %5934 = vrot.lane.b32.xlu0 %v5498, 125
        %v5935 = vpop.permute.xlu0 %5934
        %5936 = vrot.lane.b32.xlu0 %v5499, 125
        %v5937 = vpop.permute.xlu0 %5936
        %v5954 = vcombine.low %v5907, %v5915
        %v5955 = vcombine.high %v5907, %v5915
        %v5957 = vunpack.c.l.s4 1983009808
        %v5958 = vunpack.c.0.s8 %v5957
        %v5959 = vlaneseq
        %v5960 = vshrl.u32 %v5959, 7
        %v5961 = vsub.s32 %v5958, %v5960
        %v5962 = vrot.slane %v5954, %v5961
        %v5964 = vunpack.c.l.s4 1983009808
        %v5965 = vunpack.c.0.s8 %v5964
        %v5966 = vlaneseq
        %v5967 = vshrl.u32 %v5966, 7
        %v5968 = vsub.s32 %v5965, %v5967
        %v5969 = vrot.slane %v5955, %v5968
        %v5970 = vcombine.low %v5911, %v5919
        %v5971 = vcombine.high %v5911, %v5919
        %v5973 = vunpack.c.l.s4 1983009808
        %v5974 = vunpack.c.0.s8 %v5973
        %v5975 = vlaneseq
        %v5976 = vshrl.u32 %v5975, 7
        %v5977 = vsub.s32 %v5974, %v5976
        %v5978 = vrot.slane %v5970, %v5977
        %v5980 = vunpack.c.l.s4 1983009808
        %v5981 = vunpack.c.0.s8 %v5980
        %v5982 = vlaneseq
        %v5983 = vshrl.u32 %v5982, 7
        %v5984 = vsub.s32 %v5981, %v5983
        %v5985 = vrot.slane %v5971, %v5984
        %v5986 = vcombine.low %v5923, %v5931
        %v5987 = vcombine.high %v5923, %v5931
        %v5989 = vunpack.c.l.s4 1983009808
        %v5990 = vunpack.c.0.s8 %v5989
        %v5991 = vlaneseq
        %v5992 = vshrl.u32 %v5991, 7
        %v5993 = vsub.s32 %v5990, %v5992
        %v5994 = vrot.slane %v5986, %v5993
        %v5996 = vunpack.c.l.s4 1983009808
        %v5997 = vunpack.c.0.s8 %v5996
        %v5998 = vlaneseq
        %v5999 = vshrl.u32 %v5998, 7
        %v6000 = vsub.s32 %v5997, %v5999
        %v6001 = vrot.slane %v5987, %v6000
        %v6002 = vcombine.low %v5927, %v5935
        %v6003 = vcombine.high %v5927, %v5935
        %v6005 = vunpack.c.l.s4 1983009808
        %v6006 = vunpack.c.0.s8 %v6005
        %v6007 = vlaneseq
        %v6008 = vshrl.u32 %v6007, 7
        %v6009 = vsub.s32 %v6006, %v6008
        %v6010 = vrot.slane %v6002, %v6009
        %v6012 = vunpack.c.l.s4 1983009808
        %v6013 = vunpack.c.0.s8 %v6012
        %v6014 = vlaneseq
        %v6015 = vshrl.u32 %v6014, 7
        %v6016 = vsub.s32 %v6013, %v6015
        %v6017 = vrot.slane %v6003, %v6016
        %v6018 = vcombine.low %v5962, %v5978
        %v6019 = vcombine.high %v5962, %v5978
        %v6021 = vunpack.c.l.s4 1934713408
        %v6022 = vunpack.c.0.s8 %v6021
        %v6023 = vlaneseq
        %v6024 = vshrl.u32 %v6023, 7
        %v6025 = vsub.s32 %v6022, %v6024
        %v6026 = vrot.slane %v6018, %v6025
        %v6028 = vunpack.c.l.s4 1934713408
        %v6029 = vunpack.c.0.s8 %v6028
        %v6030 = vlaneseq
        %v6031 = vshrl.u32 %v6030, 7
        %v6032 = vsub.s32 %v6029, %v6031
        %v6033 = vrot.slane %v6019, %v6032
        %v6034 = vcombine.low %v5969, %v5985
        %v6035 = vcombine.high %v5969, %v5985
        %v6037 = vunpack.c.l.s4 1934713408
        %v6038 = vunpack.c.0.s8 %v6037
        %v6039 = vlaneseq
        %v6040 = vshrl.u32 %v6039, 7
        %v6041 = vsub.s32 %v6038, %v6040
        %v6042 = vrot.slane %v6034, %v6041
        %v6044 = vunpack.c.l.s4 1934713408
        %v6045 = vunpack.c.0.s8 %v6044
        %v6046 = vlaneseq
        %v6047 = vshrl.u32 %v6046, 7
        %v6048 = vsub.s32 %v6045, %v6047
        %v6049 = vrot.slane %v6035, %v6048
        %v6050 = vcombine.low %v5994, %v6010
        %v6051 = vcombine.high %v5994, %v6010
        %v6053 = vunpack.c.l.s4 1934713408
        %v6054 = vunpack.c.0.s8 %v6053
        %v6055 = vlaneseq
        %v6056 = vshrl.u32 %v6055, 7
        %v6057 = vsub.s32 %v6054, %v6056
        %v6058 = vrot.slane %v6050, %v6057
        %v6060 = vunpack.c.l.s4 1934713408
        %v6061 = vunpack.c.0.s8 %v6060
        %v6062 = vlaneseq
        %v6063 = vshrl.u32 %v6062, 7
        %v6064 = vsub.s32 %v6061, %v6063
        %v6065 = vrot.slane %v6051, %v6064
        %v6066 = vcombine.low %v6001, %v6017
        %v6067 = vcombine.high %v6001, %v6017
        %v6069 = vunpack.c.l.s4 1934713408
        %v6070 = vunpack.c.0.s8 %v6069
        %v6071 = vlaneseq
        %v6072 = vshrl.u32 %v6071, 7
        %v6073 = vsub.s32 %v6070, %v6072
        %v6074 = vrot.slane %v6066, %v6073
        %v6076 = vunpack.c.l.s4 1934713408
        %v6077 = vunpack.c.0.s8 %v6076
        %v6078 = vlaneseq
        %v6079 = vshrl.u32 %v6078, 7
        %v6080 = vsub.s32 %v6077, %v6079
        %v6081 = vrot.slane %v6067, %v6080
        %v6082 = vcombine.low %v6026, %v6058
        %v6083 = vcombine.high %v6026, %v6058
        %v6084 = vcombine.low %v6033, %v6065
        %v6085 = vcombine.high %v6033, %v6065
        %v6086 = vcombine.low %v6042, %v6074
        %v6087 = vcombine.high %v6042, %v6074
        %v6088 = vcombine.low %v6049, %v6081
        %v6089 = vcombine.high %v6049, %v6081
        %v6090 = vcombine.low %v5909, %v5917
        %v6091 = vcombine.high %v5909, %v5917
        %v6093 = vunpack.c.l.s4 1983009808
        %v6094 = vunpack.c.0.s8 %v6093
        %v6095 = vlaneseq
        %v6096 = vshrl.u32 %v6095, 7
        %v6097 = vsub.s32 %v6094, %v6096
        %v6098 = vrot.slane %v6090, %v6097
        %v6100 = vunpack.c.l.s4 1983009808
        %v6101 = vunpack.c.0.s8 %v6100
        %v6102 = vlaneseq
        %v6103 = vshrl.u32 %v6102, 7
        %v6104 = vsub.s32 %v6101, %v6103
        %v6105 = vrot.slane %v6091, %v6104
        %v6106 = vcombine.low %v5913, %v5921
        %v6107 = vcombine.high %v5913, %v5921
        %v6109 = vunpack.c.l.s4 1983009808
        %v6110 = vunpack.c.0.s8 %v6109
        %v6111 = vlaneseq
        %v6112 = vshrl.u32 %v6111, 7
        %v6113 = vsub.s32 %v6110, %v6112
        %v6114 = vrot.slane %v6106, %v6113
        %v6116 = vunpack.c.l.s4 1983009808
        %v6117 = vunpack.c.0.s8 %v6116
        %v6118 = vlaneseq
        %v6119 = vshrl.u32 %v6118, 7
        %v6120 = vsub.s32 %v6117, %v6119
        %v6121 = vrot.slane %v6107, %v6120
        %v6122 = vcombine.low %v5925, %v5933
        %v6123 = vcombine.high %v5925, %v5933
        %v6125 = vunpack.c.l.s4 1983009808
        %v6126 = vunpack.c.0.s8 %v6125
        %v6127 = vlaneseq
        %v6128 = vshrl.u32 %v6127, 7
        %v6129 = vsub.s32 %v6126, %v6128
        %v6130 = vrot.slane %v6122, %v6129
        %v6132 = vunpack.c.l.s4 1983009808
        %v6133 = vunpack.c.0.s8 %v6132
        %v6134 = vlaneseq
        %v6135 = vshrl.u32 %v6134, 7
        %v6136 = vsub.s32 %v6133, %v6135
        %v6137 = vrot.slane %v6123, %v6136
        %v6138 = vcombine.low %v5929, %v5937
        %v6139 = vcombine.high %v5929, %v5937
        %v6141 = vunpack.c.l.s4 1983009808
        %v6142 = vunpack.c.0.s8 %v6141
        %v6143 = vlaneseq
        %v6144 = vshrl.u32 %v6143, 7
        %v6145 = vsub.s32 %v6142, %v6144
        %v6146 = vrot.slane %v6138, %v6145
        %v6148 = vunpack.c.l.s4 1983009808
        %v6149 = vunpack.c.0.s8 %v6148
        %v6150 = vlaneseq
        %v6151 = vshrl.u32 %v6150, 7
        %v6152 = vsub.s32 %v6149, %v6151
        %v6153 = vrot.slane %v6139, %v6152
        %v6154 = vcombine.low %v6098, %v6114
        %v6155 = vcombine.high %v6098, %v6114
        %v6157 = vunpack.c.l.s4 1934713408
        %v6158 = vunpack.c.0.s8 %v6157
        %v6159 = vlaneseq
        %v6160 = vshrl.u32 %v6159, 7
        %v6161 = vsub.s32 %v6158, %v6160
        %v6162 = vrot.slane %v6154, %v6161
        %v6164 = vunpack.c.l.s4 1934713408
        %v6165 = vunpack.c.0.s8 %v6164
        %v6166 = vlaneseq
        %v6167 = vshrl.u32 %v6166, 7
        %v6168 = vsub.s32 %v6165, %v6167
        %v6169 = vrot.slane %v6155, %v6168
        %v6170 = vcombine.low %v6105, %v6121
        %v6171 = vcombine.high %v6105, %v6121
        %v6173 = vunpack.c.l.s4 1934713408
        %v6174 = vunpack.c.0.s8 %v6173
        %v6175 = vlaneseq
        %v6176 = vshrl.u32 %v6175, 7
        %v6177 = vsub.s32 %v6174, %v6176
        %v6178 = vrot.slane %v6170, %v6177
        %v6180 = vunpack.c.l.s4 1934713408
        %v6181 = vunpack.c.0.s8 %v6180
        %v6182 = vlaneseq
        %v6183 = vshrl.u32 %v6182, 7
        %v6184 = vsub.s32 %v6181, %v6183
        %v6185 = vrot.slane %v6171, %v6184
        %v6186 = vcombine.low %v6130, %v6146
        %v6187 = vcombine.high %v6130, %v6146
        %v6189 = vunpack.c.l.s4 1934713408
        %v6190 = vunpack.c.0.s8 %v6189
        %v6191 = vlaneseq
        %v6192 = vshrl.u32 %v6191, 7
        %v6193 = vsub.s32 %v6190, %v6192
        %v6194 = vrot.slane %v6186, %v6193
        %v6196 = vunpack.c.l.s4 1934713408
        %v6197 = vunpack.c.0.s8 %v6196
        %v6198 = vlaneseq
        %v6199 = vshrl.u32 %v6198, 7
        %v6200 = vsub.s32 %v6197, %v6199
        %v6201 = vrot.slane %v6187, %v6200
        %v6202 = vcombine.low %v6137, %v6153
        %v6203 = vcombine.high %v6137, %v6153
        %v6205 = vunpack.c.l.s4 1934713408
        %v6206 = vunpack.c.0.s8 %v6205
        %v6207 = vlaneseq
        %v6208 = vshrl.u32 %v6207, 7
        %v6209 = vsub.s32 %v6206, %v6208
        %v6210 = vrot.slane %v6202, %v6209
        %v6212 = vunpack.c.l.s4 1934713408
        %v6213 = vunpack.c.0.s8 %v6212
        %v6214 = vlaneseq
        %v6215 = vshrl.u32 %v6214, 7
        %v6216 = vsub.s32 %v6213, %v6215
        %v6217 = vrot.slane %v6203, %v6216
        %v6218 = vcombine.low %v6162, %v6194
        %v6219 = vcombine.high %v6162, %v6194
        %v6220 = vcombine.low %v6169, %v6201
        %v6221 = vcombine.high %v6169, %v6201
        %v6222 = vcombine.low %v6178, %v6210
        %v6223 = vcombine.high %v6178, %v6210
        %v6224 = vcombine.low %v6185, %v6217
        %v6225 = vcombine.high %v6185, %v6217
        %6227 = vrot.lane.b32.xlu0 %v6083, 16
        %v6228 = vpop.permute.xlu0 %6227
        %6231 = vrot.lane.b32.xlu0 %v6084, 32
        %v6232 = vpop.permute.xlu0 %6231
        %6235 = vrot.lane.b32.xlu0 %v6085, 48
        %v6236 = vpop.permute.xlu0 %6235
        %6239 = vrot.lane.b32.xlu0 %v6086, 64
        %v6240 = vpop.permute.xlu0 %6239
        %6243 = vrot.lane.b32.xlu0 %v6087, 80
        %v6244 = vpop.permute.xlu0 %6243
        %6247 = vrot.lane.b32.xlu0 %v6088, 96
        %v6248 = vpop.permute.xlu0 %6247
        %6251 = vrot.lane.b32.xlu0 %v6089, 112
        %v6252 = vpop.permute.xlu0 %6251
        %6255 = vrot.lane.b32.xlu0 %v6219, 16
        %v6256 = vpop.permute.xlu0 %6255
        %6259 = vrot.lane.b32.xlu0 %v6220, 32
        %v6260 = vpop.permute.xlu0 %6259
        %6263 = vrot.lane.b32.xlu0 %v6221, 48
        %v6264 = vpop.permute.xlu0 %6263
        %6267 = vrot.lane.b32.xlu0 %v6222, 64
        %v6268 = vpop.permute.xlu0 %6267
        %6271 = vrot.lane.b32.xlu0 %v6223, 80
        %v6272 = vpop.permute.xlu0 %6271
        %6275 = vrot.lane.b32.xlu0 %v6224, 96
        %v6276 = vpop.permute.xlu0 %6275
        %6279 = vrot.lane.b32.xlu0 %v6225, 112
        %v6280 = vpop.permute.xlu0 %6279
        %v6282 = vsel %vm314, %v6082, %v6228
        %v6283 = vsel %vm995, %v6282, %v6232
        %v6284 = vsel %vm997, %v6283, %v6236
        %v6285 = vsel %vm999, %v6284, %v6240
        %v6286 = vsel %vm1001, %v6285, %v6244
        %v6287 = vsel %vm1003, %v6286, %v6248
        %v6288 = vsel %vm1005, %v6287, %v6252
        %v6289 = vsel %vm314, %v6218, %v6256
        %v6290 = vsel %vm995, %v6289, %v6260
        %v6291 = vsel %vm997, %v6290, %v6264
        %v6292 = vsel %vm999, %v6291, %v6268
        %v6293 = vsel %vm1001, %v6292, %v6272
        %v6294 = vsel %vm1003, %v6293, %v6276
        %v6295 = vsel %vm1005, %v6294, %v6280
        %v6296 = vpack.c.bf16 %v6288, %v5898
        %v6297 = vpack.c.bf16 %v6295, %v5905
        %v6300 = vunpack.c.l.b16 %v6296
        %v6301 = vunpack.c.l.b16 %v6297
        %v6302 = vunpack.c.h.b16 %v6296
        %v6303 = vunpack.c.h.b16 %v6297
        %v6304 = vpack.c.b16 %v6301, %v6300
        %v6305 = vpack.c.b16 %v6303, %v6302
        %6308 = vst [vmem:[#allocation3 + $0x60] sm:$0xff] %v6304
        %6309 = vst [vmem:[#allocation3 + $0x68] sm:$0xff] %v6305
        %v6310 = vld [vmem:[#allocation2 + $0x2] sm:$0xff]
        %v6311 = vld [vmem:[#allocation2 + $0xa] sm:$0xff]
        %v6312 = vld [vmem:[#allocation2 + $0x1a] sm:$0xff]
        %v6313 = vld [vmem:[#allocation2 + $0x22] sm:$0xff]
        %v6314 = vld [vmem:[#allocation2 + $0x32] sm:$0xff]
        %v6315 = vld [vmem:[#allocation2 + $0x3a] sm:$0xff]
        %v6316 = vld [vmem:[#allocation2 + $0x4a] sm:$0xff]
        %v6317 = vld [vmem:[#allocation2 + $0x52] sm:$0xff]
        %v6318 = vld [vmem:[#allocation2 + $0x62] sm:$0xff]
        %v6319 = vld [vmem:[#allocation2 + $0x6a] sm:$0xff]
        %v6320 = vld [vmem:[#allocation2 + $0x7a] sm:$0xff]
        %v6321 = vld [vmem:[#allocation2 + $0x82] sm:$0xff]
        %v6322 = vld [vmem:[#allocation2 + $0x92] sm:$0xff]
        %v6323 = vld [vmem:[#allocation2 + $0x9a] sm:$0xff]
        %v6324 = vld [vmem:[#allocation2 + $0xaa] sm:$0xff]
        %v6325 = vld [vmem:[#allocation2 + $0xb2] sm:$0xff]
        %6342 = vrot.lane.b32.xlu0 %v6310, 124
        %v6343 = vpop.permute.xlu0 %6342
        %6344 = vrot.lane.b32.xlu0 %v6311, 124
        %v6345 = vpop.permute.xlu0 %6344
        %6346 = vrot.lane.b32.xlu0 %v6312, 124
        %v6347 = vpop.permute.xlu0 %6346
        %6348 = vrot.lane.b32.xlu0 %v6313, 124
        %v6349 = vpop.permute.xlu0 %6348
        %6350 = vrot.lane.b32.xlu0 %v6314, 124
        %v6351 = vpop.permute.xlu0 %6350
        %6352 = vrot.lane.b32.xlu0 %v6315, 124
        %v6353 = vpop.permute.xlu0 %6352
        %6354 = vrot.lane.b32.xlu0 %v6316, 124
        %v6355 = vpop.permute.xlu0 %6354
        %6356 = vrot.lane.b32.xlu0 %v6317, 124
        %v6357 = vpop.permute.xlu0 %6356
        %6358 = vrot.lane.b32.xlu0 %v6318, 124
        %v6359 = vpop.permute.xlu0 %6358
        %6360 = vrot.lane.b32.xlu0 %v6319, 124
        %v6361 = vpop.permute.xlu0 %6360
        %6362 = vrot.lane.b32.xlu0 %v6320, 124
        %v6363 = vpop.permute.xlu0 %6362
        %6364 = vrot.lane.b32.xlu0 %v6321, 124
        %v6365 = vpop.permute.xlu0 %6364
        %6366 = vrot.lane.b32.xlu0 %v6322, 124
        %v6367 = vpop.permute.xlu0 %6366
        %6368 = vrot.lane.b32.xlu0 %v6323, 124
        %v6369 = vpop.permute.xlu0 %6368
        %6370 = vrot.lane.b32.xlu0 %v6324, 124
        %v6371 = vpop.permute.xlu0 %6370
        %6372 = vrot.lane.b32.xlu0 %v6325, 124
        %v6373 = vpop.permute.xlu0 %6372
        %v6390 = vcombine.low %v6343, %v6351
        %v6391 = vcombine.high %v6343, %v6351
        %v6393 = vunpack.c.l.s4 1983009808
        %v6394 = vunpack.c.0.s8 %v6393
        %v6395 = vlaneseq
        %v6396 = vshrl.u32 %v6395, 7
        %v6397 = vsub.s32 %v6394, %v6396
        %v6398 = vrot.slane %v6390, %v6397
        %v6400 = vunpack.c.l.s4 1983009808
        %v6401 = vunpack.c.0.s8 %v6400
        %v6402 = vlaneseq
        %v6403 = vshrl.u32 %v6402, 7
        %v6404 = vsub.s32 %v6401, %v6403
        %v6405 = vrot.slane %v6391, %v6404
        %v6406 = vcombine.low %v6347, %v6355
        %v6407 = vcombine.high %v6347, %v6355
        %v6409 = vunpack.c.l.s4 1983009808
        %v6410 = vunpack.c.0.s8 %v6409
        %v6411 = vlaneseq
        %v6412 = vshrl.u32 %v6411, 7
        %v6413 = vsub.s32 %v6410, %v6412
        %v6414 = vrot.slane %v6406, %v6413
        %v6416 = vunpack.c.l.s4 1983009808
        %v6417 = vunpack.c.0.s8 %v6416
        %v6418 = vlaneseq
        %v6419 = vshrl.u32 %v6418, 7
        %v6420 = vsub.s32 %v6417, %v6419
        %v6421 = vrot.slane %v6407, %v6420
        %v6422 = vcombine.low %v6359, %v6367
        %v6423 = vcombine.high %v6359, %v6367
        %v6425 = vunpack.c.l.s4 1983009808
        %v6426 = vunpack.c.0.s8 %v6425
        %v6427 = vlaneseq
        %v6428 = vshrl.u32 %v6427, 7
        %v6429 = vsub.s32 %v6426, %v6428
        %v6430 = vrot.slane %v6422, %v6429
        %v6432 = vunpack.c.l.s4 1983009808
        %v6433 = vunpack.c.0.s8 %v6432
        %v6434 = vlaneseq
        %v6435 = vshrl.u32 %v6434, 7
        %v6436 = vsub.s32 %v6433, %v6435
        %v6437 = vrot.slane %v6423, %v6436
        %v6438 = vcombine.low %v6363, %v6371
        %v6439 = vcombine.high %v6363, %v6371
        %v6441 = vunpack.c.l.s4 1983009808
        %v6442 = vunpack.c.0.s8 %v6441
        %v6443 = vlaneseq
        %v6444 = vshrl.u32 %v6443, 7
        %v6445 = vsub.s32 %v6442, %v6444
        %v6446 = vrot.slane %v6438, %v6445
        %v6448 = vunpack.c.l.s4 1983009808
        %v6449 = vunpack.c.0.s8 %v6448
        %v6450 = vlaneseq
        %v6451 = vshrl.u32 %v6450, 7
        %v6452 = vsub.s32 %v6449, %v6451
        %v6453 = vrot.slane %v6439, %v6452
        %v6454 = vcombine.low %v6398, %v6414
        %v6455 = vcombine.high %v6398, %v6414
        %v6457 = vunpack.c.l.s4 1934713408
        %v6458 = vunpack.c.0.s8 %v6457
        %v6459 = vlaneseq
        %v6460 = vshrl.u32 %v6459, 7
        %v6461 = vsub.s32 %v6458, %v6460
        %v6462 = vrot.slane %v6454, %v6461
        %v6464 = vunpack.c.l.s4 1934713408
        %v6465 = vunpack.c.0.s8 %v6464
        %v6466 = vlaneseq
        %v6467 = vshrl.u32 %v6466, 7
        %v6468 = vsub.s32 %v6465, %v6467
        %v6469 = vrot.slane %v6455, %v6468
        %v6470 = vcombine.low %v6405, %v6421
        %v6471 = vcombine.high %v6405, %v6421
        %v6473 = vunpack.c.l.s4 1934713408
        %v6474 = vunpack.c.0.s8 %v6473
        %v6475 = vlaneseq
        %v6476 = vshrl.u32 %v6475, 7
        %v6477 = vsub.s32 %v6474, %v6476
        %v6478 = vrot.slane %v6470, %v6477
        %v6480 = vunpack.c.l.s4 1934713408
        %v6481 = vunpack.c.0.s8 %v6480
        %v6482 = vlaneseq
        %v6483 = vshrl.u32 %v6482, 7
        %v6484 = vsub.s32 %v6481, %v6483
        %v6485 = vrot.slane %v6471, %v6484
        %v6486 = vcombine.low %v6430, %v6446
        %v6487 = vcombine.high %v6430, %v6446
        %v6489 = vunpack.c.l.s4 1934713408
        %v6490 = vunpack.c.0.s8 %v6489
        %v6491 = vlaneseq
        %v6492 = vshrl.u32 %v6491, 7
        %v6493 = vsub.s32 %v6490, %v6492
        %v6494 = vrot.slane %v6486, %v6493
        %v6496 = vunpack.c.l.s4 1934713408
        %v6497 = vunpack.c.0.s8 %v6496
        %v6498 = vlaneseq
        %v6499 = vshrl.u32 %v6498, 7
        %v6500 = vsub.s32 %v6497, %v6499
        %v6501 = vrot.slane %v6487, %v6500
        %v6502 = vcombine.low %v6437, %v6453
        %v6503 = vcombine.high %v6437, %v6453
        %v6505 = vunpack.c.l.s4 1934713408
        %v6506 = vunpack.c.0.s8 %v6505
        %v6507 = vlaneseq
        %v6508 = vshrl.u32 %v6507, 7
        %v6509 = vsub.s32 %v6506, %v6508
        %v6510 = vrot.slane %v6502, %v6509
        %v6512 = vunpack.c.l.s4 1934713408
        %v6513 = vunpack.c.0.s8 %v6512
        %v6514 = vlaneseq
        %v6515 = vshrl.u32 %v6514, 7
        %v6516 = vsub.s32 %v6513, %v6515
        %v6517 = vrot.slane %v6503, %v6516
        %v6518 = vcombine.low %v6462, %v6494
        %v6519 = vcombine.high %v6462, %v6494
        %v6520 = vcombine.low %v6469, %v6501
        %v6521 = vcombine.high %v6469, %v6501
        %v6522 = vcombine.low %v6478, %v6510
        %v6523 = vcombine.high %v6478, %v6510
        %v6524 = vcombine.low %v6485, %v6517
        %v6525 = vcombine.high %v6485, %v6517
        %v6526 = vcombine.low %v6345, %v6353
        %v6527 = vcombine.high %v6345, %v6353
        %v6529 = vunpack.c.l.s4 1983009808
        %v6530 = vunpack.c.0.s8 %v6529
        %v6531 = vlaneseq
        %v6532 = vshrl.u32 %v6531, 7
        %v6533 = vsub.s32 %v6530, %v6532
        %v6534 = vrot.slane %v6526, %v6533
        %v6536 = vunpack.c.l.s4 1983009808
        %v6537 = vunpack.c.0.s8 %v6536
        %v6538 = vlaneseq
        %v6539 = vshrl.u32 %v6538, 7
        %v6540 = vsub.s32 %v6537, %v6539
        %v6541 = vrot.slane %v6527, %v6540
        %v6542 = vcombine.low %v6349, %v6357
        %v6543 = vcombine.high %v6349, %v6357
        %v6545 = vunpack.c.l.s4 1983009808
        %v6546 = vunpack.c.0.s8 %v6545
        %v6547 = vlaneseq
        %v6548 = vshrl.u32 %v6547, 7
        %v6549 = vsub.s32 %v6546, %v6548
        %v6550 = vrot.slane %v6542, %v6549
        %v6552 = vunpack.c.l.s4 1983009808
        %v6553 = vunpack.c.0.s8 %v6552
        %v6554 = vlaneseq
        %v6555 = vshrl.u32 %v6554, 7
        %v6556 = vsub.s32 %v6553, %v6555
        %v6557 = vrot.slane %v6543, %v6556
        %v6558 = vcombine.low %v6361, %v6369
        %v6559 = vcombine.high %v6361, %v6369
        %v6561 = vunpack.c.l.s4 1983009808
        %v6562 = vunpack.c.0.s8 %v6561
        %v6563 = vlaneseq
        %v6564 = vshrl.u32 %v6563, 7
        %v6565 = vsub.s32 %v6562, %v6564
        %v6566 = vrot.slane %v6558, %v6565
        %v6568 = vunpack.c.l.s4 1983009808
        %v6569 = vunpack.c.0.s8 %v6568
        %v6570 = vlaneseq
        %v6571 = vshrl.u32 %v6570, 7
        %v6572 = vsub.s32 %v6569, %v6571
        %v6573 = vrot.slane %v6559, %v6572
        %v6574 = vcombine.low %v6365, %v6373
        %v6575 = vcombine.high %v6365, %v6373
        %v6577 = vunpack.c.l.s4 1983009808
        %v6578 = vunpack.c.0.s8 %v6577
        %v6579 = vlaneseq
        %v6580 = vshrl.u32 %v6579, 7
        %v6581 = vsub.s32 %v6578, %v6580
        %v6582 = vrot.slane %v6574, %v6581
        %v6584 = vunpack.c.l.s4 1983009808
        %v6585 = vunpack.c.0.s8 %v6584
        %v6586 = vlaneseq
        %v6587 = vshrl.u32 %v6586, 7
        %v6588 = vsub.s32 %v6585, %v6587
        %v6589 = vrot.slane %v6575, %v6588
        %v6590 = vcombine.low %v6534, %v6550
        %v6591 = vcombine.high %v6534, %v6550
        %v6593 = vunpack.c.l.s4 1934713408
        %v6594 = vunpack.c.0.s8 %v6593
        %v6595 = vlaneseq
        %v6596 = vshrl.u32 %v6595, 7
        %v6597 = vsub.s32 %v6594, %v6596
        %v6598 = vrot.slane %v6590, %v6597
        %v6600 = vunpack.c.l.s4 1934713408
        %v6601 = vunpack.c.0.s8 %v6600
        %v6602 = vlaneseq
        %v6603 = vshrl.u32 %v6602, 7
        %v6604 = vsub.s32 %v6601, %v6603
        %v6605 = vrot.slane %v6591, %v6604
        %v6606 = vcombine.low %v6541, %v6557
        %v6607 = vcombine.high %v6541, %v6557
        %v6609 = vunpack.c.l.s4 1934713408
        %v6610 = vunpack.c.0.s8 %v6609
        %v6611 = vlaneseq
        %v6612 = vshrl.u32 %v6611, 7
        %v6613 = vsub.s32 %v6610, %v6612
        %v6614 = vrot.slane %v6606, %v6613
        %v6616 = vunpack.c.l.s4 1934713408
        %v6617 = vunpack.c.0.s8 %v6616
        %v6618 = vlaneseq
        %v6619 = vshrl.u32 %v6618, 7
        %v6620 = vsub.s32 %v6617, %v6619
        %v6621 = vrot.slane %v6607, %v6620
        %v6622 = vcombine.low %v6566, %v6582
        %v6623 = vcombine.high %v6566, %v6582
        %v6625 = vunpack.c.l.s4 1934713408
        %v6626 = vunpack.c.0.s8 %v6625
        %v6627 = vlaneseq
        %v6628 = vshrl.u32 %v6627, 7
        %v6629 = vsub.s32 %v6626, %v6628
        %v6630 = vrot.slane %v6622, %v6629
        %v6632 = vunpack.c.l.s4 1934713408
        %v6633 = vunpack.c.0.s8 %v6632
        %v6634 = vlaneseq
        %v6635 = vshrl.u32 %v6634, 7
        %v6636 = vsub.s32 %v6633, %v6635
        %v6637 = vrot.slane %v6623, %v6636
        %v6638 = vcombine.low %v6573, %v6589
        %v6639 = vcombine.high %v6573, %v6589
        %v6641 = vunpack.c.l.s4 1934713408
        %v6642 = vunpack.c.0.s8 %v6641
        %v6643 = vlaneseq
        %v6644 = vshrl.u32 %v6643, 7
        %v6645 = vsub.s32 %v6642, %v6644
        %v6646 = vrot.slane %v6638, %v6645
        %v6648 = vunpack.c.l.s4 1934713408
        %v6649 = vunpack.c.0.s8 %v6648
        %v6650 = vlaneseq
        %v6651 = vshrl.u32 %v6650, 7
        %v6652 = vsub.s32 %v6649, %v6651
        %v6653 = vrot.slane %v6639, %v6652
        %v6654 = vcombine.low %v6598, %v6630
        %v6655 = vcombine.high %v6598, %v6630
        %v6656 = vcombine.low %v6605, %v6637
        %v6657 = vcombine.high %v6605, %v6637
        %v6658 = vcombine.low %v6614, %v6646
        %v6659 = vcombine.high %v6614, %v6646
        %v6660 = vcombine.low %v6621, %v6653
        %v6661 = vcombine.high %v6621, %v6653
        %6663 = vrot.lane.b32.xlu0 %v6519, 16
        %v6664 = vpop.permute.xlu0 %6663
        %6667 = vrot.lane.b32.xlu0 %v6520, 32
        %v6668 = vpop.permute.xlu0 %6667
        %6671 = vrot.lane.b32.xlu0 %v6521, 48
        %v6672 = vpop.permute.xlu0 %6671
        %6675 = vrot.lane.b32.xlu0 %v6522, 64
        %v6676 = vpop.permute.xlu0 %6675
        %6679 = vrot.lane.b32.xlu0 %v6523, 80
        %v6680 = vpop.permute.xlu0 %6679
        %6683 = vrot.lane.b32.xlu0 %v6524, 96
        %v6684 = vpop.permute.xlu0 %6683
        %6687 = vrot.lane.b32.xlu0 %v6525, 112
        %v6688 = vpop.permute.xlu0 %6687
        %6691 = vrot.lane.b32.xlu0 %v6655, 16
        %v6692 = vpop.permute.xlu0 %6691
        %6695 = vrot.lane.b32.xlu0 %v6656, 32
        %v6696 = vpop.permute.xlu0 %6695
        %6699 = vrot.lane.b32.xlu0 %v6657, 48
        %v6700 = vpop.permute.xlu0 %6699
        %6703 = vrot.lane.b32.xlu0 %v6658, 64
        %v6704 = vpop.permute.xlu0 %6703
        %6707 = vrot.lane.b32.xlu0 %v6659, 80
        %v6708 = vpop.permute.xlu0 %6707
        %6711 = vrot.lane.b32.xlu0 %v6660, 96
        %v6712 = vpop.permute.xlu0 %6711
        %6715 = vrot.lane.b32.xlu0 %v6661, 112
        %v6716 = vpop.permute.xlu0 %6715
        %v6718 = vsel %vm314, %v6518, %v6664
        %v6719 = vsel %vm995, %v6718, %v6668
        %v6720 = vsel %vm997, %v6719, %v6672
        %v6721 = vsel %vm999, %v6720, %v6676
        %v6722 = vsel %vm1001, %v6721, %v6680
        %v6723 = vsel %vm1003, %v6722, %v6684
        %v6724 = vsel %vm1005, %v6723, %v6688
        %v6725 = vsel %vm314, %v6654, %v6692
        %v6726 = vsel %vm995, %v6725, %v6696
        %v6727 = vsel %vm997, %v6726, %v6700
        %v6728 = vsel %vm999, %v6727, %v6704
        %v6729 = vsel %vm1001, %v6728, %v6708
        %v6730 = vsel %vm1003, %v6729, %v6712
        %v6731 = vsel %vm1005, %v6730, %v6716
        %v6732 = vld [vmem:[#allocation2 + $0x3] sm:$0xff]
        %v6733 = vld [vmem:[#allocation2 + $0xb] sm:$0xff]
        %v6734 = vld [vmem:[#allocation2 + $0x1b] sm:$0xff]
        %v6735 = vld [vmem:[#allocation2 + $0x23] sm:$0xff]
        %v6736 = vld [vmem:[#allocation2 + $0x33] sm:$0xff]
        %v6737 = vld [vmem:[#allocation2 + $0x3b] sm:$0xff]
        %v6738 = vld [vmem:[#allocation2 + $0x4b] sm:$0xff]
        %v6739 = vld [vmem:[#allocation2 + $0x53] sm:$0xff]
        %v6740 = vld [vmem:[#allocation2 + $0x63] sm:$0xff]
        %v6741 = vld [vmem:[#allocation2 + $0x6b] sm:$0xff]
        %v6742 = vld [vmem:[#allocation2 + $0x7b] sm:$0xff]
        %v6743 = vld [vmem:[#allocation2 + $0x83] sm:$0xff]
        %v6744 = vld [vmem:[#allocation2 + $0x93] sm:$0xff]
        %v6745 = vld [vmem:[#allocation2 + $0x9b] sm:$0xff]
        %v6746 = vld [vmem:[#allocation2 + $0xab] sm:$0xff]
        %v6747 = vld [vmem:[#allocation2 + $0xb3] sm:$0xff]
        %v6748 = vcombine.low %v6732, %v6736
        %v6749 = vcombine.high %v6732, %v6736
        %v6751 = vunpack.c.l.s4 1983009808
        %v6752 = vunpack.c.0.s8 %v6751
        %v6753 = vlaneseq
        %v6754 = vshrl.u32 %v6753, 7
        %v6755 = vsub.s32 %v6752, %v6754
        %v6756 = vrot.slane %v6748, %v6755
        %v6758 = vunpack.c.l.s4 1983009808
        %v6759 = vunpack.c.0.s8 %v6758
        %v6760 = vlaneseq
        %v6761 = vshrl.u32 %v6760, 7
        %v6762 = vsub.s32 %v6759, %v6761
        %v6763 = vrot.slane %v6749, %v6762
        %v6764 = vcombine.low %v6734, %v6738
        %v6765 = vcombine.high %v6734, %v6738
        %v6767 = vunpack.c.l.s4 1983009808
        %v6768 = vunpack.c.0.s8 %v6767
        %v6769 = vlaneseq
        %v6770 = vshrl.u32 %v6769, 7
        %v6771 = vsub.s32 %v6768, %v6770
        %v6772 = vrot.slane %v6764, %v6771
        %v6774 = vunpack.c.l.s4 1983009808
        %v6775 = vunpack.c.0.s8 %v6774
        %v6776 = vlaneseq
        %v6777 = vshrl.u32 %v6776, 7
        %v6778 = vsub.s32 %v6775, %v6777
        %v6779 = vrot.slane %v6765, %v6778
        %v6780 = vcombine.low %v6740, %v6744
        %v6781 = vcombine.high %v6740, %v6744
        %v6783 = vunpack.c.l.s4 1983009808
        %v6784 = vunpack.c.0.s8 %v6783
        %v6785 = vlaneseq
        %v6786 = vshrl.u32 %v6785, 7
        %v6787 = vsub.s32 %v6784, %v6786
        %v6788 = vrot.slane %v6780, %v6787
        %v6790 = vunpack.c.l.s4 1983009808
        %v6791 = vunpack.c.0.s8 %v6790
        %v6792 = vlaneseq
        %v6793 = vshrl.u32 %v6792, 7
        %v6794 = vsub.s32 %v6791, %v6793
        %v6795 = vrot.slane %v6781, %v6794
        %v6796 = vcombine.low %v6742, %v6746
        %v6797 = vcombine.high %v6742, %v6746
        %v6799 = vunpack.c.l.s4 1983009808
        %v6800 = vunpack.c.0.s8 %v6799
        %v6801 = vlaneseq
        %v6802 = vshrl.u32 %v6801, 7
        %v6803 = vsub.s32 %v6800, %v6802
        %v6804 = vrot.slane %v6796, %v6803
        %v6806 = vunpack.c.l.s4 1983009808
        %v6807 = vunpack.c.0.s8 %v6806
        %v6808 = vlaneseq
        %v6809 = vshrl.u32 %v6808, 7
        %v6810 = vsub.s32 %v6807, %v6809
        %v6811 = vrot.slane %v6797, %v6810
        %v6812 = vcombine.low %v6756, %v6772
        %v6813 = vcombine.high %v6756, %v6772
        %v6815 = vunpack.c.l.s4 1934713408
        %v6816 = vunpack.c.0.s8 %v6815
        %v6817 = vlaneseq
        %v6818 = vshrl.u32 %v6817, 7
        %v6819 = vsub.s32 %v6816, %v6818
        %v6820 = vrot.slane %v6812, %v6819
        %v6822 = vunpack.c.l.s4 1934713408
        %v6823 = vunpack.c.0.s8 %v6822
        %v6824 = vlaneseq
        %v6825 = vshrl.u32 %v6824, 7
        %v6826 = vsub.s32 %v6823, %v6825
        %v6827 = vrot.slane %v6813, %v6826
        %v6828 = vcombine.low %v6763, %v6779
        %v6829 = vcombine.high %v6763, %v6779
        %v6831 = vunpack.c.l.s4 1934713408
        %v6832 = vunpack.c.0.s8 %v6831
        %v6833 = vlaneseq
        %v6834 = vshrl.u32 %v6833, 7
        %v6835 = vsub.s32 %v6832, %v6834
        %v6836 = vrot.slane %v6828, %v6835
        %v6838 = vunpack.c.l.s4 1934713408
        %v6839 = vunpack.c.0.s8 %v6838
        %v6840 = vlaneseq
        %v6841 = vshrl.u32 %v6840, 7
        %v6842 = vsub.s32 %v6839, %v6841
        %v6843 = vrot.slane %v6829, %v6842
        %v6844 = vcombine.low %v6788, %v6804
        %v6845 = vcombine.high %v6788, %v6804
        %v6847 = vunpack.c.l.s4 1934713408
        %v6848 = vunpack.c.0.s8 %v6847
        %v6849 = vlaneseq
        %v6850 = vshrl.u32 %v6849, 7
        %v6851 = vsub.s32 %v6848, %v6850
        %v6852 = vrot.slane %v6844, %v6851
        %v6854 = vunpack.c.l.s4 1934713408
        %v6855 = vunpack.c.0.s8 %v6854
        %v6856 = vlaneseq
        %v6857 = vshrl.u32 %v6856, 7
        %v6858 = vsub.s32 %v6855, %v6857
        %v6859 = vrot.slane %v6845, %v6858
        %v6860 = vcombine.low %v6795, %v6811
        %v6861 = vcombine.high %v6795, %v6811
        %v6863 = vunpack.c.l.s4 1934713408
        %v6864 = vunpack.c.0.s8 %v6863
        %v6865 = vlaneseq
        %v6866 = vshrl.u32 %v6865, 7
        %v6867 = vsub.s32 %v6864, %v6866
        %v6868 = vrot.slane %v6860, %v6867
        %v6870 = vunpack.c.l.s4 1934713408
        %v6871 = vunpack.c.0.s8 %v6870
        %v6872 = vlaneseq
        %v6873 = vshrl.u32 %v6872, 7
        %v6874 = vsub.s32 %v6871, %v6873
        %v6875 = vrot.slane %v6861, %v6874
        %v6876 = vcombine.low %v6820, %v6852
        %v6877 = vcombine.high %v6820, %v6852
        %v6878 = vcombine.low %v6827, %v6859
        %v6879 = vcombine.high %v6827, %v6859
        %v6880 = vcombine.low %v6836, %v6868
        %v6881 = vcombine.high %v6836, %v6868
        %v6882 = vcombine.low %v6843, %v6875
        %v6883 = vcombine.high %v6843, %v6875
        %v6884 = vcombine.low %v6733, %v6737
        %v6885 = vcombine.high %v6733, %v6737
        %v6887 = vunpack.c.l.s4 1983009808
        %v6888 = vunpack.c.0.s8 %v6887
        %v6889 = vlaneseq
        %v6890 = vshrl.u32 %v6889, 7
        %v6891 = vsub.s32 %v6888, %v6890
        %v6892 = vrot.slane %v6884, %v6891
        %v6894 = vunpack.c.l.s4 1983009808
        %v6895 = vunpack.c.0.s8 %v6894
        %v6896 = vlaneseq
        %v6897 = vshrl.u32 %v6896, 7
        %v6898 = vsub.s32 %v6895, %v6897
        %v6899 = vrot.slane %v6885, %v6898
        %v6900 = vcombine.low %v6735, %v6739
        %v6901 = vcombine.high %v6735, %v6739
        %v6903 = vunpack.c.l.s4 1983009808
        %v6904 = vunpack.c.0.s8 %v6903
        %v6905 = vlaneseq
        %v6906 = vshrl.u32 %v6905, 7
        %v6907 = vsub.s32 %v6904, %v6906
        %v6908 = vrot.slane %v6900, %v6907
        %v6910 = vunpack.c.l.s4 1983009808
        %v6911 = vunpack.c.0.s8 %v6910
        %v6912 = vlaneseq
        %v6913 = vshrl.u32 %v6912, 7
        %v6914 = vsub.s32 %v6911, %v6913
        %v6915 = vrot.slane %v6901, %v6914
        %v6916 = vcombine.low %v6741, %v6745
        %v6917 = vcombine.high %v6741, %v6745
        %v6919 = vunpack.c.l.s4 1983009808
        %v6920 = vunpack.c.0.s8 %v6919
        %v6921 = vlaneseq
        %v6922 = vshrl.u32 %v6921, 7
        %v6923 = vsub.s32 %v6920, %v6922
        %v6924 = vrot.slane %v6916, %v6923
        %v6926 = vunpack.c.l.s4 1983009808
        %v6927 = vunpack.c.0.s8 %v6926
        %v6928 = vlaneseq
        %v6929 = vshrl.u32 %v6928, 7
        %v6930 = vsub.s32 %v6927, %v6929
        %v6931 = vrot.slane %v6917, %v6930
        %v6932 = vcombine.low %v6743, %v6747
        %v6933 = vcombine.high %v6743, %v6747
        %v6935 = vunpack.c.l.s4 1983009808
        %v6936 = vunpack.c.0.s8 %v6935
        %v6937 = vlaneseq
        %v6938 = vshrl.u32 %v6937, 7
        %v6939 = vsub.s32 %v6936, %v6938
        %v6940 = vrot.slane %v6932, %v6939
        %v6942 = vunpack.c.l.s4 1983009808
        %v6943 = vunpack.c.0.s8 %v6942
        %v6944 = vlaneseq
        %v6945 = vshrl.u32 %v6944, 7
        %v6946 = vsub.s32 %v6943, %v6945
        %v6947 = vrot.slane %v6933, %v6946
        %v6948 = vcombine.low %v6892, %v6908
        %v6949 = vcombine.high %v6892, %v6908
        %v6951 = vunpack.c.l.s4 1934713408
        %v6952 = vunpack.c.0.s8 %v6951
        %v6953 = vlaneseq
        %v6954 = vshrl.u32 %v6953, 7
        %v6955 = vsub.s32 %v6952, %v6954
        %v6956 = vrot.slane %v6948, %v6955
        %v6958 = vunpack.c.l.s4 1934713408
        %v6959 = vunpack.c.0.s8 %v6958
        %v6960 = vlaneseq
        %v6961 = vshrl.u32 %v6960, 7
        %v6962 = vsub.s32 %v6959, %v6961
        %v6963 = vrot.slane %v6949, %v6962
        %v6964 = vcombine.low %v6899, %v6915
        %v6965 = vcombine.high %v6899, %v6915
        %v6967 = vunpack.c.l.s4 1934713408
        %v6968 = vunpack.c.0.s8 %v6967
        %v6969 = vlaneseq
        %v6970 = vshrl.u32 %v6969, 7
        %v6971 = vsub.s32 %v6968, %v6970
        %v6972 = vrot.slane %v6964, %v6971
        %v6974 = vunpack.c.l.s4 1934713408
        %v6975 = vunpack.c.0.s8 %v6974
        %v6976 = vlaneseq
        %v6977 = vshrl.u32 %v6976, 7
        %v6978 = vsub.s32 %v6975, %v6977
        %v6979 = vrot.slane %v6965, %v6978
        %v6980 = vcombine.low %v6924, %v6940
        %v6981 = vcombine.high %v6924, %v6940
        %v6983 = vunpack.c.l.s4 1934713408
        %v6984 = vunpack.c.0.s8 %v6983
        %v6985 = vlaneseq
        %v6986 = vshrl.u32 %v6985, 7
        %v6987 = vsub.s32 %v6984, %v6986
        %v6988 = vrot.slane %v6980, %v6987
        %v6990 = vunpack.c.l.s4 1934713408
        %v6991 = vunpack.c.0.s8 %v6990
        %v6992 = vlaneseq
        %v6993 = vshrl.u32 %v6992, 7
        %v6994 = vsub.s32 %v6991, %v6993
        %v6995 = vrot.slane %v6981, %v6994
        %v6996 = vcombine.low %v6931, %v6947
        %v6997 = vcombine.high %v6931, %v6947
        %v6999 = vunpack.c.l.s4 1934713408
        %v7000 = vunpack.c.0.s8 %v6999
        %v7001 = vlaneseq
        %v7002 = vshrl.u32 %v7001, 7
        %v7003 = vsub.s32 %v7000, %v7002
        %v7004 = vrot.slane %v6996, %v7003
        %v7006 = vunpack.c.l.s4 1934713408
        %v7007 = vunpack.c.0.s8 %v7006
        %v7008 = vlaneseq
        %v7009 = vshrl.u32 %v7008, 7
        %v7010 = vsub.s32 %v7007, %v7009
        %v7011 = vrot.slane %v6997, %v7010
        %v7012 = vcombine.low %v6956, %v6988
        %v7013 = vcombine.high %v6956, %v6988
        %v7014 = vcombine.low %v6963, %v6995
        %v7015 = vcombine.high %v6963, %v6995
        %v7016 = vcombine.low %v6972, %v7004
        %v7017 = vcombine.high %v6972, %v7004
        %v7018 = vcombine.low %v6979, %v7011
        %v7019 = vcombine.high %v6979, %v7011
        %7021 = vrot.lane.b32.xlu0 %v6877, 16
        %v7022 = vpop.permute.xlu0 %7021
        %7025 = vrot.lane.b32.xlu0 %v6878, 32
        %v7026 = vpop.permute.xlu0 %7025
        %7029 = vrot.lane.b32.xlu0 %v6879, 48
        %v7030 = vpop.permute.xlu0 %7029
        %7033 = vrot.lane.b32.xlu0 %v6880, 64
        %v7034 = vpop.permute.xlu0 %7033
        %7037 = vrot.lane.b32.xlu0 %v6881, 80
        %v7038 = vpop.permute.xlu0 %7037
        %7041 = vrot.lane.b32.xlu0 %v6882, 96
        %v7042 = vpop.permute.xlu0 %7041
        %7045 = vrot.lane.b32.xlu0 %v6883, 112
        %v7046 = vpop.permute.xlu0 %7045
        %7049 = vrot.lane.b32.xlu0 %v7013, 16
        %v7050 = vpop.permute.xlu0 %7049
        %7053 = vrot.lane.b32.xlu0 %v7014, 32
        %v7054 = vpop.permute.xlu0 %7053
        %7057 = vrot.lane.b32.xlu0 %v7015, 48
        %v7058 = vpop.permute.xlu0 %7057
        %7061 = vrot.lane.b32.xlu0 %v7016, 64
        %v7062 = vpop.permute.xlu0 %7061
        %7065 = vrot.lane.b32.xlu0 %v7017, 80
        %v7066 = vpop.permute.xlu0 %7065
        %7069 = vrot.lane.b32.xlu0 %v7018, 96
        %v7070 = vpop.permute.xlu0 %7069
        %7073 = vrot.lane.b32.xlu0 %v7019, 112
        %v7074 = vpop.permute.xlu0 %7073
        %v7076 = vsel %vm314, %v6876, %v7022
        %v7077 = vsel %vm995, %v7076, %v7026
        %v7078 = vsel %vm997, %v7077, %v7030
        %v7079 = vsel %vm999, %v7078, %v7034
        %v7080 = vsel %vm1001, %v7079, %v7038
        %v7081 = vsel %vm1003, %v7080, %v7042
        %v7082 = vsel %vm1005, %v7081, %v7046
        %v7083 = vsel %vm314, %v7012, %v7050
        %v7084 = vsel %vm995, %v7083, %v7054
        %v7085 = vsel %vm997, %v7084, %v7058
        %v7086 = vsel %vm999, %v7085, %v7062
        %v7087 = vsel %vm1001, %v7086, %v7066
        %v7088 = vsel %vm1003, %v7087, %v7070
        %v7089 = vsel %vm1005, %v7088, %v7074
        %v7090 = vpack.c.bf16 %v7082, %v6724
        %v7091 = vpack.c.bf16 %v7089, %v6731
        %v7094 = vunpack.c.l.b16 %v7090
        %v7095 = vunpack.c.l.b16 %v7091
        %v7096 = vunpack.c.h.b16 %v7090
        %v7097 = vunpack.c.h.b16 %v7091
        %v7098 = vpack.c.b16 %v7095, %v7094
        %v7099 = vpack.c.b16 %v7097, %v7096
        %7102 = vst [vmem:[#allocation3 + $0x70] sm:$0xff] %v7098
        %7103 = vst [vmem:[#allocation3 + $0x78] sm:$0xff] %v7099
        %v7104 = vld [vmem:[#allocation2 + $0x3] sm:$0xff]
        %v7105 = vld [vmem:[#allocation2 + $0xb] sm:$0xff]
        %v7106 = vld [vmem:[#allocation2 + $0x1b] sm:$0xff]
        %v7107 = vld [vmem:[#allocation2 + $0x23] sm:$0xff]
        %v7108 = vld [vmem:[#allocation2 + $0x33] sm:$0xff]
        %v7109 = vld [vmem:[#allocation2 + $0x3b] sm:$0xff]
        %v7110 = vld [vmem:[#allocation2 + $0x4b] sm:$0xff]
        %v7111 = vld [vmem:[#allocation2 + $0x53] sm:$0xff]
        %v7112 = vld [vmem:[#allocation2 + $0x63] sm:$0xff]
        %v7113 = vld [vmem:[#allocation2 + $0x6b] sm:$0xff]
        %v7114 = vld [vmem:[#allocation2 + $0x7b] sm:$0xff]
        %v7115 = vld [vmem:[#allocation2 + $0x83] sm:$0xff]
        %v7116 = vld [vmem:[#allocation2 + $0x93] sm:$0xff]
        %v7117 = vld [vmem:[#allocation2 + $0x9b] sm:$0xff]
        %v7118 = vld [vmem:[#allocation2 + $0xab] sm:$0xff]
        %v7119 = vld [vmem:[#allocation2 + $0xb3] sm:$0xff]
        %7136 = vrot.lane.b32.xlu0 %v7104, 127
        %v7137 = vpop.permute.xlu0 %7136
        %7138 = vrot.lane.b32.xlu0 %v7105, 127
        %v7139 = vpop.permute.xlu0 %7138
        %7140 = vrot.lane.b32.xlu0 %v7106, 127
        %v7141 = vpop.permute.xlu0 %7140
        %7142 = vrot.lane.b32.xlu0 %v7107, 127
        %v7143 = vpop.permute.xlu0 %7142
        %7144 = vrot.lane.b32.xlu0 %v7108, 127
        %v7145 = vpop.permute.xlu0 %7144
        %7146 = vrot.lane.b32.xlu0 %v7109, 127
        %v7147 = vpop.permute.xlu0 %7146
        %7148 = vrot.lane.b32.xlu0 %v7110, 127
        %v7149 = vpop.permute.xlu0 %7148
        %7150 = vrot.lane.b32.xlu0 %v7111, 127
        %v7151 = vpop.permute.xlu0 %7150
        %7152 = vrot.lane.b32.xlu0 %v7112, 127
        %v7153 = vpop.permute.xlu0 %7152
        %7154 = vrot.lane.b32.xlu0 %v7113, 127
        %v7155 = vpop.permute.xlu0 %7154
        %7156 = vrot.lane.b32.xlu0 %v7114, 127
        %v7157 = vpop.permute.xlu0 %7156
        %7158 = vrot.lane.b32.xlu0 %v7115, 127
        %v7159 = vpop.permute.xlu0 %7158
        %7160 = vrot.lane.b32.xlu0 %v7116, 127
        %v7161 = vpop.permute.xlu0 %7160
        %7162 = vrot.lane.b32.xlu0 %v7117, 127
        %v7163 = vpop.permute.xlu0 %7162
        %7164 = vrot.lane.b32.xlu0 %v7118, 127
        %v7165 = vpop.permute.xlu0 %7164
        %7166 = vrot.lane.b32.xlu0 %v7119, 127
        %v7167 = vpop.permute.xlu0 %7166
        %v7184 = vcombine.low %v7137, %v7145
        %v7185 = vcombine.high %v7137, %v7145
        %v7187 = vunpack.c.l.s4 1983009808
        %v7188 = vunpack.c.0.s8 %v7187
        %v7189 = vlaneseq
        %v7190 = vshrl.u32 %v7189, 7
        %v7191 = vsub.s32 %v7188, %v7190
        %v7192 = vrot.slane %v7184, %v7191
        %v7194 = vunpack.c.l.s4 1983009808
        %v7195 = vunpack.c.0.s8 %v7194
        %v7196 = vlaneseq
        %v7197 = vshrl.u32 %v7196, 7
        %v7198 = vsub.s32 %v7195, %v7197
        %v7199 = vrot.slane %v7185, %v7198
        %v7200 = vcombine.low %v7141, %v7149
        %v7201 = vcombine.high %v7141, %v7149
        %v7203 = vunpack.c.l.s4 1983009808
        %v7204 = vunpack.c.0.s8 %v7203
        %v7205 = vlaneseq
        %v7206 = vshrl.u32 %v7205, 7
        %v7207 = vsub.s32 %v7204, %v7206
        %v7208 = vrot.slane %v7200, %v7207
        %v7210 = vunpack.c.l.s4 1983009808
        %v7211 = vunpack.c.0.s8 %v7210
        %v7212 = vlaneseq
        %v7213 = vshrl.u32 %v7212, 7
        %v7214 = vsub.s32 %v7211, %v7213
        %v7215 = vrot.slane %v7201, %v7214
        %v7216 = vcombine.low %v7153, %v7161
        %v7217 = vcombine.high %v7153, %v7161
        %v7219 = vunpack.c.l.s4 1983009808
        %v7220 = vunpack.c.0.s8 %v7219
        %v7221 = vlaneseq
        %v7222 = vshrl.u32 %v7221, 7
        %v7223 = vsub.s32 %v7220, %v7222
        %v7224 = vrot.slane %v7216, %v7223
        %v7226 = vunpack.c.l.s4 1983009808
        %v7227 = vunpack.c.0.s8 %v7226
        %v7228 = vlaneseq
        %v7229 = vshrl.u32 %v7228, 7
        %v7230 = vsub.s32 %v7227, %v7229
        %v7231 = vrot.slane %v7217, %v7230
        %v7232 = vcombine.low %v7157, %v7165
        %v7233 = vcombine.high %v7157, %v7165
        %v7235 = vunpack.c.l.s4 1983009808
        %v7236 = vunpack.c.0.s8 %v7235
        %v7237 = vlaneseq
        %v7238 = vshrl.u32 %v7237, 7
        %v7239 = vsub.s32 %v7236, %v7238
        %v7240 = vrot.slane %v7232, %v7239
        %v7242 = vunpack.c.l.s4 1983009808
        %v7243 = vunpack.c.0.s8 %v7242
        %v7244 = vlaneseq
        %v7245 = vshrl.u32 %v7244, 7
        %v7246 = vsub.s32 %v7243, %v7245
        %v7247 = vrot.slane %v7233, %v7246
        %v7248 = vcombine.low %v7192, %v7208
        %v7249 = vcombine.high %v7192, %v7208
        %v7251 = vunpack.c.l.s4 1934713408
        %v7252 = vunpack.c.0.s8 %v7251
        %v7253 = vlaneseq
        %v7254 = vshrl.u32 %v7253, 7
        %v7255 = vsub.s32 %v7252, %v7254
        %v7256 = vrot.slane %v7248, %v7255
        %v7258 = vunpack.c.l.s4 1934713408
        %v7259 = vunpack.c.0.s8 %v7258
        %v7260 = vlaneseq
        %v7261 = vshrl.u32 %v7260, 7
        %v7262 = vsub.s32 %v7259, %v7261
        %v7263 = vrot.slane %v7249, %v7262
        %v7264 = vcombine.low %v7199, %v7215
        %v7265 = vcombine.high %v7199, %v7215
        %v7267 = vunpack.c.l.s4 1934713408
        %v7268 = vunpack.c.0.s8 %v7267
        %v7269 = vlaneseq
        %v7270 = vshrl.u32 %v7269, 7
        %v7271 = vsub.s32 %v7268, %v7270
        %v7272 = vrot.slane %v7264, %v7271
        %v7274 = vunpack.c.l.s4 1934713408
        %v7275 = vunpack.c.0.s8 %v7274
        %v7276 = vlaneseq
        %v7277 = vshrl.u32 %v7276, 7
        %v7278 = vsub.s32 %v7275, %v7277
        %v7279 = vrot.slane %v7265, %v7278
        %v7280 = vcombine.low %v7224, %v7240
        %v7281 = vcombine.high %v7224, %v7240
        %v7283 = vunpack.c.l.s4 1934713408
        %v7284 = vunpack.c.0.s8 %v7283
        %v7285 = vlaneseq
        %v7286 = vshrl.u32 %v7285, 7
        %v7287 = vsub.s32 %v7284, %v7286
        %v7288 = vrot.slane %v7280, %v7287
        %v7290 = vunpack.c.l.s4 1934713408
        %v7291 = vunpack.c.0.s8 %v7290
        %v7292 = vlaneseq
        %v7293 = vshrl.u32 %v7292, 7
        %v7294 = vsub.s32 %v7291, %v7293
        %v7295 = vrot.slane %v7281, %v7294
        %v7296 = vcombine.low %v7231, %v7247
        %v7297 = vcombine.high %v7231, %v7247
        %v7299 = vunpack.c.l.s4 1934713408
        %v7300 = vunpack.c.0.s8 %v7299
        %v7301 = vlaneseq
        %v7302 = vshrl.u32 %v7301, 7
        %v7303 = vsub.s32 %v7300, %v7302
        %v7304 = vrot.slane %v7296, %v7303
        %v7306 = vunpack.c.l.s4 1934713408
        %v7307 = vunpack.c.0.s8 %v7306
        %v7308 = vlaneseq
        %v7309 = vshrl.u32 %v7308, 7
        %v7310 = vsub.s32 %v7307, %v7309
        %v7311 = vrot.slane %v7297, %v7310
        %v7312 = vcombine.low %v7256, %v7288
        %v7313 = vcombine.high %v7256, %v7288
        %v7314 = vcombine.low %v7263, %v7295
        %v7315 = vcombine.high %v7263, %v7295
        %v7316 = vcombine.low %v7272, %v7304
        %v7317 = vcombine.high %v7272, %v7304
        %v7318 = vcombine.low %v7279, %v7311
        %v7319 = vcombine.high %v7279, %v7311
        %v7320 = vcombine.low %v7139, %v7147
        %v7321 = vcombine.high %v7139, %v7147
        %v7323 = vunpack.c.l.s4 1983009808
        %v7324 = vunpack.c.0.s8 %v7323
        %v7325 = vlaneseq
        %v7326 = vshrl.u32 %v7325, 7
        %v7327 = vsub.s32 %v7324, %v7326
        %v7328 = vrot.slane %v7320, %v7327
        %v7330 = vunpack.c.l.s4 1983009808
        %v7331 = vunpack.c.0.s8 %v7330
        %v7332 = vlaneseq
        %v7333 = vshrl.u32 %v7332, 7
        %v7334 = vsub.s32 %v7331, %v7333
        %v7335 = vrot.slane %v7321, %v7334
        %v7336 = vcombine.low %v7143, %v7151
        %v7337 = vcombine.high %v7143, %v7151
        %v7339 = vunpack.c.l.s4 1983009808
        %v7340 = vunpack.c.0.s8 %v7339
        %v7341 = vlaneseq
        %v7342 = vshrl.u32 %v7341, 7
        %v7343 = vsub.s32 %v7340, %v7342
        %v7344 = vrot.slane %v7336, %v7343
        %v7346 = vunpack.c.l.s4 1983009808
        %v7347 = vunpack.c.0.s8 %v7346
        %v7348 = vlaneseq
        %v7349 = vshrl.u32 %v7348, 7
        %v7350 = vsub.s32 %v7347, %v7349
        %v7351 = vrot.slane %v7337, %v7350
        %v7352 = vcombine.low %v7155, %v7163
        %v7353 = vcombine.high %v7155, %v7163
        %v7355 = vunpack.c.l.s4 1983009808
        %v7356 = vunpack.c.0.s8 %v7355
        %v7357 = vlaneseq
        %v7358 = vshrl.u32 %v7357, 7
        %v7359 = vsub.s32 %v7356, %v7358
        %v7360 = vrot.slane %v7352, %v7359
        %v7362 = vunpack.c.l.s4 1983009808
        %v7363 = vunpack.c.0.s8 %v7362
        %v7364 = vlaneseq
        %v7365 = vshrl.u32 %v7364, 7
        %v7366 = vsub.s32 %v7363, %v7365
        %v7367 = vrot.slane %v7353, %v7366
        %v7368 = vcombine.low %v7159, %v7167
        %v7369 = vcombine.high %v7159, %v7167
        %v7371 = vunpack.c.l.s4 1983009808
        %v7372 = vunpack.c.0.s8 %v7371
        %v7373 = vlaneseq
        %v7374 = vshrl.u32 %v7373, 7
        %v7375 = vsub.s32 %v7372, %v7374
        %v7376 = vrot.slane %v7368, %v7375
        %v7378 = vunpack.c.l.s4 1983009808
        %v7379 = vunpack.c.0.s8 %v7378
        %v7380 = vlaneseq
        %v7381 = vshrl.u32 %v7380, 7
        %v7382 = vsub.s32 %v7379, %v7381
        %v7383 = vrot.slane %v7369, %v7382
        %v7384 = vcombine.low %v7328, %v7344
        %v7385 = vcombine.high %v7328, %v7344
        %v7387 = vunpack.c.l.s4 1934713408
        %v7388 = vunpack.c.0.s8 %v7387
        %v7389 = vlaneseq
        %v7390 = vshrl.u32 %v7389, 7
        %v7391 = vsub.s32 %v7388, %v7390
        %v7392 = vrot.slane %v7384, %v7391
        %v7394 = vunpack.c.l.s4 1934713408
        %v7395 = vunpack.c.0.s8 %v7394
        %v7396 = vlaneseq
        %v7397 = vshrl.u32 %v7396, 7
        %v7398 = vsub.s32 %v7395, %v7397
        %v7399 = vrot.slane %v7385, %v7398
        %v7400 = vcombine.low %v7335, %v7351
        %v7401 = vcombine.high %v7335, %v7351
        %v7403 = vunpack.c.l.s4 1934713408
        %v7404 = vunpack.c.0.s8 %v7403
        %v7405 = vlaneseq
        %v7406 = vshrl.u32 %v7405, 7
        %v7407 = vsub.s32 %v7404, %v7406
        %v7408 = vrot.slane %v7400, %v7407
        %v7410 = vunpack.c.l.s4 1934713408
        %v7411 = vunpack.c.0.s8 %v7410
        %v7412 = vlaneseq
        %v7413 = vshrl.u32 %v7412, 7
        %v7414 = vsub.s32 %v7411, %v7413
        %v7415 = vrot.slane %v7401, %v7414
        %v7416 = vcombine.low %v7360, %v7376
        %v7417 = vcombine.high %v7360, %v7376
        %v7419 = vunpack.c.l.s4 1934713408
        %v7420 = vunpack.c.0.s8 %v7419
        %v7421 = vlaneseq
        %v7422 = vshrl.u32 %v7421, 7
        %v7423 = vsub.s32 %v7420, %v7422
        %v7424 = vrot.slane %v7416, %v7423
        %v7426 = vunpack.c.l.s4 1934713408
        %v7427 = vunpack.c.0.s8 %v7426
        %v7428 = vlaneseq
        %v7429 = vshrl.u32 %v7428, 7
        %v7430 = vsub.s32 %v7427, %v7429
        %v7431 = vrot.slane %v7417, %v7430
        %v7432 = vcombine.low %v7367, %v7383
        %v7433 = vcombine.high %v7367, %v7383
        %v7435 = vunpack.c.l.s4 1934713408
        %v7436 = vunpack.c.0.s8 %v7435
        %v7437 = vlaneseq
        %v7438 = vshrl.u32 %v7437, 7
        %v7439 = vsub.s32 %v7436, %v7438
        %v7440 = vrot.slane %v7432, %v7439
        %v7442 = vunpack.c.l.s4 1934713408
        %v7443 = vunpack.c.0.s8 %v7442
        %v7444 = vlaneseq
        %v7445 = vshrl.u32 %v7444, 7
        %v7446 = vsub.s32 %v7443, %v7445
        %v7447 = vrot.slane %v7433, %v7446
        %v7448 = vcombine.low %v7392, %v7424
        %v7449 = vcombine.high %v7392, %v7424
        %v7450 = vcombine.low %v7399, %v7431
        %v7451 = vcombine.high %v7399, %v7431
        %v7452 = vcombine.low %v7408, %v7440
        %v7453 = vcombine.high %v7408, %v7440
        %v7454 = vcombine.low %v7415, %v7447
        %v7455 = vcombine.high %v7415, %v7447
        %7457 = vrot.lane.b32.xlu0 %v7313, 16
        %v7458 = vpop.permute.xlu0 %7457
        %7461 = vrot.lane.b32.xlu0 %v7314, 32
        %v7462 = vpop.permute.xlu0 %7461
        %7465 = vrot.lane.b32.xlu0 %v7315, 48
        %v7466 = vpop.permute.xlu0 %7465
        %7469 = vrot.lane.b32.xlu0 %v7316, 64
        %v7470 = vpop.permute.xlu0 %7469
        %7473 = vrot.lane.b32.xlu0 %v7317, 80
        %v7474 = vpop.permute.xlu0 %7473
        %7477 = vrot.lane.b32.xlu0 %v7318, 96
        %v7478 = vpop.permute.xlu0 %7477
        %7481 = vrot.lane.b32.xlu0 %v7319, 112
        %v7482 = vpop.permute.xlu0 %7481
        %7485 = vrot.lane.b32.xlu0 %v7449, 16
        %v7486 = vpop.permute.xlu0 %7485
        %7489 = vrot.lane.b32.xlu0 %v7450, 32
        %v7490 = vpop.permute.xlu0 %7489
        %7493 = vrot.lane.b32.xlu0 %v7451, 48
        %v7494 = vpop.permute.xlu0 %7493
        %7497 = vrot.lane.b32.xlu0 %v7452, 64
        %v7498 = vpop.permute.xlu0 %7497
        %7501 = vrot.lane.b32.xlu0 %v7453, 80
        %v7502 = vpop.permute.xlu0 %7501
        %7505 = vrot.lane.b32.xlu0 %v7454, 96
        %v7506 = vpop.permute.xlu0 %7505
        %7509 = vrot.lane.b32.xlu0 %v7455, 112
        %v7510 = vpop.permute.xlu0 %7509
        %v7512 = vsel %vm314, %v7312, %v7458
        %v7513 = vsel %vm995, %v7512, %v7462
        %v7514 = vsel %vm997, %v7513, %v7466
        %v7515 = vsel %vm999, %v7514, %v7470
        %v7516 = vsel %vm1001, %v7515, %v7474
        %v7517 = vsel %vm1003, %v7516, %v7478
        %v7518 = vsel %vm1005, %v7517, %v7482
        %v7519 = vsel %vm314, %v7448, %v7486
        %v7520 = vsel %vm995, %v7519, %v7490
        %v7521 = vsel %vm997, %v7520, %v7494
        %v7522 = vsel %vm999, %v7521, %v7498
        %v7523 = vsel %vm1001, %v7522, %v7502
        %v7524 = vsel %vm1003, %v7523, %v7506
        %v7525 = vsel %vm1005, %v7524, %v7510
        %7526 = vrot.lane.b32.xlu0 %v7104, 126
        %v7527 = vpop.permute.xlu0 %7526
        %7528 = vrot.lane.b32.xlu0 %v7105, 126
        %v7529 = vpop.permute.xlu0 %7528
        %7530 = vrot.lane.b32.xlu0 %v7106, 126
        %v7531 = vpop.permute.xlu0 %7530
        %7532 = vrot.lane.b32.xlu0 %v7107, 126
        %v7533 = vpop.permute.xlu0 %7532
        %7534 = vrot.lane.b32.xlu0 %v7108, 126
        %v7535 = vpop.permute.xlu0 %7534
        %7536 = vrot.lane.b32.xlu0 %v7109, 126
        %v7537 = vpop.permute.xlu0 %7536
        %7538 = vrot.lane.b32.xlu0 %v7110, 126
        %v7539 = vpop.permute.xlu0 %7538
        %7540 = vrot.lane.b32.xlu0 %v7111, 126
        %v7541 = vpop.permute.xlu0 %7540
        %7542 = vrot.lane.b32.xlu0 %v7112, 126
        %v7543 = vpop.permute.xlu0 %7542
        %7544 = vrot.lane.b32.xlu0 %v7113, 126
        %v7545 = vpop.permute.xlu0 %7544
        %7546 = vrot.lane.b32.xlu0 %v7114, 126
        %v7547 = vpop.permute.xlu0 %7546
        %7548 = vrot.lane.b32.xlu0 %v7115, 126
        %v7549 = vpop.permute.xlu0 %7548
        %7550 = vrot.lane.b32.xlu0 %v7116, 126
        %v7551 = vpop.permute.xlu0 %7550
        %7552 = vrot.lane.b32.xlu0 %v7117, 126
        %v7553 = vpop.permute.xlu0 %7552
        %7554 = vrot.lane.b32.xlu0 %v7118, 126
        %v7555 = vpop.permute.xlu0 %7554
        %7556 = vrot.lane.b32.xlu0 %v7119, 126
        %v7557 = vpop.permute.xlu0 %7556
        %v7574 = vcombine.low %v7527, %v7535
        %v7575 = vcombine.high %v7527, %v7535
        %v7577 = vunpack.c.l.s4 1983009808
        %v7578 = vunpack.c.0.s8 %v7577
        %v7579 = vlaneseq
        %v7580 = vshrl.u32 %v7579, 7
        %v7581 = vsub.s32 %v7578, %v7580
        %v7582 = vrot.slane %v7574, %v7581
        %v7584 = vunpack.c.l.s4 1983009808
        %v7585 = vunpack.c.0.s8 %v7584
        %v7586 = vlaneseq
        %v7587 = vshrl.u32 %v7586, 7
        %v7588 = vsub.s32 %v7585, %v7587
        %v7589 = vrot.slane %v7575, %v7588
        %v7590 = vcombine.low %v7531, %v7539
        %v7591 = vcombine.high %v7531, %v7539
        %v7593 = vunpack.c.l.s4 1983009808
        %v7594 = vunpack.c.0.s8 %v7593
        %v7595 = vlaneseq
        %v7596 = vshrl.u32 %v7595, 7
        %v7597 = vsub.s32 %v7594, %v7596
        %v7598 = vrot.slane %v7590, %v7597
        %v7600 = vunpack.c.l.s4 1983009808
        %v7601 = vunpack.c.0.s8 %v7600
        %v7602 = vlaneseq
        %v7603 = vshrl.u32 %v7602, 7
        %v7604 = vsub.s32 %v7601, %v7603
        %v7605 = vrot.slane %v7591, %v7604
        %v7606 = vcombine.low %v7543, %v7551
        %v7607 = vcombine.high %v7543, %v7551
        %v7609 = vunpack.c.l.s4 1983009808
        %v7610 = vunpack.c.0.s8 %v7609
        %v7611 = vlaneseq
        %v7612 = vshrl.u32 %v7611, 7
        %v7613 = vsub.s32 %v7610, %v7612
        %v7614 = vrot.slane %v7606, %v7613
        %v7616 = vunpack.c.l.s4 1983009808
        %v7617 = vunpack.c.0.s8 %v7616
        %v7618 = vlaneseq
        %v7619 = vshrl.u32 %v7618, 7
        %v7620 = vsub.s32 %v7617, %v7619
        %v7621 = vrot.slane %v7607, %v7620
        %v7622 = vcombine.low %v7547, %v7555
        %v7623 = vcombine.high %v7547, %v7555
        %v7625 = vunpack.c.l.s4 1983009808
        %v7626 = vunpack.c.0.s8 %v7625
        %v7627 = vlaneseq
        %v7628 = vshrl.u32 %v7627, 7
        %v7629 = vsub.s32 %v7626, %v7628
        %v7630 = vrot.slane %v7622, %v7629
        %v7632 = vunpack.c.l.s4 1983009808
        %v7633 = vunpack.c.0.s8 %v7632
        %v7634 = vlaneseq
        %v7635 = vshrl.u32 %v7634, 7
        %v7636 = vsub.s32 %v7633, %v7635
        %v7637 = vrot.slane %v7623, %v7636
        %v7638 = vcombine.low %v7582, %v7598
        %v7639 = vcombine.high %v7582, %v7598
        %v7641 = vunpack.c.l.s4 1934713408
        %v7642 = vunpack.c.0.s8 %v7641
        %v7643 = vlaneseq
        %v7644 = vshrl.u32 %v7643, 7
        %v7645 = vsub.s32 %v7642, %v7644
        %v7646 = vrot.slane %v7638, %v7645
        %v7648 = vunpack.c.l.s4 1934713408
        %v7649 = vunpack.c.0.s8 %v7648
        %v7650 = vlaneseq
        %v7651 = vshrl.u32 %v7650, 7
        %v7652 = vsub.s32 %v7649, %v7651
        %v7653 = vrot.slane %v7639, %v7652
        %v7654 = vcombine.low %v7589, %v7605
        %v7655 = vcombine.high %v7589, %v7605
        %v7657 = vunpack.c.l.s4 1934713408
        %v7658 = vunpack.c.0.s8 %v7657
        %v7659 = vlaneseq
        %v7660 = vshrl.u32 %v7659, 7
        %v7661 = vsub.s32 %v7658, %v7660
        %v7662 = vrot.slane %v7654, %v7661
        %v7664 = vunpack.c.l.s4 1934713408
        %v7665 = vunpack.c.0.s8 %v7664
        %v7666 = vlaneseq
        %v7667 = vshrl.u32 %v7666, 7
        %v7668 = vsub.s32 %v7665, %v7667
        %v7669 = vrot.slane %v7655, %v7668
        %v7670 = vcombine.low %v7614, %v7630
        %v7671 = vcombine.high %v7614, %v7630
        %v7673 = vunpack.c.l.s4 1934713408
        %v7674 = vunpack.c.0.s8 %v7673
        %v7675 = vlaneseq
        %v7676 = vshrl.u32 %v7675, 7
        %v7677 = vsub.s32 %v7674, %v7676
        %v7678 = vrot.slane %v7670, %v7677
        %v7680 = vunpack.c.l.s4 1934713408
        %v7681 = vunpack.c.0.s8 %v7680
        %v7682 = vlaneseq
        %v7683 = vshrl.u32 %v7682, 7
        %v7684 = vsub.s32 %v7681, %v7683
        %v7685 = vrot.slane %v7671, %v7684
        %v7686 = vcombine.low %v7621, %v7637
        %v7687 = vcombine.high %v7621, %v7637
        %v7689 = vunpack.c.l.s4 1934713408
        %v7690 = vunpack.c.0.s8 %v7689
        %v7691 = vlaneseq
        %v7692 = vshrl.u32 %v7691, 7
        %v7693 = vsub.s32 %v7690, %v7692
        %v7694 = vrot.slane %v7686, %v7693
        %v7696 = vunpack.c.l.s4 1934713408
        %v7697 = vunpack.c.0.s8 %v7696
        %v7698 = vlaneseq
        %v7699 = vshrl.u32 %v7698, 7
        %v7700 = vsub.s32 %v7697, %v7699
        %v7701 = vrot.slane %v7687, %v7700
        %v7702 = vcombine.low %v7646, %v7678
        %v7703 = vcombine.high %v7646, %v7678
        %v7704 = vcombine.low %v7653, %v7685
        %v7705 = vcombine.high %v7653, %v7685
        %v7706 = vcombine.low %v7662, %v7694
        %v7707 = vcombine.high %v7662, %v7694
        %v7708 = vcombine.low %v7669, %v7701
        %v7709 = vcombine.high %v7669, %v7701
        %v7710 = vcombine.low %v7529, %v7537
        %v7711 = vcombine.high %v7529, %v7537
        %v7713 = vunpack.c.l.s4 1983009808
        %v7714 = vunpack.c.0.s8 %v7713
        %v7715 = vlaneseq
        %v7716 = vshrl.u32 %v7715, 7
        %v7717 = vsub.s32 %v7714, %v7716
        %v7718 = vrot.slane %v7710, %v7717
        %v7720 = vunpack.c.l.s4 1983009808
        %v7721 = vunpack.c.0.s8 %v7720
        %v7722 = vlaneseq
        %v7723 = vshrl.u32 %v7722, 7
        %v7724 = vsub.s32 %v7721, %v7723
        %v7725 = vrot.slane %v7711, %v7724
        %v7726 = vcombine.low %v7533, %v7541
        %v7727 = vcombine.high %v7533, %v7541
        %v7729 = vunpack.c.l.s4 1983009808
        %v7730 = vunpack.c.0.s8 %v7729
        %v7731 = vlaneseq
        %v7732 = vshrl.u32 %v7731, 7
        %v7733 = vsub.s32 %v7730, %v7732
        %v7734 = vrot.slane %v7726, %v7733
        %v7736 = vunpack.c.l.s4 1983009808
        %v7737 = vunpack.c.0.s8 %v7736
        %v7738 = vlaneseq
        %v7739 = vshrl.u32 %v7738, 7
        %v7740 = vsub.s32 %v7737, %v7739
        %v7741 = vrot.slane %v7727, %v7740
        %v7742 = vcombine.low %v7545, %v7553
        %v7743 = vcombine.high %v7545, %v7553
        %v7745 = vunpack.c.l.s4 1983009808
        %v7746 = vunpack.c.0.s8 %v7745
        %v7747 = vlaneseq
        %v7748 = vshrl.u32 %v7747, 7
        %v7749 = vsub.s32 %v7746, %v7748
        %v7750 = vrot.slane %v7742, %v7749
        %v7752 = vunpack.c.l.s4 1983009808
        %v7753 = vunpack.c.0.s8 %v7752
        %v7754 = vlaneseq
        %v7755 = vshrl.u32 %v7754, 7
        %v7756 = vsub.s32 %v7753, %v7755
        %v7757 = vrot.slane %v7743, %v7756
        %v7758 = vcombine.low %v7549, %v7557
        %v7759 = vcombine.high %v7549, %v7557
        %v7761 = vunpack.c.l.s4 1983009808
        %v7762 = vunpack.c.0.s8 %v7761
        %v7763 = vlaneseq
        %v7764 = vshrl.u32 %v7763, 7
        %v7765 = vsub.s32 %v7762, %v7764
        %v7766 = vrot.slane %v7758, %v7765
        %v7768 = vunpack.c.l.s4 1983009808
        %v7769 = vunpack.c.0.s8 %v7768
        %v7770 = vlaneseq
        %v7771 = vshrl.u32 %v7770, 7
        %v7772 = vsub.s32 %v7769, %v7771
        %v7773 = vrot.slane %v7759, %v7772
        %v7774 = vcombine.low %v7718, %v7734
        %v7775 = vcombine.high %v7718, %v7734
        %v7777 = vunpack.c.l.s4 1934713408
        %v7778 = vunpack.c.0.s8 %v7777
        %v7779 = vlaneseq
        %v7780 = vshrl.u32 %v7779, 7
        %v7781 = vsub.s32 %v7778, %v7780
        %v7782 = vrot.slane %v7774, %v7781
        %v7784 = vunpack.c.l.s4 1934713408
        %v7785 = vunpack.c.0.s8 %v7784
        %v7786 = vlaneseq
        %v7787 = vshrl.u32 %v7786, 7
        %v7788 = vsub.s32 %v7785, %v7787
        %v7789 = vrot.slane %v7775, %v7788
        %v7790 = vcombine.low %v7725, %v7741
        %v7791 = vcombine.high %v7725, %v7741
        %v7793 = vunpack.c.l.s4 1934713408
        %v7794 = vunpack.c.0.s8 %v7793
        %v7795 = vlaneseq
        %v7796 = vshrl.u32 %v7795, 7
        %v7797 = vsub.s32 %v7794, %v7796
        %v7798 = vrot.slane %v7790, %v7797
        %v7800 = vunpack.c.l.s4 1934713408
        %v7801 = vunpack.c.0.s8 %v7800
        %v7802 = vlaneseq
        %v7803 = vshrl.u32 %v7802, 7
        %v7804 = vsub.s32 %v7801, %v7803
        %v7805 = vrot.slane %v7791, %v7804
        %v7806 = vcombine.low %v7750, %v7766
        %v7807 = vcombine.high %v7750, %v7766
        %v7809 = vunpack.c.l.s4 1934713408
        %v7810 = vunpack.c.0.s8 %v7809
        %v7811 = vlaneseq
        %v7812 = vshrl.u32 %v7811, 7
        %v7813 = vsub.s32 %v7810, %v7812
        %v7814 = vrot.slane %v7806, %v7813
        %v7816 = vunpack.c.l.s4 1934713408
        %v7817 = vunpack.c.0.s8 %v7816
        %v7818 = vlaneseq
        %v7819 = vshrl.u32 %v7818, 7
        %v7820 = vsub.s32 %v7817, %v7819
        %v7821 = vrot.slane %v7807, %v7820
        %v7822 = vcombine.low %v7757, %v7773
        %v7823 = vcombine.high %v7757, %v7773
        %v7825 = vunpack.c.l.s4 1934713408
        %v7826 = vunpack.c.0.s8 %v7825
        %v7827 = vlaneseq
        %v7828 = vshrl.u32 %v7827, 7
        %v7829 = vsub.s32 %v7826, %v7828
        %v7830 = vrot.slane %v7822, %v7829
        %v7832 = vunpack.c.l.s4 1934713408
        %v7833 = vunpack.c.0.s8 %v7832
        %v7834 = vlaneseq
        %v7835 = vshrl.u32 %v7834, 7
        %v7836 = vsub.s32 %v7833, %v7835
        %v7837 = vrot.slane %v7823, %v7836
        %v7838 = vcombine.low %v7782, %v7814
        %v7839 = vcombine.high %v7782, %v7814
        %v7840 = vcombine.low %v7789, %v7821
        %v7841 = vcombine.high %v7789, %v7821
        %v7842 = vcombine.low %v7798, %v7830
        %v7843 = vcombine.high %v7798, %v7830
        %v7844 = vcombine.low %v7805, %v7837
        %v7845 = vcombine.high %v7805, %v7837
        %7847 = vrot.lane.b32.xlu0 %v7703, 16
        %v7848 = vpop.permute.xlu0 %7847
        %7851 = vrot.lane.b32.xlu0 %v7704, 32
        %v7852 = vpop.permute.xlu0 %7851
        %7855 = vrot.lane.b32.xlu0 %v7705, 48
        %v7856 = vpop.permute.xlu0 %7855
        %7859 = vrot.lane.b32.xlu0 %v7706, 64
        %v7860 = vpop.permute.xlu0 %7859
        %7863 = vrot.lane.b32.xlu0 %v7707, 80
        %v7864 = vpop.permute.xlu0 %7863
        %7867 = vrot.lane.b32.xlu0 %v7708, 96
        %v7868 = vpop.permute.xlu0 %7867
        %7871 = vrot.lane.b32.xlu0 %v7709, 112
        %v7872 = vpop.permute.xlu0 %7871
        %7875 = vrot.lane.b32.xlu0 %v7839, 16
        %v7876 = vpop.permute.xlu0 %7875
        %7879 = vrot.lane.b32.xlu0 %v7840, 32
        %v7880 = vpop.permute.xlu0 %7879
        %7883 = vrot.lane.b32.xlu0 %v7841, 48
        %v7884 = vpop.permute.xlu0 %7883
        %7887 = vrot.lane.b32.xlu0 %v7842, 64
        %v7888 = vpop.permute.xlu0 %7887
        %7891 = vrot.lane.b32.xlu0 %v7843, 80
        %v7892 = vpop.permute.xlu0 %7891
        %7895 = vrot.lane.b32.xlu0 %v7844, 96
        %v7896 = vpop.permute.xlu0 %7895
        %7899 = vrot.lane.b32.xlu0 %v7845, 112
        %v7900 = vpop.permute.xlu0 %7899
        %v7902 = vsel %vm314, %v7702, %v7848
        %v7903 = vsel %vm995, %v7902, %v7852
        %v7904 = vsel %vm997, %v7903, %v7856
        %v7905 = vsel %vm999, %v7904, %v7860
        %v7906 = vsel %vm1001, %v7905, %v7864
        %v7907 = vsel %vm1003, %v7906, %v7868
        %v7908 = vsel %vm1005, %v7907, %v7872
        %v7909 = vsel %vm314, %v7838, %v7876
        %v7910 = vsel %vm995, %v7909, %v7880
        %v7911 = vsel %vm997, %v7910, %v7884
        %v7912 = vsel %vm999, %v7911, %v7888
        %v7913 = vsel %vm1001, %v7912, %v7892
        %v7914 = vsel %vm1003, %v7913, %v7896
        %v7915 = vsel %vm1005, %v7914, %v7900
        %v7916 = vpack.c.bf16 %v7908, %v7518
        %v7917 = vpack.c.bf16 %v7915, %v7525
        %v7920 = vunpack.c.l.b16 %v7916
        %v7921 = vunpack.c.l.b16 %v7917
        %v7922 = vunpack.c.h.b16 %v7916
        %v7923 = vunpack.c.h.b16 %v7917
        %v7924 = vpack.c.b16 %v7921, %v7920
        %v7925 = vpack.c.b16 %v7923, %v7922
        %7928 = vst [vmem:[#allocation3 + $0x80] sm:$0xff] %v7924
        %7929 = vst [vmem:[#allocation3 + $0x88] sm:$0xff] %v7925
        %v7930 = vld [vmem:[#allocation2 + $0x3] sm:$0xff]
        %v7931 = vld [vmem:[#allocation2 + $0xb] sm:$0xff]
        %v7932 = vld [vmem:[#allocation2 + $0x1b] sm:$0xff]
        %v7933 = vld [vmem:[#allocation2 + $0x23] sm:$0xff]
        %v7934 = vld [vmem:[#allocation2 + $0x33] sm:$0xff]
        %v7935 = vld [vmem:[#allocation2 + $0x3b] sm:$0xff]
        %v7936 = vld [vmem:[#allocation2 + $0x4b] sm:$0xff]
        %v7937 = vld [vmem:[#allocation2 + $0x53] sm:$0xff]
        %v7938 = vld [vmem:[#allocation2 + $0x63] sm:$0xff]
        %v7939 = vld [vmem:[#allocation2 + $0x6b] sm:$0xff]
        %v7940 = vld [vmem:[#allocation2 + $0x7b] sm:$0xff]
        %v7941 = vld [vmem:[#allocation2 + $0x83] sm:$0xff]
        %v7942 = vld [vmem:[#allocation2 + $0x93] sm:$0xff]
        %v7943 = vld [vmem:[#allocation2 + $0x9b] sm:$0xff]
        %v7944 = vld [vmem:[#allocation2 + $0xab] sm:$0xff]
        %v7945 = vld [vmem:[#allocation2 + $0xb3] sm:$0xff]
        %7962 = vrot.lane.b32.xlu0 %v7930, 125
        %v7963 = vpop.permute.xlu0 %7962
        %7964 = vrot.lane.b32.xlu0 %v7931, 125
        %v7965 = vpop.permute.xlu0 %7964
        %7966 = vrot.lane.b32.xlu0 %v7932, 125
        %v7967 = vpop.permute.xlu0 %7966
        %7968 = vrot.lane.b32.xlu0 %v7933, 125
        %v7969 = vpop.permute.xlu0 %7968
        %7970 = vrot.lane.b32.xlu0 %v7934, 125
        %v7971 = vpop.permute.xlu0 %7970
        %7972 = vrot.lane.b32.xlu0 %v7935, 125
        %v7973 = vpop.permute.xlu0 %7972
        %7974 = vrot.lane.b32.xlu0 %v7936, 125
        %v7975 = vpop.permute.xlu0 %7974
        %7976 = vrot.lane.b32.xlu0 %v7937, 125
        %v7977 = vpop.permute.xlu0 %7976
        %7978 = vrot.lane.b32.xlu0 %v7938, 125
        %v7979 = vpop.permute.xlu0 %7978
        %7980 = vrot.lane.b32.xlu0 %v7939, 125
        %v7981 = vpop.permute.xlu0 %7980
        %7982 = vrot.lane.b32.xlu0 %v7940, 125
        %v7983 = vpop.permute.xlu0 %7982
        %7984 = vrot.lane.b32.xlu0 %v7941, 125
        %v7985 = vpop.permute.xlu0 %7984
        %7986 = vrot.lane.b32.xlu0 %v7942, 125
        %v7987 = vpop.permute.xlu0 %7986
        %7988 = vrot.lane.b32.xlu0 %v7943, 125
        %v7989 = vpop.permute.xlu0 %7988
        %7990 = vrot.lane.b32.xlu0 %v7944, 125
        %v7991 = vpop.permute.xlu0 %7990
        %7992 = vrot.lane.b32.xlu0 %v7945, 125
        %v7993 = vpop.permute.xlu0 %7992
        %v8010 = vcombine.low %v7963, %v7971
        %v8011 = vcombine.high %v7963, %v7971
        %v8013 = vunpack.c.l.s4 1983009808
        %v8014 = vunpack.c.0.s8 %v8013
        %v8015 = vlaneseq
        %v8016 = vshrl.u32 %v8015, 7
        %v8017 = vsub.s32 %v8014, %v8016
        %v8018 = vrot.slane %v8010, %v8017
        %v8020 = vunpack.c.l.s4 1983009808
        %v8021 = vunpack.c.0.s8 %v8020
        %v8022 = vlaneseq
        %v8023 = vshrl.u32 %v8022, 7
        %v8024 = vsub.s32 %v8021, %v8023
        %v8025 = vrot.slane %v8011, %v8024
        %v8026 = vcombine.low %v7967, %v7975
        %v8027 = vcombine.high %v7967, %v7975
        %v8029 = vunpack.c.l.s4 1983009808
        %v8030 = vunpack.c.0.s8 %v8029
        %v8031 = vlaneseq
        %v8032 = vshrl.u32 %v8031, 7
        %v8033 = vsub.s32 %v8030, %v8032
        %v8034 = vrot.slane %v8026, %v8033
        %v8036 = vunpack.c.l.s4 1983009808
        %v8037 = vunpack.c.0.s8 %v8036
        %v8038 = vlaneseq
        %v8039 = vshrl.u32 %v8038, 7
        %v8040 = vsub.s32 %v8037, %v8039
        %v8041 = vrot.slane %v8027, %v8040
        %v8042 = vcombine.low %v7979, %v7987
        %v8043 = vcombine.high %v7979, %v7987
        %v8045 = vunpack.c.l.s4 1983009808
        %v8046 = vunpack.c.0.s8 %v8045
        %v8047 = vlaneseq
        %v8048 = vshrl.u32 %v8047, 7
        %v8049 = vsub.s32 %v8046, %v8048
        %v8050 = vrot.slane %v8042, %v8049
        %v8052 = vunpack.c.l.s4 1983009808
        %v8053 = vunpack.c.0.s8 %v8052
        %v8054 = vlaneseq
        %v8055 = vshrl.u32 %v8054, 7
        %v8056 = vsub.s32 %v8053, %v8055
        %v8057 = vrot.slane %v8043, %v8056
        %v8058 = vcombine.low %v7983, %v7991
        %v8059 = vcombine.high %v7983, %v7991
        %v8061 = vunpack.c.l.s4 1983009808
        %v8062 = vunpack.c.0.s8 %v8061
        %v8063 = vlaneseq
        %v8064 = vshrl.u32 %v8063, 7
        %v8065 = vsub.s32 %v8062, %v8064
        %v8066 = vrot.slane %v8058, %v8065
        %v8068 = vunpack.c.l.s4 1983009808
        %v8069 = vunpack.c.0.s8 %v8068
        %v8070 = vlaneseq
        %v8071 = vshrl.u32 %v8070, 7
        %v8072 = vsub.s32 %v8069, %v8071
        %v8073 = vrot.slane %v8059, %v8072
        %v8074 = vcombine.low %v8018, %v8034
        %v8075 = vcombine.high %v8018, %v8034
        %v8077 = vunpack.c.l.s4 1934713408
        %v8078 = vunpack.c.0.s8 %v8077
        %v8079 = vlaneseq
        %v8080 = vshrl.u32 %v8079, 7
        %v8081 = vsub.s32 %v8078, %v8080
        %v8082 = vrot.slane %v8074, %v8081
        %v8084 = vunpack.c.l.s4 1934713408
        %v8085 = vunpack.c.0.s8 %v8084
        %v8086 = vlaneseq
        %v8087 = vshrl.u32 %v8086, 7
        %v8088 = vsub.s32 %v8085, %v8087
        %v8089 = vrot.slane %v8075, %v8088
        %v8090 = vcombine.low %v8025, %v8041
        %v8091 = vcombine.high %v8025, %v8041
        %v8093 = vunpack.c.l.s4 1934713408
        %v8094 = vunpack.c.0.s8 %v8093
        %v8095 = vlaneseq
        %v8096 = vshrl.u32 %v8095, 7
        %v8097 = vsub.s32 %v8094, %v8096
        %v8098 = vrot.slane %v8090, %v8097
        %v8100 = vunpack.c.l.s4 1934713408
        %v8101 = vunpack.c.0.s8 %v8100
        %v8102 = vlaneseq
        %v8103 = vshrl.u32 %v8102, 7
        %v8104 = vsub.s32 %v8101, %v8103
        %v8105 = vrot.slane %v8091, %v8104
        %v8106 = vcombine.low %v8050, %v8066
        %v8107 = vcombine.high %v8050, %v8066
        %v8109 = vunpack.c.l.s4 1934713408
        %v8110 = vunpack.c.0.s8 %v8109
        %v8111 = vlaneseq
        %v8112 = vshrl.u32 %v8111, 7
        %v8113 = vsub.s32 %v8110, %v8112
        %v8114 = vrot.slane %v8106, %v8113
        %v8116 = vunpack.c.l.s4 1934713408
        %v8117 = vunpack.c.0.s8 %v8116
        %v8118 = vlaneseq
        %v8119 = vshrl.u32 %v8118, 7
        %v8120 = vsub.s32 %v8117, %v8119
        %v8121 = vrot.slane %v8107, %v8120
        %v8122 = vcombine.low %v8057, %v8073
        %v8123 = vcombine.high %v8057, %v8073
        %v8125 = vunpack.c.l.s4 1934713408
        %v8126 = vunpack.c.0.s8 %v8125
        %v8127 = vlaneseq
        %v8128 = vshrl.u32 %v8127, 7
        %v8129 = vsub.s32 %v8126, %v8128
        %v8130 = vrot.slane %v8122, %v8129
        %v8132 = vunpack.c.l.s4 1934713408
        %v8133 = vunpack.c.0.s8 %v8132
        %v8134 = vlaneseq
        %v8135 = vshrl.u32 %v8134, 7
        %v8136 = vsub.s32 %v8133, %v8135
        %v8137 = vrot.slane %v8123, %v8136
        %v8138 = vcombine.low %v8082, %v8114
        %v8139 = vcombine.high %v8082, %v8114
        %v8140 = vcombine.low %v8089, %v8121
        %v8141 = vcombine.high %v8089, %v8121
        %v8142 = vcombine.low %v8098, %v8130
        %v8143 = vcombine.high %v8098, %v8130
        %v8144 = vcombine.low %v8105, %v8137
        %v8145 = vcombine.high %v8105, %v8137
        %v8146 = vcombine.low %v7965, %v7973
        %v8147 = vcombine.high %v7965, %v7973
        %v8149 = vunpack.c.l.s4 1983009808
        %v8150 = vunpack.c.0.s8 %v8149
        %v8151 = vlaneseq
        %v8152 = vshrl.u32 %v8151, 7
        %v8153 = vsub.s32 %v8150, %v8152
        %v8154 = vrot.slane %v8146, %v8153
        %v8156 = vunpack.c.l.s4 1983009808
        %v8157 = vunpack.c.0.s8 %v8156
        %v8158 = vlaneseq
        %v8159 = vshrl.u32 %v8158, 7
        %v8160 = vsub.s32 %v8157, %v8159
        %v8161 = vrot.slane %v8147, %v8160
        %v8162 = vcombine.low %v7969, %v7977
        %v8163 = vcombine.high %v7969, %v7977
        %v8165 = vunpack.c.l.s4 1983009808
        %v8166 = vunpack.c.0.s8 %v8165
        %v8167 = vlaneseq
        %v8168 = vshrl.u32 %v8167, 7
        %v8169 = vsub.s32 %v8166, %v8168
        %v8170 = vrot.slane %v8162, %v8169
        %v8172 = vunpack.c.l.s4 1983009808
        %v8173 = vunpack.c.0.s8 %v8172
        %v8174 = vlaneseq
        %v8175 = vshrl.u32 %v8174, 7
        %v8176 = vsub.s32 %v8173, %v8175
        %v8177 = vrot.slane %v8163, %v8176
        %v8178 = vcombine.low %v7981, %v7989
        %v8179 = vcombine.high %v7981, %v7989
        %v8181 = vunpack.c.l.s4 1983009808
        %v8182 = vunpack.c.0.s8 %v8181
        %v8183 = vlaneseq
        %v8184 = vshrl.u32 %v8183, 7
        %v8185 = vsub.s32 %v8182, %v8184
        %v8186 = vrot.slane %v8178, %v8185
        %v8188 = vunpack.c.l.s4 1983009808
        %v8189 = vunpack.c.0.s8 %v8188
        %v8190 = vlaneseq
        %v8191 = vshrl.u32 %v8190, 7
        %v8192 = vsub.s32 %v8189, %v8191
        %v8193 = vrot.slane %v8179, %v8192
        %v8194 = vcombine.low %v7985, %v7993
        %v8195 = vcombine.high %v7985, %v7993
        %v8197 = vunpack.c.l.s4 1983009808
        %v8198 = vunpack.c.0.s8 %v8197
        %v8199 = vlaneseq
        %v8200 = vshrl.u32 %v8199, 7
        %v8201 = vsub.s32 %v8198, %v8200
        %v8202 = vrot.slane %v8194, %v8201
        %v8204 = vunpack.c.l.s4 1983009808
        %v8205 = vunpack.c.0.s8 %v8204
        %v8206 = vlaneseq
        %v8207 = vshrl.u32 %v8206, 7
        %v8208 = vsub.s32 %v8205, %v8207
        %v8209 = vrot.slane %v8195, %v8208
        %v8210 = vcombine.low %v8154, %v8170
        %v8211 = vcombine.high %v8154, %v8170
        %v8213 = vunpack.c.l.s4 1934713408
        %v8214 = vunpack.c.0.s8 %v8213
        %v8215 = vlaneseq
        %v8216 = vshrl.u32 %v8215, 7
        %v8217 = vsub.s32 %v8214, %v8216
        %v8218 = vrot.slane %v8210, %v8217
        %v8220 = vunpack.c.l.s4 1934713408
        %v8221 = vunpack.c.0.s8 %v8220
        %v8222 = vlaneseq
        %v8223 = vshrl.u32 %v8222, 7
        %v8224 = vsub.s32 %v8221, %v8223
        %v8225 = vrot.slane %v8211, %v8224
        %v8226 = vcombine.low %v8161, %v8177
        %v8227 = vcombine.high %v8161, %v8177
        %v8229 = vunpack.c.l.s4 1934713408
        %v8230 = vunpack.c.0.s8 %v8229
        %v8231 = vlaneseq
        %v8232 = vshrl.u32 %v8231, 7
        %v8233 = vsub.s32 %v8230, %v8232
        %v8234 = vrot.slane %v8226, %v8233
        %v8236 = vunpack.c.l.s4 1934713408
        %v8237 = vunpack.c.0.s8 %v8236
        %v8238 = vlaneseq
        %v8239 = vshrl.u32 %v8238, 7
        %v8240 = vsub.s32 %v8237, %v8239
        %v8241 = vrot.slane %v8227, %v8240
        %v8242 = vcombine.low %v8186, %v8202
        %v8243 = vcombine.high %v8186, %v8202
        %v8245 = vunpack.c.l.s4 1934713408
        %v8246 = vunpack.c.0.s8 %v8245
        %v8247 = vlaneseq
        %v8248 = vshrl.u32 %v8247, 7
        %v8249 = vsub.s32 %v8246, %v8248
        %v8250 = vrot.slane %v8242, %v8249
        %v8252 = vunpack.c.l.s4 1934713408
        %v8253 = vunpack.c.0.s8 %v8252
        %v8254 = vlaneseq
        %v8255 = vshrl.u32 %v8254, 7
        %v8256 = vsub.s32 %v8253, %v8255
        %v8257 = vrot.slane %v8243, %v8256
        %v8258 = vcombine.low %v8193, %v8209
        %v8259 = vcombine.high %v8193, %v8209
        %v8261 = vunpack.c.l.s4 1934713408
        %v8262 = vunpack.c.0.s8 %v8261
        %v8263 = vlaneseq
        %v8264 = vshrl.u32 %v8263, 7
        %v8265 = vsub.s32 %v8262, %v8264
        %v8266 = vrot.slane %v8258, %v8265
        %v8268 = vunpack.c.l.s4 1934713408
        %v8269 = vunpack.c.0.s8 %v8268
        %v8270 = vlaneseq
        %v8271 = vshrl.u32 %v8270, 7
        %v8272 = vsub.s32 %v8269, %v8271
        %v8273 = vrot.slane %v8259, %v8272
        %v8274 = vcombine.low %v8218, %v8250
        %v8275 = vcombine.high %v8218, %v8250
        %v8276 = vcombine.low %v8225, %v8257
        %v8277 = vcombine.high %v8225, %v8257
        %v8278 = vcombine.low %v8234, %v8266
        %v8279 = vcombine.high %v8234, %v8266
        %v8280 = vcombine.low %v8241, %v8273
        %v8281 = vcombine.high %v8241, %v8273
        %8283 = vrot.lane.b32.xlu0 %v8139, 16
        %v8284 = vpop.permute.xlu0 %8283
        %8287 = vrot.lane.b32.xlu0 %v8140, 32
        %v8288 = vpop.permute.xlu0 %8287
        %8291 = vrot.lane.b32.xlu0 %v8141, 48
        %v8292 = vpop.permute.xlu0 %8291
        %8295 = vrot.lane.b32.xlu0 %v8142, 64
        %v8296 = vpop.permute.xlu0 %8295
        %8299 = vrot.lane.b32.xlu0 %v8143, 80
        %v8300 = vpop.permute.xlu0 %8299
        %8303 = vrot.lane.b32.xlu0 %v8144, 96
        %v8304 = vpop.permute.xlu0 %8303
        %8307 = vrot.lane.b32.xlu0 %v8145, 112
        %v8308 = vpop.permute.xlu0 %8307
        %8311 = vrot.lane.b32.xlu0 %v8275, 16
        %v8312 = vpop.permute.xlu0 %8311
        %8315 = vrot.lane.b32.xlu0 %v8276, 32
        %v8316 = vpop.permute.xlu0 %8315
        %8319 = vrot.lane.b32.xlu0 %v8277, 48
        %v8320 = vpop.permute.xlu0 %8319
        %8323 = vrot.lane.b32.xlu0 %v8278, 64
        %v8324 = vpop.permute.xlu0 %8323
        %8327 = vrot.lane.b32.xlu0 %v8279, 80
        %v8328 = vpop.permute.xlu0 %8327
        %8331 = vrot.lane.b32.xlu0 %v8280, 96
        %v8332 = vpop.permute.xlu0 %8331
        %8335 = vrot.lane.b32.xlu0 %v8281, 112
        %v8336 = vpop.permute.xlu0 %8335
        %v8338 = vsel %vm314, %v8138, %v8284
        %v8339 = vsel %vm995, %v8338, %v8288
        %v8340 = vsel %vm997, %v8339, %v8292
        %v8341 = vsel %vm999, %v8340, %v8296
        %v8342 = vsel %vm1001, %v8341, %v8300
        %v8343 = vsel %vm1003, %v8342, %v8304
        %v8344 = vsel %vm1005, %v8343, %v8308
        %v8345 = vsel %vm314, %v8274, %v8312
        %v8346 = vsel %vm995, %v8345, %v8316
        %v8347 = vsel %vm997, %v8346, %v8320
        %v8348 = vsel %vm999, %v8347, %v8324
        %v8349 = vsel %vm1001, %v8348, %v8328
        %v8350 = vsel %vm1003, %v8349, %v8332
        %v8351 = vsel %vm1005, %v8350, %v8336
        %8352 = vrot.lane.b32.xlu0 %v7930, 124
        %v8353 = vpop.permute.xlu0 %8352
        %8354 = vrot.lane.b32.xlu0 %v7931, 124
        %v8355 = vpop.permute.xlu0 %8354
        %8356 = vrot.lane.b32.xlu0 %v7932, 124
        %v8357 = vpop.permute.xlu0 %8356
        %8358 = vrot.lane.b32.xlu0 %v7933, 124
        %v8359 = vpop.permute.xlu0 %8358
        %8360 = vrot.lane.b32.xlu0 %v7934, 124
        %v8361 = vpop.permute.xlu0 %8360
        %8362 = vrot.lane.b32.xlu0 %v7935, 124
        %v8363 = vpop.permute.xlu0 %8362
        %8364 = vrot.lane.b32.xlu0 %v7936, 124
        %v8365 = vpop.permute.xlu0 %8364
        %8366 = vrot.lane.b32.xlu0 %v7937, 124
        %v8367 = vpop.permute.xlu0 %8366
        %8368 = vrot.lane.b32.xlu0 %v7938, 124
        %v8369 = vpop.permute.xlu0 %8368
        %8370 = vrot.lane.b32.xlu0 %v7939, 124
        %v8371 = vpop.permute.xlu0 %8370
        %8372 = vrot.lane.b32.xlu0 %v7940, 124
        %v8373 = vpop.permute.xlu0 %8372
        %8374 = vrot.lane.b32.xlu0 %v7941, 124
        %v8375 = vpop.permute.xlu0 %8374
        %8376 = vrot.lane.b32.xlu0 %v7942, 124
        %v8377 = vpop.permute.xlu0 %8376
        %8378 = vrot.lane.b32.xlu0 %v7943, 124
        %v8379 = vpop.permute.xlu0 %8378
        %8380 = vrot.lane.b32.xlu0 %v7944, 124
        %v8381 = vpop.permute.xlu0 %8380
        %8382 = vrot.lane.b32.xlu0 %v7945, 124
        %v8383 = vpop.permute.xlu0 %8382
        %v8400 = vcombine.low %v8353, %v8361
        %v8401 = vcombine.high %v8353, %v8361
        %v8403 = vunpack.c.l.s4 1983009808
        %v8404 = vunpack.c.0.s8 %v8403
        %v8405 = vlaneseq
        %v8406 = vshrl.u32 %v8405, 7
        %v8407 = vsub.s32 %v8404, %v8406
        %v8408 = vrot.slane %v8400, %v8407
        %v8410 = vunpack.c.l.s4 1983009808
        %v8411 = vunpack.c.0.s8 %v8410
        %v8412 = vlaneseq
        %v8413 = vshrl.u32 %v8412, 7
        %v8414 = vsub.s32 %v8411, %v8413
        %v8415 = vrot.slane %v8401, %v8414
        %v8416 = vcombine.low %v8357, %v8365
        %v8417 = vcombine.high %v8357, %v8365
        %v8419 = vunpack.c.l.s4 1983009808
        %v8420 = vunpack.c.0.s8 %v8419
        %v8421 = vlaneseq
        %v8422 = vshrl.u32 %v8421, 7
        %v8423 = vsub.s32 %v8420, %v8422
        %v8424 = vrot.slane %v8416, %v8423
        %v8426 = vunpack.c.l.s4 1983009808
        %v8427 = vunpack.c.0.s8 %v8426
        %v8428 = vlaneseq
        %v8429 = vshrl.u32 %v8428, 7
        %v8430 = vsub.s32 %v8427, %v8429
        %v8431 = vrot.slane %v8417, %v8430
        %v8432 = vcombine.low %v8369, %v8377
        %v8433 = vcombine.high %v8369, %v8377
        %v8435 = vunpack.c.l.s4 1983009808
        %v8436 = vunpack.c.0.s8 %v8435
        %v8437 = vlaneseq
        %v8438 = vshrl.u32 %v8437, 7
        %v8439 = vsub.s32 %v8436, %v8438
        %v8440 = vrot.slane %v8432, %v8439
        %v8442 = vunpack.c.l.s4 1983009808
        %v8443 = vunpack.c.0.s8 %v8442
        %v8444 = vlaneseq
        %v8445 = vshrl.u32 %v8444, 7
        %v8446 = vsub.s32 %v8443, %v8445
        %v8447 = vrot.slane %v8433, %v8446
        %v8448 = vcombine.low %v8373, %v8381
        %v8449 = vcombine.high %v8373, %v8381
        %v8451 = vunpack.c.l.s4 1983009808
        %v8452 = vunpack.c.0.s8 %v8451
        %v8453 = vlaneseq
        %v8454 = vshrl.u32 %v8453, 7
        %v8455 = vsub.s32 %v8452, %v8454
        %v8456 = vrot.slane %v8448, %v8455
        %v8458 = vunpack.c.l.s4 1983009808
        %v8459 = vunpack.c.0.s8 %v8458
        %v8460 = vlaneseq
        %v8461 = vshrl.u32 %v8460, 7
        %v8462 = vsub.s32 %v8459, %v8461
        %v8463 = vrot.slane %v8449, %v8462
        %v8464 = vcombine.low %v8408, %v8424
        %v8465 = vcombine.high %v8408, %v8424
        %v8467 = vunpack.c.l.s4 1934713408
        %v8468 = vunpack.c.0.s8 %v8467
        %v8469 = vlaneseq
        %v8470 = vshrl.u32 %v8469, 7
        %v8471 = vsub.s32 %v8468, %v8470
        %v8472 = vrot.slane %v8464, %v8471
        %v8474 = vunpack.c.l.s4 1934713408
        %v8475 = vunpack.c.0.s8 %v8474
        %v8476 = vlaneseq
        %v8477 = vshrl.u32 %v8476, 7
        %v8478 = vsub.s32 %v8475, %v8477
        %v8479 = vrot.slane %v8465, %v8478
        %v8480 = vcombine.low %v8415, %v8431
        %v8481 = vcombine.high %v8415, %v8431
        %v8483 = vunpack.c.l.s4 1934713408
        %v8484 = vunpack.c.0.s8 %v8483
        %v8485 = vlaneseq
        %v8486 = vshrl.u32 %v8485, 7
        %v8487 = vsub.s32 %v8484, %v8486
        %v8488 = vrot.slane %v8480, %v8487
        %v8490 = vunpack.c.l.s4 1934713408
        %v8491 = vunpack.c.0.s8 %v8490
        %v8492 = vlaneseq
        %v8493 = vshrl.u32 %v8492, 7
        %v8494 = vsub.s32 %v8491, %v8493
        %v8495 = vrot.slane %v8481, %v8494
        %v8496 = vcombine.low %v8440, %v8456
        %v8497 = vcombine.high %v8440, %v8456
        %v8499 = vunpack.c.l.s4 1934713408
        %v8500 = vunpack.c.0.s8 %v8499
        %v8501 = vlaneseq
        %v8502 = vshrl.u32 %v8501, 7
        %v8503 = vsub.s32 %v8500, %v8502
        %v8504 = vrot.slane %v8496, %v8503
        %v8506 = vunpack.c.l.s4 1934713408
        %v8507 = vunpack.c.0.s8 %v8506
        %v8508 = vlaneseq
        %v8509 = vshrl.u32 %v8508, 7
        %v8510 = vsub.s32 %v8507, %v8509
        %v8511 = vrot.slane %v8497, %v8510
        %v8512 = vcombine.low %v8447, %v8463
        %v8513 = vcombine.high %v8447, %v8463
        %v8515 = vunpack.c.l.s4 1934713408
        %v8516 = vunpack.c.0.s8 %v8515
        %v8517 = vlaneseq
        %v8518 = vshrl.u32 %v8517, 7
        %v8519 = vsub.s32 %v8516, %v8518
        %v8520 = vrot.slane %v8512, %v8519
        %v8522 = vunpack.c.l.s4 1934713408
        %v8523 = vunpack.c.0.s8 %v8522
        %v8524 = vlaneseq
        %v8525 = vshrl.u32 %v8524, 7
        %v8526 = vsub.s32 %v8523, %v8525
        %v8527 = vrot.slane %v8513, %v8526
        %v8528 = vcombine.low %v8472, %v8504
        %v8529 = vcombine.high %v8472, %v8504
        %v8530 = vcombine.low %v8479, %v8511
        %v8531 = vcombine.high %v8479, %v8511
        %v8532 = vcombine.low %v8488, %v8520
        %v8533 = vcombine.high %v8488, %v8520
        %v8534 = vcombine.low %v8495, %v8527
        %v8535 = vcombine.high %v8495, %v8527
        %v8536 = vcombine.low %v8355, %v8363
        %v8537 = vcombine.high %v8355, %v8363
        %v8539 = vunpack.c.l.s4 1983009808
        %v8540 = vunpack.c.0.s8 %v8539
        %v8541 = vlaneseq
        %v8542 = vshrl.u32 %v8541, 7
        %v8543 = vsub.s32 %v8540, %v8542
        %v8544 = vrot.slane %v8536, %v8543
        %v8546 = vunpack.c.l.s4 1983009808
        %v8547 = vunpack.c.0.s8 %v8546
        %v8548 = vlaneseq
        %v8549 = vshrl.u32 %v8548, 7
        %v8550 = vsub.s32 %v8547, %v8549
        %v8551 = vrot.slane %v8537, %v8550
        %v8552 = vcombine.low %v8359, %v8367
        %v8553 = vcombine.high %v8359, %v8367
        %v8555 = vunpack.c.l.s4 1983009808
        %v8556 = vunpack.c.0.s8 %v8555
        %v8557 = vlaneseq
        %v8558 = vshrl.u32 %v8557, 7
        %v8559 = vsub.s32 %v8556, %v8558
        %v8560 = vrot.slane %v8552, %v8559
        %v8562 = vunpack.c.l.s4 1983009808
        %v8563 = vunpack.c.0.s8 %v8562
        %v8564 = vlaneseq
        %v8565 = vshrl.u32 %v8564, 7
        %v8566 = vsub.s32 %v8563, %v8565
        %v8567 = vrot.slane %v8553, %v8566
        %v8568 = vcombine.low %v8371, %v8379
        %v8569 = vcombine.high %v8371, %v8379
        %v8571 = vunpack.c.l.s4 1983009808
        %v8572 = vunpack.c.0.s8 %v8571
        %v8573 = vlaneseq
        %v8574 = vshrl.u32 %v8573, 7
        %v8575 = vsub.s32 %v8572, %v8574
        %v8576 = vrot.slane %v8568, %v8575
        %v8578 = vunpack.c.l.s4 1983009808
        %v8579 = vunpack.c.0.s8 %v8578
        %v8580 = vlaneseq
        %v8581 = vshrl.u32 %v8580, 7
        %v8582 = vsub.s32 %v8579, %v8581
        %v8583 = vrot.slane %v8569, %v8582
        %v8584 = vcombine.low %v8375, %v8383
        %v8585 = vcombine.high %v8375, %v8383
        %v8587 = vunpack.c.l.s4 1983009808
        %v8588 = vunpack.c.0.s8 %v8587
        %v8589 = vlaneseq
        %v8590 = vshrl.u32 %v8589, 7
        %v8591 = vsub.s32 %v8588, %v8590
        %v8592 = vrot.slane %v8584, %v8591
        %v8594 = vunpack.c.l.s4 1983009808
        %v8595 = vunpack.c.0.s8 %v8594
        %v8596 = vlaneseq
        %v8597 = vshrl.u32 %v8596, 7
        %v8598 = vsub.s32 %v8595, %v8597
        %v8599 = vrot.slane %v8585, %v8598
        %v8600 = vcombine.low %v8544, %v8560
        %v8601 = vcombine.high %v8544, %v8560
        %v8603 = vunpack.c.l.s4 1934713408
        %v8604 = vunpack.c.0.s8 %v8603
        %v8605 = vlaneseq
        %v8606 = vshrl.u32 %v8605, 7
        %v8607 = vsub.s32 %v8604, %v8606
        %v8608 = vrot.slane %v8600, %v8607
        %v8610 = vunpack.c.l.s4 1934713408
        %v8611 = vunpack.c.0.s8 %v8610
        %v8612 = vlaneseq
        %v8613 = vshrl.u32 %v8612, 7
        %v8614 = vsub.s32 %v8611, %v8613
        %v8615 = vrot.slane %v8601, %v8614
        %v8616 = vcombine.low %v8551, %v8567
        %v8617 = vcombine.high %v8551, %v8567
        %v8619 = vunpack.c.l.s4 1934713408
        %v8620 = vunpack.c.0.s8 %v8619
        %v8621 = vlaneseq
        %v8622 = vshrl.u32 %v8621, 7
        %v8623 = vsub.s32 %v8620, %v8622
        %v8624 = vrot.slane %v8616, %v8623
        %v8626 = vunpack.c.l.s4 1934713408
        %v8627 = vunpack.c.0.s8 %v8626
        %v8628 = vlaneseq
        %v8629 = vshrl.u32 %v8628, 7
        %v8630 = vsub.s32 %v8627, %v8629
        %v8631 = vrot.slane %v8617, %v8630
        %v8632 = vcombine.low %v8576, %v8592
        %v8633 = vcombine.high %v8576, %v8592
        %v8635 = vunpack.c.l.s4 1934713408
        %v8636 = vunpack.c.0.s8 %v8635
        %v8637 = vlaneseq
        %v8638 = vshrl.u32 %v8637, 7
        %v8639 = vsub.s32 %v8636, %v8638
        %v8640 = vrot.slane %v8632, %v8639
        %v8642 = vunpack.c.l.s4 1934713408
        %v8643 = vunpack.c.0.s8 %v8642
        %v8644 = vlaneseq
        %v8645 = vshrl.u32 %v8644, 7
        %v8646 = vsub.s32 %v8643, %v8645
        %v8647 = vrot.slane %v8633, %v8646
        %v8648 = vcombine.low %v8583, %v8599
        %v8649 = vcombine.high %v8583, %v8599
        %v8651 = vunpack.c.l.s4 1934713408
        %v8652 = vunpack.c.0.s8 %v8651
        %v8653 = vlaneseq
        %v8654 = vshrl.u32 %v8653, 7
        %v8655 = vsub.s32 %v8652, %v8654
        %v8656 = vrot.slane %v8648, %v8655
        %v8658 = vunpack.c.l.s4 1934713408
        %v8659 = vunpack.c.0.s8 %v8658
        %v8660 = vlaneseq
        %v8661 = vshrl.u32 %v8660, 7
        %v8662 = vsub.s32 %v8659, %v8661
        %v8663 = vrot.slane %v8649, %v8662
        %v8664 = vcombine.low %v8608, %v8640
        %v8665 = vcombine.high %v8608, %v8640
        %v8666 = vcombine.low %v8615, %v8647
        %v8667 = vcombine.high %v8615, %v8647
        %v8668 = vcombine.low %v8624, %v8656
        %v8669 = vcombine.high %v8624, %v8656
        %v8670 = vcombine.low %v8631, %v8663
        %v8671 = vcombine.high %v8631, %v8663
        %8673 = vrot.lane.b32.xlu0 %v8529, 16
        %v8674 = vpop.permute.xlu0 %8673
        %8677 = vrot.lane.b32.xlu0 %v8530, 32
        %v8678 = vpop.permute.xlu0 %8677
        %8681 = vrot.lane.b32.xlu0 %v8531, 48
        %v8682 = vpop.permute.xlu0 %8681
        %8685 = vrot.lane.b32.xlu0 %v8532, 64
        %v8686 = vpop.permute.xlu0 %8685
        %8689 = vrot.lane.b32.xlu0 %v8533, 80
        %v8690 = vpop.permute.xlu0 %8689
        %8693 = vrot.lane.b32.xlu0 %v8534, 96
        %v8694 = vpop.permute.xlu0 %8693
        %8697 = vrot.lane.b32.xlu0 %v8535, 112
        %v8698 = vpop.permute.xlu0 %8697
        %8701 = vrot.lane.b32.xlu0 %v8665, 16
        %v8702 = vpop.permute.xlu0 %8701
        %8705 = vrot.lane.b32.xlu0 %v8666, 32
        %v8706 = vpop.permute.xlu0 %8705
        %8709 = vrot.lane.b32.xlu0 %v8667, 48
        %v8710 = vpop.permute.xlu0 %8709
        %8713 = vrot.lane.b32.xlu0 %v8668, 64
        %v8714 = vpop.permute.xlu0 %8713
        %8717 = vrot.lane.b32.xlu0 %v8669, 80
        %v8718 = vpop.permute.xlu0 %8717
        %8721 = vrot.lane.b32.xlu0 %v8670, 96
        %v8722 = vpop.permute.xlu0 %8721
        %8725 = vrot.lane.b32.xlu0 %v8671, 112
        %v8726 = vpop.permute.xlu0 %8725
        %v8728 = vsel %vm314, %v8528, %v8674
        %v8729 = vsel %vm995, %v8728, %v8678
        %v8730 = vsel %vm997, %v8729, %v8682
        %v8731 = vsel %vm999, %v8730, %v8686
        %v8732 = vsel %vm1001, %v8731, %v8690
        %v8733 = vsel %vm1003, %v8732, %v8694
        %v8734 = vsel %vm1005, %v8733, %v8698
        %v8735 = vsel %vm314, %v8664, %v8702
        %v8736 = vsel %vm995, %v8735, %v8706
        %v8737 = vsel %vm997, %v8736, %v8710
        %v8738 = vsel %vm999, %v8737, %v8714
        %v8739 = vsel %vm1001, %v8738, %v8718
        %v8740 = vsel %vm1003, %v8739, %v8722
        %v8741 = vsel %vm1005, %v8740, %v8726
        %v8742 = vpack.c.bf16 %v8734, %v8344
        %v8743 = vpack.c.bf16 %v8741, %v8351
        %v8746 = vunpack.c.l.b16 %v8742
        %v8747 = vunpack.c.l.b16 %v8743
        %v8748 = vunpack.c.h.b16 %v8742
        %v8749 = vunpack.c.h.b16 %v8743
        %v8750 = vpack.c.b16 %v8747, %v8746
        %v8751 = vpack.c.b16 %v8749, %v8748
        %8754 = vst [vmem:[#allocation3 + $0x90] sm:$0xff] %v8750
        %8755 = vst [vmem:[#allocation3 + $0x98] sm:$0xff] %v8751
        %v8756 = vld [vmem:[#allocation2 + $0x4] sm:$0xff]
        %v8757 = vld [vmem:[#allocation2 + $0xc] sm:$0xff]
        %v8758 = vld [vmem:[#allocation2 + $0x1c] sm:$0xff]
        %v8759 = vld [vmem:[#allocation2 + $0x24] sm:$0xff]
        %v8760 = vld [vmem:[#allocation2 + $0x34] sm:$0xff]
        %v8761 = vld [vmem:[#allocation2 + $0x3c] sm:$0xff]
        %v8762 = vld [vmem:[#allocation2 + $0x4c] sm:$0xff]
        %v8763 = vld [vmem:[#allocation2 + $0x54] sm:$0xff]
        %v8764 = vld [vmem:[#allocation2 + $0x64] sm:$0xff]
        %v8765 = vld [vmem:[#allocation2 + $0x6c] sm:$0xff]
        %v8766 = vld [vmem:[#allocation2 + $0x7c] sm:$0xff]
        %v8767 = vld [vmem:[#allocation2 + $0x84] sm:$0xff]
        %v8768 = vld [vmem:[#allocation2 + $0x94] sm:$0xff]
        %v8769 = vld [vmem:[#allocation2 + $0x9c] sm:$0xff]
        %v8770 = vld [vmem:[#allocation2 + $0xac] sm:$0xff]
        %v8771 = vld [vmem:[#allocation2 + $0xb4] sm:$0xff]
        %v8772 = vcombine.low %v8756, %v8760
        %v8773 = vcombine.high %v8756, %v8760
        %v8775 = vunpack.c.l.s4 1983009808
        %v8776 = vunpack.c.0.s8 %v8775
        %v8777 = vlaneseq
        %v8778 = vshrl.u32 %v8777, 7
        %v8779 = vsub.s32 %v8776, %v8778
        %v8780 = vrot.slane %v8772, %v8779
        %v8782 = vunpack.c.l.s4 1983009808
        %v8783 = vunpack.c.0.s8 %v8782
        %v8784 = vlaneseq
        %v8785 = vshrl.u32 %v8784, 7
        %v8786 = vsub.s32 %v8783, %v8785
        %v8787 = vrot.slane %v8773, %v8786
        %v8788 = vcombine.low %v8758, %v8762
        %v8789 = vcombine.high %v8758, %v8762
        %v8791 = vunpack.c.l.s4 1983009808
        %v8792 = vunpack.c.0.s8 %v8791
        %v8793 = vlaneseq
        %v8794 = vshrl.u32 %v8793, 7
        %v8795 = vsub.s32 %v8792, %v8794
        %v8796 = vrot.slane %v8788, %v8795
        %v8798 = vunpack.c.l.s4 1983009808
        %v8799 = vunpack.c.0.s8 %v8798
        %v8800 = vlaneseq
        %v8801 = vshrl.u32 %v8800, 7
        %v8802 = vsub.s32 %v8799, %v8801
        %v8803 = vrot.slane %v8789, %v8802
        %v8804 = vcombine.low %v8764, %v8768
        %v8805 = vcombine.high %v8764, %v8768
        %v8807 = vunpack.c.l.s4 1983009808
        %v8808 = vunpack.c.0.s8 %v8807
        %v8809 = vlaneseq
        %v8810 = vshrl.u32 %v8809, 7
        %v8811 = vsub.s32 %v8808, %v8810
        %v8812 = vrot.slane %v8804, %v8811
        %v8814 = vunpack.c.l.s4 1983009808
        %v8815 = vunpack.c.0.s8 %v8814
        %v8816 = vlaneseq
        %v8817 = vshrl.u32 %v8816, 7
        %v8818 = vsub.s32 %v8815, %v8817
        %v8819 = vrot.slane %v8805, %v8818
        %v8820 = vcombine.low %v8766, %v8770
        %v8821 = vcombine.high %v8766, %v8770
        %v8823 = vunpack.c.l.s4 1983009808
        %v8824 = vunpack.c.0.s8 %v8823
        %v8825 = vlaneseq
        %v8826 = vshrl.u32 %v8825, 7
        %v8827 = vsub.s32 %v8824, %v8826
        %v8828 = vrot.slane %v8820, %v8827
        %v8830 = vunpack.c.l.s4 1983009808
        %v8831 = vunpack.c.0.s8 %v8830
        %v8832 = vlaneseq
        %v8833 = vshrl.u32 %v8832, 7
        %v8834 = vsub.s32 %v8831, %v8833
        %v8835 = vrot.slane %v8821, %v8834
        %v8836 = vcombine.low %v8780, %v8796
        %v8837 = vcombine.high %v8780, %v8796
        %v8839 = vunpack.c.l.s4 1934713408
        %v8840 = vunpack.c.0.s8 %v8839
        %v8841 = vlaneseq
        %v8842 = vshrl.u32 %v8841, 7
        %v8843 = vsub.s32 %v8840, %v8842
        %v8844 = vrot.slane %v8836, %v8843
        %v8846 = vunpack.c.l.s4 1934713408
        %v8847 = vunpack.c.0.s8 %v8846
        %v8848 = vlaneseq
        %v8849 = vshrl.u32 %v8848, 7
        %v8850 = vsub.s32 %v8847, %v8849
        %v8851 = vrot.slane %v8837, %v8850
        %v8852 = vcombine.low %v8787, %v8803
        %v8853 = vcombine.high %v8787, %v8803
        %v8855 = vunpack.c.l.s4 1934713408
        %v8856 = vunpack.c.0.s8 %v8855
        %v8857 = vlaneseq
        %v8858 = vshrl.u32 %v8857, 7
        %v8859 = vsub.s32 %v8856, %v8858
        %v8860 = vrot.slane %v8852, %v8859
        %v8862 = vunpack.c.l.s4 1934713408
        %v8863 = vunpack.c.0.s8 %v8862
        %v8864 = vlaneseq
        %v8865 = vshrl.u32 %v8864, 7
        %v8866 = vsub.s32 %v8863, %v8865
        %v8867 = vrot.slane %v8853, %v8866
        %v8868 = vcombine.low %v8812, %v8828
        %v8869 = vcombine.high %v8812, %v8828
        %v8871 = vunpack.c.l.s4 1934713408
        %v8872 = vunpack.c.0.s8 %v8871
        %v8873 = vlaneseq
        %v8874 = vshrl.u32 %v8873, 7
        %v8875 = vsub.s32 %v8872, %v8874
        %v8876 = vrot.slane %v8868, %v8875
        %v8878 = vunpack.c.l.s4 1934713408
        %v8879 = vunpack.c.0.s8 %v8878
        %v8880 = vlaneseq
        %v8881 = vshrl.u32 %v8880, 7
        %v8882 = vsub.s32 %v8879, %v8881
        %v8883 = vrot.slane %v8869, %v8882
        %v8884 = vcombine.low %v8819, %v8835
        %v8885 = vcombine.high %v8819, %v8835
        %v8887 = vunpack.c.l.s4 1934713408
        %v8888 = vunpack.c.0.s8 %v8887
        %v8889 = vlaneseq
        %v8890 = vshrl.u32 %v8889, 7
        %v8891 = vsub.s32 %v8888, %v8890
        %v8892 = vrot.slane %v8884, %v8891
        %v8894 = vunpack.c.l.s4 1934713408
        %v8895 = vunpack.c.0.s8 %v8894
        %v8896 = vlaneseq
        %v8897 = vshrl.u32 %v8896, 7
        %v8898 = vsub.s32 %v8895, %v8897
        %v8899 = vrot.slane %v8885, %v8898
        %v8900 = vcombine.low %v8844, %v8876
        %v8901 = vcombine.high %v8844, %v8876
        %v8902 = vcombine.low %v8851, %v8883
        %v8903 = vcombine.high %v8851, %v8883
        %v8904 = vcombine.low %v8860, %v8892
        %v8905 = vcombine.high %v8860, %v8892
        %v8906 = vcombine.low %v8867, %v8899
        %v8907 = vcombine.high %v8867, %v8899
        %v8908 = vcombine.low %v8757, %v8761
        %v8909 = vcombine.high %v8757, %v8761
        %v8911 = vunpack.c.l.s4 1983009808
        %v8912 = vunpack.c.0.s8 %v8911
        %v8913 = vlaneseq
        %v8914 = vshrl.u32 %v8913, 7
        %v8915 = vsub.s32 %v8912, %v8914
        %v8916 = vrot.slane %v8908, %v8915
        %v8918 = vunpack.c.l.s4 1983009808
        %v8919 = vunpack.c.0.s8 %v8918
        %v8920 = vlaneseq
        %v8921 = vshrl.u32 %v8920, 7
        %v8922 = vsub.s32 %v8919, %v8921
        %v8923 = vrot.slane %v8909, %v8922
        %v8924 = vcombine.low %v8759, %v8763
        %v8925 = vcombine.high %v8759, %v8763
        %v8927 = vunpack.c.l.s4 1983009808
        %v8928 = vunpack.c.0.s8 %v8927
        %v8929 = vlaneseq
        %v8930 = vshrl.u32 %v8929, 7
        %v8931 = vsub.s32 %v8928, %v8930
        %v8932 = vrot.slane %v8924, %v8931
        %v8934 = vunpack.c.l.s4 1983009808
        %v8935 = vunpack.c.0.s8 %v8934
        %v8936 = vlaneseq
        %v8937 = vshrl.u32 %v8936, 7
        %v8938 = vsub.s32 %v8935, %v8937
        %v8939 = vrot.slane %v8925, %v8938
        %v8940 = vcombine.low %v8765, %v8769
        %v8941 = vcombine.high %v8765, %v8769
        %v8943 = vunpack.c.l.s4 1983009808
        %v8944 = vunpack.c.0.s8 %v8943
        %v8945 = vlaneseq
        %v8946 = vshrl.u32 %v8945, 7
        %v8947 = vsub.s32 %v8944, %v8946
        %v8948 = vrot.slane %v8940, %v8947
        %v8950 = vunpack.c.l.s4 1983009808
        %v8951 = vunpack.c.0.s8 %v8950
        %v8952 = vlaneseq
        %v8953 = vshrl.u32 %v8952, 7
        %v8954 = vsub.s32 %v8951, %v8953
        %v8955 = vrot.slane %v8941, %v8954
        %v8956 = vcombine.low %v8767, %v8771
        %v8957 = vcombine.high %v8767, %v8771
        %v8959 = vunpack.c.l.s4 1983009808
        %v8960 = vunpack.c.0.s8 %v8959
        %v8961 = vlaneseq
        %v8962 = vshrl.u32 %v8961, 7
        %v8963 = vsub.s32 %v8960, %v8962
        %v8964 = vrot.slane %v8956, %v8963
        %v8966 = vunpack.c.l.s4 1983009808
        %v8967 = vunpack.c.0.s8 %v8966
        %v8968 = vlaneseq
        %v8969 = vshrl.u32 %v8968, 7
        %v8970 = vsub.s32 %v8967, %v8969
        %v8971 = vrot.slane %v8957, %v8970
        %v8972 = vcombine.low %v8916, %v8932
        %v8973 = vcombine.high %v8916, %v8932
        %v8975 = vunpack.c.l.s4 1934713408
        %v8976 = vunpack.c.0.s8 %v8975
        %v8977 = vlaneseq
        %v8978 = vshrl.u32 %v8977, 7
        %v8979 = vsub.s32 %v8976, %v8978
        %v8980 = vrot.slane %v8972, %v8979
        %v8982 = vunpack.c.l.s4 1934713408
        %v8983 = vunpack.c.0.s8 %v8982
        %v8984 = vlaneseq
        %v8985 = vshrl.u32 %v8984, 7
        %v8986 = vsub.s32 %v8983, %v8985
        %v8987 = vrot.slane %v8973, %v8986
        %v8988 = vcombine.low %v8923, %v8939
        %v8989 = vcombine.high %v8923, %v8939
        %v8991 = vunpack.c.l.s4 1934713408
        %v8992 = vunpack.c.0.s8 %v8991
        %v8993 = vlaneseq
        %v8994 = vshrl.u32 %v8993, 7
        %v8995 = vsub.s32 %v8992, %v8994
        %v8996 = vrot.slane %v8988, %v8995
        %v8998 = vunpack.c.l.s4 1934713408
        %v8999 = vunpack.c.0.s8 %v8998
        %v9000 = vlaneseq
        %v9001 = vshrl.u32 %v9000, 7
        %v9002 = vsub.s32 %v8999, %v9001
        %v9003 = vrot.slane %v8989, %v9002
        %v9004 = vcombine.low %v8948, %v8964
        %v9005 = vcombine.high %v8948, %v8964
        %v9007 = vunpack.c.l.s4 1934713408
        %v9008 = vunpack.c.0.s8 %v9007
        %v9009 = vlaneseq
        %v9010 = vshrl.u32 %v9009, 7
        %v9011 = vsub.s32 %v9008, %v9010
        %v9012 = vrot.slane %v9004, %v9011
        %v9014 = vunpack.c.l.s4 1934713408
        %v9015 = vunpack.c.0.s8 %v9014
        %v9016 = vlaneseq
        %v9017 = vshrl.u32 %v9016, 7
        %v9018 = vsub.s32 %v9015, %v9017
        %v9019 = vrot.slane %v9005, %v9018
        %v9020 = vcombine.low %v8955, %v8971
        %v9021 = vcombine.high %v8955, %v8971
        %v9023 = vunpack.c.l.s4 1934713408
        %v9024 = vunpack.c.0.s8 %v9023
        %v9025 = vlaneseq
        %v9026 = vshrl.u32 %v9025, 7
        %v9027 = vsub.s32 %v9024, %v9026
        %v9028 = vrot.slane %v9020, %v9027
        %v9030 = vunpack.c.l.s4 1934713408
        %v9031 = vunpack.c.0.s8 %v9030
        %v9032 = vlaneseq
        %v9033 = vshrl.u32 %v9032, 7
        %v9034 = vsub.s32 %v9031, %v9033
        %v9035 = vrot.slane %v9021, %v9034
        %v9036 = vcombine.low %v8980, %v9012
        %v9037 = vcombine.high %v8980, %v9012
        %v9038 = vcombine.low %v8987, %v9019
        %v9039 = vcombine.high %v8987, %v9019
        %v9040 = vcombine.low %v8996, %v9028
        %v9041 = vcombine.high %v8996, %v9028
        %v9042 = vcombine.low %v9003, %v9035
        %v9043 = vcombine.high %v9003, %v9035
        %9045 = vrot.lane.b32.xlu0 %v8901, 16
        %v9046 = vpop.permute.xlu0 %9045
        %9049 = vrot.lane.b32.xlu0 %v8902, 32
        %v9050 = vpop.permute.xlu0 %9049
        %9053 = vrot.lane.b32.xlu0 %v8903, 48
        %v9054 = vpop.permute.xlu0 %9053
        %9057 = vrot.lane.b32.xlu0 %v8904, 64
        %v9058 = vpop.permute.xlu0 %9057
        %9061 = vrot.lane.b32.xlu0 %v8905, 80
        %v9062 = vpop.permute.xlu0 %9061
        %9065 = vrot.lane.b32.xlu0 %v8906, 96
        %v9066 = vpop.permute.xlu0 %9065
        %9069 = vrot.lane.b32.xlu0 %v8907, 112
        %v9070 = vpop.permute.xlu0 %9069
        %9073 = vrot.lane.b32.xlu0 %v9037, 16
        %v9074 = vpop.permute.xlu0 %9073
        %9077 = vrot.lane.b32.xlu0 %v9038, 32
        %v9078 = vpop.permute.xlu0 %9077
        %9081 = vrot.lane.b32.xlu0 %v9039, 48
        %v9082 = vpop.permute.xlu0 %9081
        %9085 = vrot.lane.b32.xlu0 %v9040, 64
        %v9086 = vpop.permute.xlu0 %9085
        %9089 = vrot.lane.b32.xlu0 %v9041, 80
        %v9090 = vpop.permute.xlu0 %9089
        %9093 = vrot.lane.b32.xlu0 %v9042, 96
        %v9094 = vpop.permute.xlu0 %9093
        %9097 = vrot.lane.b32.xlu0 %v9043, 112
        %v9098 = vpop.permute.xlu0 %9097
        %v9100 = vsel %vm314, %v8900, %v9046
        %v9101 = vsel %vm995, %v9100, %v9050
        %v9102 = vsel %vm997, %v9101, %v9054
        %v9103 = vsel %vm999, %v9102, %v9058
        %v9104 = vsel %vm1001, %v9103, %v9062
        %v9105 = vsel %vm1003, %v9104, %v9066
        %v9106 = vsel %vm1005, %v9105, %v9070
        %v9107 = vsel %vm314, %v9036, %v9074
        %v9108 = vsel %vm995, %v9107, %v9078
        %v9109 = vsel %vm997, %v9108, %v9082
        %v9110 = vsel %vm999, %v9109, %v9086
        %v9111 = vsel %vm1001, %v9110, %v9090
        %v9112 = vsel %vm1003, %v9111, %v9094
        %v9113 = vsel %vm1005, %v9112, %v9098
        %9130 = vrot.lane.b32.xlu0 %v8756, 127
        %v9131 = vpop.permute.xlu0 %9130
        %9132 = vrot.lane.b32.xlu0 %v8757, 127
        %v9133 = vpop.permute.xlu0 %9132
        %9134 = vrot.lane.b32.xlu0 %v8758, 127
        %v9135 = vpop.permute.xlu0 %9134
        %9136 = vrot.lane.b32.xlu0 %v8759, 127
        %v9137 = vpop.permute.xlu0 %9136
        %9138 = vrot.lane.b32.xlu0 %v8760, 127
        %v9139 = vpop.permute.xlu0 %9138
        %9140 = vrot.lane.b32.xlu0 %v8761, 127
        %v9141 = vpop.permute.xlu0 %9140
        %9142 = vrot.lane.b32.xlu0 %v8762, 127
        %v9143 = vpop.permute.xlu0 %9142
        %9144 = vrot.lane.b32.xlu0 %v8763, 127
        %v9145 = vpop.permute.xlu0 %9144
        %9146 = vrot.lane.b32.xlu0 %v8764, 127
        %v9147 = vpop.permute.xlu0 %9146
        %9148 = vrot.lane.b32.xlu0 %v8765, 127
        %v9149 = vpop.permute.xlu0 %9148
        %9150 = vrot.lane.b32.xlu0 %v8766, 127
        %v9151 = vpop.permute.xlu0 %9150
        %9152 = vrot.lane.b32.xlu0 %v8767, 127
        %v9153 = vpop.permute.xlu0 %9152
        %9154 = vrot.lane.b32.xlu0 %v8768, 127
        %v9155 = vpop.permute.xlu0 %9154
        %9156 = vrot.lane.b32.xlu0 %v8769, 127
        %v9157 = vpop.permute.xlu0 %9156
        %9158 = vrot.lane.b32.xlu0 %v8770, 127
        %v9159 = vpop.permute.xlu0 %9158
        %9160 = vrot.lane.b32.xlu0 %v8771, 127
        %v9161 = vpop.permute.xlu0 %9160
        %v9178 = vcombine.low %v9131, %v9139
        %v9179 = vcombine.high %v9131, %v9139
        %v9181 = vunpack.c.l.s4 1983009808
        %v9182 = vunpack.c.0.s8 %v9181
        %v9183 = vlaneseq
        %v9184 = vshrl.u32 %v9183, 7
        %v9185 = vsub.s32 %v9182, %v9184
        %v9186 = vrot.slane %v9178, %v9185
        %v9188 = vunpack.c.l.s4 1983009808
        %v9189 = vunpack.c.0.s8 %v9188
        %v9190 = vlaneseq
        %v9191 = vshrl.u32 %v9190, 7
        %v9192 = vsub.s32 %v9189, %v9191
        %v9193 = vrot.slane %v9179, %v9192
        %v9194 = vcombine.low %v9135, %v9143
        %v9195 = vcombine.high %v9135, %v9143
        %v9197 = vunpack.c.l.s4 1983009808
        %v9198 = vunpack.c.0.s8 %v9197
        %v9199 = vlaneseq
        %v9200 = vshrl.u32 %v9199, 7
        %v9201 = vsub.s32 %v9198, %v9200
        %v9202 = vrot.slane %v9194, %v9201
        %v9204 = vunpack.c.l.s4 1983009808
        %v9205 = vunpack.c.0.s8 %v9204
        %v9206 = vlaneseq
        %v9207 = vshrl.u32 %v9206, 7
        %v9208 = vsub.s32 %v9205, %v9207
        %v9209 = vrot.slane %v9195, %v9208
        %v9210 = vcombine.low %v9147, %v9155
        %v9211 = vcombine.high %v9147, %v9155
        %v9213 = vunpack.c.l.s4 1983009808
        %v9214 = vunpack.c.0.s8 %v9213
        %v9215 = vlaneseq
        %v9216 = vshrl.u32 %v9215, 7
        %v9217 = vsub.s32 %v9214, %v9216
        %v9218 = vrot.slane %v9210, %v9217
        %v9220 = vunpack.c.l.s4 1983009808
        %v9221 = vunpack.c.0.s8 %v9220
        %v9222 = vlaneseq
        %v9223 = vshrl.u32 %v9222, 7
        %v9224 = vsub.s32 %v9221, %v9223
        %v9225 = vrot.slane %v9211, %v9224
        %v9226 = vcombine.low %v9151, %v9159
        %v9227 = vcombine.high %v9151, %v9159
        %v9229 = vunpack.c.l.s4 1983009808
        %v9230 = vunpack.c.0.s8 %v9229
        %v9231 = vlaneseq
        %v9232 = vshrl.u32 %v9231, 7
        %v9233 = vsub.s32 %v9230, %v9232
        %v9234 = vrot.slane %v9226, %v9233
        %v9236 = vunpack.c.l.s4 1983009808
        %v9237 = vunpack.c.0.s8 %v9236
        %v9238 = vlaneseq
        %v9239 = vshrl.u32 %v9238, 7
        %v9240 = vsub.s32 %v9237, %v9239
        %v9241 = vrot.slane %v9227, %v9240
        %v9242 = vcombine.low %v9186, %v9202
        %v9243 = vcombine.high %v9186, %v9202
        %v9245 = vunpack.c.l.s4 1934713408
        %v9246 = vunpack.c.0.s8 %v9245
        %v9247 = vlaneseq
        %v9248 = vshrl.u32 %v9247, 7
        %v9249 = vsub.s32 %v9246, %v9248
        %v9250 = vrot.slane %v9242, %v9249
        %v9252 = vunpack.c.l.s4 1934713408
        %v9253 = vunpack.c.0.s8 %v9252
        %v9254 = vlaneseq
        %v9255 = vshrl.u32 %v9254, 7
        %v9256 = vsub.s32 %v9253, %v9255
        %v9257 = vrot.slane %v9243, %v9256
        %v9258 = vcombine.low %v9193, %v9209
        %v9259 = vcombine.high %v9193, %v9209
        %v9261 = vunpack.c.l.s4 1934713408
        %v9262 = vunpack.c.0.s8 %v9261
        %v9263 = vlaneseq
        %v9264 = vshrl.u32 %v9263, 7
        %v9265 = vsub.s32 %v9262, %v9264
        %v9266 = vrot.slane %v9258, %v9265
        %v9268 = vunpack.c.l.s4 1934713408
        %v9269 = vunpack.c.0.s8 %v9268
        %v9270 = vlaneseq
        %v9271 = vshrl.u32 %v9270, 7
        %v9272 = vsub.s32 %v9269, %v9271
        %v9273 = vrot.slane %v9259, %v9272
        %v9274 = vcombine.low %v9218, %v9234
        %v9275 = vcombine.high %v9218, %v9234
        %v9277 = vunpack.c.l.s4 1934713408
        %v9278 = vunpack.c.0.s8 %v9277
        %v9279 = vlaneseq
        %v9280 = vshrl.u32 %v9279, 7
        %v9281 = vsub.s32 %v9278, %v9280
        %v9282 = vrot.slane %v9274, %v9281
        %v9284 = vunpack.c.l.s4 1934713408
        %v9285 = vunpack.c.0.s8 %v9284
        %v9286 = vlaneseq
        %v9287 = vshrl.u32 %v9286, 7
        %v9288 = vsub.s32 %v9285, %v9287
        %v9289 = vrot.slane %v9275, %v9288
        %v9290 = vcombine.low %v9225, %v9241
        %v9291 = vcombine.high %v9225, %v9241
        %v9293 = vunpack.c.l.s4 1934713408
        %v9294 = vunpack.c.0.s8 %v9293
        %v9295 = vlaneseq
        %v9296 = vshrl.u32 %v9295, 7
        %v9297 = vsub.s32 %v9294, %v9296
        %v9298 = vrot.slane %v9290, %v9297
        %v9300 = vunpack.c.l.s4 1934713408
        %v9301 = vunpack.c.0.s8 %v9300
        %v9302 = vlaneseq
        %v9303 = vshrl.u32 %v9302, 7
        %v9304 = vsub.s32 %v9301, %v9303
        %v9305 = vrot.slane %v9291, %v9304
        %v9306 = vcombine.low %v9250, %v9282
        %v9307 = vcombine.high %v9250, %v9282
        %v9308 = vcombine.low %v9257, %v9289
        %v9309 = vcombine.high %v9257, %v9289
        %v9310 = vcombine.low %v9266, %v9298
        %v9311 = vcombine.high %v9266, %v9298
        %v9312 = vcombine.low %v9273, %v9305
        %v9313 = vcombine.high %v9273, %v9305
        %v9314 = vcombine.low %v9133, %v9141
        %v9315 = vcombine.high %v9133, %v9141
        %v9317 = vunpack.c.l.s4 1983009808
        %v9318 = vunpack.c.0.s8 %v9317
        %v9319 = vlaneseq
        %v9320 = vshrl.u32 %v9319, 7
        %v9321 = vsub.s32 %v9318, %v9320
        %v9322 = vrot.slane %v9314, %v9321
        %v9324 = vunpack.c.l.s4 1983009808
        %v9325 = vunpack.c.0.s8 %v9324
        %v9326 = vlaneseq
        %v9327 = vshrl.u32 %v9326, 7
        %v9328 = vsub.s32 %v9325, %v9327
        %v9329 = vrot.slane %v9315, %v9328
        %v9330 = vcombine.low %v9137, %v9145
        %v9331 = vcombine.high %v9137, %v9145
        %v9333 = vunpack.c.l.s4 1983009808
        %v9334 = vunpack.c.0.s8 %v9333
        %v9335 = vlaneseq
        %v9336 = vshrl.u32 %v9335, 7
        %v9337 = vsub.s32 %v9334, %v9336
        %v9338 = vrot.slane %v9330, %v9337
        %v9340 = vunpack.c.l.s4 1983009808
        %v9341 = vunpack.c.0.s8 %v9340
        %v9342 = vlaneseq
        %v9343 = vshrl.u32 %v9342, 7
        %v9344 = vsub.s32 %v9341, %v9343
        %v9345 = vrot.slane %v9331, %v9344
        %v9346 = vcombine.low %v9149, %v9157
        %v9347 = vcombine.high %v9149, %v9157
        %v9349 = vunpack.c.l.s4 1983009808
        %v9350 = vunpack.c.0.s8 %v9349
        %v9351 = vlaneseq
        %v9352 = vshrl.u32 %v9351, 7
        %v9353 = vsub.s32 %v9350, %v9352
        %v9354 = vrot.slane %v9346, %v9353
        %v9356 = vunpack.c.l.s4 1983009808
        %v9357 = vunpack.c.0.s8 %v9356
        %v9358 = vlaneseq
        %v9359 = vshrl.u32 %v9358, 7
        %v9360 = vsub.s32 %v9357, %v9359
        %v9361 = vrot.slane %v9347, %v9360
        %v9362 = vcombine.low %v9153, %v9161
        %v9363 = vcombine.high %v9153, %v9161
        %v9365 = vunpack.c.l.s4 1983009808
        %v9366 = vunpack.c.0.s8 %v9365
        %v9367 = vlaneseq
        %v9368 = vshrl.u32 %v9367, 7
        %v9369 = vsub.s32 %v9366, %v9368
        %v9370 = vrot.slane %v9362, %v9369
        %v9372 = vunpack.c.l.s4 1983009808
        %v9373 = vunpack.c.0.s8 %v9372
        %v9374 = vlaneseq
        %v9375 = vshrl.u32 %v9374, 7
        %v9376 = vsub.s32 %v9373, %v9375
        %v9377 = vrot.slane %v9363, %v9376
        %v9378 = vcombine.low %v9322, %v9338
        %v9379 = vcombine.high %v9322, %v9338
        %v9381 = vunpack.c.l.s4 1934713408
        %v9382 = vunpack.c.0.s8 %v9381
        %v9383 = vlaneseq
        %v9384 = vshrl.u32 %v9383, 7
        %v9385 = vsub.s32 %v9382, %v9384
        %v9386 = vrot.slane %v9378, %v9385
        %v9388 = vunpack.c.l.s4 1934713408
        %v9389 = vunpack.c.0.s8 %v9388
        %v9390 = vlaneseq
        %v9391 = vshrl.u32 %v9390, 7
        %v9392 = vsub.s32 %v9389, %v9391
        %v9393 = vrot.slane %v9379, %v9392
        %v9394 = vcombine.low %v9329, %v9345
        %v9395 = vcombine.high %v9329, %v9345
        %v9397 = vunpack.c.l.s4 1934713408
        %v9398 = vunpack.c.0.s8 %v9397
        %v9399 = vlaneseq
        %v9400 = vshrl.u32 %v9399, 7
        %v9401 = vsub.s32 %v9398, %v9400
        %v9402 = vrot.slane %v9394, %v9401
        %v9404 = vunpack.c.l.s4 1934713408
        %v9405 = vunpack.c.0.s8 %v9404
        %v9406 = vlaneseq
        %v9407 = vshrl.u32 %v9406, 7
        %v9408 = vsub.s32 %v9405, %v9407
        %v9409 = vrot.slane %v9395, %v9408
        %v9410 = vcombine.low %v9354, %v9370
        %v9411 = vcombine.high %v9354, %v9370
        %v9413 = vunpack.c.l.s4 1934713408
        %v9414 = vunpack.c.0.s8 %v9413
        %v9415 = vlaneseq
        %v9416 = vshrl.u32 %v9415, 7
        %v9417 = vsub.s32 %v9414, %v9416
        %v9418 = vrot.slane %v9410, %v9417
        %v9420 = vunpack.c.l.s4 1934713408
        %v9421 = vunpack.c.0.s8 %v9420
        %v9422 = vlaneseq
        %v9423 = vshrl.u32 %v9422, 7
        %v9424 = vsub.s32 %v9421, %v9423
        %v9425 = vrot.slane %v9411, %v9424
        %v9426 = vcombine.low %v9361, %v9377
        %v9427 = vcombine.high %v9361, %v9377
        %v9429 = vunpack.c.l.s4 1934713408
        %v9430 = vunpack.c.0.s8 %v9429
        %v9431 = vlaneseq
        %v9432 = vshrl.u32 %v9431, 7
        %v9433 = vsub.s32 %v9430, %v9432
        %v9434 = vrot.slane %v9426, %v9433
        %v9436 = vunpack.c.l.s4 1934713408
        %v9437 = vunpack.c.0.s8 %v9436
        %v9438 = vlaneseq
        %v9439 = vshrl.u32 %v9438, 7
        %v9440 = vsub.s32 %v9437, %v9439
        %v9441 = vrot.slane %v9427, %v9440
        %v9442 = vcombine.low %v9386, %v9418
        %v9443 = vcombine.high %v9386, %v9418
        %v9444 = vcombine.low %v9393, %v9425
        %v9445 = vcombine.high %v9393, %v9425
        %v9446 = vcombine.low %v9402, %v9434
        %v9447 = vcombine.high %v9402, %v9434
        %v9448 = vcombine.low %v9409, %v9441
        %v9449 = vcombine.high %v9409, %v9441
        %9451 = vrot.lane.b32.xlu0 %v9307, 16
        %v9452 = vpop.permute.xlu0 %9451
        %9455 = vrot.lane.b32.xlu0 %v9308, 32
        %v9456 = vpop.permute.xlu0 %9455
        %9459 = vrot.lane.b32.xlu0 %v9309, 48
        %v9460 = vpop.permute.xlu0 %9459
        %9463 = vrot.lane.b32.xlu0 %v9310, 64
        %v9464 = vpop.permute.xlu0 %9463
        %9467 = vrot.lane.b32.xlu0 %v9311, 80
        %v9468 = vpop.permute.xlu0 %9467
        %9471 = vrot.lane.b32.xlu0 %v9312, 96
        %v9472 = vpop.permute.xlu0 %9471
        %9475 = vrot.lane.b32.xlu0 %v9313, 112
        %v9476 = vpop.permute.xlu0 %9475
        %9479 = vrot.lane.b32.xlu0 %v9443, 16
        %v9480 = vpop.permute.xlu0 %9479
        %9483 = vrot.lane.b32.xlu0 %v9444, 32
        %v9484 = vpop.permute.xlu0 %9483
        %9487 = vrot.lane.b32.xlu0 %v9445, 48
        %v9488 = vpop.permute.xlu0 %9487
        %9491 = vrot.lane.b32.xlu0 %v9446, 64
        %v9492 = vpop.permute.xlu0 %9491
        %9495 = vrot.lane.b32.xlu0 %v9447, 80
        %v9496 = vpop.permute.xlu0 %9495
        %9499 = vrot.lane.b32.xlu0 %v9448, 96
        %v9500 = vpop.permute.xlu0 %9499
        %9503 = vrot.lane.b32.xlu0 %v9449, 112
        %v9504 = vpop.permute.xlu0 %9503
        %v9506 = vsel %vm314, %v9306, %v9452
        %v9507 = vsel %vm995, %v9506, %v9456
        %v9508 = vsel %vm997, %v9507, %v9460
        %v9509 = vsel %vm999, %v9508, %v9464
        %v9510 = vsel %vm1001, %v9509, %v9468
        %v9511 = vsel %vm1003, %v9510, %v9472
        %v9512 = vsel %vm1005, %v9511, %v9476
        %v9513 = vsel %vm314, %v9442, %v9480
        %v9514 = vsel %vm995, %v9513, %v9484
        %v9515 = vsel %vm997, %v9514, %v9488
        %v9516 = vsel %vm999, %v9515, %v9492
        %v9517 = vsel %vm1001, %v9516, %v9496
        %v9518 = vsel %vm1003, %v9517, %v9500
        %v9519 = vsel %vm1005, %v9518, %v9504
        %v9520 = vpack.c.bf16 %v9512, %v9106
        %v9521 = vpack.c.bf16 %v9519, %v9113
        %v9524 = vunpack.c.l.b16 %v9520
        %v9525 = vunpack.c.l.b16 %v9521
        %v9526 = vunpack.c.h.b16 %v9520
        %v9527 = vunpack.c.h.b16 %v9521
        %v9528 = vpack.c.b16 %v9525, %v9524
        %v9529 = vpack.c.b16 %v9527, %v9526
        %9532 = vst [vmem:[#allocation3 + $0xa0] sm:$0xff] %v9528
        %9533 = vst [vmem:[#allocation3 + $0xa8] sm:$0xff] %v9529
        %v9534 = vld [vmem:[#allocation2 + $0x4] sm:$0xff]
        %v9535 = vld [vmem:[#allocation2 + $0xc] sm:$0xff]
        %v9536 = vld [vmem:[#allocation2 + $0x1c] sm:$0xff]
        %v9537 = vld [vmem:[#allocation2 + $0x24] sm:$0xff]
        %v9538 = vld [vmem:[#allocation2 + $0x34] sm:$0xff]
        %v9539 = vld [vmem:[#allocation2 + $0x3c] sm:$0xff]
        %v9540 = vld [vmem:[#allocation2 + $0x4c] sm:$0xff]
        %v9541 = vld [vmem:[#allocation2 + $0x54] sm:$0xff]
        %v9542 = vld [vmem:[#allocation2 + $0x64] sm:$0xff]
        %v9543 = vld [vmem:[#allocation2 + $0x6c] sm:$0xff]
        %v9544 = vld [vmem:[#allocation2 + $0x7c] sm:$0xff]
        %v9545 = vld [vmem:[#allocation2 + $0x84] sm:$0xff]
        %v9546 = vld [vmem:[#allocation2 + $0x94] sm:$0xff]
        %v9547 = vld [vmem:[#allocation2 + $0x9c] sm:$0xff]
        %v9548 = vld [vmem:[#allocation2 + $0xac] sm:$0xff]
        %v9549 = vld [vmem:[#allocation2 + $0xb4] sm:$0xff]
        %9566 = vrot.lane.b32.xlu0 %v9534, 126
        %v9567 = vpop.permute.xlu0 %9566
        %9568 = vrot.lane.b32.xlu0 %v9535, 126
        %v9569 = vpop.permute.xlu0 %9568
        %9570 = vrot.lane.b32.xlu0 %v9536, 126
        %v9571 = vpop.permute.xlu0 %9570
        %9572 = vrot.lane.b32.xlu0 %v9537, 126
        %v9573 = vpop.permute.xlu0 %9572
        %9574 = vrot.lane.b32.xlu0 %v9538, 126
        %v9575 = vpop.permute.xlu0 %9574
        %9576 = vrot.lane.b32.xlu0 %v9539, 126
        %v9577 = vpop.permute.xlu0 %9576
        %9578 = vrot.lane.b32.xlu0 %v9540, 126
        %v9579 = vpop.permute.xlu0 %9578
        %9580 = vrot.lane.b32.xlu0 %v9541, 126
        %v9581 = vpop.permute.xlu0 %9580
        %9582 = vrot.lane.b32.xlu0 %v9542, 126
        %v9583 = vpop.permute.xlu0 %9582
        %9584 = vrot.lane.b32.xlu0 %v9543, 126
        %v9585 = vpop.permute.xlu0 %9584
        %9586 = vrot.lane.b32.xlu0 %v9544, 126
        %v9587 = vpop.permute.xlu0 %9586
        %9588 = vrot.lane.b32.xlu0 %v9545, 126
        %v9589 = vpop.permute.xlu0 %9588
        %9590 = vrot.lane.b32.xlu0 %v9546, 126
        %v9591 = vpop.permute.xlu0 %9590
        %9592 = vrot.lane.b32.xlu0 %v9547, 126
        %v9593 = vpop.permute.xlu0 %9592
        %9594 = vrot.lane.b32.xlu0 %v9548, 126
        %v9595 = vpop.permute.xlu0 %9594
        %9596 = vrot.lane.b32.xlu0 %v9549, 126
        %v9597 = vpop.permute.xlu0 %9596
        %v9614 = vcombine.low %v9567, %v9575
        %v9615 = vcombine.high %v9567, %v9575
        %v9617 = vunpack.c.l.s4 1983009808
        %v9618 = vunpack.c.0.s8 %v9617
        %v9619 = vlaneseq
        %v9620 = vshrl.u32 %v9619, 7
        %v9621 = vsub.s32 %v9618, %v9620
        %v9622 = vrot.slane %v9614, %v9621
        %v9624 = vunpack.c.l.s4 1983009808
        %v9625 = vunpack.c.0.s8 %v9624
        %v9626 = vlaneseq
        %v9627 = vshrl.u32 %v9626, 7
        %v9628 = vsub.s32 %v9625, %v9627
        %v9629 = vrot.slane %v9615, %v9628
        %v9630 = vcombine.low %v9571, %v9579
        %v9631 = vcombine.high %v9571, %v9579
        %v9633 = vunpack.c.l.s4 1983009808
        %v9634 = vunpack.c.0.s8 %v9633
        %v9635 = vlaneseq
        %v9636 = vshrl.u32 %v9635, 7
        %v9637 = vsub.s32 %v9634, %v9636
        %v9638 = vrot.slane %v9630, %v9637
        %v9640 = vunpack.c.l.s4 1983009808
        %v9641 = vunpack.c.0.s8 %v9640
        %v9642 = vlaneseq
        %v9643 = vshrl.u32 %v9642, 7
        %v9644 = vsub.s32 %v9641, %v9643
        %v9645 = vrot.slane %v9631, %v9644
        %v9646 = vcombine.low %v9583, %v9591
        %v9647 = vcombine.high %v9583, %v9591
        %v9649 = vunpack.c.l.s4 1983009808
        %v9650 = vunpack.c.0.s8 %v9649
        %v9651 = vlaneseq
        %v9652 = vshrl.u32 %v9651, 7
        %v9653 = vsub.s32 %v9650, %v9652
        %v9654 = vrot.slane %v9646, %v9653
        %v9656 = vunpack.c.l.s4 1983009808
        %v9657 = vunpack.c.0.s8 %v9656
        %v9658 = vlaneseq
        %v9659 = vshrl.u32 %v9658, 7
        %v9660 = vsub.s32 %v9657, %v9659
        %v9661 = vrot.slane %v9647, %v9660
        %v9662 = vcombine.low %v9587, %v9595
        %v9663 = vcombine.high %v9587, %v9595
        %v9665 = vunpack.c.l.s4 1983009808
        %v9666 = vunpack.c.0.s8 %v9665
        %v9667 = vlaneseq
        %v9668 = vshrl.u32 %v9667, 7
        %v9669 = vsub.s32 %v9666, %v9668
        %v9670 = vrot.slane %v9662, %v9669
        %v9672 = vunpack.c.l.s4 1983009808
        %v9673 = vunpack.c.0.s8 %v9672
        %v9674 = vlaneseq
        %v9675 = vshrl.u32 %v9674, 7
        %v9676 = vsub.s32 %v9673, %v9675
        %v9677 = vrot.slane %v9663, %v9676
        %v9678 = vcombine.low %v9622, %v9638
        %v9679 = vcombine.high %v9622, %v9638
        %v9681 = vunpack.c.l.s4 1934713408
        %v9682 = vunpack.c.0.s8 %v9681
        %v9683 = vlaneseq
        %v9684 = vshrl.u32 %v9683, 7
        %v9685 = vsub.s32 %v9682, %v9684
        %v9686 = vrot.slane %v9678, %v9685
        %v9688 = vunpack.c.l.s4 1934713408
        %v9689 = vunpack.c.0.s8 %v9688
        %v9690 = vlaneseq
        %v9691 = vshrl.u32 %v9690, 7
        %v9692 = vsub.s32 %v9689, %v9691
        %v9693 = vrot.slane %v9679, %v9692
        %v9694 = vcombine.low %v9629, %v9645
        %v9695 = vcombine.high %v9629, %v9645
        %v9697 = vunpack.c.l.s4 1934713408
        %v9698 = vunpack.c.0.s8 %v9697
        %v9699 = vlaneseq
        %v9700 = vshrl.u32 %v9699, 7
        %v9701 = vsub.s32 %v9698, %v9700
        %v9702 = vrot.slane %v9694, %v9701
        %v9704 = vunpack.c.l.s4 1934713408
        %v9705 = vunpack.c.0.s8 %v9704
        %v9706 = vlaneseq
        %v9707 = vshrl.u32 %v9706, 7
        %v9708 = vsub.s32 %v9705, %v9707
        %v9709 = vrot.slane %v9695, %v9708
        %v9710 = vcombine.low %v9654, %v9670
        %v9711 = vcombine.high %v9654, %v9670
        %v9713 = vunpack.c.l.s4 1934713408
        %v9714 = vunpack.c.0.s8 %v9713
        %v9715 = vlaneseq
        %v9716 = vshrl.u32 %v9715, 7
        %v9717 = vsub.s32 %v9714, %v9716
        %v9718 = vrot.slane %v9710, %v9717
        %v9720 = vunpack.c.l.s4 1934713408
        %v9721 = vunpack.c.0.s8 %v9720
        %v9722 = vlaneseq
        %v9723 = vshrl.u32 %v9722, 7
        %v9724 = vsub.s32 %v9721, %v9723
        %v9725 = vrot.slane %v9711, %v9724
        %v9726 = vcombine.low %v9661, %v9677
        %v9727 = vcombine.high %v9661, %v9677
        %v9729 = vunpack.c.l.s4 1934713408
        %v9730 = vunpack.c.0.s8 %v9729
        %v9731 = vlaneseq
        %v9732 = vshrl.u32 %v9731, 7
        %v9733 = vsub.s32 %v9730, %v9732
        %v9734 = vrot.slane %v9726, %v9733
        %v9736 = vunpack.c.l.s4 1934713408
        %v9737 = vunpack.c.0.s8 %v9736
        %v9738 = vlaneseq
        %v9739 = vshrl.u32 %v9738, 7
        %v9740 = vsub.s32 %v9737, %v9739
        %v9741 = vrot.slane %v9727, %v9740
        %v9742 = vcombine.low %v9686, %v9718
        %v9743 = vcombine.high %v9686, %v9718
        %v9744 = vcombine.low %v9693, %v9725
        %v9745 = vcombine.high %v9693, %v9725
        %v9746 = vcombine.low %v9702, %v9734
        %v9747 = vcombine.high %v9702, %v9734
        %v9748 = vcombine.low %v9709, %v9741
        %v9749 = vcombine.high %v9709, %v9741
        %v9750 = vcombine.low %v9569, %v9577
        %v9751 = vcombine.high %v9569, %v9577
        %v9753 = vunpack.c.l.s4 1983009808
        %v9754 = vunpack.c.0.s8 %v9753
        %v9755 = vlaneseq
        %v9756 = vshrl.u32 %v9755, 7
        %v9757 = vsub.s32 %v9754, %v9756
        %v9758 = vrot.slane %v9750, %v9757
        %v9760 = vunpack.c.l.s4 1983009808
        %v9761 = vunpack.c.0.s8 %v9760
        %v9762 = vlaneseq
        %v9763 = vshrl.u32 %v9762, 7
        %v9764 = vsub.s32 %v9761, %v9763
        %v9765 = vrot.slane %v9751, %v9764
        %v9766 = vcombine.low %v9573, %v9581
        %v9767 = vcombine.high %v9573, %v9581
        %v9769 = vunpack.c.l.s4 1983009808
        %v9770 = vunpack.c.0.s8 %v9769
        %v9771 = vlaneseq
        %v9772 = vshrl.u32 %v9771, 7
        %v9773 = vsub.s32 %v9770, %v9772
        %v9774 = vrot.slane %v9766, %v9773
        %v9776 = vunpack.c.l.s4 1983009808
        %v9777 = vunpack.c.0.s8 %v9776
        %v9778 = vlaneseq
        %v9779 = vshrl.u32 %v9778, 7
        %v9780 = vsub.s32 %v9777, %v9779
        %v9781 = vrot.slane %v9767, %v9780
        %v9782 = vcombine.low %v9585, %v9593
        %v9783 = vcombine.high %v9585, %v9593
        %v9785 = vunpack.c.l.s4 1983009808
        %v9786 = vunpack.c.0.s8 %v9785
        %v9787 = vlaneseq
        %v9788 = vshrl.u32 %v9787, 7
        %v9789 = vsub.s32 %v9786, %v9788
        %v9790 = vrot.slane %v9782, %v9789
        %v9792 = vunpack.c.l.s4 1983009808
        %v9793 = vunpack.c.0.s8 %v9792
        %v9794 = vlaneseq
        %v9795 = vshrl.u32 %v9794, 7
        %v9796 = vsub.s32 %v9793, %v9795
        %v9797 = vrot.slane %v9783, %v9796
        %v9798 = vcombine.low %v9589, %v9597
        %v9799 = vcombine.high %v9589, %v9597
        %v9801 = vunpack.c.l.s4 1983009808
        %v9802 = vunpack.c.0.s8 %v9801
        %v9803 = vlaneseq
        %v9804 = vshrl.u32 %v9803, 7
        %v9805 = vsub.s32 %v9802, %v9804
        %v9806 = vrot.slane %v9798, %v9805
        %v9808 = vunpack.c.l.s4 1983009808
        %v9809 = vunpack.c.0.s8 %v9808
        %v9810 = vlaneseq
        %v9811 = vshrl.u32 %v9810, 7
        %v9812 = vsub.s32 %v9809, %v9811
        %v9813 = vrot.slane %v9799, %v9812
        %v9814 = vcombine.low %v9758, %v9774
        %v9815 = vcombine.high %v9758, %v9774
        %v9817 = vunpack.c.l.s4 1934713408
        %v9818 = vunpack.c.0.s8 %v9817
        %v9819 = vlaneseq
        %v9820 = vshrl.u32 %v9819, 7
        %v9821 = vsub.s32 %v9818, %v9820
        %v9822 = vrot.slane %v9814, %v9821
        %v9824 = vunpack.c.l.s4 1934713408
        %v9825 = vunpack.c.0.s8 %v9824
        %v9826 = vlaneseq
        %v9827 = vshrl.u32 %v9826, 7
        %v9828 = vsub.s32 %v9825, %v9827
        %v9829 = vrot.slane %v9815, %v9828
        %v9830 = vcombine.low %v9765, %v9781
        %v9831 = vcombine.high %v9765, %v9781
        %v9833 = vunpack.c.l.s4 1934713408
        %v9834 = vunpack.c.0.s8 %v9833
        %v9835 = vlaneseq
        %v9836 = vshrl.u32 %v9835, 7
        %v9837 = vsub.s32 %v9834, %v9836
        %v9838 = vrot.slane %v9830, %v9837
        %v9840 = vunpack.c.l.s4 1934713408
        %v9841 = vunpack.c.0.s8 %v9840
        %v9842 = vlaneseq
        %v9843 = vshrl.u32 %v9842, 7
        %v9844 = vsub.s32 %v9841, %v9843
        %v9845 = vrot.slane %v9831, %v9844
        %v9846 = vcombine.low %v9790, %v9806
        %v9847 = vcombine.high %v9790, %v9806
        %v9849 = vunpack.c.l.s4 1934713408
        %v9850 = vunpack.c.0.s8 %v9849
        %v9851 = vlaneseq
        %v9852 = vshrl.u32 %v9851, 7
        %v9853 = vsub.s32 %v9850, %v9852
        %v9854 = vrot.slane %v9846, %v9853
        %v9856 = vunpack.c.l.s4 1934713408
        %v9857 = vunpack.c.0.s8 %v9856
        %v9858 = vlaneseq
        %v9859 = vshrl.u32 %v9858, 7
        %v9860 = vsub.s32 %v9857, %v9859
        %v9861 = vrot.slane %v9847, %v9860
        %v9862 = vcombine.low %v9797, %v9813
        %v9863 = vcombine.high %v9797, %v9813
        %v9865 = vunpack.c.l.s4 1934713408
        %v9866 = vunpack.c.0.s8 %v9865
        %v9867 = vlaneseq
        %v9868 = vshrl.u32 %v9867, 7
        %v9869 = vsub.s32 %v9866, %v9868
        %v9870 = vrot.slane %v9862, %v9869
        %v9872 = vunpack.c.l.s4 1934713408
        %v9873 = vunpack.c.0.s8 %v9872
        %v9874 = vlaneseq
        %v9875 = vshrl.u32 %v9874, 7
        %v9876 = vsub.s32 %v9873, %v9875
        %v9877 = vrot.slane %v9863, %v9876
        %v9878 = vcombine.low %v9822, %v9854
        %v9879 = vcombine.high %v9822, %v9854
        %v9880 = vcombine.low %v9829, %v9861
        %v9881 = vcombine.high %v9829, %v9861
        %v9882 = vcombine.low %v9838, %v9870
        %v9883 = vcombine.high %v9838, %v9870
        %v9884 = vcombine.low %v9845, %v9877
        %v9885 = vcombine.high %v9845, %v9877
        %9887 = vrot.lane.b32.xlu0 %v9743, 16
        %v9888 = vpop.permute.xlu0 %9887
        %9891 = vrot.lane.b32.xlu0 %v9744, 32
        %v9892 = vpop.permute.xlu0 %9891
        %9895 = vrot.lane.b32.xlu0 %v9745, 48
        %v9896 = vpop.permute.xlu0 %9895
        %9899 = vrot.lane.b32.xlu0 %v9746, 64
        %v9900 = vpop.permute.xlu0 %9899
        %9903 = vrot.lane.b32.xlu0 %v9747, 80
        %v9904 = vpop.permute.xlu0 %9903
        %9907 = vrot.lane.b32.xlu0 %v9748, 96
        %v9908 = vpop.permute.xlu0 %9907
        %9911 = vrot.lane.b32.xlu0 %v9749, 112
        %v9912 = vpop.permute.xlu0 %9911
        %9915 = vrot.lane.b32.xlu0 %v9879, 16
        %v9916 = vpop.permute.xlu0 %9915
        %9919 = vrot.lane.b32.xlu0 %v9880, 32
        %v9920 = vpop.permute.xlu0 %9919
        %9923 = vrot.lane.b32.xlu0 %v9881, 48
        %v9924 = vpop.permute.xlu0 %9923
        %9927 = vrot.lane.b32.xlu0 %v9882, 64
        %v9928 = vpop.permute.xlu0 %9927
        %9931 = vrot.lane.b32.xlu0 %v9883, 80
        %v9932 = vpop.permute.xlu0 %9931
        %9935 = vrot.lane.b32.xlu0 %v9884, 96
        %v9936 = vpop.permute.xlu0 %9935
        %9939 = vrot.lane.b32.xlu0 %v9885, 112
        %v9940 = vpop.permute.xlu0 %9939
        %v9942 = vsel %vm314, %v9742, %v9888
        %v9943 = vsel %vm995, %v9942, %v9892
        %v9944 = vsel %vm997, %v9943, %v9896
        %v9945 = vsel %vm999, %v9944, %v9900
        %v9946 = vsel %vm1001, %v9945, %v9904
        %v9947 = vsel %vm1003, %v9946, %v9908
        %v9948 = vsel %vm1005, %v9947, %v9912
        %v9949 = vsel %vm314, %v9878, %v9916
        %v9950 = vsel %vm995, %v9949, %v9920
        %v9951 = vsel %vm997, %v9950, %v9924
        %v9952 = vsel %vm999, %v9951, %v9928
        %v9953 = vsel %vm1001, %v9952, %v9932
        %v9954 = vsel %vm1003, %v9953, %v9936
        %v9955 = vsel %vm1005, %v9954, %v9940
        %9956 = vrot.lane.b32.xlu0 %v9534, 125
        %v9957 = vpop.permute.xlu0 %9956
        %9958 = vrot.lane.b32.xlu0 %v9535, 125
        %v9959 = vpop.permute.xlu0 %9958
        %9960 = vrot.lane.b32.xlu0 %v9536, 125
        %v9961 = vpop.permute.xlu0 %9960
        %9962 = vrot.lane.b32.xlu0 %v9537, 125
        %v9963 = vpop.permute.xlu0 %9962
        %9964 = vrot.lane.b32.xlu0 %v9538, 125
        %v9965 = vpop.permute.xlu0 %9964
        %9966 = vrot.lane.b32.xlu0 %v9539, 125
        %v9967 = vpop.permute.xlu0 %9966
        %9968 = vrot.lane.b32.xlu0 %v9540, 125
        %v9969 = vpop.permute.xlu0 %9968
        %9970 = vrot.lane.b32.xlu0 %v9541, 125
        %v9971 = vpop.permute.xlu0 %9970
        %9972 = vrot.lane.b32.xlu0 %v9542, 125
        %v9973 = vpop.permute.xlu0 %9972
        %9974 = vrot.lane.b32.xlu0 %v9543, 125
        %v9975 = vpop.permute.xlu0 %9974
        %9976 = vrot.lane.b32.xlu0 %v9544, 125
        %v9977 = vpop.permute.xlu0 %9976
        %9978 = vrot.lane.b32.xlu0 %v9545, 125
        %v9979 = vpop.permute.xlu0 %9978
        %9980 = vrot.lane.b32.xlu0 %v9546, 125
        %v9981 = vpop.permute.xlu0 %9980
        %9982 = vrot.lane.b32.xlu0 %v9547, 125
        %v9983 = vpop.permute.xlu0 %9982
        %9984 = vrot.lane.b32.xlu0 %v9548, 125
        %v9985 = vpop.permute.xlu0 %9984
        %9986 = vrot.lane.b32.xlu0 %v9549, 125
        %v9987 = vpop.permute.xlu0 %9986
        %v10004 = vcombine.low %v9957, %v9965
        %v10005 = vcombine.high %v9957, %v9965
        %v10007 = vunpack.c.l.s4 1983009808
        %v10008 = vunpack.c.0.s8 %v10007
        %v10009 = vlaneseq
        %v10010 = vshrl.u32 %v10009, 7
        %v10011 = vsub.s32 %v10008, %v10010
        %v10012 = vrot.slane %v10004, %v10011
        %v10014 = vunpack.c.l.s4 1983009808
        %v10015 = vunpack.c.0.s8 %v10014
        %v10016 = vlaneseq
        %v10017 = vshrl.u32 %v10016, 7
        %v10018 = vsub.s32 %v10015, %v10017
        %v10019 = vrot.slane %v10005, %v10018
        %v10020 = vcombine.low %v9961, %v9969
        %v10021 = vcombine.high %v9961, %v9969
        %v10023 = vunpack.c.l.s4 1983009808
        %v10024 = vunpack.c.0.s8 %v10023
        %v10025 = vlaneseq
        %v10026 = vshrl.u32 %v10025, 7
        %v10027 = vsub.s32 %v10024, %v10026
        %v10028 = vrot.slane %v10020, %v10027
        %v10030 = vunpack.c.l.s4 1983009808
        %v10031 = vunpack.c.0.s8 %v10030
        %v10032 = vlaneseq
        %v10033 = vshrl.u32 %v10032, 7
        %v10034 = vsub.s32 %v10031, %v10033
        %v10035 = vrot.slane %v10021, %v10034
        %v10036 = vcombine.low %v9973, %v9981
        %v10037 = vcombine.high %v9973, %v9981
        %v10039 = vunpack.c.l.s4 1983009808
        %v10040 = vunpack.c.0.s8 %v10039
        %v10041 = vlaneseq
        %v10042 = vshrl.u32 %v10041, 7
        %v10043 = vsub.s32 %v10040, %v10042
        %v10044 = vrot.slane %v10036, %v10043
        %v10046 = vunpack.c.l.s4 1983009808
        %v10047 = vunpack.c.0.s8 %v10046
        %v10048 = vlaneseq
        %v10049 = vshrl.u32 %v10048, 7
        %v10050 = vsub.s32 %v10047, %v10049
        %v10051 = vrot.slane %v10037, %v10050
        %v10052 = vcombine.low %v9977, %v9985
        %v10053 = vcombine.high %v9977, %v9985
        %v10055 = vunpack.c.l.s4 1983009808
        %v10056 = vunpack.c.0.s8 %v10055
        %v10057 = vlaneseq
        %v10058 = vshrl.u32 %v10057, 7
        %v10059 = vsub.s32 %v10056, %v10058
        %v10060 = vrot.slane %v10052, %v10059
        %v10062 = vunpack.c.l.s4 1983009808
        %v10063 = vunpack.c.0.s8 %v10062
        %v10064 = vlaneseq
        %v10065 = vshrl.u32 %v10064, 7
        %v10066 = vsub.s32 %v10063, %v10065
        %v10067 = vrot.slane %v10053, %v10066
        %v10068 = vcombine.low %v10012, %v10028
        %v10069 = vcombine.high %v10012, %v10028
        %v10071 = vunpack.c.l.s4 1934713408
        %v10072 = vunpack.c.0.s8 %v10071
        %v10073 = vlaneseq
        %v10074 = vshrl.u32 %v10073, 7
        %v10075 = vsub.s32 %v10072, %v10074
        %v10076 = vrot.slane %v10068, %v10075
        %v10078 = vunpack.c.l.s4 1934713408
        %v10079 = vunpack.c.0.s8 %v10078
        %v10080 = vlaneseq
        %v10081 = vshrl.u32 %v10080, 7
        %v10082 = vsub.s32 %v10079, %v10081
        %v10083 = vrot.slane %v10069, %v10082
        %v10084 = vcombine.low %v10019, %v10035
        %v10085 = vcombine.high %v10019, %v10035
        %v10087 = vunpack.c.l.s4 1934713408
        %v10088 = vunpack.c.0.s8 %v10087
        %v10089 = vlaneseq
        %v10090 = vshrl.u32 %v10089, 7
        %v10091 = vsub.s32 %v10088, %v10090
        %v10092 = vrot.slane %v10084, %v10091
        %v10094 = vunpack.c.l.s4 1934713408
        %v10095 = vunpack.c.0.s8 %v10094
        %v10096 = vlaneseq
        %v10097 = vshrl.u32 %v10096, 7
        %v10098 = vsub.s32 %v10095, %v10097
        %v10099 = vrot.slane %v10085, %v10098
        %v10100 = vcombine.low %v10044, %v10060
        %v10101 = vcombine.high %v10044, %v10060
        %v10103 = vunpack.c.l.s4 1934713408
        %v10104 = vunpack.c.0.s8 %v10103
        %v10105 = vlaneseq
        %v10106 = vshrl.u32 %v10105, 7
        %v10107 = vsub.s32 %v10104, %v10106
        %v10108 = vrot.slane %v10100, %v10107
        %v10110 = vunpack.c.l.s4 1934713408
        %v10111 = vunpack.c.0.s8 %v10110
        %v10112 = vlaneseq
        %v10113 = vshrl.u32 %v10112, 7
        %v10114 = vsub.s32 %v10111, %v10113
        %v10115 = vrot.slane %v10101, %v10114
        %v10116 = vcombine.low %v10051, %v10067
        %v10117 = vcombine.high %v10051, %v10067
        %v10119 = vunpack.c.l.s4 1934713408
        %v10120 = vunpack.c.0.s8 %v10119
        %v10121 = vlaneseq
        %v10122 = vshrl.u32 %v10121, 7
        %v10123 = vsub.s32 %v10120, %v10122
        %v10124 = vrot.slane %v10116, %v10123
        %v10126 = vunpack.c.l.s4 1934713408
        %v10127 = vunpack.c.0.s8 %v10126
        %v10128 = vlaneseq
        %v10129 = vshrl.u32 %v10128, 7
        %v10130 = vsub.s32 %v10127, %v10129
        %v10131 = vrot.slane %v10117, %v10130
        %v10132 = vcombine.low %v10076, %v10108
        %v10133 = vcombine.high %v10076, %v10108
        %v10134 = vcombine.low %v10083, %v10115
        %v10135 = vcombine.high %v10083, %v10115
        %v10136 = vcombine.low %v10092, %v10124
        %v10137 = vcombine.high %v10092, %v10124
        %v10138 = vcombine.low %v10099, %v10131
        %v10139 = vcombine.high %v10099, %v10131
        %v10140 = vcombine.low %v9959, %v9967
        %v10141 = vcombine.high %v9959, %v9967
        %v10143 = vunpack.c.l.s4 1983009808
        %v10144 = vunpack.c.0.s8 %v10143
        %v10145 = vlaneseq
        %v10146 = vshrl.u32 %v10145, 7
        %v10147 = vsub.s32 %v10144, %v10146
        %v10148 = vrot.slane %v10140, %v10147
        %v10150 = vunpack.c.l.s4 1983009808
        %v10151 = vunpack.c.0.s8 %v10150
        %v10152 = vlaneseq
        %v10153 = vshrl.u32 %v10152, 7
        %v10154 = vsub.s32 %v10151, %v10153
        %v10155 = vrot.slane %v10141, %v10154
        %v10156 = vcombine.low %v9963, %v9971
        %v10157 = vcombine.high %v9963, %v9971
        %v10159 = vunpack.c.l.s4 1983009808
        %v10160 = vunpack.c.0.s8 %v10159
        %v10161 = vlaneseq
        %v10162 = vshrl.u32 %v10161, 7
        %v10163 = vsub.s32 %v10160, %v10162
        %v10164 = vrot.slane %v10156, %v10163
        %v10166 = vunpack.c.l.s4 1983009808
        %v10167 = vunpack.c.0.s8 %v10166
        %v10168 = vlaneseq
        %v10169 = vshrl.u32 %v10168, 7
        %v10170 = vsub.s32 %v10167, %v10169
        %v10171 = vrot.slane %v10157, %v10170
        %v10172 = vcombine.low %v9975, %v9983
        %v10173 = vcombine.high %v9975, %v9983
        %v10175 = vunpack.c.l.s4 1983009808
        %v10176 = vunpack.c.0.s8 %v10175
        %v10177 = vlaneseq
        %v10178 = vshrl.u32 %v10177, 7
        %v10179 = vsub.s32 %v10176, %v10178
        %v10180 = vrot.slane %v10172, %v10179
        %v10182 = vunpack.c.l.s4 1983009808
        %v10183 = vunpack.c.0.s8 %v10182
        %v10184 = vlaneseq
        %v10185 = vshrl.u32 %v10184, 7
        %v10186 = vsub.s32 %v10183, %v10185
        %v10187 = vrot.slane %v10173, %v10186
        %v10188 = vcombine.low %v9979, %v9987
        %v10189 = vcombine.high %v9979, %v9987
        %v10191 = vunpack.c.l.s4 1983009808
        %v10192 = vunpack.c.0.s8 %v10191
        %v10193 = vlaneseq
        %v10194 = vshrl.u32 %v10193, 7
        %v10195 = vsub.s32 %v10192, %v10194
        %v10196 = vrot.slane %v10188, %v10195
        %v10198 = vunpack.c.l.s4 1983009808
        %v10199 = vunpack.c.0.s8 %v10198
        %v10200 = vlaneseq
        %v10201 = vshrl.u32 %v10200, 7
        %v10202 = vsub.s32 %v10199, %v10201
        %v10203 = vrot.slane %v10189, %v10202
        %v10204 = vcombine.low %v10148, %v10164
        %v10205 = vcombine.high %v10148, %v10164
        %v10207 = vunpack.c.l.s4 1934713408
        %v10208 = vunpack.c.0.s8 %v10207
        %v10209 = vlaneseq
        %v10210 = vshrl.u32 %v10209, 7
        %v10211 = vsub.s32 %v10208, %v10210
        %v10212 = vrot.slane %v10204, %v10211
        %v10214 = vunpack.c.l.s4 1934713408
        %v10215 = vunpack.c.0.s8 %v10214
        %v10216 = vlaneseq
        %v10217 = vshrl.u32 %v10216, 7
        %v10218 = vsub.s32 %v10215, %v10217
        %v10219 = vrot.slane %v10205, %v10218
        %v10220 = vcombine.low %v10155, %v10171
        %v10221 = vcombine.high %v10155, %v10171
        %v10223 = vunpack.c.l.s4 1934713408
        %v10224 = vunpack.c.0.s8 %v10223
        %v10225 = vlaneseq
        %v10226 = vshrl.u32 %v10225, 7
        %v10227 = vsub.s32 %v10224, %v10226
        %v10228 = vrot.slane %v10220, %v10227
        %v10230 = vunpack.c.l.s4 1934713408
        %v10231 = vunpack.c.0.s8 %v10230
        %v10232 = vlaneseq
        %v10233 = vshrl.u32 %v10232, 7
        %v10234 = vsub.s32 %v10231, %v10233
        %v10235 = vrot.slane %v10221, %v10234
        %v10236 = vcombine.low %v10180, %v10196
        %v10237 = vcombine.high %v10180, %v10196
        %v10239 = vunpack.c.l.s4 1934713408
        %v10240 = vunpack.c.0.s8 %v10239
        %v10241 = vlaneseq
        %v10242 = vshrl.u32 %v10241, 7
        %v10243 = vsub.s32 %v10240, %v10242
        %v10244 = vrot.slane %v10236, %v10243
        %v10246 = vunpack.c.l.s4 1934713408
        %v10247 = vunpack.c.0.s8 %v10246
        %v10248 = vlaneseq
        %v10249 = vshrl.u32 %v10248, 7
        %v10250 = vsub.s32 %v10247, %v10249
        %v10251 = vrot.slane %v10237, %v10250
        %v10252 = vcombine.low %v10187, %v10203
        %v10253 = vcombine.high %v10187, %v10203
        %v10255 = vunpack.c.l.s4 1934713408
        %v10256 = vunpack.c.0.s8 %v10255
        %v10257 = vlaneseq
        %v10258 = vshrl.u32 %v10257, 7
        %v10259 = vsub.s32 %v10256, %v10258
        %v10260 = vrot.slane %v10252, %v10259
        %v10262 = vunpack.c.l.s4 1934713408
        %v10263 = vunpack.c.0.s8 %v10262
        %v10264 = vlaneseq
        %v10265 = vshrl.u32 %v10264, 7
        %v10266 = vsub.s32 %v10263, %v10265
        %v10267 = vrot.slane %v10253, %v10266
        %v10268 = vcombine.low %v10212, %v10244
        %v10269 = vcombine.high %v10212, %v10244
        %v10270 = vcombine.low %v10219, %v10251
        %v10271 = vcombine.high %v10219, %v10251
        %v10272 = vcombine.low %v10228, %v10260
        %v10273 = vcombine.high %v10228, %v10260
        %v10274 = vcombine.low %v10235, %v10267
        %v10275 = vcombine.high %v10235, %v10267
        %10277 = vrot.lane.b32.xlu0 %v10133, 16
        %v10278 = vpop.permute.xlu0 %10277
        %10281 = vrot.lane.b32.xlu0 %v10134, 32
        %v10282 = vpop.permute.xlu0 %10281
        %10285 = vrot.lane.b32.xlu0 %v10135, 48
        %v10286 = vpop.permute.xlu0 %10285
        %10289 = vrot.lane.b32.xlu0 %v10136, 64
        %v10290 = vpop.permute.xlu0 %10289
        %10293 = vrot.lane.b32.xlu0 %v10137, 80
        %v10294 = vpop.permute.xlu0 %10293
        %10297 = vrot.lane.b32.xlu0 %v10138, 96
        %v10298 = vpop.permute.xlu0 %10297
        %10301 = vrot.lane.b32.xlu0 %v10139, 112
        %v10302 = vpop.permute.xlu0 %10301
        %10305 = vrot.lane.b32.xlu0 %v10269, 16
        %v10306 = vpop.permute.xlu0 %10305
        %10309 = vrot.lane.b32.xlu0 %v10270, 32
        %v10310 = vpop.permute.xlu0 %10309
        %10313 = vrot.lane.b32.xlu0 %v10271, 48
        %v10314 = vpop.permute.xlu0 %10313
        %10317 = vrot.lane.b32.xlu0 %v10272, 64
        %v10318 = vpop.permute.xlu0 %10317
        %10321 = vrot.lane.b32.xlu0 %v10273, 80
        %v10322 = vpop.permute.xlu0 %10321
        %10325 = vrot.lane.b32.xlu0 %v10274, 96
        %v10326 = vpop.permute.xlu0 %10325
        %10329 = vrot.lane.b32.xlu0 %v10275, 112
        %v10330 = vpop.permute.xlu0 %10329
        %v10332 = vsel %vm314, %v10132, %v10278
        %v10333 = vsel %vm995, %v10332, %v10282
        %v10334 = vsel %vm997, %v10333, %v10286
        %v10335 = vsel %vm999, %v10334, %v10290
        %v10336 = vsel %vm1001, %v10335, %v10294
        %v10337 = vsel %vm1003, %v10336, %v10298
        %v10338 = vsel %vm1005, %v10337, %v10302
        %v10339 = vsel %vm314, %v10268, %v10306
        %v10340 = vsel %vm995, %v10339, %v10310
        %v10341 = vsel %vm997, %v10340, %v10314
        %v10342 = vsel %vm999, %v10341, %v10318
        %v10343 = vsel %vm1001, %v10342, %v10322
        %v10344 = vsel %vm1003, %v10343, %v10326
        %v10345 = vsel %vm1005, %v10344, %v10330
        %v10346 = vpack.c.bf16 %v10338, %v9948
        %v10347 = vpack.c.bf16 %v10345, %v9955
        %v10350 = vunpack.c.l.b16 %v10346
        %v10351 = vunpack.c.l.b16 %v10347
        %v10352 = vunpack.c.h.b16 %v10346
        %v10353 = vunpack.c.h.b16 %v10347
        %v10354 = vpack.c.b16 %v10351, %v10350
        %v10355 = vpack.c.b16 %v10353, %v10352
        %10358 = vst [vmem:[#allocation3 + $0xb0] sm:$0xff] %v10354
        %10359 = vst [vmem:[#allocation3 + $0xb8] sm:$0xff] %v10355
        %v10360 = vld [vmem:[#allocation2 + $0x4] sm:$0xff]
        %v10361 = vld [vmem:[#allocation2 + $0xc] sm:$0xff]
        %v10362 = vld [vmem:[#allocation2 + $0x1c] sm:$0xff]
        %v10363 = vld [vmem:[#allocation2 + $0x24] sm:$0xff]
        %v10364 = vld [vmem:[#allocation2 + $0x34] sm:$0xff]
        %v10365 = vld [vmem:[#allocation2 + $0x3c] sm:$0xff]
        %v10366 = vld [vmem:[#allocation2 + $0x4c] sm:$0xff]
        %v10367 = vld [vmem:[#allocation2 + $0x54] sm:$0xff]
        %v10368 = vld [vmem:[#allocation2 + $0x64] sm:$0xff]
        %v10369 = vld [vmem:[#allocation2 + $0x6c] sm:$0xff]
        %v10370 = vld [vmem:[#allocation2 + $0x7c] sm:$0xff]
        %v10371 = vld [vmem:[#allocation2 + $0x84] sm:$0xff]
        %v10372 = vld [vmem:[#allocation2 + $0x94] sm:$0xff]
        %v10373 = vld [vmem:[#allocation2 + $0x9c] sm:$0xff]
        %v10374 = vld [vmem:[#allocation2 + $0xac] sm:$0xff]
        %v10375 = vld [vmem:[#allocation2 + $0xb4] sm:$0xff]
        %10392 = vrot.lane.b32.xlu0 %v10360, 124
        %v10393 = vpop.permute.xlu0 %10392
        %10394 = vrot.lane.b32.xlu0 %v10361, 124
        %v10395 = vpop.permute.xlu0 %10394
        %10396 = vrot.lane.b32.xlu0 %v10362, 124
        %v10397 = vpop.permute.xlu0 %10396
        %10398 = vrot.lane.b32.xlu0 %v10363, 124
        %v10399 = vpop.permute.xlu0 %10398
        %10400 = vrot.lane.b32.xlu0 %v10364, 124
        %v10401 = vpop.permute.xlu0 %10400
        %10402 = vrot.lane.b32.xlu0 %v10365, 124
        %v10403 = vpop.permute.xlu0 %10402
        %10404 = vrot.lane.b32.xlu0 %v10366, 124
        %v10405 = vpop.permute.xlu0 %10404
        %10406 = vrot.lane.b32.xlu0 %v10367, 124
        %v10407 = vpop.permute.xlu0 %10406
        %10408 = vrot.lane.b32.xlu0 %v10368, 124
        %v10409 = vpop.permute.xlu0 %10408
        %10410 = vrot.lane.b32.xlu0 %v10369, 124
        %v10411 = vpop.permute.xlu0 %10410
        %10412 = vrot.lane.b32.xlu0 %v10370, 124
        %v10413 = vpop.permute.xlu0 %10412
        %10414 = vrot.lane.b32.xlu0 %v10371, 124
        %v10415 = vpop.permute.xlu0 %10414
        %10416 = vrot.lane.b32.xlu0 %v10372, 124
        %v10417 = vpop.permute.xlu0 %10416
        %10418 = vrot.lane.b32.xlu0 %v10373, 124
        %v10419 = vpop.permute.xlu0 %10418
        %10420 = vrot.lane.b32.xlu0 %v10374, 124
        %v10421 = vpop.permute.xlu0 %10420
        %10422 = vrot.lane.b32.xlu0 %v10375, 124
        %v10423 = vpop.permute.xlu0 %10422
        %v10440 = vcombine.low %v10393, %v10401
        %v10441 = vcombine.high %v10393, %v10401
        %v10443 = vunpack.c.l.s4 1983009808
        %v10444 = vunpack.c.0.s8 %v10443
        %v10445 = vlaneseq
        %v10446 = vshrl.u32 %v10445, 7
        %v10447 = vsub.s32 %v10444, %v10446
        %v10448 = vrot.slane %v10440, %v10447
        %v10450 = vunpack.c.l.s4 1983009808
        %v10451 = vunpack.c.0.s8 %v10450
        %v10452 = vlaneseq
        %v10453 = vshrl.u32 %v10452, 7
        %v10454 = vsub.s32 %v10451, %v10453
        %v10455 = vrot.slane %v10441, %v10454
        %v10456 = vcombine.low %v10397, %v10405
        %v10457 = vcombine.high %v10397, %v10405
        %v10459 = vunpack.c.l.s4 1983009808
        %v10460 = vunpack.c.0.s8 %v10459
        %v10461 = vlaneseq
        %v10462 = vshrl.u32 %v10461, 7
        %v10463 = vsub.s32 %v10460, %v10462
        %v10464 = vrot.slane %v10456, %v10463
        %v10466 = vunpack.c.l.s4 1983009808
        %v10467 = vunpack.c.0.s8 %v10466
        %v10468 = vlaneseq
        %v10469 = vshrl.u32 %v10468, 7
        %v10470 = vsub.s32 %v10467, %v10469
        %v10471 = vrot.slane %v10457, %v10470
        %v10472 = vcombine.low %v10409, %v10417
        %v10473 = vcombine.high %v10409, %v10417
        %v10475 = vunpack.c.l.s4 1983009808
        %v10476 = vunpack.c.0.s8 %v10475
        %v10477 = vlaneseq
        %v10478 = vshrl.u32 %v10477, 7
        %v10479 = vsub.s32 %v10476, %v10478
        %v10480 = vrot.slane %v10472, %v10479
        %v10482 = vunpack.c.l.s4 1983009808
        %v10483 = vunpack.c.0.s8 %v10482
        %v10484 = vlaneseq
        %v10485 = vshrl.u32 %v10484, 7
        %v10486 = vsub.s32 %v10483, %v10485
        %v10487 = vrot.slane %v10473, %v10486
        %v10488 = vcombine.low %v10413, %v10421
        %v10489 = vcombine.high %v10413, %v10421
        %v10491 = vunpack.c.l.s4 1983009808
        %v10492 = vunpack.c.0.s8 %v10491
        %v10493 = vlaneseq
        %v10494 = vshrl.u32 %v10493, 7
        %v10495 = vsub.s32 %v10492, %v10494
        %v10496 = vrot.slane %v10488, %v10495
        %v10498 = vunpack.c.l.s4 1983009808
        %v10499 = vunpack.c.0.s8 %v10498
        %v10500 = vlaneseq
        %v10501 = vshrl.u32 %v10500, 7
        %v10502 = vsub.s32 %v10499, %v10501
        %v10503 = vrot.slane %v10489, %v10502
        %v10504 = vcombine.low %v10448, %v10464
        %v10505 = vcombine.high %v10448, %v10464
        %v10507 = vunpack.c.l.s4 1934713408
        %v10508 = vunpack.c.0.s8 %v10507
        %v10509 = vlaneseq
        %v10510 = vshrl.u32 %v10509, 7
        %v10511 = vsub.s32 %v10508, %v10510
        %v10512 = vrot.slane %v10504, %v10511
        %v10514 = vunpack.c.l.s4 1934713408
        %v10515 = vunpack.c.0.s8 %v10514
        %v10516 = vlaneseq
        %v10517 = vshrl.u32 %v10516, 7
        %v10518 = vsub.s32 %v10515, %v10517
        %v10519 = vrot.slane %v10505, %v10518
        %v10520 = vcombine.low %v10455, %v10471
        %v10521 = vcombine.high %v10455, %v10471
        %v10523 = vunpack.c.l.s4 1934713408
        %v10524 = vunpack.c.0.s8 %v10523
        %v10525 = vlaneseq
        %v10526 = vshrl.u32 %v10525, 7
        %v10527 = vsub.s32 %v10524, %v10526
        %v10528 = vrot.slane %v10520, %v10527
        %v10530 = vunpack.c.l.s4 1934713408
        %v10531 = vunpack.c.0.s8 %v10530
        %v10532 = vlaneseq
        %v10533 = vshrl.u32 %v10532, 7
        %v10534 = vsub.s32 %v10531, %v10533
        %v10535 = vrot.slane %v10521, %v10534
        %v10536 = vcombine.low %v10480, %v10496
        %v10537 = vcombine.high %v10480, %v10496
        %v10539 = vunpack.c.l.s4 1934713408
        %v10540 = vunpack.c.0.s8 %v10539
        %v10541 = vlaneseq
        %v10542 = vshrl.u32 %v10541, 7
        %v10543 = vsub.s32 %v10540, %v10542
        %v10544 = vrot.slane %v10536, %v10543
        %v10546 = vunpack.c.l.s4 1934713408
        %v10547 = vunpack.c.0.s8 %v10546
        %v10548 = vlaneseq
        %v10549 = vshrl.u32 %v10548, 7
        %v10550 = vsub.s32 %v10547, %v10549
        %v10551 = vrot.slane %v10537, %v10550
        %v10552 = vcombine.low %v10487, %v10503
        %v10553 = vcombine.high %v10487, %v10503
        %v10555 = vunpack.c.l.s4 1934713408
        %v10556 = vunpack.c.0.s8 %v10555
        %v10557 = vlaneseq
        %v10558 = vshrl.u32 %v10557, 7
        %v10559 = vsub.s32 %v10556, %v10558
        %v10560 = vrot.slane %v10552, %v10559
        %v10562 = vunpack.c.l.s4 1934713408
        %v10563 = vunpack.c.0.s8 %v10562
        %v10564 = vlaneseq
        %v10565 = vshrl.u32 %v10564, 7
        %v10566 = vsub.s32 %v10563, %v10565
        %v10567 = vrot.slane %v10553, %v10566
        %v10568 = vcombine.low %v10512, %v10544
        %v10569 = vcombine.high %v10512, %v10544
        %v10570 = vcombine.low %v10519, %v10551
        %v10571 = vcombine.high %v10519, %v10551
        %v10572 = vcombine.low %v10528, %v10560
        %v10573 = vcombine.high %v10528, %v10560
        %v10574 = vcombine.low %v10535, %v10567
        %v10575 = vcombine.high %v10535, %v10567
        %v10576 = vcombine.low %v10395, %v10403
        %v10577 = vcombine.high %v10395, %v10403
        %v10579 = vunpack.c.l.s4 1983009808
        %v10580 = vunpack.c.0.s8 %v10579
        %v10581 = vlaneseq
        %v10582 = vshrl.u32 %v10581, 7
        %v10583 = vsub.s32 %v10580, %v10582
        %v10584 = vrot.slane %v10576, %v10583
        %v10586 = vunpack.c.l.s4 1983009808
        %v10587 = vunpack.c.0.s8 %v10586
        %v10588 = vlaneseq
        %v10589 = vshrl.u32 %v10588, 7
        %v10590 = vsub.s32 %v10587, %v10589
        %v10591 = vrot.slane %v10577, %v10590
        %v10592 = vcombine.low %v10399, %v10407
        %v10593 = vcombine.high %v10399, %v10407
        %v10595 = vunpack.c.l.s4 1983009808
        %v10596 = vunpack.c.0.s8 %v10595
        %v10597 = vlaneseq
        %v10598 = vshrl.u32 %v10597, 7
        %v10599 = vsub.s32 %v10596, %v10598
        %v10600 = vrot.slane %v10592, %v10599
        %v10602 = vunpack.c.l.s4 1983009808
        %v10603 = vunpack.c.0.s8 %v10602
        %v10604 = vlaneseq
        %v10605 = vshrl.u32 %v10604, 7
        %v10606 = vsub.s32 %v10603, %v10605
        %v10607 = vrot.slane %v10593, %v10606
        %v10608 = vcombine.low %v10411, %v10419
        %v10609 = vcombine.high %v10411, %v10419
        %v10611 = vunpack.c.l.s4 1983009808
        %v10612 = vunpack.c.0.s8 %v10611
        %v10613 = vlaneseq
        %v10614 = vshrl.u32 %v10613, 7
        %v10615 = vsub.s32 %v10612, %v10614
        %v10616 = vrot.slane %v10608, %v10615
        %v10618 = vunpack.c.l.s4 1983009808
        %v10619 = vunpack.c.0.s8 %v10618
        %v10620 = vlaneseq
        %v10621 = vshrl.u32 %v10620, 7
        %v10622 = vsub.s32 %v10619, %v10621
        %v10623 = vrot.slane %v10609, %v10622
        %v10624 = vcombine.low %v10415, %v10423
        %v10625 = vcombine.high %v10415, %v10423
        %v10627 = vunpack.c.l.s4 1983009808
        %v10628 = vunpack.c.0.s8 %v10627
        %v10629 = vlaneseq
        %v10630 = vshrl.u32 %v10629, 7
        %v10631 = vsub.s32 %v10628, %v10630
        %v10632 = vrot.slane %v10624, %v10631
        %v10634 = vunpack.c.l.s4 1983009808
        %v10635 = vunpack.c.0.s8 %v10634
        %v10636 = vlaneseq
        %v10637 = vshrl.u32 %v10636, 7
        %v10638 = vsub.s32 %v10635, %v10637
        %v10639 = vrot.slane %v10625, %v10638
        %v10640 = vcombine.low %v10584, %v10600
        %v10641 = vcombine.high %v10584, %v10600
        %v10643 = vunpack.c.l.s4 1934713408
        %v10644 = vunpack.c.0.s8 %v10643
        %v10645 = vlaneseq
        %v10646 = vshrl.u32 %v10645, 7
        %v10647 = vsub.s32 %v10644, %v10646
        %v10648 = vrot.slane %v10640, %v10647
        %v10650 = vunpack.c.l.s4 1934713408
        %v10651 = vunpack.c.0.s8 %v10650
        %v10652 = vlaneseq
        %v10653 = vshrl.u32 %v10652, 7
        %v10654 = vsub.s32 %v10651, %v10653
        %v10655 = vrot.slane %v10641, %v10654
        %v10656 = vcombine.low %v10591, %v10607
        %v10657 = vcombine.high %v10591, %v10607
        %v10659 = vunpack.c.l.s4 1934713408
        %v10660 = vunpack.c.0.s8 %v10659
        %v10661 = vlaneseq
        %v10662 = vshrl.u32 %v10661, 7
        %v10663 = vsub.s32 %v10660, %v10662
        %v10664 = vrot.slane %v10656, %v10663
        %v10666 = vunpack.c.l.s4 1934713408
        %v10667 = vunpack.c.0.s8 %v10666
        %v10668 = vlaneseq
        %v10669 = vshrl.u32 %v10668, 7
        %v10670 = vsub.s32 %v10667, %v10669
        %v10671 = vrot.slane %v10657, %v10670
        %v10672 = vcombine.low %v10616, %v10632
        %v10673 = vcombine.high %v10616, %v10632
        %v10675 = vunpack.c.l.s4 1934713408
        %v10676 = vunpack.c.0.s8 %v10675
        %v10677 = vlaneseq
        %v10678 = vshrl.u32 %v10677, 7
        %v10679 = vsub.s32 %v10676, %v10678
        %v10680 = vrot.slane %v10672, %v10679
        %v10682 = vunpack.c.l.s4 1934713408
        %v10683 = vunpack.c.0.s8 %v10682
        %v10684 = vlaneseq
        %v10685 = vshrl.u32 %v10684, 7
        %v10686 = vsub.s32 %v10683, %v10685
        %v10687 = vrot.slane %v10673, %v10686
        %v10688 = vcombine.low %v10623, %v10639
        %v10689 = vcombine.high %v10623, %v10639
        %v10691 = vunpack.c.l.s4 1934713408
        %v10692 = vunpack.c.0.s8 %v10691
        %v10693 = vlaneseq
        %v10694 = vshrl.u32 %v10693, 7
        %v10695 = vsub.s32 %v10692, %v10694
        %v10696 = vrot.slane %v10688, %v10695
        %v10698 = vunpack.c.l.s4 1934713408
        %v10699 = vunpack.c.0.s8 %v10698
        %v10700 = vlaneseq
        %v10701 = vshrl.u32 %v10700, 7
        %v10702 = vsub.s32 %v10699, %v10701
        %v10703 = vrot.slane %v10689, %v10702
        %v10704 = vcombine.low %v10648, %v10680
        %v10705 = vcombine.high %v10648, %v10680
        %v10706 = vcombine.low %v10655, %v10687
        %v10707 = vcombine.high %v10655, %v10687
        %v10708 = vcombine.low %v10664, %v10696
        %v10709 = vcombine.high %v10664, %v10696
        %v10710 = vcombine.low %v10671, %v10703
        %v10711 = vcombine.high %v10671, %v10703
        %10713 = vrot.lane.b32.xlu0 %v10569, 16
        %v10714 = vpop.permute.xlu0 %10713
        %10717 = vrot.lane.b32.xlu0 %v10570, 32
        %v10718 = vpop.permute.xlu0 %10717
        %10721 = vrot.lane.b32.xlu0 %v10571, 48
        %v10722 = vpop.permute.xlu0 %10721
        %10725 = vrot.lane.b32.xlu0 %v10572, 64
        %v10726 = vpop.permute.xlu0 %10725
        %10729 = vrot.lane.b32.xlu0 %v10573, 80
        %v10730 = vpop.permute.xlu0 %10729
        %10733 = vrot.lane.b32.xlu0 %v10574, 96
        %v10734 = vpop.permute.xlu0 %10733
        %10737 = vrot.lane.b32.xlu0 %v10575, 112
        %v10738 = vpop.permute.xlu0 %10737
        %10741 = vrot.lane.b32.xlu0 %v10705, 16
        %v10742 = vpop.permute.xlu0 %10741
        %10745 = vrot.lane.b32.xlu0 %v10706, 32
        %v10746 = vpop.permute.xlu0 %10745
        %10749 = vrot.lane.b32.xlu0 %v10707, 48
        %v10750 = vpop.permute.xlu0 %10749
        %10753 = vrot.lane.b32.xlu0 %v10708, 64
        %v10754 = vpop.permute.xlu0 %10753
        %10757 = vrot.lane.b32.xlu0 %v10709, 80
        %v10758 = vpop.permute.xlu0 %10757
        %10761 = vrot.lane.b32.xlu0 %v10710, 96
        %v10762 = vpop.permute.xlu0 %10761
        %10765 = vrot.lane.b32.xlu0 %v10711, 112
        %v10766 = vpop.permute.xlu0 %10765
        %v10768 = vsel %vm314, %v10568, %v10714
        %v10769 = vsel %vm995, %v10768, %v10718
        %v10770 = vsel %vm997, %v10769, %v10722
        %v10771 = vsel %vm999, %v10770, %v10726
        %v10772 = vsel %vm1001, %v10771, %v10730
        %v10773 = vsel %vm1003, %v10772, %v10734
        %v10774 = vsel %vm1005, %v10773, %v10738
        %v10775 = vsel %vm314, %v10704, %v10742
        %v10776 = vsel %vm995, %v10775, %v10746
        %v10777 = vsel %vm997, %v10776, %v10750
        %v10778 = vsel %vm999, %v10777, %v10754
        %v10779 = vsel %vm1001, %v10778, %v10758
        %v10780 = vsel %vm1003, %v10779, %v10762
        %v10781 = vsel %vm1005, %v10780, %v10766
        %v10782 = vpack.c.bf16 %v10774, %v10774
        %v10783 = vpack.c.bf16 %v10781, %v10781
        %v10786 = vunpack.c.l.b16 %v10782
        %v10787 = vunpack.c.l.b16 %v10783
        %v10788 = vpack.c.b16 %v10787, %v10786
        %10790 = vst [vmem:[#allocation3 + $0xc0] sm:$0xff] %v10788
        %v10791 = vld [vmem:[%s5] sm:$0xff]
        %v10792 = vld [vmem:[%s5 + $0x8] sm:$0xff]
        %v10793 = vld [vmem:[%s5 + $0x10] sm:$0xff]
        %v10794 = vld [vmem:[#allocation3] sm:$0xff]
        %v10795 = vld [vmem:[#allocation3 + $0x8] sm:$0xff]
        %v10796 = vld [vmem:[#allocation3 + $0x10] sm:$0xff]
        %v10797 = vld [vmem:[#allocation3 + $0x18] sm:$0xff]
        %v10798 = vld [vmem:[#allocation3 + $0x20] sm:$0xff]
        %v10799 = vld [vmem:[#allocation3 + $0x28] sm:$0xff]
        %v10800 = vld [vmem:[#allocation3 + $0x30] sm:$0xff]
        %v10801 = vld [vmem:[#allocation3 + $0x38] sm:$0xff]
        %v10802 = vld [vmem:[#allocation3 + $0x40] sm:$0xff]
        %v10803 = vld [vmem:[#allocation3 + $0x48] sm:$0xff]
        %v10804 = vld [vmem:[#allocation3 + $0x50] sm:$0xff]
        %v10805 = vld [vmem:[#allocation3 + $0x58] sm:$0xff]
        %v10806 = vld [vmem:[#allocation3 + $0x60] sm:$0xff]
        %v10807 = vld [vmem:[#allocation3 + $0x68] sm:$0xff]
        %v10808 = vld [vmem:[#allocation3 + $0x70] sm:$0xff]
        %v10809 = vld [vmem:[#allocation3 + $0x78] sm:$0xff]
        %v10810 = vld [vmem:[#allocation3 + $0x80] sm:$0xff]
        %v10811 = vld [vmem:[#allocation3 + $0x88] sm:$0xff]
        %v10812 = vld [vmem:[#allocation3 + $0x90] sm:$0xff]
        %v10813 = vld [vmem:[#allocation3 + $0x98] sm:$0xff]
        %v10814 = vld [vmem:[#allocation3 + $0xa0] sm:$0xff]
        %v10815 = vld [vmem:[#allocation3 + $0xa8] sm:$0xff]
        %v10816 = vld [vmem:[#allocation3 + $0xb0] sm:$0xff]
        %v10817 = vld [vmem:[#allocation3 + $0xb8] sm:$0xff]
        %v10818 = vld [vmem:[#allocation3 + $0xc0] sm:$0xff]
        %v10822 = vunpack.c.l.b16 %v10791
        %v10823 = vunpack.c.h.b16 %v10791
        %v10824 = vunpack.c.l.b16 %v10792
        %v10825 = vunpack.c.h.b16 %v10792
        %v10826 = vunpack.c.l.b16 %v10793
        %v10827 = vunpack.c.h.b16 %v10793
        %v10828 = vpack.c.b16 %v10824, %v10822
        %v10829 = vpack.c.b16 %v10825, %v10823
        %v10830 = vpack.c.b16 %v10826, %v10826
        %v10831 = vpack.c.b16 %v10827, %v10827
        %v10859 = vunpack.c.l.b16 %v10794
        %v10860 = vunpack.c.h.b16 %v10794
        %v10861 = vunpack.c.l.b16 %v10795
        %v10862 = vunpack.c.h.b16 %v10795
        %v10863 = vunpack.c.l.b16 %v10796
        %v10864 = vunpack.c.h.b16 %v10796
        %v10865 = vunpack.c.l.b16 %v10797
        %v10866 = vunpack.c.h.b16 %v10797
        %v10867 = vunpack.c.l.b16 %v10798
        %v10868 = vunpack.c.h.b16 %v10798
        %v10869 = vunpack.c.l.b16 %v10799
        %v10870 = vunpack.c.h.b16 %v10799
        %v10871 = vunpack.c.l.b16 %v10800
        %v10872 = vunpack.c.h.b16 %v10800
        %v10873 = vunpack.c.l.b16 %v10801
        %v10874 = vunpack.c.h.b16 %v10801
        %v10875 = vunpack.c.l.b16 %v10802
        %v10876 = vunpack.c.h.b16 %v10802
        %v10877 = vunpack.c.l.b16 %v10803
        %v10878 = vunpack.c.h.b16 %v10803
        %v10879 = vunpack.c.l.b16 %v10804
        %v10880 = vunpack.c.h.b16 %v10804
        %v10881 = vunpack.c.l.b16 %v10805
        %v10882 = vunpack.c.h.b16 %v10805
        %v10883 = vunpack.c.l.b16 %v10806
        %v10884 = vunpack.c.h.b16 %v10806
        %v10885 = vunpack.c.l.b16 %v10807
        %v10886 = vunpack.c.h.b16 %v10807
        %v10887 = vunpack.c.l.b16 %v10808
        %v10888 = vunpack.c.h.b16 %v10808
        %v10889 = vunpack.c.l.b16 %v10809
        %v10890 = vunpack.c.h.b16 %v10809
        %v10891 = vunpack.c.l.b16 %v10810
        %v10892 = vunpack.c.h.b16 %v10810
        %v10893 = vunpack.c.l.b16 %v10811
        %v10894 = vunpack.c.h.b16 %v10811
        %v10895 = vunpack.c.l.b16 %v10812
        %v10896 = vunpack.c.h.b16 %v10812
        %v10897 = vunpack.c.l.b16 %v10813
        %v10898 = vunpack.c.h.b16 %v10813
        %v10899 = vunpack.c.l.b16 %v10814
        %v10900 = vunpack.c.h.b16 %v10814
        %v10901 = vunpack.c.l.b16 %v10815
        %v10902 = vunpack.c.h.b16 %v10815
        %v10903 = vunpack.c.l.b16 %v10816
        %v10904 = vunpack.c.h.b16 %v10816
        %v10905 = vunpack.c.l.b16 %v10817
        %v10906 = vunpack.c.h.b16 %v10817
        %v10907 = vunpack.c.l.b16 %v10818
        %v10908 = vunpack.c.h.b16 %v10818
        %v10909 = vpack.c.b16 %v10861, %v10859
        %v10910 = vpack.c.b16 %v10862, %v10860
        %v10911 = vpack.c.b16 %v10865, %v10863
        %v10912 = vpack.c.b16 %v10866, %v10864
        %v10913 = vpack.c.b16 %v10869, %v10867
        %v10914 = vpack.c.b16 %v10870, %v10868
        %v10915 = vpack.c.b16 %v10873, %v10871
        %v10916 = vpack.c.b16 %v10874, %v10872
        %v10917 = vpack.c.b16 %v10877, %v10875
        %v10918 = vpack.c.b16 %v10878, %v10876
        %v10919 = vpack.c.b16 %v10881, %v10879
        %v10920 = vpack.c.b16 %v10882, %v10880
        %v10921 = vpack.c.b16 %v10885, %v10883
        %v10922 = vpack.c.b16 %v10886, %v10884
        %v10923 = vpack.c.b16 %v10889, %v10887
        %v10924 = vpack.c.b16 %v10890, %v10888
        %v10925 = vpack.c.b16 %v10893, %v10891
        %v10926 = vpack.c.b16 %v10894, %v10892
        %v10927 = vpack.c.b16 %v10897, %v10895
        %v10928 = vpack.c.b16 %v10898, %v10896
        %v10929 = vpack.c.b16 %v10901, %v10899
        %v10930 = vpack.c.b16 %v10902, %v10900
        %v10931 = vpack.c.b16 %v10905, %v10903
        %v10932 = vpack.c.b16 %v10906, %v10904
        %v10933 = vpack.c.b16 %v10907, %v10907
        %v10934 = vpack.c.b16 %v10908, %v10908
        %vm10959 = vcmask 588800
        %v10961 = vsel %vm10959, %v10829, 0
        %v10964 = vsel %vm10959, %v10831, 0
        %vm10966 = vcmask 1043456
        %v10968 = vsel %vm10966, %v10933, 0
        %v10971 = vsel %vm10966, %v10934, 0
        %10973 = vmatprep.subr.bf16.mxu0 %v10910
        %10974 = vmatpush1.bf16.msra.mxu0 %v10909
        %10975 = vmatprep.subr.bf16.mxu0 %v10912
        %10976 = vmatpush1.bf16.msra.mxu0 %v10911
        %10977 = vmatprep.subr.bf16.mxu0 %v10914
        %10978 = vmatpush1.bf16.msra.mxu0 %v10913
        %10979 = vmatprep.subr.bf16.mxu0 %v10916
        %10980 = vmatpush1.bf16.msra.mxu0 %v10915
        %10981 = vmatprep.subr.bf16.mxu0 %v10918
        %10982 = vmatpush1.bf16.msra.mxu0 %v10917
        %10983 = vmatprep.subr.bf16.mxu0 %v10920
        %10984 = vmatpush1.bf16.msra.mxu0 %v10919
        %10985 = vmatprep.subr.bf16.mxu0 %v10922
        %10986 = vmatpush1.bf16.msra.mxu0 %v10921
        %10987 = vmatprep.subr.bf16.mxu0 %v10924
        %10988 = vmatpush1.bf16.msra.mxu0 %v10923
        %10989 = vmatprep.subr.bf16.mxu0 %v10926
        %10990 = vmatpush1.bf16.msra.mxu0 %v10925
        %10991 = vmatprep.subr.bf16.mxu0 %v10928
        %10992 = vmatpush1.bf16.msra.mxu0 %v10927
        %10993 = vmatprep.subr.bf16.mxu0 %v10930
        %10994 = vmatpush1.bf16.msra.mxu0 %v10929
        %10995 = vmatprep.subr.bf16.mxu0 %v10932
        %10996 = vmatpush1.bf16.msra.mxu0 %v10931
        %10997 = vmatprep.subr.bf16.mxu0 %v10971
        %10998 = vmatpush1.bf16.msra.mxu0 %v10968
        %10999 = vmatprep.subr.bf16.mxu0 0
        %11000 = vmatpush1.bf16.msra.mxu0 0
        %11001 = vmatprep.subr.bf16.mxu0 0
        %11002 = vmatpush1.bf16.msra.mxu0 0
        %11003 = vmatprep.subr.bf16.mxu0 0
        %11004 = vmatpush1.bf16.msra.mxu0 0
        %11005 = vmatprep.mubr.bf16.mxu0 %v10961
        %11006 = vmatmul.mubr.bf16.gmra.mrb[0].mxu0 %v10828
        %v11007 = vpop.f32.mrb[0].mxu0
        %v11008 = vadd.f32 0.0, %v11007
        %v11009 = vpop.f32.mrb[0].mxu0
        %v11010 = vadd.f32 0.0, %v11009
        %v11011 = vpop.f32.mrb[0].mxu0
        %v11012 = vadd.f32 0.0, %v11011
        %v11013 = vpop.f32.mrb[0].mxu0
        %v11014 = vadd.f32 0.0, %v11013
        %11015 = vmatprep.mubr.bf16.mxu0 %v10964
        %11016 = vmatmul.mubr.bf16.gmra.mrb[0].mxu0 %v10830
        %v11017 = vpop.f32.mrb[0].mxu0
        %v11018 = vadd.f32 0.0, %v11017
        %v11019 = vpop.f32.mrb[0].mxu0
        %v11020 = vadd.f32 0.0, %v11019
        %v11021 = vpop.f32.mrb[0].mxu0
        %v11022 = vpop.f32.mrb[0].mxu0
        %11023 = vdwg.mxu0
        %v11024 = vld [vmem:[%s6] sm:$0xff]
        %v11025 = vld [vmem:[%s6 + $0x8] sm:$0xff]
        %v11026 = vld [vmem:[%s6 + $0x10] sm:$0xff]
        %11028 = vset.pattern.permute.xlu0 0
        %11029 = vperm.xlu0 %11028, %v11024
        %v11030 = vpop.permute.xlu0 %11029
        %v11032 = vadd.f32 %v11008, %v11030
        %v11033 = vadd.f32 %v11010, %v11030
        %s11035 = vtos %v518
        %v11036 = vstv %s11035
        %v11038 = vmul.f32 %v11032, %v11036
        %v11039 = vmul.f32 %v11033, %v11036
        %11041 = vset.pattern.permute.xlu0 0
        %11042 = vperm.xlu0 %11041, %v11025
        %v11043 = vpop.permute.xlu0 %11042
        %v11045 = vadd.f32 %v11012, %v11043
        %v11046 = vadd.f32 %v11014, %v11043
        %v11047 = vrot.slane %v518, 1
        %s11048 = vtos %v11047
        %v11049 = vstv %s11048
        %v11051 = vmul.f32 %v11045, %v11049
        %v11052 = vmul.f32 %v11046, %v11049
        %v11053 = vadd.f32 %v11038, %v11051
        %v11054 = vadd.f32 %v11039, %v11052
        %11056 = vset.pattern.permute.xlu0 0
        %11057 = vperm.xlu0 %11056, %v11026
        %v11058 = vpop.permute.xlu0 %11057
        %v11060 = vadd.f32 %v11018, %v11058
        %v11061 = vadd.f32 %v11020, %v11058
        %v11062 = vrot.slane %v518, 2
        %s11063 = vtos %v11062
        %v11064 = vstv %s11063
        %v11066 = vmul.f32 %v11060, %v11064
        %v11067 = vmul.f32 %v11061, %v11064
        %v11068 = vadd.f32 %v11053, %v11066
        %v11069 = vadd.f32 %v11054, %v11067
        %11070 = vst [vmem:[%s296] sm:$0xff] %v11068
        %11071 = vst [vmem:[%s296 + $0x8] sm:$0xff] %v11069
        %s11072 = sand.u32 %s184, 1
        %s11073 = scalar_lea.sflag [#allocation6], %s11072
        %s11074 = sand.u32 %s184, 1
        %s11075 = smul.addr %s11074, 16
        %s11076 = scalar_lea.vmem [#allocation7], %s11075
        // Predicated region
        $region53: #{tpu_custom_call.1} parent=47 // pred_check
          %p11077 = pneg %p194
        $region54: #{tpu_custom_call.1} parent=47 // pred_check_branch
          %11079 = sbr.rel (%p11077) target = $region56
        $region55: #{tpu_custom_call.1} parent=47 // pred_region
          %s11081 = ssub.s32 256, 256
          %11082 = vsyncadd %s11073, %s11081
          %s11083 = smul.addr %s24, 2
          %s11084 = smul.addr %s11083, 128
          %s11085 = scalar_lea.hbm %s7, %s11084
          %s11087 = sshll.u32 %s11076, 4
          %s11088 = int_to_ptr.vmem [resolvable:$true] %s11087
          %11090 = dma.vmem_to_hbm [thread:$0]  %s11088, 256, %s11085, %s11073
        $region56: #{tpu_custom_call.1} parent=47 // pred_fallthru
          _
      $region48: #{tpu_custom_call.1} parent=5 // pred_fallthru
        _
      %p11091 = scmp.le.s32.totalorder 2, %s19
      // Predicated region
      $region57: #{tpu_custom_call.1} parent=5 // pred_check
        %p11092 = pneg %p11091
      $region58: #{tpu_custom_call.1} parent=5 // pred_check_branch
        %11094 = sbr.rel (%p11092) target = $region60
      $region59: #{tpu_custom_call.1} parent=5 // pred_region
        %s11095 = ssub.s32 %s19, 2
        // Predicated region
        $region61: #{tpu_custom_call.1} parent=59 // pred_check
          %p11096 = pneg %p200
        $region62: #{tpu_custom_call.1} parent=59 // pred_check_branch
          %11098 = sbr.rel (%p11096) target = $region64
        $region63: #{tpu_custom_call.1} parent=59 // pred_region
          %s11099 = sand.u32 %s185, 1
          %s11100 = scalar_lea.sflag [#allocation6], %s11099
          %s11101 = sand.u32 %s185, 1
          %s11102 = smul.addr %s11101, 16
          %s11103 = scalar_lea.vmem [#allocation7], %s11102
          %11104 = dma.done %s11100, 256
        $region64: #{tpu_custom_call.1} parent=59 // pred_fallthru
          _
      $region60: #{tpu_custom_call.1} parent=5 // pred_fallthru
        _
    $region6: #{tpu_custom_call.1} parent=1 // loop_footer
      %s23 = sadd.s32 1, %s19
    $region7: #{tpu_custom_call.1} parent=1 // loop_footer_branch
      %18 = sbr.rel target = $region3
    $region8: #{tpu_custom_call.1} parent=1 // loop_exit
      _
    %11105 = vsyncpa [#allocation5], 1
    %s11106 = scalar_lea.sflag [#allocation5], 1
    %11107 = vsyncpa %s11106, 1
    %11108 = vsyncpa [#allocation6], 1
    %s11109 = scalar_lea.sflag [#allocation6], 1
    %11110 = vsyncpa %s11109, 1

</llo_original>
